<compile_context>
chip_gen: v7x
topology: tpu7x:2x2x1
jax: 0.10.0
libtpu: 0.0.40
codegen_flags: <defaults>
</compile_context>

<pallas_src>
import math

import jax
import jax.numpy as jnp
from jax import lax
from jax.experimental import pallas as pl
from jax.experimental.pallas import tpu as pltpu


_VMEM_SPEC = pl.BlockSpec(memory_space=pltpu.MemorySpace.VMEM)


# ----------------------------------------------------------------------------
# Fused kernel factory
# ----------------------------------------------------------------------------

def _make_actor_kernel(T, B, n_enc, mlp_kinds):
    """Build the fused forward kernel.

    Kernel ref order:
      x_ref                                   (T*B, in_dim)   time-major rows
      per GRU layer (n_enc times):
        w_ir, w_iz, w_in                      (in_d, H)  input->hidden, per gate
        w_hr, w_hz, w_hn                      (H, H)     hidden->hidden, per gate
        b_r, b_z, b_in, b_hn                  (1, H)     (b_r/b_z fold b_ih+b_hh)
      per MLP layer: (w_t, b[, gamma, beta])  w_t is (in, out)
      out_ref                                 (B, out_dim)
    """
    f32 = jnp.float32

    def kernel(*refs):
        idx = 0
        x_ref = refs[idx]; idx += 1
        gru = []
        for _ in range(n_enc):
            gru.append(refs[idx:idx + 10]); idx += 10
        mlp = []
        for k in mlp_kinds:
            mlp.append(refs[idx:idx + k]); idx += k
        out_ref = refs[idx]

        def cell(xr, xz, xn, h, whr, whz, whn, bhn):
            # PyTorch GRU cell (b_ih/b_hh for r,z already folded into xr/xz;
            # b_in folded into xn; b_hn must stay inside r * (...)).
            gh_r = jnp.dot(h, whr, preferred_element_type=f32)
            gh_z = jnp.dot(h, whz, preferred_element_type=f32)
            gh_n = jnp.dot(h, whn, preferred_element_type=f32)
            r = jax.nn.sigmoid(xr + gh_r)
            z = jax.nn.sigmoid(xz + gh_z)
            n = jnp.tanh(xn + r * (gh_n + bhn))
            return (1.0 - z) * n + z * h

        # ---- GRU layer 0: input projection hoisted out of the recurrence ----
        w_ir, w_iz, w_in, w_hr, w_hz, w_hn, b_r, b_z, b_in, b_hn = gru[0]
        H = w_hr.shape[0]
        x2d = x_ref[...]                                      # (T*B, in_dim)
        gi_r = jnp.dot(x2d, w_ir[...], preferred_element_type=f32) + b_r[...]
        gi_z = jnp.dot(x2d, w_iz[...], preferred_element_type=f32) + b_z[...]
        gi_n = jnp.dot(x2d, w_in[...], preferred_element_type=f32) + b_in[...]
        whr, whz, whn, bhn = w_hr[...], w_hz[...], w_hn[...], b_hn[...]

        h = jnp.zeros((B, H), f32)
        hs = []
        for t in range(T):                    # static T -> fully unrolled
            lo = t * B                        # time-major rows: [t*B, (t+1)*B)
            h = cell(gi_r[lo:lo + B], gi_z[lo:lo + B], gi_n[lo:lo + B],
                     h, whr, whz, whn, bhn)
            hs.append(h)

        # ---- GRU layers 1..n_enc-1 (no per-step stores; values stay live) ----
        for l in range(1, n_enc):
            w_ir, w_iz, w_in, w_hr, w_hz, w_hn, b_r, b_z, b_in, b_hn = gru[l]
            wir, wiz, win = w_ir[...], w_iz[...], w_in[...]
            whr, whz, whn = w_hr[...], w_hz[...], w_hn[...]
            br, bz, bin_, bhn = b_r[...], b_z[...], b_in[...], b_hn[...]
            h = jnp.zeros((B, H), f32)
            nxt = []
            for t in range(T):
                xt = hs[t]
                # These dots depend only on the previous layer's h_t, so they
                # are off this layer's serial h-dependency chain.
                xr = jnp.dot(xt, wir, preferred_element_type=f32) + br
                xz = jnp.dot(xt, wiz, preferred_element_type=f32) + bz
                xn = jnp.dot(xt, win, preferred_element_type=f32) + bin_
                h = cell(xr, xz, xn, h, whr, whz, whn, bhn)
                nxt.append(h)
            hs = nxt

        # ---- MLP on the last timestep's hidden state ----
        y = hs[-1]                                            # (B, H)
        for layer in mlp:
            if len(layer) == 4:                               # Linear+LN+ReLU
                w_t, b, gamma, beta = layer
                y = jnp.dot(y, w_t[...], preferred_element_type=f32) + b[...]
                mean = jnp.mean(y, axis=-1, keepdims=True)
                var = jnp.mean((y - mean) ** 2, axis=-1, keepdims=True)
                y = (y - mean) * lax.rsqrt(var + 1e-5)
                y = y * gamma[...] + beta[...]
                y = jnp.maximum(y, 0.0)
            else:                                             # final Linear
                w_t, b = layer
                y = jnp.dot(y, w_t[...], preferred_element_type=f32) + b[...]

        out_ref[...] = y        # single (B, out_dim) store; only HBM output

    return kernel


# ----------------------------------------------------------------------------
# Parameter init (PyTorch-default-style) and one-time preparation
# ----------------------------------------------------------------------------

def init_actor_params(key, input_dim, output_dim, embedding_dim, hidden_dim,
                      encoder_layers, decoder_layers):
    """PyTorch-layout parameters (same as nn.GRU / nn.Linear / nn.LayerNorm)."""
    params = {"gru": [], "mlp": []}

    k_gru = 1.0 / math.sqrt(embedding_dim)
    for layer in range(encoder_layers):
        in_d = input_dim if layer == 0 else embedding_dim
        key, k1, k2, k3, k4 = jax.random.split(key, 5)
        w_ih = jax.random.uniform(k1, (3 * embedding_dim, in_d),
                                  jnp.float32, -k_gru, k_gru)
        w_hh = jax.random.uniform(k2, (3 * embedding_dim, embedding_dim),
                                  jnp.float32, -k_gru, k_gru)
        b_ih = jax.random.uniform(k3, (3 * embedding_dim,),
                                  jnp.float32, -k_gru, k_gru)
        b_hh = jax.random.uniform(k4, (3 * embedding_dim,),
                                  jnp.float32, -k_gru, k_gru)
        params["gru"].append((w_ih, w_hh, b_ih, b_hh))

    dim_list = [embedding_dim] + [hidden_dim] * decoder_layers + [output_dim]
    for i in range(len(dim_list) - 1):
        k_lin = 1.0 / math.sqrt(dim_list[i])
        key, k1, k2 = jax.random.split(key, 3)
        w = jax.random.uniform(k1, (dim_list[i + 1], dim_list[i]),
                               jnp.float32, -k_lin, k_lin)
        b = jax.random.uniform(k2, (dim_list[i + 1],),
                               jnp.float32, -k_lin, k_lin)
        if i < len(dim_list) - 2:
            gamma = jnp.ones((dim_list[i + 1],), jnp.float32)
            beta = jnp.zeros((dim_list[i + 1],), jnp.float32)
            params["mlp"].append(("ln_relu", w, b, gamma, beta))
        else:
            params["mlp"].append(("linear", w, b))
    return params


def prepare_params(params):
    """One-time (outside the forward path) transpose / per-gate split / bias fold."""
    prepped = {"gru": [], "mlp": []}
    for (w_ih, w_hh, b_ih, b_hh) in params["gru"]:
        H = w_hh.shape[1]
        w_ir, w_iz, w_in = w_ih[:H].T, w_ih[H:2 * H].T, w_ih[2 * H:].T   # (in_d, H)
        w_hr, w_hz, w_hn = w_hh[:H].T, w_hh[H:2 * H].T, w_hh[2 * H:].T   # (H, H)
        b_r = (b_ih[:H] + b_hh[:H]).reshape(1, H)
        b_z = (b_ih[H:2 * H] + b_hh[H:2 * H]).reshape(1, H)
        b_in = b_ih[2 * H:].reshape(1, H)
        b_hn = b_hh[2 * H:].reshape(1, H)
        prepped["gru"].append((w_ir, w_iz, w_in, w_hr, w_hz, w_hn,
                               b_r, b_z, b_in, b_hn))
    for layer in params["mlp"]:
        if layer[0] == "ln_relu":
            _, w, b, gamma, beta = layer
            prepped["mlp"].append((w.T, b.reshape(1, -1),
                                   gamma.reshape(1, -1), beta.reshape(1, -1)))
        else:
            _, w, b = layer
            prepped["mlp"].append((w.T, b.reshape(1, -1)))
    return prepped


# ----------------------------------------------------------------------------
# Forward pass (single fused pallas_call) and pure-JAX reference
# ----------------------------------------------------------------------------

def actor_forward(prepped, state):
    """state: (B, T, input_dim) float32, PyTorch batch_first convention."""
    B, T, in_dim = state.shape
    gru_layers = prepped["gru"]
    mlp_layers = prepped["mlp"]
    out_dim = mlp_layers[-1][0].shape[1]

    # Time-major flatten so the kernel's hoisted input projection yields
    # contiguous per-timestep row blocks.  Tiny (256 B) op, fused under jit.
    x_tm2d = jnp.transpose(state, (1, 0, 2)).reshape(T * B, in_dim)
    x_tm2d = x_tm2d.astype(jnp.float32)

    kernel = _make_actor_kernel(T, B, n_enc=len(gru_layers),
                                mlp_kinds=tuple(len(l) for l in mlp_layers))

    flat_inputs = [x_tm2d]
    for lyr in gru_layers:
        flat_inputs.extend(lyr)
    for lyr in mlp_layers:
        flat_inputs.extend(lyr)

    return pl.pallas_call(
        kernel,
        out_shape=jax.ShapeDtypeStruct((B, out_dim), jnp.float32),
        in_specs=[_VMEM_SPEC] * len(flat_inputs),
        out_specs=_VMEM_SPEC,
    )(*flat_inputs)


def actor_forward_ref(params, state):
    """Pure-JAX reference on the original (PyTorch-layout) parameters."""
    x = state.astype(jnp.float32)  # (B, T, D)
    for (w_ih, w_hh, b_ih, b_hh) in params["gru"]:
        B, T, _ = x.shape
        H = w_hh.shape[1]
        h = jnp.zeros((B, H), jnp.float32)
        outs = []
        for t in range(T):
            gi = x[:, t] @ w_ih.T + b_ih
            gh = h @ w_hh.T + b_hh
            i_r, i_z, i_n = jnp.split(gi, 3, axis=-1)
            h_r, h_z, h_n = jnp.split(gh, 3, axis=-1)
            r = jax.nn.sigmoid(i_r + h_r)
            z = jax.nn.sigmoid(i_z + h_z)
            n = jnp.tanh(i_n + r * h_n)
            h = (1.0 - z) * n + z * h
            outs.append(h)
        x = jnp.stack(outs, axis=1)
    emb = x[:, -1, :]

    h = emb
    for layer in params["mlp"]:
        if layer[0] == "ln_relu":
            _, w, b, gamma, beta = layer
            y = h @ w.T + b
            mean = jnp.mean(y, axis=-1, keepdims=True)
            var = jnp.mean((y - mean) ** 2, axis=-1, keepdims=True)
            y = (y - mean) / jnp.sqrt(var + 1e-5) * gamma + beta
            h = jnp.maximum(y, 0.0)
        else:
            _, w, b = layer
            h = h @ w.T + b
    return h


# ----------------------------------------------------------------------------
# Main
# ----------------------------------------------------------------------------

if __name__ == "__main__":
    B, T = 2, 8
    input_dim, output_dim = 4, 4
    embedding_dim, hidden_dim = 32, 32
    encoder_layers, decoder_layers = 2, 2

    key = jax.random.PRNGKey(0)
    key, pkey, xkey = jax.random.split(key, 3)
    params = init_actor_params(pkey, input_dim, output_dim, embedding_dim,
                               hidden_dim, encoder_layers, decoder_layers)
    prepped = prepare_params(params)          # one-time weight prep
    state = jax.random.normal(xkey, (B, T, input_dim), jnp.float32)

    fwd = jax.jit(actor_forward)              # one executable, one dispatch
    action = jax.block_until_ready(fwd(prepped, state))

    ref = jax.block_until_ready(actor_forward_ref(params, state))
    assert action.shape == (B, output_dim), action.shape
    assert jnp.allclose(action, ref, atol=2e-3, rtol=2e-3), (
        "mismatch vs reference", action, ref)

    print("KERNEL_OK")
</pallas_src>

<mosaic_0001>
module attributes {stable_mosaic.version = 11 : i64} {
  func.func @kernel(%arg0: memref<16x4xf32, #tpu.memory_space<vmem>>, %arg1: memref<4x32xf32, #tpu.memory_space<vmem>>, %arg2: memref<4x32xf32, #tpu.memory_space<vmem>>, %arg3: memref<4x32xf32, #tpu.memory_space<vmem>>, %arg4: memref<32x32xf32, #tpu.memory_space<vmem>>, %arg5: memref<32x32xf32, #tpu.memory_space<vmem>>, %arg6: memref<32x32xf32, #tpu.memory_space<vmem>>, %arg7: memref<1x32xf32, #tpu.memory_space<vmem>>, %arg8: memref<1x32xf32, #tpu.memory_space<vmem>>, %arg9: memref<1x32xf32, #tpu.memory_space<vmem>>, %arg10: memref<1x32xf32, #tpu.memory_space<vmem>>, %arg11: memref<32x32xf32, #tpu.memory_space<vmem>>, %arg12: memref<32x32xf32, #tpu.memory_space<vmem>>, %arg13: memref<32x32xf32, #tpu.memory_space<vmem>>, %arg14: memref<32x32xf32, #tpu.memory_space<vmem>>, %arg15: memref<32x32xf32, #tpu.memory_space<vmem>>, %arg16: memref<32x32xf32, #tpu.memory_space<vmem>>, %arg17: memref<1x32xf32, #tpu.memory_space<vmem>>, %arg18: memref<1x32xf32, #tpu.memory_space<vmem>>, %arg19: memref<1x32xf32, #tpu.memory_space<vmem>>, %arg20: memref<1x32xf32, #tpu.memory_space<vmem>>, %arg21: memref<32x32xf32, #tpu.memory_space<vmem>>, %arg22: memref<1x32xf32, #tpu.memory_space<vmem>>, %arg23: memref<1x32xf32, #tpu.memory_space<vmem>>, %arg24: memref<1x32xf32, #tpu.memory_space<vmem>>, %arg25: memref<32x32xf32, #tpu.memory_space<vmem>>, %arg26: memref<1x32xf32, #tpu.memory_space<vmem>>, %arg27: memref<1x32xf32, #tpu.memory_space<vmem>>, %arg28: memref<1x32xf32, #tpu.memory_space<vmem>>, %arg29: memref<32x4xf32, #tpu.memory_space<vmem>>, %arg30: memref<1x4xf32, #tpu.memory_space<vmem>>, %arg31: memref<2x4xf32, #tpu.memory_space<vmem>>) attributes {dimension_semantics = [], scalar_prefetch = 0 : i64, scratch_operands = 0 : i64, tpu.core_type = #tpu.core_type<tc>} {
    %c0 = arith.constant 0 : index
    %c0_0 = arith.constant 0 : index
    %0 = vector.load %arg0[%c0, %c0_0] : memref<16x4xf32, #tpu.memory_space<vmem>>, vector<16x4xf32>
    %c0_1 = arith.constant 0 : index
    %c0_2 = arith.constant 0 : index
    %1 = vector.load %arg1[%c0_1, %c0_2] : memref<4x32xf32, #tpu.memory_space<vmem>>, vector<4x32xf32>
    %cst = arith.constant dense<0.000000e+00> : vector<16x32xf32>
    %2 = tpu.matmul %0, %1, %cst {dimension_numbers = #tpu.dot_dimension_numbers<[1], [0], [0], [1], [0, 0, 1, 1], [], []>} : vector<16x4xf32>, vector<4x32xf32>, vector<16x32xf32> -> vector<16x32xf32>
    %c0_3 = arith.constant 0 : index
    %c0_4 = arith.constant 0 : index
    %3 = vector.load %arg7[%c0_3, %c0_4] : memref<1x32xf32, #tpu.memory_space<vmem>>, vector<1x32xf32>
    %4 = vector.broadcast %3 : vector<1x32xf32> to vector<16x32xf32>
    %5 = arith.addf %2, %4 : vector<16x32xf32>
    %c0_5 = arith.constant 0 : index
    %c0_6 = arith.constant 0 : index
    %6 = vector.load %arg2[%c0_5, %c0_6] : memref<4x32xf32, #tpu.memory_space<vmem>>, vector<4x32xf32>
    %cst_7 = arith.constant dense<0.000000e+00> : vector<16x32xf32>
    %7 = tpu.matmul %0, %6, %cst_7 {dimension_numbers = #tpu.dot_dimension_numbers<[1], [0], [0], [1], [0, 0, 1, 1], [], []>} : vector<16x4xf32>, vector<4x32xf32>, vector<16x32xf32> -> vector<16x32xf32>
    %c0_8 = arith.constant 0 : index
    %c0_9 = arith.constant 0 : index
    %8 = vector.load %arg8[%c0_8, %c0_9] : memref<1x32xf32, #tpu.memory_space<vmem>>, vector<1x32xf32>
    %9 = vector.broadcast %8 : vector<1x32xf32> to vector<16x32xf32>
    %10 = arith.addf %7, %9 : vector<16x32xf32>
    %c0_10 = arith.constant 0 : index
    %c0_11 = arith.constant 0 : index
    %11 = vector.load %arg3[%c0_10, %c0_11] : memref<4x32xf32, #tpu.memory_space<vmem>>, vector<4x32xf32>
    %cst_12 = arith.constant dense<0.000000e+00> : vector<16x32xf32>
    %12 = tpu.matmul %0, %11, %cst_12 {dimension_numbers = #tpu.dot_dimension_numbers<[1], [0], [0], [1], [0, 0, 1, 1], [], []>} : vector<16x4xf32>, vector<4x32xf32>, vector<16x32xf32> -> vector<16x32xf32>
    %c0_13 = arith.constant 0 : index
    %c0_14 = arith.constant 0 : index
    %13 = vector.load %arg9[%c0_13, %c0_14] : memref<1x32xf32, #tpu.memory_space<vmem>>, vector<1x32xf32>
    %14 = vector.broadcast %13 : vector<1x32xf32> to vector<16x32xf32>
    %15 = arith.addf %12, %14 : vector<16x32xf32>
    %c0_15 = arith.constant 0 : index
    %c0_16 = arith.constant 0 : index
    %16 = vector.load %arg4[%c0_15, %c0_16] : memref<32x32xf32, #tpu.memory_space<vmem>>, vector<32x32xf32>
    %c0_17 = arith.constant 0 : index
    %c0_18 = arith.constant 0 : index
    %17 = vector.load %arg5[%c0_17, %c0_18] : memref<32x32xf32, #tpu.memory_space<vmem>>, vector<32x32xf32>
    %c0_19 = arith.constant 0 : index
    %c0_20 = arith.constant 0 : index
    %18 = vector.load %arg6[%c0_19, %c0_20] : memref<32x32xf32, #tpu.memory_space<vmem>>, vector<32x32xf32>
    %c0_21 = arith.constant 0 : index
    %c0_22 = arith.constant 0 : index
    %19 = vector.load %arg10[%c0_21, %c0_22] : memref<1x32xf32, #tpu.memory_space<vmem>>, vector<1x32xf32>
    %cst_23 = arith.constant 0.000000e+00 : f32
    %20 = vector.broadcast %cst_23 : f32 to vector<2x32xf32>
    %21 = vector.extract_strided_slice %5 {offsets = [0, 0], sizes = [2, 32], strides = [1, 1]} : vector<16x32xf32> to vector<2x32xf32>
    %22 = vector.extract_strided_slice %10 {offsets = [0, 0], sizes = [2, 32], strides = [1, 1]} : vector<16x32xf32> to vector<2x32xf32>
    %23 = vector.extract_strided_slice %15 {offsets = [0, 0], sizes = [2, 32], strides = [1, 1]} : vector<16x32xf32> to vector<2x32xf32>
    %cst_24 = arith.constant dense<0.000000e+00> : vector<2x32xf32>
    %24 = tpu.matmul %20, %16, %cst_24 {dimension_numbers = #tpu.dot_dimension_numbers<[1], [0], [0], [1], [0, 0, 1, 1], [], []>} : vector<2x32xf32>, vector<32x32xf32>, vector<2x32xf32> -> vector<2x32xf32>
    %cst_25 = arith.constant dense<0.000000e+00> : vector<2x32xf32>
    %25 = tpu.matmul %20, %17, %cst_25 {dimension_numbers = #tpu.dot_dimension_numbers<[1], [0], [0], [1], [0, 0, 1, 1], [], []>} : vector<2x32xf32>, vector<32x32xf32>, vector<2x32xf32> -> vector<2x32xf32>
    %cst_26 = arith.constant dense<0.000000e+00> : vector<2x32xf32>
    %26 = tpu.matmul %20, %18, %cst_26 {dimension_numbers = #tpu.dot_dimension_numbers<[1], [0], [0], [1], [0, 0, 1, 1], [], []>} : vector<2x32xf32>, vector<32x32xf32>, vector<2x32xf32> -> vector<2x32xf32>
    %27 = arith.addf %21, %24 : vector<2x32xf32>
    %28 = arith.negf %27 : vector<2x32xf32>
    %29 = math.exp %28 : vector<2x32xf32>
    %cst_27 = arith.constant 1.000000e+00 : f32
    %30 = vector.broadcast %cst_27 : f32 to vector<2x32xf32>
    %31 = arith.addf %30, %29 : vector<2x32xf32>
    %32 = arith.divf %30, %31 : vector<2x32xf32>
    %33 = arith.addf %22, %25 : vector<2x32xf32>
    %34 = arith.negf %33 : vector<2x32xf32>
    %35 = math.exp %34 : vector<2x32xf32>
    %cst_28 = arith.constant 1.000000e+00 : f32
    %36 = vector.broadcast %cst_28 : f32 to vector<2x32xf32>
    %37 = arith.addf %36, %35 : vector<2x32xf32>
    %38 = arith.divf %36, %37 : vector<2x32xf32>
    %39 = vector.broadcast %19 : vector<1x32xf32> to vector<2x32xf32>
    %40 = arith.addf %26, %39 : vector<2x32xf32>
    %41 = arith.mulf %32, %40 : vector<2x32xf32>
    %42 = arith.addf %23, %41 : vector<2x32xf32>
    %43 = math.tanh %42 : vector<2x32xf32>
    %cst_29 = arith.constant 1.000000e+00 : f32
    %44 = vector.broadcast %cst_29 : f32 to vector<2x32xf32>
    %45 = arith.subf %44, %38 : vector<2x32xf32>
    %46 = arith.mulf %45, %43 : vector<2x32xf32>
    %47 = arith.mulf %38, %20 : vector<2x32xf32>
    %48 = arith.addf %46, %47 : vector<2x32xf32>
    %49 = vector.extract_strided_slice %5 {offsets = [2, 0], sizes = [2, 32], strides = [1, 1]} : vector<16x32xf32> to vector<2x32xf32>
    %50 = vector.extract_strided_slice %10 {offsets = [2, 0], sizes = [2, 32], strides = [1, 1]} : vector<16x32xf32> to vector<2x32xf32>
    %51 = vector.extract_strided_slice %15 {offsets = [2, 0], sizes = [2, 32], strides = [1, 1]} : vector<16x32xf32> to vector<2x32xf32>
    %cst_30 = arith.constant dense<0.000000e+00> : vector<2x32xf32>
    %52 = tpu.matmul %48, %16, %cst_30 {dimension_numbers = #tpu.dot_dimension_numbers<[1], [0], [0], [1], [0, 0, 1, 1], [], []>} : vector<2x32xf32>, vector<32x32xf32>, vector<2x32xf32> -> vector<2x32xf32>
    %cst_31 = arith.constant dense<0.000000e+00> : vector<2x32xf32>
    %53 = tpu.matmul %48, %17, %cst_31 {dimension_numbers = #tpu.dot_dimension_numbers<[1], [0], [0], [1], [0, 0, 1, 1], [], []>} : vector<2x32xf32>, vector<32x32xf32>, vector<2x32xf32> -> vector<2x32xf32>
    %cst_32 = arith.constant dense<0.000000e+00> : vector<2x32xf32>
    %54 = tpu.matmul %48, %18, %cst_32 {dimension_numbers = #tpu.dot_dimension_numbers<[1], [0], [0], [1], [0, 0, 1, 1], [], []>} : vector<2x32xf32>, vector<32x32xf32>, vector<2x32xf32> -> vector<2x32xf32>
    %55 = arith.addf %49, %52 : vector<2x32xf32>
    %56 = arith.negf %55 : vector<2x32xf32>
    %57 = math.exp %56 : vector<2x32xf32>
    %cst_33 = arith.constant 1.000000e+00 : f32
    %58 = vector.broadcast %cst_33 : f32 to vector<2x32xf32>
    %59 = arith.addf %58, %57 : vector<2x32xf32>
    %60 = arith.divf %58, %59 : vector<2x32xf32>
    %61 = arith.addf %50, %53 : vector<2x32xf32>
    %62 = arith.negf %61 : vector<2x32xf32>
    %63 = math.exp %62 : vector<2x32xf32>
    %cst_34 = arith.constant 1.000000e+00 : f32
    %64 = vector.broadcast %cst_34 : f32 to vector<2x32xf32>
    %65 = arith.addf %64, %63 : vector<2x32xf32>
    %66 = arith.divf %64, %65 : vector<2x32xf32>
    %67 = vector.broadcast %19 : vector<1x32xf32> to vector<2x32xf32>
    %68 = arith.addf %54, %67 : vector<2x32xf32>
    %69 = arith.mulf %60, %68 : vector<2x32xf32>
    %70 = arith.addf %51, %69 : vector<2x32xf32>
    %71 = math.tanh %70 : vector<2x32xf32>
    %cst_35 = arith.constant 1.000000e+00 : f32
    %72 = vector.broadcast %cst_35 : f32 to vector<2x32xf32>
    %73 = arith.subf %72, %66 : vector<2x32xf32>
    %74 = arith.mulf %73, %71 : vector<2x32xf32>
    %75 = arith.mulf %66, %48 : vector<2x32xf32>
    %76 = arith.addf %74, %75 : vector<2x32xf32>
    %77 = vector.extract_strided_slice %5 {offsets = [4, 0], sizes = [2, 32], strides = [1, 1]} : vector<16x32xf32> to vector<2x32xf32>
    %78 = vector.extract_strided_slice %10 {offsets = [4, 0], sizes = [2, 32], strides = [1, 1]} : vector<16x32xf32> to vector<2x32xf32>
    %79 = vector.extract_strided_slice %15 {offsets = [4, 0], sizes = [2, 32], strides = [1, 1]} : vector<16x32xf32> to vector<2x32xf32>
    %cst_36 = arith.constant dense<0.000000e+00> : vector<2x32xf32>
    %80 = tpu.matmul %76, %16, %cst_36 {dimension_numbers = #tpu.dot_dimension_numbers<[1], [0], [0], [1], [0, 0, 1, 1], [], []>} : vector<2x32xf32>, vector<32x32xf32>, vector<2x32xf32> -> vector<2x32xf32>
    %cst_37 = arith.constant dense<0.000000e+00> : vector<2x32xf32>
    %81 = tpu.matmul %76, %17, %cst_37 {dimension_numbers = #tpu.dot_dimension_numbers<[1], [0], [0], [1], [0, 0, 1, 1], [], []>} : vector<2x32xf32>, vector<32x32xf32>, vector<2x32xf32> -> vector<2x32xf32>
    %cst_38 = arith.constant dense<0.000000e+00> : vector<2x32xf32>
    %82 = tpu.matmul %76, %18, %cst_38 {dimension_numbers = #tpu.dot_dimension_numbers<[1], [0], [0], [1], [0, 0, 1, 1], [], []>} : vector<2x32xf32>, vector<32x32xf32>, vector<2x32xf32> -> vector<2x32xf32>
    %83 = arith.addf %77, %80 : vector<2x32xf32>
    %84 = arith.negf %83 : vector<2x32xf32>
    %85 = math.exp %84 : vector<2x32xf32>
    %cst_39 = arith.constant 1.000000e+00 : f32
    %86 = vector.broadcast %cst_39 : f32 to vector<2x32xf32>
    %87 = arith.addf %86, %85 : vector<2x32xf32>
    %88 = arith.divf %86, %87 : vector<2x32xf32>
    %89 = arith.addf %78, %81 : vector<2x32xf32>
    %90 = arith.negf %89 : vector<2x32xf32>
    %91 = math.exp %90 : vector<2x32xf32>
    %cst_40 = arith.constant 1.000000e+00 : f32
    %92 = vector.broadcast %cst_40 : f32 to vector<2x32xf32>
    %93 = arith.addf %92, %91 : vector<2x32xf32>
    %94 = arith.divf %92, %93 : vector<2x32xf32>
    %95 = vector.broadcast %19 : vector<1x32xf32> to vector<2x32xf32>
    %96 = arith.addf %82, %95 : vector<2x32xf32>
    %97 = arith.mulf %88, %96 : vector<2x32xf32>
    %98 = arith.addf %79, %97 : vector<2x32xf32>
    %99 = math.tanh %98 : vector<2x32xf32>
    %cst_41 = arith.constant 1.000000e+00 : f32
    %100 = vector.broadcast %cst_41 : f32 to vector<2x32xf32>
    %101 = arith.subf %100, %94 : vector<2x32xf32>
    %102 = arith.mulf %101, %99 : vector<2x32xf32>
    %103 = arith.mulf %94, %76 : vector<2x32xf32>
    %104 = arith.addf %102, %103 : vector<2x32xf32>
    %105 = vector.extract_strided_slice %5 {offsets = [6, 0], sizes = [2, 32], strides = [1, 1]} : vector<16x32xf32> to vector<2x32xf32>
    %106 = vector.extract_strided_slice %10 {offsets = [6, 0], sizes = [2, 32], strides = [1, 1]} : vector<16x32xf32> to vector<2x32xf32>
    %107 = vector.extract_strided_slice %15 {offsets = [6, 0], sizes = [2, 32], strides = [1, 1]} : vector<16x32xf32> to vector<2x32xf32>
    %cst_42 = arith.constant dense<0.000000e+00> : vector<2x32xf32>
    %108 = tpu.matmul %104, %16, %cst_42 {dimension_numbers = #tpu.dot_dimension_numbers<[1], [0], [0], [1], [0, 0, 1, 1], [], []>} : vector<2x32xf32>, vector<32x32xf32>, vector<2x32xf32> -> vector<2x32xf32>
    %cst_43 = arith.constant dense<0.000000e+00> : vector<2x32xf32>
    %109 = tpu.matmul %104, %17, %cst_43 {dimension_numbers = #tpu.dot_dimension_numbers<[1], [0], [0], [1], [0, 0, 1, 1], [], []>} : vector<2x32xf32>, vector<32x32xf32>, vector<2x32xf32> -> vector<2x32xf32>
    %cst_44 = arith.constant dense<0.000000e+00> : vector<2x32xf32>
    %110 = tpu.matmul %104, %18, %cst_44 {dimension_numbers = #tpu.dot_dimension_numbers<[1], [0], [0], [1], [0, 0, 1, 1], [], []>} : vector<2x32xf32>, vector<32x32xf32>, vector<2x32xf32> -> vector<2x32xf32>
    %111 = arith.addf %105, %108 : vector<2x32xf32>
    %112 = arith.negf %111 : vector<2x32xf32>
    %113 = math.exp %112 : vector<2x32xf32>
    %cst_45 = arith.constant 1.000000e+00 : f32
    %114 = vector.broadcast %cst_45 : f32 to vector<2x32xf32>
    %115 = arith.addf %114, %113 : vector<2x32xf32>
    %116 = arith.divf %114, %115 : vector<2x32xf32>
    %117 = arith.addf %106, %109 : vector<2x32xf32>
    %118 = arith.negf %117 : vector<2x32xf32>
    %119 = math.exp %118 : vector<2x32xf32>
    %cst_46 = arith.constant 1.000000e+00 : f32
    %120 = vector.broadcast %cst_46 : f32 to vector<2x32xf32>
    %121 = arith.addf %120, %119 : vector<2x32xf32>
    %122 = arith.divf %120, %121 : vector<2x32xf32>
    %123 = vector.broadcast %19 : vector<1x32xf32> to vector<2x32xf32>
    %124 = arith.addf %110, %123 : vector<2x32xf32>
    %125 = arith.mulf %116, %124 : vector<2x32xf32>
    %126 = arith.addf %107, %125 : vector<2x32xf32>
    %127 = math.tanh %126 : vector<2x32xf32>
    %cst_47 = arith.constant 1.000000e+00 : f32
    %128 = vector.broadcast %cst_47 : f32 to vector<2x32xf32>
    %129 = arith.subf %128, %122 : vector<2x32xf32>
    %130 = arith.mulf %129, %127 : vector<2x32xf32>
    %131 = arith.mulf %122, %104 : vector<2x32xf32>
    %132 = arith.addf %130, %131 : vector<2x32xf32>
    %133 = vector.extract_strided_slice %5 {offsets = [8, 0], sizes = [2, 32], strides = [1, 1]} : vector<16x32xf32> to vector<2x32xf32>
    %134 = vector.extract_strided_slice %10 {offsets = [8, 0], sizes = [2, 32], strides = [1, 1]} : vector<16x32xf32> to vector<2x32xf32>
    %135 = vector.extract_strided_slice %15 {offsets = [8, 0], sizes = [2, 32], strides = [1, 1]} : vector<16x32xf32> to vector<2x32xf32>
    %cst_48 = arith.constant dense<0.000000e+00> : vector<2x32xf32>
    %136 = tpu.matmul %132, %16, %cst_48 {dimension_numbers = #tpu.dot_dimension_numbers<[1], [0], [0], [1], [0, 0, 1, 1], [], []>} : vector<2x32xf32>, vector<32x32xf32>, vector<2x32xf32> -> vector<2x32xf32>
    %cst_49 = arith.constant dense<0.000000e+00> : vector<2x32xf32>
    %137 = tpu.matmul %132, %17, %cst_49 {dimension_numbers = #tpu.dot_dimension_numbers<[1], [0], [0], [1], [0, 0, 1, 1], [], []>} : vector<2x32xf32>, vector<32x32xf32>, vector<2x32xf32> -> vector<2x32xf32>
    %cst_50 = arith.constant dense<0.000000e+00> : vector<2x32xf32>
    %138 = tpu.matmul %132, %18, %cst_50 {dimension_numbers = #tpu.dot_dimension_numbers<[1], [0], [0], [1], [0, 0, 1, 1], [], []>} : vector<2x32xf32>, vector<32x32xf32>, vector<2x32xf32> -> vector<2x32xf32>
    %139 = arith.addf %133, %136 : vector<2x32xf32>
    %140 = arith.negf %139 : vector<2x32xf32>
    %141 = math.exp %140 : vector<2x32xf32>
    %cst_51 = arith.constant 1.000000e+00 : f32
    %142 = vector.broadcast %cst_51 : f32 to vector<2x32xf32>
    %143 = arith.addf %142, %141 : vector<2x32xf32>
    %144 = arith.divf %142, %143 : vector<2x32xf32>
    %145 = arith.addf %134, %137 : vector<2x32xf32>
    %146 = arith.negf %145 : vector<2x32xf32>
    %147 = math.exp %146 : vector<2x32xf32>
    %cst_52 = arith.constant 1.000000e+00 : f32
    %148 = vector.broadcast %cst_52 : f32 to vector<2x32xf32>
    %149 = arith.addf %148, %147 : vector<2x32xf32>
    %150 = arith.divf %148, %149 : vector<2x32xf32>
    %151 = vector.broadcast %19 : vector<1x32xf32> to vector<2x32xf32>
    %152 = arith.addf %138, %151 : vector<2x32xf32>
    %153 = arith.mulf %144, %152 : vector<2x32xf32>
    %154 = arith.addf %135, %153 : vector<2x32xf32>
    %155 = math.tanh %154 : vector<2x32xf32>
    %cst_53 = arith.constant 1.000000e+00 : f32
    %156 = vector.broadcast %cst_53 : f32 to vector<2x32xf32>
    %157 = arith.subf %156, %150 : vector<2x32xf32>
    %158 = arith.mulf %157, %155 : vector<2x32xf32>
    %159 = arith.mulf %150, %132 : vector<2x32xf32>
    %160 = arith.addf %158, %159 : vector<2x32xf32>
    %161 = vector.extract_strided_slice %5 {offsets = [10, 0], sizes = [2, 32], strides = [1, 1]} : vector<16x32xf32> to vector<2x32xf32>
    %162 = vector.extract_strided_slice %10 {offsets = [10, 0], sizes = [2, 32], strides = [1, 1]} : vector<16x32xf32> to vector<2x32xf32>
    %163 = vector.extract_strided_slice %15 {offsets = [10, 0], sizes = [2, 32], strides = [1, 1]} : vector<16x32xf32> to vector<2x32xf32>
    %cst_54 = arith.constant dense<0.000000e+00> : vector<2x32xf32>
    %164 = tpu.matmul %160, %16, %cst_54 {dimension_numbers = #tpu.dot_dimension_numbers<[1], [0], [0], [1], [0, 0, 1, 1], [], []>} : vector<2x32xf32>, vector<32x32xf32>, vector<2x32xf32> -> vector<2x32xf32>
    %cst_55 = arith.constant dense<0.000000e+00> : vector<2x32xf32>
    %165 = tpu.matmul %160, %17, %cst_55 {dimension_numbers = #tpu.dot_dimension_numbers<[1], [0], [0], [1], [0, 0, 1, 1], [], []>} : vector<2x32xf32>, vector<32x32xf32>, vector<2x32xf32> -> vector<2x32xf32>
    %cst_56 = arith.constant dense<0.000000e+00> : vector<2x32xf32>
    %166 = tpu.matmul %160, %18, %cst_56 {dimension_numbers = #tpu.dot_dimension_numbers<[1], [0], [0], [1], [0, 0, 1, 1], [], []>} : vector<2x32xf32>, vector<32x32xf32>, vector<2x32xf32> -> vector<2x32xf32>
    %167 = arith.addf %161, %164 : vector<2x32xf32>
    %168 = arith.negf %167 : vector<2x32xf32>
    %169 = math.exp %168 : vector<2x32xf32>
    %cst_57 = arith.constant 1.000000e+00 : f32
    %170 = vector.broadcast %cst_57 : f32 to vector<2x32xf32>
    %171 = arith.addf %170, %169 : vector<2x32xf32>
    %172 = arith.divf %170, %171 : vector<2x32xf32>
    %173 = arith.addf %162, %165 : vector<2x32xf32>
    %174 = arith.negf %173 : vector<2x32xf32>
    %175 = math.exp %174 : vector<2x32xf32>
    %cst_58 = arith.constant 1.000000e+00 : f32
    %176 = vector.broadcast %cst_58 : f32 to vector<2x32xf32>
    %177 = arith.addf %176, %175 : vector<2x32xf32>
    %178 = arith.divf %176, %177 : vector<2x32xf32>
    %179 = vector.broadcast %19 : vector<1x32xf32> to vector<2x32xf32>
    %180 = arith.addf %166, %179 : vector<2x32xf32>
    %181 = arith.mulf %172, %180 : vector<2x32xf32>
    %182 = arith.addf %163, %181 : vector<2x32xf32>
    %183 = math.tanh %182 : vector<2x32xf32>
    %cst_59 = arith.constant 1.000000e+00 : f32
    %184 = vector.broadcast %cst_59 : f32 to vector<2x32xf32>
    %185 = arith.subf %184, %178 : vector<2x32xf32>
    %186 = arith.mulf %185, %183 : vector<2x32xf32>
    %187 = arith.mulf %178, %160 : vector<2x32xf32>
    %188 = arith.addf %186, %187 : vector<2x32xf32>
    %189 = vector.extract_strided_slice %5 {offsets = [12, 0], sizes = [2, 32], strides = [1, 1]} : vector<16x32xf32> to vector<2x32xf32>
    %190 = vector.extract_strided_slice %10 {offsets = [12, 0], sizes = [2, 32], strides = [1, 1]} : vector<16x32xf32> to vector<2x32xf32>
    %191 = vector.extract_strided_slice %15 {offsets = [12, 0], sizes = [2, 32], strides = [1, 1]} : vector<16x32xf32> to vector<2x32xf32>
    %cst_60 = arith.constant dense<0.000000e+00> : vector<2x32xf32>
    %192 = tpu.matmul %188, %16, %cst_60 {dimension_numbers = #tpu.dot_dimension_numbers<[1], [0], [0], [1], [0, 0, 1, 1], [], []>} : vector<2x32xf32>, vector<32x32xf32>, vector<2x32xf32> -> vector<2x32xf32>
    %cst_61 = arith.constant dense<0.000000e+00> : vector<2x32xf32>
    %193 = tpu.matmul %188, %17, %cst_61 {dimension_numbers = #tpu.dot_dimension_numbers<[1], [0], [0], [1], [0, 0, 1, 1], [], []>} : vector<2x32xf32>, vector<32x32xf32>, vector<2x32xf32> -> vector<2x32xf32>
    %cst_62 = arith.constant dense<0.000000e+00> : vector<2x32xf32>
    %194 = tpu.matmul %188, %18, %cst_62 {dimension_numbers = #tpu.dot_dimension_numbers<[1], [0], [0], [1], [0, 0, 1, 1], [], []>} : vector<2x32xf32>, vector<32x32xf32>, vector<2x32xf32> -> vector<2x32xf32>
    %195 = arith.addf %189, %192 : vector<2x32xf32>
    %196 = arith.negf %195 : vector<2x32xf32>
    %197 = math.exp %196 : vector<2x32xf32>
    %cst_63 = arith.constant 1.000000e+00 : f32
    %198 = vector.broadcast %cst_63 : f32 to vector<2x32xf32>
    %199 = arith.addf %198, %197 : vector<2x32xf32>
    %200 = arith.divf %198, %199 : vector<2x32xf32>
    %201 = arith.addf %190, %193 : vector<2x32xf32>
    %202 = arith.negf %201 : vector<2x32xf32>
    %203 = math.exp %202 : vector<2x32xf32>
    %cst_64 = arith.constant 1.000000e+00 : f32
    %204 = vector.broadcast %cst_64 : f32 to vector<2x32xf32>
    %205 = arith.addf %204, %203 : vector<2x32xf32>
    %206 = arith.divf %204, %205 : vector<2x32xf32>
    %207 = vector.broadcast %19 : vector<1x32xf32> to vector<2x32xf32>
    %208 = arith.addf %194, %207 : vector<2x32xf32>
    %209 = arith.mulf %200, %208 : vector<2x32xf32>
    %210 = arith.addf %191, %209 : vector<2x32xf32>
    %211 = math.tanh %210 : vector<2x32xf32>
    %cst_65 = arith.constant 1.000000e+00 : f32
    %212 = vector.broadcast %cst_65 : f32 to vector<2x32xf32>
    %213 = arith.subf %212, %206 : vector<2x32xf32>
    %214 = arith.mulf %213, %211 : vector<2x32xf32>
    %215 = arith.mulf %206, %188 : vector<2x32xf32>
    %216 = arith.addf %214, %215 : vector<2x32xf32>
    %217 = vector.extract_strided_slice %5 {offsets = [14, 0], sizes = [2, 32], strides = [1, 1]} : vector<16x32xf32> to vector<2x32xf32>
    %218 = vector.extract_strided_slice %10 {offsets = [14, 0], sizes = [2, 32], strides = [1, 1]} : vector<16x32xf32> to vector<2x32xf32>
    %219 = vector.extract_strided_slice %15 {offsets = [14, 0], sizes = [2, 32], strides = [1, 1]} : vector<16x32xf32> to vector<2x32xf32>
    %cst_66 = arith.constant dense<0.000000e+00> : vector<2x32xf32>
    %220 = tpu.matmul %216, %16, %cst_66 {dimension_numbers = #tpu.dot_dimension_numbers<[1], [0], [0], [1], [0, 0, 1, 1], [], []>} : vector<2x32xf32>, vector<32x32xf32>, vector<2x32xf32> -> vector<2x32xf32>
    %cst_67 = arith.constant dense<0.000000e+00> : vector<2x32xf32>
    %221 = tpu.matmul %216, %17, %cst_67 {dimension_numbers = #tpu.dot_dimension_numbers<[1], [0], [0], [1], [0, 0, 1, 1], [], []>} : vector<2x32xf32>, vector<32x32xf32>, vector<2x32xf32> -> vector<2x32xf32>
    %cst_68 = arith.constant dense<0.000000e+00> : vector<2x32xf32>
    %222 = tpu.matmul %216, %18, %cst_68 {dimension_numbers = #tpu.dot_dimension_numbers<[1], [0], [0], [1], [0, 0, 1, 1], [], []>} : vector<2x32xf32>, vector<32x32xf32>, vector<2x32xf32> -> vector<2x32xf32>
    %223 = arith.addf %217, %220 : vector<2x32xf32>
    %224 = arith.negf %223 : vector<2x32xf32>
    %225 = math.exp %224 : vector<2x32xf32>
    %cst_69 = arith.constant 1.000000e+00 : f32
    %226 = vector.broadcast %cst_69 : f32 to vector<2x32xf32>
    %227 = arith.addf %226, %225 : vector<2x32xf32>
    %228 = arith.divf %226, %227 : vector<2x32xf32>
    %229 = arith.addf %218, %221 : vector<2x32xf32>
    %230 = arith.negf %229 : vector<2x32xf32>
    %231 = math.exp %230 : vector<2x32xf32>
    %cst_70 = arith.constant 1.000000e+00 : f32
    %232 = vector.broadcast %cst_70 : f32 to vector<2x32xf32>
    %233 = arith.addf %232, %231 : vector<2x32xf32>
    %234 = arith.divf %232, %233 : vector<2x32xf32>
    %235 = vector.broadcast %19 : vector<1x32xf32> to vector<2x32xf32>
    %236 = arith.addf %222, %235 : vector<2x32xf32>
    %237 = arith.mulf %228, %236 : vector<2x32xf32>
    %238 = arith.addf %219, %237 : vector<2x32xf32>
    %239 = math.tanh %238 : vector<2x32xf32>
    %cst_71 = arith.constant 1.000000e+00 : f32
    %240 = vector.broadcast %cst_71 : f32 to vector<2x32xf32>
    %241 = arith.subf %240, %234 : vector<2x32xf32>
    %242 = arith.mulf %241, %239 : vector<2x32xf32>
    %243 = arith.mulf %234, %216 : vector<2x32xf32>
    %244 = arith.addf %242, %243 : vector<2x32xf32>
    %c0_72 = arith.constant 0 : index
    %c0_73 = arith.constant 0 : index
    %245 = vector.load %arg11[%c0_72, %c0_73] : memref<32x32xf32, #tpu.memory_space<vmem>>, vector<32x32xf32>
    %c0_74 = arith.constant 0 : index
    %c0_75 = arith.constant 0 : index
    %246 = vector.load %arg12[%c0_74, %c0_75] : memref<32x32xf32, #tpu.memory_space<vmem>>, vector<32x32xf32>
    %c0_76 = arith.constant 0 : index
    %c0_77 = arith.constant 0 : index
    %247 = vector.load %arg13[%c0_76, %c0_77] : memref<32x32xf32, #tpu.memory_space<vmem>>, vector<32x32xf32>
    %c0_78 = arith.constant 0 : index
    %c0_79 = arith.constant 0 : index
    %248 = vector.load %arg14[%c0_78, %c0_79] : memref<32x32xf32, #tpu.memory_space<vmem>>, vector<32x32xf32>
    %c0_80 = arith.constant 0 : index
    %c0_81 = arith.constant 0 : index
    %249 = vector.load %arg15[%c0_80, %c0_81] : memref<32x32xf32, #tpu.memory_space<vmem>>, vector<32x32xf32>
    %c0_82 = arith.constant 0 : index
    %c0_83 = arith.constant 0 : index
    %250 = vector.load %arg16[%c0_82, %c0_83] : memref<32x32xf32, #tpu.memory_space<vmem>>, vector<32x32xf32>
    %c0_84 = arith.constant 0 : index
    %c0_85 = arith.constant 0 : index
    %251 = vector.load %arg17[%c0_84, %c0_85] : memref<1x32xf32, #tpu.memory_space<vmem>>, vector<1x32xf32>
    %c0_86 = arith.constant 0 : index
    %c0_87 = arith.constant 0 : index
    %252 = vector.load %arg18[%c0_86, %c0_87] : memref<1x32xf32, #tpu.memory_space<vmem>>, vector<1x32xf32>
    %c0_88 = arith.constant 0 : index
    %c0_89 = arith.constant 0 : index
    %253 = vector.load %arg19[%c0_88, %c0_89] : memref<1x32xf32, #tpu.memory_space<vmem>>, vector<1x32xf32>
    %c0_90 = arith.constant 0 : index
    %c0_91 = arith.constant 0 : index
    %254 = vector.load %arg20[%c0_90, %c0_91] : memref<1x32xf32, #tpu.memory_space<vmem>>, vector<1x32xf32>
    %cst_92 = arith.constant 0.000000e+00 : f32
    %255 = vector.broadcast %cst_92 : f32 to vector<2x32xf32>
    %cst_93 = arith.constant dense<0.000000e+00> : vector<2x32xf32>
    %256 = tpu.matmul %48, %245, %cst_93 {dimension_numbers = #tpu.dot_dimension_numbers<[1], [0], [0], [1], [0, 0, 1, 1], [], []>} : vector<2x32xf32>, vector<32x32xf32>, vector<2x32xf32> -> vector<2x32xf32>
    %257 = vector.broadcast %251 : vector<1x32xf32> to vector<2x32xf32>
    %258 = arith.addf %256, %257 : vector<2x32xf32>
    %cst_94 = arith.constant dense<0.000000e+00> : vector<2x32xf32>
    %259 = tpu.matmul %48, %246, %cst_94 {dimension_numbers = #tpu.dot_dimension_numbers<[1], [0], [0], [1], [0, 0, 1, 1], [], []>} : vector<2x32xf32>, vector<32x32xf32>, vector<2x32xf32> -> vector<2x32xf32>
    %260 = vector.broadcast %252 : vector<1x32xf32> to vector<2x32xf32>
    %261 = arith.addf %259, %260 : vector<2x32xf32>
    %cst_95 = arith.constant dense<0.000000e+00> : vector<2x32xf32>
    %262 = tpu.matmul %48, %247, %cst_95 {dimension_numbers = #tpu.dot_dimension_numbers<[1], [0], [0], [1], [0, 0, 1, 1], [], []>} : vector<2x32xf32>, vector<32x32xf32>, vector<2x32xf32> -> vector<2x32xf32>
    %263 = vector.broadcast %253 : vector<1x32xf32> to vector<2x32xf32>
    %264 = arith.addf %262, %263 : vector<2x32xf32>
    %cst_96 = arith.constant dense<0.000000e+00> : vector<2x32xf32>
    %265 = tpu.matmul %255, %248, %cst_96 {dimension_numbers = #tpu.dot_dimension_numbers<[1], [0], [0], [1], [0, 0, 1, 1], [], []>} : vector<2x32xf32>, vector<32x32xf32>, vector<2x32xf32> -> vector<2x32xf32>
    %cst_97 = arith.constant dense<0.000000e+00> : vector<2x32xf32>
    %266 = tpu.matmul %255, %249, %cst_97 {dimension_numbers = #tpu.dot_dimension_numbers<[1], [0], [0], [1], [0, 0, 1, 1], [], []>} : vector<2x32xf32>, vector<32x32xf32>, vector<2x32xf32> -> vector<2x32xf32>
    %cst_98 = arith.constant dense<0.000000e+00> : vector<2x32xf32>
    %267 = tpu.matmul %255, %250, %cst_98 {dimension_numbers = #tpu.dot_dimension_numbers<[1], [0], [0], [1], [0, 0, 1, 1], [], []>} : vector<2x32xf32>, vector<32x32xf32>, vector<2x32xf32> -> vector<2x32xf32>
    %268 = arith.addf %258, %265 : vector<2x32xf32>
    %269 = arith.negf %268 : vector<2x32xf32>
    %270 = math.exp %269 : vector<2x32xf32>
    %cst_99 = arith.constant 1.000000e+00 : f32
    %271 = vector.broadcast %cst_99 : f32 to vector<2x32xf32>
    %272 = arith.addf %271, %270 : vector<2x32xf32>
    %273 = arith.divf %271, %272 : vector<2x32xf32>
    %274 = arith.addf %261, %266 : vector<2x32xf32>
    %275 = arith.negf %274 : vector<2x32xf32>
    %276 = math.exp %275 : vector<2x32xf32>
    %cst_100 = arith.constant 1.000000e+00 : f32
    %277 = vector.broadcast %cst_100 : f32 to vector<2x32xf32>
    %278 = arith.addf %277, %276 : vector<2x32xf32>
    %279 = arith.divf %277, %278 : vector<2x32xf32>
    %280 = vector.broadcast %254 : vector<1x32xf32> to vector<2x32xf32>
    %281 = arith.addf %267, %280 : vector<2x32xf32>
    %282 = arith.mulf %273, %281 : vector<2x32xf32>
    %283 = arith.addf %264, %282 : vector<2x32xf32>
    %284 = math.tanh %283 : vector<2x32xf32>
    %cst_101 = arith.constant 1.000000e+00 : f32
    %285 = vector.broadcast %cst_101 : f32 to vector<2x32xf32>
    %286 = arith.subf %285, %279 : vector<2x32xf32>
    %287 = arith.mulf %286, %284 : vector<2x32xf32>
    %288 = arith.mulf %279, %255 : vector<2x32xf32>
    %289 = arith.addf %287, %288 : vector<2x32xf32>
    %cst_102 = arith.constant dense<0.000000e+00> : vector<2x32xf32>
    %290 = tpu.matmul %76, %245, %cst_102 {dimension_numbers = #tpu.dot_dimension_numbers<[1], [0], [0], [1], [0, 0, 1, 1], [], []>} : vector<2x32xf32>, vector<32x32xf32>, vector<2x32xf32> -> vector<2x32xf32>
    %291 = vector.broadcast %251 : vector<1x32xf32> to vector<2x32xf32>
    %292 = arith.addf %290, %291 : vector<2x32xf32>
    %cst_103 = arith.constant dense<0.000000e+00> : vector<2x32xf32>
    %293 = tpu.matmul %76, %246, %cst_103 {dimension_numbers = #tpu.dot_dimension_numbers<[1], [0], [0], [1], [0, 0, 1, 1], [], []>} : vector<2x32xf32>, vector<32x32xf32>, vector<2x32xf32> -> vector<2x32xf32>
    %294 = vector.broadcast %252 : vector<1x32xf32> to vector<2x32xf32>
    %295 = arith.addf %293, %294 : vector<2x32xf32>
    %cst_104 = arith.constant dense<0.000000e+00> : vector<2x32xf32>
    %296 = tpu.matmul %76, %247, %cst_104 {dimension_numbers = #tpu.dot_dimension_numbers<[1], [0], [0], [1], [0, 0, 1, 1], [], []>} : vector<2x32xf32>, vector<32x32xf32>, vector<2x32xf32> -> vector<2x32xf32>
    %297 = vector.broadcast %253 : vector<1x32xf32> to vector<2x32xf32>
    %298 = arith.addf %296, %297 : vector<2x32xf32>
    %cst_105 = arith.constant dense<0.000000e+00> : vector<2x32xf32>
    %299 = tpu.matmul %289, %248, %cst_105 {dimension_numbers = #tpu.dot_dimension_numbers<[1], [0], [0], [1], [0, 0, 1, 1], [], []>} : vector<2x32xf32>, vector<32x32xf32>, vector<2x32xf32> -> vector<2x32xf32>
    %cst_106 = arith.constant dense<0.000000e+00> : vector<2x32xf32>
    %300 = tpu.matmul %289, %249, %cst_106 {dimension_numbers = #tpu.dot_dimension_numbers<[1], [0], [0], [1], [0, 0, 1, 1], [], []>} : vector<2x32xf32>, vector<32x32xf32>, vector<2x32xf32> -> vector<2x32xf32>
    %cst_107 = arith.constant dense<0.000000e+00> : vector<2x32xf32>
    %301 = tpu.matmul %289, %250, %cst_107 {dimension_numbers = #tpu.dot_dimension_numbers<[1], [0], [0], [1], [0, 0, 1, 1], [], []>} : vector<2x32xf32>, vector<32x32xf32>, vector<2x32xf32> -> vector<2x32xf32>
    %302 = arith.addf %292, %299 : vector<2x32xf32>
    %303 = arith.negf %302 : vector<2x32xf32>
    %304 = math.exp %303 : vector<2x32xf32>
    %cst_108 = arith.constant 1.000000e+00 : f32
    %305 = vector.broadcast %cst_108 : f32 to vector<2x32xf32>
    %306 = arith.addf %305, %304 : vector<2x32xf32>
    %307 = arith.divf %305, %306 : vector<2x32xf32>
    %308 = arith.addf %295, %300 : vector<2x32xf32>
    %309 = arith.negf %308 : vector<2x32xf32>
    %310 = math.exp %309 : vector<2x32xf32>
    %cst_109 = arith.constant 1.000000e+00 : f32
    %311 = vector.broadcast %cst_109 : f32 to vector<2x32xf32>
    %312 = arith.addf %311, %310 : vector<2x32xf32>
    %313 = arith.divf %311, %312 : vector<2x32xf32>
    %314 = vector.broadcast %254 : vector<1x32xf32> to vector<2x32xf32>
    %315 = arith.addf %301, %314 : vector<2x32xf32>
    %316 = arith.mulf %307, %315 : vector<2x32xf32>
    %317 = arith.addf %298, %316 : vector<2x32xf32>
    %318 = math.tanh %317 : vector<2x32xf32>
    %cst_110 = arith.constant 1.000000e+00 : f32
    %319 = vector.broadcast %cst_110 : f32 to vector<2x32xf32>
    %320 = arith.subf %319, %313 : vector<2x32xf32>
    %321 = arith.mulf %320, %318 : vector<2x32xf32>
    %322 = arith.mulf %313, %289 : vector<2x32xf32>
    %323 = arith.addf %321, %322 : vector<2x32xf32>
    %cst_111 = arith.constant dense<0.000000e+00> : vector<2x32xf32>
    %324 = tpu.matmul %104, %245, %cst_111 {dimension_numbers = #tpu.dot_dimension_numbers<[1], [0], [0], [1], [0, 0, 1, 1], [], []>} : vector<2x32xf32>, vector<32x32xf32>, vector<2x32xf32> -> vector<2x32xf32>
    %325 = vector.broadcast %251 : vector<1x32xf32> to vector<2x32xf32>
    %326 = arith.addf %324, %325 : vector<2x32xf32>
    %cst_112 = arith.constant dense<0.000000e+00> : vector<2x32xf32>
    %327 = tpu.matmul %104, %246, %cst_112 {dimension_numbers = #tpu.dot_dimension_numbers<[1], [0], [0], [1], [0, 0, 1, 1], [], []>} : vector<2x32xf32>, vector<32x32xf32>, vector<2x32xf32> -> vector<2x32xf32>
    %328 = vector.broadcast %252 : vector<1x32xf32> to vector<2x32xf32>
    %329 = arith.addf %327, %328 : vector<2x32xf32>
    %cst_113 = arith.constant dense<0.000000e+00> : vector<2x32xf32>
    %330 = tpu.matmul %104, %247, %cst_113 {dimension_numbers = #tpu.dot_dimension_numbers<[1], [0], [0], [1], [0, 0, 1, 1], [], []>} : vector<2x32xf32>, vector<32x32xf32>, vector<2x32xf32> -> vector<2x32xf32>
    %331 = vector.broadcast %253 : vector<1x32xf32> to vector<2x32xf32>
    %332 = arith.addf %330, %331 : vector<2x32xf32>
    %cst_114 = arith.constant dense<0.000000e+00> : vector<2x32xf32>
    %333 = tpu.matmul %323, %248, %cst_114 {dimension_numbers = #tpu.dot_dimension_numbers<[1], [0], [0], [1], [0, 0, 1, 1], [], []>} : vector<2x32xf32>, vector<32x32xf32>, vector<2x32xf32> -> vector<2x32xf32>
    %cst_115 = arith.constant dense<0.000000e+00> : vector<2x32xf32>
    %334 = tpu.matmul %323, %249, %cst_115 {dimension_numbers = #tpu.dot_dimension_numbers<[1], [0], [0], [1], [0, 0, 1, 1], [], []>} : vector<2x32xf32>, vector<32x32xf32>, vector<2x32xf32> -> vector<2x32xf32>
    %cst_116 = arith.constant dense<0.000000e+00> : vector<2x32xf32>
    %335 = tpu.matmul %323, %250, %cst_116 {dimension_numbers = #tpu.dot_dimension_numbers<[1], [0], [0], [1], [0, 0, 1, 1], [], []>} : vector<2x32xf32>, vector<32x32xf32>, vector<2x32xf32> -> vector<2x32xf32>
    %336 = arith.addf %326, %333 : vector<2x32xf32>
    %337 = arith.negf %336 : vector<2x32xf32>
    %338 = math.exp %337 : vector<2x32xf32>
    %cst_117 = arith.constant 1.000000e+00 : f32
    %339 = vector.broadcast %cst_117 : f32 to vector<2x32xf32>
    %340 = arith.addf %339, %338 : vector<2x32xf32>
    %341 = arith.divf %339, %340 : vector<2x32xf32>
    %342 = arith.addf %329, %334 : vector<2x32xf32>
    %343 = arith.negf %342 : vector<2x32xf32>
    %344 = math.exp %343 : vector<2x32xf32>
    %cst_118 = arith.constant 1.000000e+00 : f32
    %345 = vector.broadcast %cst_118 : f32 to vector<2x32xf32>
    %346 = arith.addf %345, %344 : vector<2x32xf32>
    %347 = arith.divf %345, %346 : vector<2x32xf32>
    %348 = vector.broadcast %254 : vector<1x32xf32> to vector<2x32xf32>
    %349 = arith.addf %335, %348 : vector<2x32xf32>
    %350 = arith.mulf %341, %349 : vector<2x32xf32>
    %351 = arith.addf %332, %350 : vector<2x32xf32>
    %352 = math.tanh %351 : vector<2x32xf32>
    %cst_119 = arith.constant 1.000000e+00 : f32
    %353 = vector.broadcast %cst_119 : f32 to vector<2x32xf32>
    %354 = arith.subf %353, %347 : vector<2x32xf32>
    %355 = arith.mulf %354, %352 : vector<2x32xf32>
    %356 = arith.mulf %347, %323 : vector<2x32xf32>
    %357 = arith.addf %355, %356 : vector<2x32xf32>
    %cst_120 = arith.constant dense<0.000000e+00> : vector<2x32xf32>
    %358 = tpu.matmul %132, %245, %cst_120 {dimension_numbers = #tpu.dot_dimension_numbers<[1], [0], [0], [1], [0, 0, 1, 1], [], []>} : vector<2x32xf32>, vector<32x32xf32>, vector<2x32xf32> -> vector<2x32xf32>
    %359 = vector.broadcast %251 : vector<1x32xf32> to vector<2x32xf32>
    %360 = arith.addf %358, %359 : vector<2x32xf32>
    %cst_121 = arith.constant dense<0.000000e+00> : vector<2x32xf32>
    %361 = tpu.matmul %132, %246, %cst_121 {dimension_numbers = #tpu.dot_dimension_numbers<[1], [0], [0], [1], [0, 0, 1, 1], [], []>} : vector<2x32xf32>, vector<32x32xf32>, vector<2x32xf32> -> vector<2x32xf32>
    %362 = vector.broadcast %252 : vector<1x32xf32> to vector<2x32xf32>
    %363 = arith.addf %361, %362 : vector<2x32xf32>
    %cst_122 = arith.constant dense<0.000000e+00> : vector<2x32xf32>
    %364 = tpu.matmul %132, %247, %cst_122 {dimension_numbers = #tpu.dot_dimension_numbers<[1], [0], [0], [1], [0, 0, 1, 1], [], []>} : vector<2x32xf32>, vector<32x32xf32>, vector<2x32xf32> -> vector<2x32xf32>
    %365 = vector.broadcast %253 : vector<1x32xf32> to vector<2x32xf32>
    %366 = arith.addf %364, %365 : vector<2x32xf32>
    %cst_123 = arith.constant dense<0.000000e+00> : vector<2x32xf32>
    %367 = tpu.matmul %357, %248, %cst_123 {dimension_numbers = #tpu.dot_dimension_numbers<[1], [0], [0], [1], [0, 0, 1, 1], [], []>} : vector<2x32xf32>, vector<32x32xf32>, vector<2x32xf32> -> vector<2x32xf32>
    %cst_124 = arith.constant dense<0.000000e+00> : vector<2x32xf32>
    %368 = tpu.matmul %357, %249, %cst_124 {dimension_numbers = #tpu.dot_dimension_numbers<[1], [0], [0], [1], [0, 0, 1, 1], [], []>} : vector<2x32xf32>, vector<32x32xf32>, vector<2x32xf32> -> vector<2x32xf32>
    %cst_125 = arith.constant dense<0.000000e+00> : vector<2x32xf32>
    %369 = tpu.matmul %357, %250, %cst_125 {dimension_numbers = #tpu.dot_dimension_numbers<[1], [0], [0], [1], [0, 0, 1, 1], [], []>} : vector<2x32xf32>, vector<32x32xf32>, vector<2x32xf32> -> vector<2x32xf32>
    %370 = arith.addf %360, %367 : vector<2x32xf32>
    %371 = arith.negf %370 : vector<2x32xf32>
    %372 = math.exp %371 : vector<2x32xf32>
    %cst_126 = arith.constant 1.000000e+00 : f32
    %373 = vector.broadcast %cst_126 : f32 to vector<2x32xf32>
    %374 = arith.addf %373, %372 : vector<2x32xf32>
    %375 = arith.divf %373, %374 : vector<2x32xf32>
    %376 = arith.addf %363, %368 : vector<2x32xf32>
    %377 = arith.negf %376 : vector<2x32xf32>
    %378 = math.exp %377 : vector<2x32xf32>
    %cst_127 = arith.constant 1.000000e+00 : f32
    %379 = vector.broadcast %cst_127 : f32 to vector<2x32xf32>
    %380 = arith.addf %379, %378 : vector<2x32xf32>
    %381 = arith.divf %379, %380 : vector<2x32xf32>
    %382 = vector.broadcast %254 : vector<1x32xf32> to vector<2x32xf32>
    %383 = arith.addf %369, %382 : vector<2x32xf32>
    %384 = arith.mulf %375, %383 : vector<2x32xf32>
    %385 = arith.addf %366, %384 : vector<2x32xf32>
    %386 = math.tanh %385 : vector<2x32xf32>
    %cst_128 = arith.constant 1.000000e+00 : f32
    %387 = vector.broadcast %cst_128 : f32 to vector<2x32xf32>
    %388 = arith.subf %387, %381 : vector<2x32xf32>
    %389 = arith.mulf %388, %386 : vector<2x32xf32>
    %390 = arith.mulf %381, %357 : vector<2x32xf32>
    %391 = arith.addf %389, %390 : vector<2x32xf32>
    %cst_129 = arith.constant dense<0.000000e+00> : vector<2x32xf32>
    %392 = tpu.matmul %160, %245, %cst_129 {dimension_numbers = #tpu.dot_dimension_numbers<[1], [0], [0], [1], [0, 0, 1, 1], [], []>} : vector<2x32xf32>, vector<32x32xf32>, vector<2x32xf32> -> vector<2x32xf32>
    %393 = vector.broadcast %251 : vector<1x32xf32> to vector<2x32xf32>
    %394 = arith.addf %392, %393 : vector<2x32xf32>
    %cst_130 = arith.constant dense<0.000000e+00> : vector<2x32xf32>
    %395 = tpu.matmul %160, %246, %cst_130 {dimension_numbers = #tpu.dot_dimension_numbers<[1], [0], [0], [1], [0, 0, 1, 1], [], []>} : vector<2x32xf32>, vector<32x32xf32>, vector<2x32xf32> -> vector<2x32xf32>
    %396 = vector.broadcast %252 : vector<1x32xf32> to vector<2x32xf32>
    %397 = arith.addf %395, %396 : vector<2x32xf32>
    %cst_131 = arith.constant dense<0.000000e+00> : vector<2x32xf32>
    %398 = tpu.matmul %160, %247, %cst_131 {dimension_numbers = #tpu.dot_dimension_numbers<[1], [0], [0], [1], [0, 0, 1, 1], [], []>} : vector<2x32xf32>, vector<32x32xf32>, vector<2x32xf32> -> vector<2x32xf32>
    %399 = vector.broadcast %253 : vector<1x32xf32> to vector<2x32xf32>
    %400 = arith.addf %398, %399 : vector<2x32xf32>
    %cst_132 = arith.constant dense<0.000000e+00> : vector<2x32xf32>
    %401 = tpu.matmul %391, %248, %cst_132 {dimension_numbers = #tpu.dot_dimension_numbers<[1], [0], [0], [1], [0, 0, 1, 1], [], []>} : vector<2x32xf32>, vector<32x32xf32>, vector<2x32xf32> -> vector<2x32xf32>
    %cst_133 = arith.constant dense<0.000000e+00> : vector<2x32xf32>
    %402 = tpu.matmul %391, %249, %cst_133 {dimension_numbers = #tpu.dot_dimension_numbers<[1], [0], [0], [1], [0, 0, 1, 1], [], []>} : vector<2x32xf32>, vector<32x32xf32>, vector<2x32xf32> -> vector<2x32xf32>
    %cst_134 = arith.constant dense<0.000000e+00> : vector<2x32xf32>
    %403 = tpu.matmul %391, %250, %cst_134 {dimension_numbers = #tpu.dot_dimension_numbers<[1], [0], [0], [1], [0, 0, 1, 1], [], []>} : vector<2x32xf32>, vector<32x32xf32>, vector<2x32xf32> -> vector<2x32xf32>
    %404 = arith.addf %394, %401 : vector<2x32xf32>
    %405 = arith.negf %404 : vector<2x32xf32>
    %406 = math.exp %405 : vector<2x32xf32>
    %cst_135 = arith.constant 1.000000e+00 : f32
    %407 = vector.broadcast %cst_135 : f32 to vector<2x32xf32>
    %408 = arith.addf %407, %406 : vector<2x32xf32>
    %409 = arith.divf %407, %408 : vector<2x32xf32>
    %410 = arith.addf %397, %402 : vector<2x32xf32>
    %411 = arith.negf %410 : vector<2x32xf32>
    %412 = math.exp %411 : vector<2x32xf32>
    %cst_136 = arith.constant 1.000000e+00 : f32
    %413 = vector.broadcast %cst_136 : f32 to vector<2x32xf32>
    %414 = arith.addf %413, %412 : vector<2x32xf32>
    %415 = arith.divf %413, %414 : vector<2x32xf32>
    %416 = vector.broadcast %254 : vector<1x32xf32> to vector<2x32xf32>
    %417 = arith.addf %403, %416 : vector<2x32xf32>
    %418 = arith.mulf %409, %417 : vector<2x32xf32>
    %419 = arith.addf %400, %418 : vector<2x32xf32>
    %420 = math.tanh %419 : vector<2x32xf32>
    %cst_137 = arith.constant 1.000000e+00 : f32
    %421 = vector.broadcast %cst_137 : f32 to vector<2x32xf32>
    %422 = arith.subf %421, %415 : vector<2x32xf32>
    %423 = arith.mulf %422, %420 : vector<2x32xf32>
    %424 = arith.mulf %415, %391 : vector<2x32xf32>
    %425 = arith.addf %423, %424 : vector<2x32xf32>
    %cst_138 = arith.constant dense<0.000000e+00> : vector<2x32xf32>
    %426 = tpu.matmul %188, %245, %cst_138 {dimension_numbers = #tpu.dot_dimension_numbers<[1], [0], [0], [1], [0, 0, 1, 1], [], []>} : vector<2x32xf32>, vector<32x32xf32>, vector<2x32xf32> -> vector<2x32xf32>
    %427 = vector.broadcast %251 : vector<1x32xf32> to vector<2x32xf32>
    %428 = arith.addf %426, %427 : vector<2x32xf32>
    %cst_139 = arith.constant dense<0.000000e+00> : vector<2x32xf32>
    %429 = tpu.matmul %188, %246, %cst_139 {dimension_numbers = #tpu.dot_dimension_numbers<[1], [0], [0], [1], [0, 0, 1, 1], [], []>} : vector<2x32xf32>, vector<32x32xf32>, vector<2x32xf32> -> vector<2x32xf32>
    %430 = vector.broadcast %252 : vector<1x32xf32> to vector<2x32xf32>
    %431 = arith.addf %429, %430 : vector<2x32xf32>
    %cst_140 = arith.constant dense<0.000000e+00> : vector<2x32xf32>
    %432 = tpu.matmul %188, %247, %cst_140 {dimension_numbers = #tpu.dot_dimension_numbers<[1], [0], [0], [1], [0, 0, 1, 1], [], []>} : vector<2x32xf32>, vector<32x32xf32>, vector<2x32xf32> -> vector<2x32xf32>
    %433 = vector.broadcast %253 : vector<1x32xf32> to vector<2x32xf32>
    %434 = arith.addf %432, %433 : vector<2x32xf32>
    %cst_141 = arith.constant dense<0.000000e+00> : vector<2x32xf32>
    %435 = tpu.matmul %425, %248, %cst_141 {dimension_numbers = #tpu.dot_dimension_numbers<[1], [0], [0], [1], [0, 0, 1, 1], [], []>} : vector<2x32xf32>, vector<32x32xf32>, vector<2x32xf32> -> vector<2x32xf32>
    %cst_142 = arith.constant dense<0.000000e+00> : vector<2x32xf32>
    %436 = tpu.matmul %425, %249, %cst_142 {dimension_numbers = #tpu.dot_dimension_numbers<[1], [0], [0], [1], [0, 0, 1, 1], [], []>} : vector<2x32xf32>, vector<32x32xf32>, vector<2x32xf32> -> vector<2x32xf32>
    %cst_143 = arith.constant dense<0.000000e+00> : vector<2x32xf32>
    %437 = tpu.matmul %425, %250, %cst_143 {dimension_numbers = #tpu.dot_dimension_numbers<[1], [0], [0], [1], [0, 0, 1, 1], [], []>} : vector<2x32xf32>, vector<32x32xf32>, vector<2x32xf32> -> vector<2x32xf32>
    %438 = arith.addf %428, %435 : vector<2x32xf32>
    %439 = arith.negf %438 : vector<2x32xf32>
    %440 = math.exp %439 : vector<2x32xf32>
    %cst_144 = arith.constant 1.000000e+00 : f32
    %441 = vector.broadcast %cst_144 : f32 to vector<2x32xf32>
    %442 = arith.addf %441, %440 : vector<2x32xf32>
    %443 = arith.divf %441, %442 : vector<2x32xf32>
    %444 = arith.addf %431, %436 : vector<2x32xf32>
    %445 = arith.negf %444 : vector<2x32xf32>
    %446 = math.exp %445 : vector<2x32xf32>
    %cst_145 = arith.constant 1.000000e+00 : f32
    %447 = vector.broadcast %cst_145 : f32 to vector<2x32xf32>
    %448 = arith.addf %447, %446 : vector<2x32xf32>
    %449 = arith.divf %447, %448 : vector<2x32xf32>
    %450 = vector.broadcast %254 : vector<1x32xf32> to vector<2x32xf32>
    %451 = arith.addf %437, %450 : vector<2x32xf32>
    %452 = arith.mulf %443, %451 : vector<2x32xf32>
    %453 = arith.addf %434, %452 : vector<2x32xf32>
    %454 = math.tanh %453 : vector<2x32xf32>
    %cst_146 = arith.constant 1.000000e+00 : f32
    %455 = vector.broadcast %cst_146 : f32 to vector<2x32xf32>
    %456 = arith.subf %455, %449 : vector<2x32xf32>
    %457 = arith.mulf %456, %454 : vector<2x32xf32>
    %458 = arith.mulf %449, %425 : vector<2x32xf32>
    %459 = arith.addf %457, %458 : vector<2x32xf32>
    %cst_147 = arith.constant dense<0.000000e+00> : vector<2x32xf32>
    %460 = tpu.matmul %216, %245, %cst_147 {dimension_numbers = #tpu.dot_dimension_numbers<[1], [0], [0], [1], [0, 0, 1, 1], [], []>} : vector<2x32xf32>, vector<32x32xf32>, vector<2x32xf32> -> vector<2x32xf32>
    %461 = vector.broadcast %251 : vector<1x32xf32> to vector<2x32xf32>
    %462 = arith.addf %460, %461 : vector<2x32xf32>
    %cst_148 = arith.constant dense<0.000000e+00> : vector<2x32xf32>
    %463 = tpu.matmul %216, %246, %cst_148 {dimension_numbers = #tpu.dot_dimension_numbers<[1], [0], [0], [1], [0, 0, 1, 1], [], []>} : vector<2x32xf32>, vector<32x32xf32>, vector<2x32xf32> -> vector<2x32xf32>
    %464 = vector.broadcast %252 : vector<1x32xf32> to vector<2x32xf32>
    %465 = arith.addf %463, %464 : vector<2x32xf32>
    %cst_149 = arith.constant dense<0.000000e+00> : vector<2x32xf32>
    %466 = tpu.matmul %216, %247, %cst_149 {dimension_numbers = #tpu.dot_dimension_numbers<[1], [0], [0], [1], [0, 0, 1, 1], [], []>} : vector<2x32xf32>, vector<32x32xf32>, vector<2x32xf32> -> vector<2x32xf32>
    %467 = vector.broadcast %253 : vector<1x32xf32> to vector<2x32xf32>
    %468 = arith.addf %466, %467 : vector<2x32xf32>
    %cst_150 = arith.constant dense<0.000000e+00> : vector<2x32xf32>
    %469 = tpu.matmul %459, %248, %cst_150 {dimension_numbers = #tpu.dot_dimension_numbers<[1], [0], [0], [1], [0, 0, 1, 1], [], []>} : vector<2x32xf32>, vector<32x32xf32>, vector<2x32xf32> -> vector<2x32xf32>
    %cst_151 = arith.constant dense<0.000000e+00> : vector<2x32xf32>
    %470 = tpu.matmul %459, %249, %cst_151 {dimension_numbers = #tpu.dot_dimension_numbers<[1], [0], [0], [1], [0, 0, 1, 1], [], []>} : vector<2x32xf32>, vector<32x32xf32>, vector<2x32xf32> -> vector<2x32xf32>
    %cst_152 = arith.constant dense<0.000000e+00> : vector<2x32xf32>
    %471 = tpu.matmul %459, %250, %cst_152 {dimension_numbers = #tpu.dot_dimension_numbers<[1], [0], [0], [1], [0, 0, 1, 1], [], []>} : vector<2x32xf32>, vector<32x32xf32>, vector<2x32xf32> -> vector<2x32xf32>
    %472 = arith.addf %462, %469 : vector<2x32xf32>
    %473 = arith.negf %472 : vector<2x32xf32>
    %474 = math.exp %473 : vector<2x32xf32>
    %cst_153 = arith.constant 1.000000e+00 : f32
    %475 = vector.broadcast %cst_153 : f32 to vector<2x32xf32>
    %476 = arith.addf %475, %474 : vector<2x32xf32>
    %477 = arith.divf %475, %476 : vector<2x32xf32>
    %478 = arith.addf %465, %470 : vector<2x32xf32>
    %479 = arith.negf %478 : vector<2x32xf32>
    %480 = math.exp %479 : vector<2x32xf32>
    %cst_154 = arith.constant 1.000000e+00 : f32
    %481 = vector.broadcast %cst_154 : f32 to vector<2x32xf32>
    %482 = arith.addf %481, %480 : vector<2x32xf32>
    %483 = arith.divf %481, %482 : vector<2x32xf32>
    %484 = vector.broadcast %254 : vector<1x32xf32> to vector<2x32xf32>
    %485 = arith.addf %471, %484 : vector<2x32xf32>
    %486 = arith.mulf %477, %485 : vector<2x32xf32>
    %487 = arith.addf %468, %486 : vector<2x32xf32>
    %488 = math.tanh %487 : vector<2x32xf32>
    %cst_155 = arith.constant 1.000000e+00 : f32
    %489 = vector.broadcast %cst_155 : f32 to vector<2x32xf32>
    %490 = arith.subf %489, %483 : vector<2x32xf32>
    %491 = arith.mulf %490, %488 : vector<2x32xf32>
    %492 = arith.mulf %483, %459 : vector<2x32xf32>
    %493 = arith.addf %491, %492 : vector<2x32xf32>
    %cst_156 = arith.constant dense<0.000000e+00> : vector<2x32xf32>
    %494 = tpu.matmul %244, %245, %cst_156 {dimension_numbers = #tpu.dot_dimension_numbers<[1], [0], [0], [1], [0, 0, 1, 1], [], []>} : vector<2x32xf32>, vector<32x32xf32>, vector<2x32xf32> -> vector<2x32xf32>
    %495 = vector.broadcast %251 : vector<1x32xf32> to vector<2x32xf32>
    %496 = arith.addf %494, %495 : vector<2x32xf32>
    %cst_157 = arith.constant dense<0.000000e+00> : vector<2x32xf32>
    %497 = tpu.matmul %244, %246, %cst_157 {dimension_numbers = #tpu.dot_dimension_numbers<[1], [0], [0], [1], [0, 0, 1, 1], [], []>} : vector<2x32xf32>, vector<32x32xf32>, vector<2x32xf32> -> vector<2x32xf32>
    %498 = vector.broadcast %252 : vector<1x32xf32> to vector<2x32xf32>
    %499 = arith.addf %497, %498 : vector<2x32xf32>
    %cst_158 = arith.constant dense<0.000000e+00> : vector<2x32xf32>
    %500 = tpu.matmul %244, %247, %cst_158 {dimension_numbers = #tpu.dot_dimension_numbers<[1], [0], [0], [1], [0, 0, 1, 1], [], []>} : vector<2x32xf32>, vector<32x32xf32>, vector<2x32xf32> -> vector<2x32xf32>
    %501 = vector.broadcast %253 : vector<1x32xf32> to vector<2x32xf32>
    %502 = arith.addf %500, %501 : vector<2x32xf32>
    %cst_159 = arith.constant dense<0.000000e+00> : vector<2x32xf32>
    %503 = tpu.matmul %493, %248, %cst_159 {dimension_numbers = #tpu.dot_dimension_numbers<[1], [0], [0], [1], [0, 0, 1, 1], [], []>} : vector<2x32xf32>, vector<32x32xf32>, vector<2x32xf32> -> vector<2x32xf32>
    %cst_160 = arith.constant dense<0.000000e+00> : vector<2x32xf32>
    %504 = tpu.matmul %493, %249, %cst_160 {dimension_numbers = #tpu.dot_dimension_numbers<[1], [0], [0], [1], [0, 0, 1, 1], [], []>} : vector<2x32xf32>, vector<32x32xf32>, vector<2x32xf32> -> vector<2x32xf32>
    %cst_161 = arith.constant dense<0.000000e+00> : vector<2x32xf32>
    %505 = tpu.matmul %493, %250, %cst_161 {dimension_numbers = #tpu.dot_dimension_numbers<[1], [0], [0], [1], [0, 0, 1, 1], [], []>} : vector<2x32xf32>, vector<32x32xf32>, vector<2x32xf32> -> vector<2x32xf32>
    %506 = arith.addf %496, %503 : vector<2x32xf32>
    %507 = arith.negf %506 : vector<2x32xf32>
    %508 = math.exp %507 : vector<2x32xf32>
    %cst_162 = arith.constant 1.000000e+00 : f32
    %509 = vector.broadcast %cst_162 : f32 to vector<2x32xf32>
    %510 = arith.addf %509, %508 : vector<2x32xf32>
    %511 = arith.divf %509, %510 : vector<2x32xf32>
    %512 = arith.addf %499, %504 : vector<2x32xf32>
    %513 = arith.negf %512 : vector<2x32xf32>
    %514 = math.exp %513 : vector<2x32xf32>
    %cst_163 = arith.constant 1.000000e+00 : f32
    %515 = vector.broadcast %cst_163 : f32 to vector<2x32xf32>
    %516 = arith.addf %515, %514 : vector<2x32xf32>
    %517 = arith.divf %515, %516 : vector<2x32xf32>
    %518 = vector.broadcast %254 : vector<1x32xf32> to vector<2x32xf32>
    %519 = arith.addf %505, %518 : vector<2x32xf32>
    %520 = arith.mulf %511, %519 : vector<2x32xf32>
    %521 = arith.addf %502, %520 : vector<2x32xf32>
    %522 = math.tanh %521 : vector<2x32xf32>
    %cst_164 = arith.constant 1.000000e+00 : f32
    %523 = vector.broadcast %cst_164 : f32 to vector<2x32xf32>
    %524 = arith.subf %523, %517 : vector<2x32xf32>
    %525 = arith.mulf %524, %522 : vector<2x32xf32>
    %526 = arith.mulf %517, %493 : vector<2x32xf32>
    %527 = arith.addf %525, %526 : vector<2x32xf32>
    %c0_165 = arith.constant 0 : index
    %c0_166 = arith.constant 0 : index
    %528 = vector.load %arg21[%c0_165, %c0_166] : memref<32x32xf32, #tpu.memory_space<vmem>>, vector<32x32xf32>
    %cst_167 = arith.constant dense<0.000000e+00> : vector<2x32xf32>
    %529 = tpu.matmul %527, %528, %cst_167 {dimension_numbers = #tpu.dot_dimension_numbers<[1], [0], [0], [1], [0, 0, 1, 1], [], []>} : vector<2x32xf32>, vector<32x32xf32>, vector<2x32xf32> -> vector<2x32xf32>
    %c0_168 = arith.constant 0 : index
    %c0_169 = arith.constant 0 : index
    %530 = vector.load %arg22[%c0_168, %c0_169] : memref<1x32xf32, #tpu.memory_space<vmem>>, vector<1x32xf32>
    %531 = vector.broadcast %530 : vector<1x32xf32> to vector<2x32xf32>
    %532 = arith.addf %529, %531 : vector<2x32xf32>
    %cst_170 = arith.constant dense<0.000000e+00> : vector<2xf32>
    %533 = vector.multi_reduction <add>, %532, %cst_170 [1] : vector<2x32xf32> to vector<2xf32>
    %534 = vector.shape_cast %533 : vector<2xf32> to vector<2x1xf32>
    %cst_171 = arith.constant 3.200000e+01 : f32
    %535 = vector.broadcast %cst_171 : f32 to vector<2x1xf32>
    %536 = arith.divf %534, %535 : vector<2x1xf32>
    %537 = vector.broadcast %536 : vector<2x1xf32> to vector<2x32xf32>
    %538 = arith.subf %532, %537 : vector<2x32xf32>
    %539 = arith.mulf %538, %538 : vector<2x32xf32>
    %cst_172 = arith.constant dense<0.000000e+00> : vector<2xf32>
    %540 = vector.multi_reduction <add>, %539, %cst_172 [1] : vector<2x32xf32> to vector<2xf32>
    %541 = vector.shape_cast %540 : vector<2xf32> to vector<2x1xf32>
    %cst_173 = arith.constant 3.200000e+01 : f32
    %542 = vector.broadcast %cst_173 : f32 to vector<2x1xf32>
    %543 = arith.divf %541, %542 : vector<2x1xf32>
    %544 = vector.broadcast %536 : vector<2x1xf32> to vector<2x32xf32>
    %545 = arith.subf %532, %544 : vector<2x32xf32>
    %cst_174 = arith.constant 9.99999974E-6 : f32
    %546 = vector.broadcast %cst_174 : f32 to vector<2x1xf32>
    %547 = arith.addf %543, %546 : vector<2x1xf32>
    %548 = math.rsqrt %547 : vector<2x1xf32>
    %549 = vector.broadcast %548 : vector<2x1xf32> to vector<2x32xf32>
    %550 = arith.mulf %545, %549 : vector<2x32xf32>
    %c0_175 = arith.constant 0 : index
    %c0_176 = arith.constant 0 : index
    %551 = vector.load %arg23[%c0_175, %c0_176] : memref<1x32xf32, #tpu.memory_space<vmem>>, vector<1x32xf32>
    %552 = vector.broadcast %551 : vector<1x32xf32> to vector<2x32xf32>
    %553 = arith.mulf %550, %552 : vector<2x32xf32>
    %c0_177 = arith.constant 0 : index
    %c0_178 = arith.constant 0 : index
    %554 = vector.load %arg24[%c0_177, %c0_178] : memref<1x32xf32, #tpu.memory_space<vmem>>, vector<1x32xf32>
    %555 = vector.broadcast %554 : vector<1x32xf32> to vector<2x32xf32>
    %556 = arith.addf %553, %555 : vector<2x32xf32>
    %cst_179 = arith.constant 0.000000e+00 : f32
    %557 = vector.broadcast %cst_179 : f32 to vector<2x32xf32>
    %558 = arith.maximumf %556, %557 : vector<2x32xf32>
    %c0_180 = arith.constant 0 : index
    %c0_181 = arith.constant 0 : index
    %559 = vector.load %arg25[%c0_180, %c0_181] : memref<32x32xf32, #tpu.memory_space<vmem>>, vector<32x32xf32>
    %cst_182 = arith.constant dense<0.000000e+00> : vector<2x32xf32>
    %560 = tpu.matmul %558, %559, %cst_182 {dimension_numbers = #tpu.dot_dimension_numbers<[1], [0], [0], [1], [0, 0, 1, 1], [], []>} : vector<2x32xf32>, vector<32x32xf32>, vector<2x32xf32> -> vector<2x32xf32>
    %c0_183 = arith.constant 0 : index
    %c0_184 = arith.constant 0 : index
    %561 = vector.load %arg26[%c0_183, %c0_184] : memref<1x32xf32, #tpu.memory_space<vmem>>, vector<1x32xf32>
    %562 = vector.broadcast %561 : vector<1x32xf32> to vector<2x32xf32>
    %563 = arith.addf %560, %562 : vector<2x32xf32>
    %cst_185 = arith.constant dense<0.000000e+00> : vector<2xf32>
    %564 = vector.multi_reduction <add>, %563, %cst_185 [1] : vector<2x32xf32> to vector<2xf32>
    %565 = vector.shape_cast %564 : vector<2xf32> to vector<2x1xf32>
    %cst_186 = arith.constant 3.200000e+01 : f32
    %566 = vector.broadcast %cst_186 : f32 to vector<2x1xf32>
    %567 = arith.divf %565, %566 : vector<2x1xf32>
    %568 = vector.broadcast %567 : vector<2x1xf32> to vector<2x32xf32>
    %569 = arith.subf %563, %568 : vector<2x32xf32>
    %570 = arith.mulf %569, %569 : vector<2x32xf32>
    %cst_187 = arith.constant dense<0.000000e+00> : vector<2xf32>
    %571 = vector.multi_reduction <add>, %570, %cst_187 [1] : vector<2x32xf32> to vector<2xf32>
    %572 = vector.shape_cast %571 : vector<2xf32> to vector<2x1xf32>
    %cst_188 = arith.constant 3.200000e+01 : f32
    %573 = vector.broadcast %cst_188 : f32 to vector<2x1xf32>
    %574 = arith.divf %572, %573 : vector<2x1xf32>
    %575 = vector.broadcast %567 : vector<2x1xf32> to vector<2x32xf32>
    %576 = arith.subf %563, %575 : vector<2x32xf32>
    %cst_189 = arith.constant 9.99999974E-6 : f32
    %577 = vector.broadcast %cst_189 : f32 to vector<2x1xf32>
    %578 = arith.addf %574, %577 : vector<2x1xf32>
    %579 = math.rsqrt %578 : vector<2x1xf32>
    %580 = vector.broadcast %579 : vector<2x1xf32> to vector<2x32xf32>
    %581 = arith.mulf %576, %580 : vector<2x32xf32>
    %c0_190 = arith.constant 0 : index
    %c0_191 = arith.constant 0 : index
    %582 = vector.load %arg27[%c0_190, %c0_191] : memref<1x32xf32, #tpu.memory_space<vmem>>, vector<1x32xf32>
    %583 = vector.broadcast %582 : vector<1x32xf32> to vector<2x32xf32>
    %584 = arith.mulf %581, %583 : vector<2x32xf32>
    %c0_192 = arith.constant 0 : index
    %c0_193 = arith.constant 0 : index
    %585 = vector.load %arg28[%c0_192, %c0_193] : memref<1x32xf32, #tpu.memory_space<vmem>>, vector<1x32xf32>
    %586 = vector.broadcast %585 : vector<1x32xf32> to vector<2x32xf32>
    %587 = arith.addf %584, %586 : vector<2x32xf32>
    %cst_194 = arith.constant 0.000000e+00 : f32
    %588 = vector.broadcast %cst_194 : f32 to vector<2x32xf32>
    %589 = arith.maximumf %587, %588 : vector<2x32xf32>
    %c0_195 = arith.constant 0 : index
    %c0_196 = arith.constant 0 : index
    %590 = vector.load %arg29[%c0_195, %c0_196] : memref<32x4xf32, #tpu.memory_space<vmem>>, vector<32x4xf32>
    %cst_197 = arith.constant dense<0.000000e+00> : vector<2x4xf32>
    %591 = tpu.matmul %589, %590, %cst_197 {dimension_numbers = #tpu.dot_dimension_numbers<[1], [0], [0], [1], [0, 0, 1, 1], [], []>} : vector<2x32xf32>, vector<32x4xf32>, vector<2x4xf32> -> vector<2x4xf32>
    %c0_198 = arith.constant 0 : index
    %c0_199 = arith.constant 0 : index
    %592 = vector.load %arg30[%c0_198, %c0_199] : memref<1x4xf32, #tpu.memory_space<vmem>>, vector<1x4xf32>
    %593 = vector.broadcast %592 : vector<1x4xf32> to vector<2x4xf32>
    %594 = arith.addf %591, %593 : vector<2x4xf32>
    %c0_200 = arith.constant 0 : index
    %c0_201 = arith.constant 0 : index
    %595 = vector.load %arg31[%c0_200, %c0_201] : memref<2x4xf32, #tpu.memory_space<vmem>>, vector<2x4xf32>
    tpu.vector_store %arg31[%c0_200, %c0_201], %594 {strides = array<i32>} : memref<2x4xf32, #tpu.memory_space<vmem>>, vector<2x4xf32>,
    return
  }
}

</mosaic_0001>

<llo_original>
// kernel: actor_forward.1
$region0: #{actor_forward.1}
  #allocation0 [shape = 'u32[]', space=smem, size = 0x4, offset = 0x4, fixed_abs, tag = 'smem constant byte address 0x4 - core index']
  #allocation1 [shape = 'u32[144,128]{1,0:T(1,128)}', space=vmem, size = 0x12000, scoped, tag = 'internal scratch']
  %s0 = inlined_call_operand.smem [shape: u32[32], index: -1, kind: input, shape index: {}]
  %s1 = sld [smem:[%s0]]
  %s2 = scalar_lea.smem %s0, 1
  %s3 = sld [smem:[%s2]]
  %s4 = scalar_lea.smem %s0, 2
  %s5 = sld [smem:[%s4]]
  %s6 = scalar_lea.smem %s0, 3
  %s7 = sld [smem:[%s6]]
  %s8 = scalar_lea.smem %s0, 4
  %s9 = sld [smem:[%s8]]
  %s10 = scalar_lea.smem %s0, 5
  %s11 = sld [smem:[%s10]]
  %s12 = scalar_lea.smem %s0, 6
  %s13 = sld [smem:[%s12]]
  %s14 = scalar_lea.smem %s0, 7
  %s15 = sld [smem:[%s14]]
  %s16 = scalar_lea.smem %s0, 8
  %s17 = sld [smem:[%s16]]
  %s18 = scalar_lea.smem %s0, 9
  %s19 = sld [smem:[%s18]]
  %s20 = scalar_lea.smem %s0, 10
  %s21 = sld [smem:[%s20]]
  %s22 = scalar_lea.smem %s0, 11
  %s23 = sld [smem:[%s22]]
  %s24 = scalar_lea.smem %s0, 12
  %s25 = sld [smem:[%s24]]
  %s26 = scalar_lea.smem %s0, 13
  %s27 = sld [smem:[%s26]]
  %s28 = scalar_lea.smem %s0, 14
  %s29 = sld [smem:[%s28]]
  %s30 = scalar_lea.smem %s0, 15
  %s31 = sld [smem:[%s30]]
  %s32 = scalar_lea.smem %s0, 16
  %s33 = sld [smem:[%s32]]
  %s34 = scalar_lea.smem %s0, 17
  %s35 = sld [smem:[%s34]]
  %s36 = scalar_lea.smem %s0, 18
  %s37 = sld [smem:[%s36]]
  %s38 = scalar_lea.smem %s0, 19
  %s39 = sld [smem:[%s38]]
  %s40 = scalar_lea.smem %s0, 20
  %s41 = sld [smem:[%s40]]
  %s42 = scalar_lea.smem %s0, 21
  %s43 = sld [smem:[%s42]]
  %s44 = scalar_lea.smem %s0, 22
  %s45 = sld [smem:[%s44]]
  %s46 = scalar_lea.smem %s0, 23
  %s47 = sld [smem:[%s46]]
  %s48 = scalar_lea.smem %s0, 24
  %s49 = sld [smem:[%s48]]
  %s50 = scalar_lea.smem %s0, 25
  %s51 = sld [smem:[%s50]]
  %s52 = scalar_lea.smem %s0, 26
  %s53 = sld [smem:[%s52]]
  %s54 = scalar_lea.smem %s0, 27
  %s55 = sld [smem:[%s54]]
  %s56 = scalar_lea.smem %s0, 28
  %s57 = sld [smem:[%s56]]
  %s58 = scalar_lea.smem %s0, 29
  %s59 = sld [smem:[%s58]]
  %s60 = scalar_lea.smem %s0, 30
  %s61 = sld [smem:[%s60]]
  %s62 = scalar_lea.smem %s0, 31
  %s63 = sld [smem:[%s62]]
  %s64 = sld [smem:[#allocation0]]
  $region194: #{actor_forward.1} parent=0
    _
  %s66 = ssub.s32 1, %s64
  %s67 = scalar_select 0, %s66, %s64
  $region1: #{actor_forward.1} parent=0
    #allocation2 [shape = 'u8[2048]{0}', space=vmem, size = 0x800, scoped, tag = 'input window, operand 1, single buffered']
    #allocation3 [shape = 's32[1]{0}', space=sflag, size = 0x4, scoped, tag = 'scoped memory for actor_forward.1']
    #allocation4 [shape = 's32[1]{0}', space=sflag, size = 0x4, scoped, tag = 'scoped memory for actor_forward.1']
    #allocation5 [shape = 'u8[2048]{0}', space=vmem, size = 0x800, scoped, tag = 'input window, operand 2, single buffered']
    #allocation6 [shape = 's32[1]{0}', space=sflag, size = 0x4, scoped, tag = 'scoped memory for actor_forward.1']
    #allocation7 [shape = 'u8[2048]{0}', space=vmem, size = 0x800, scoped, tag = 'input window, operand 3, single buffered']
    #allocation8 [shape = 'u8[16384]{0}', space=vmem, size = 0x4000, scoped, tag = 'input window, operand 6, single buffered']
    #allocation9 [shape = 's32[1]{0}', space=sflag, size = 0x4, scoped, tag = 'scoped memory for actor_forward.1']
    #allocation10 [shape = 'u8[512]{0}', space=vmem, size = 0x400, scoped, tag = 'input window, operand 7, single buffered']
    #allocation11 [shape = 'u8[512]{0}', space=vmem, size = 0x400, scoped, tag = 'input window, operand 8, single buffered']
    #allocation12 [shape = 's32[1]{0}', space=sflag, size = 0x4, scoped, tag = 'scoped memory for actor_forward.1']
    #allocation13 [shape = 'u8[512]{0}', space=vmem, size = 0x400, scoped, tag = 'input window, operand 9, single buffered']
    #allocation14 [shape = 'u8[512]{0}', space=vmem, size = 0x400, scoped, tag = 'input window, operand 10, single buffered']
    #allocation15 [shape = 's32[1]{0}', space=sflag, size = 0x4, scoped, tag = 'scoped memory for actor_forward.1']
    #allocation16 [shape = 'u8[16384]{0}', space=vmem, size = 0x4000, scoped, tag = 'input window, operand 12, single buffered']
    #allocation17 [shape = 'u8[16384]{0}', space=vmem, size = 0x4000, scoped, tag = 'input window, operand 13, single buffered']
    #allocation18 [shape = 's32[1]{0}', space=sflag, size = 0x4, scoped, tag = 'scoped memory for actor_forward.1']
    #allocation19 [shape = 'u8[16384]{0}', space=vmem, size = 0x4000, scoped, tag = 'input window, operand 14, single buffered']
    #allocation20 [shape = 'u8[16384]{0}', space=vmem, size = 0x4000, scoped, tag = 'input window, operand 15, single buffered']
    #allocation21 [shape = 's32[1]{0}', space=sflag, size = 0x4, scoped, tag = 'scoped memory for actor_forward.1']
    #allocation22 [shape = 'u8[16384]{0}', space=vmem, size = 0x4000, scoped, tag = 'input window, operand 16, single buffered']
    #allocation23 [shape = 'u8[512]{0}', space=vmem, size = 0x400, scoped, tag = 'input window, operand 17, single buffered']
    #allocation24 [shape = 's32[1]{0}', space=sflag, size = 0x4, scoped, tag = 'scoped memory for actor_forward.1']
    #allocation25 [shape = 'u8[16384]{0}', space=vmem, size = 0x4000, scoped, tag = 'input window, operand 25, single buffered']
    #allocation26 [shape = 'u8[1024]{0}', space=vmem, size = 0x400, scoped, tag = 'output window, operand 0, single buffered']
    %68 = vsyncpa [#allocation3], 0
    %69 = vsyncpa [#allocation6], 0
    %70 = vsyncpa [#allocation9], 0
    %71 = vsyncpa [#allocation12], 0
    %72 = vsyncpa [#allocation15], 0
    %73 = vsyncpa [#allocation18], 0
    %74 = vsyncpa [#allocation21], 0
    %75 = vsyncpa [#allocation24], 0
    %76 = vsyncpa [#allocation4], 0
    // Predicated region
    $region2: #{actor_forward.1} parent=1 // pred_check
      _
    $region3: #{actor_forward.1} parent=1 // pred_check_branch
      %78 = sbr.rel (0) target = $region5
    $region4: #{actor_forward.1} parent=1 // pred_region
      _
    $region5: #{actor_forward.1} parent=1 // pred_fallthru
      _
    // Predicated region
    $region6: #{actor_forward.1} parent=1 // pred_check
      _
    $region7: #{actor_forward.1} parent=1 // pred_check_branch
      %80 = sbr.rel (0) target = $region9
    $region8: #{actor_forward.1} parent=1 // pred_region
      %s82 = ssub.s32 64, 64
      %83 = vsyncadd [#allocation3], %s82
      %s85 = sshll.u32 [#allocation2], 4
      %s86 = int_to_ptr.vmem [resolvable:$true] %s85
      %88 = dma.hbm_to_vmem [thread:$0]  %s3, 64, %s86, [#allocation3]
    $region9: #{actor_forward.1} parent=1 // pred_fallthru
      _
    // Predicated region
    $region10: #{actor_forward.1} parent=1 // pred_check
      _
    $region11: #{actor_forward.1} parent=1 // pred_check_branch
      %90 = sbr.rel (0) target = $region13
    $region12: #{actor_forward.1} parent=1 // pred_region
      %s92 = ssub.s32 64, 64
      %93 = vsyncadd [#allocation6], %s92
      %s95 = sshll.u32 [#allocation5], 4
      %s96 = int_to_ptr.vmem [resolvable:$true] %s95
      %98 = dma.hbm_to_vmem [thread:$0]  %s5, 64, %s96, [#allocation6]
    $region13: #{actor_forward.1} parent=1 // pred_fallthru
      _
    // Predicated region
    $region14: #{actor_forward.1} parent=1 // pred_check
      _
    $region15: #{actor_forward.1} parent=1 // pred_check_branch
      %100 = sbr.rel (0) target = $region17
    $region16: #{actor_forward.1} parent=1 // pred_region
      %s102 = ssub.s32 64, 64
      %103 = vsyncadd [#allocation6], %s102
      %s105 = sshll.u32 [#allocation7], 4
      %s106 = int_to_ptr.vmem [resolvable:$true] %s105
      %108 = dma.hbm_to_vmem [thread:$0]  %s7, 64, %s106, [#allocation6]
    $region17: #{actor_forward.1} parent=1 // pred_fallthru
      _
    // Predicated region
    $region18: #{actor_forward.1} parent=1 // pred_check
      _
    $region19: #{actor_forward.1} parent=1 // pred_check_branch
      %110 = sbr.rel (0) target = $region21
    $region20: #{actor_forward.1} parent=1 // pred_region
      _
    $region21: #{actor_forward.1} parent=1 // pred_fallthru
      _
    // Predicated region
    $region22: #{actor_forward.1} parent=1 // pred_check
      _
    $region23: #{actor_forward.1} parent=1 // pred_check_branch
      %112 = sbr.rel (0) target = $region25
    $region24: #{actor_forward.1} parent=1 // pred_region
      _
    $region25: #{actor_forward.1} parent=1 // pred_fallthru
      _
    // Predicated region
    $region26: #{actor_forward.1} parent=1 // pred_check
      _
    $region27: #{actor_forward.1} parent=1 // pred_check_branch
      %114 = sbr.rel (0) target = $region29
    $region28: #{actor_forward.1} parent=1 // pred_region
      %s116 = ssub.s32 512, 512
      %117 = vsyncadd [#allocation9], %s116
      %s118 = sshll.u32 [#allocation8], 4
      %s119 = int_to_ptr.vmem [resolvable:$true] %s118
      %124 = dma.hbm_to_vmem [thread:$0]  %s13, 512, %s119, [#allocation9], 128, 128, 8
    $region29: #{actor_forward.1} parent=1 // pred_fallthru
      _
    // Predicated region
    $region30: #{actor_forward.1} parent=1 // pred_check
      _
    $region31: #{actor_forward.1} parent=1 // pred_check_branch
      %126 = sbr.rel (0) target = $region33
    $region32: #{actor_forward.1} parent=1 // pred_region
      %s128 = ssub.s32 16, 16
      %129 = vsyncadd [#allocation9], %s128
      %s131 = sshll.u32 [#allocation10], 4
      %s132 = int_to_ptr.vmem [resolvable:$true] %s131
      %134 = dma.hbm_to_vmem [thread:$0]  %s15, 16, %s132, [#allocation9]
    $region33: #{actor_forward.1} parent=1 // pred_fallthru
      _
    // Predicated region
    $region34: #{actor_forward.1} parent=1 // pred_check
      _
    $region35: #{actor_forward.1} parent=1 // pred_check_branch
      %136 = sbr.rel (0) target = $region37
    $region36: #{actor_forward.1} parent=1 // pred_region
      %s138 = ssub.s32 16, 16
      %139 = vsyncadd [#allocation12], %s138
      %s141 = sshll.u32 [#allocation11], 4
      %s142 = int_to_ptr.vmem [resolvable:$true] %s141
      %144 = dma.hbm_to_vmem [thread:$0]  %s17, 16, %s142, [#allocation12]
    $region37: #{actor_forward.1} parent=1 // pred_fallthru
      _
    // Predicated region
    $region38: #{actor_forward.1} parent=1 // pred_check
      _
    $region39: #{actor_forward.1} parent=1 // pred_check_branch
      %146 = sbr.rel (0) target = $region41
    $region40: #{actor_forward.1} parent=1 // pred_region
      %s148 = ssub.s32 16, 16
      %149 = vsyncadd [#allocation12], %s148
      %s151 = sshll.u32 [#allocation13], 4
      %s152 = int_to_ptr.vmem [resolvable:$true] %s151
      %154 = dma.hbm_to_vmem [thread:$0]  %s19, 16, %s152, [#allocation12]
    $region41: #{actor_forward.1} parent=1 // pred_fallthru
      _
    // Predicated region
    $region42: #{actor_forward.1} parent=1 // pred_check
      _
    $region43: #{actor_forward.1} parent=1 // pred_check_branch
      %156 = sbr.rel (0) target = $region45
    $region44: #{actor_forward.1} parent=1 // pred_region
      %s158 = ssub.s32 16, 16
      %159 = vsyncadd [#allocation15], %s158
      %s161 = sshll.u32 [#allocation14], 4
      %s162 = int_to_ptr.vmem [resolvable:$true] %s161
      %164 = dma.hbm_to_vmem [thread:$0]  %s21, 16, %s162, [#allocation15]
    $region45: #{actor_forward.1} parent=1 // pred_fallthru
      _
    // Predicated region
    $region46: #{actor_forward.1} parent=1 // pred_check
      _
    $region47: #{actor_forward.1} parent=1 // pred_check_branch
      %166 = sbr.rel (0) target = $region49
    $region48: #{actor_forward.1} parent=1 // pred_region
      _
    $region49: #{actor_forward.1} parent=1 // pred_fallthru
      _
    // Predicated region
    $region50: #{actor_forward.1} parent=1 // pred_check
      _
    $region51: #{actor_forward.1} parent=1 // pred_check_branch
      %168 = sbr.rel (0) target = $region53
    $region52: #{actor_forward.1} parent=1 // pred_region
      %s170 = ssub.s32 512, 512
      %171 = vsyncadd [#allocation15], %s170
      %s172 = sshll.u32 [#allocation16], 4
      %s173 = int_to_ptr.vmem [resolvable:$true] %s172
      %178 = dma.hbm_to_vmem [thread:$0]  %s25, 512, %s173, [#allocation15], 128, 128, 8
    $region53: #{actor_forward.1} parent=1 // pred_fallthru
      _
    // Predicated region
    $region54: #{actor_forward.1} parent=1 // pred_check
      _
    $region55: #{actor_forward.1} parent=1 // pred_check_branch
      %180 = sbr.rel (0) target = $region57
    $region56: #{actor_forward.1} parent=1 // pred_region
      %s182 = ssub.s32 512, 512
      %183 = vsyncadd [#allocation18], %s182
      %s184 = sshll.u32 [#allocation17], 4
      %s185 = int_to_ptr.vmem [resolvable:$true] %s184
      %190 = dma.hbm_to_vmem [thread:$0]  %s27, 512, %s185, [#allocation18], 128, 128, 8
    $region57: #{actor_forward.1} parent=1 // pred_fallthru
      _
    // Predicated region
    $region58: #{actor_forward.1} parent=1 // pred_check
      _
    $region59: #{actor_forward.1} parent=1 // pred_check_branch
      %192 = sbr.rel (0) target = $region61
    $region60: #{actor_forward.1} parent=1 // pred_region
      %s194 = ssub.s32 512, 512
      %195 = vsyncadd [#allocation18], %s194
      %s196 = sshll.u32 [#allocation19], 4
      %s197 = int_to_ptr.vmem [resolvable:$true] %s196
      %202 = dma.hbm_to_vmem [thread:$0]  %s29, 512, %s197, [#allocation18], 128, 128, 8
    $region61: #{actor_forward.1} parent=1 // pred_fallthru
      _
    // Predicated region
    $region62: #{actor_forward.1} parent=1 // pred_check
      _
    $region63: #{actor_forward.1} parent=1 // pred_check_branch
      %204 = sbr.rel (0) target = $region65
    $region64: #{actor_forward.1} parent=1 // pred_region
      %s206 = ssub.s32 512, 512
      %207 = vsyncadd [#allocation21], %s206
      %s208 = sshll.u32 [#allocation20], 4
      %s209 = int_to_ptr.vmem [resolvable:$true] %s208
      %214 = dma.hbm_to_vmem [thread:$0]  %s31, 512, %s209, [#allocation21], 128, 128, 8
    $region65: #{actor_forward.1} parent=1 // pred_fallthru
      _
    // Predicated region
    $region66: #{actor_forward.1} parent=1 // pred_check
      _
    $region67: #{actor_forward.1} parent=1 // pred_check_branch
      %216 = sbr.rel (0) target = $region69
    $region68: #{actor_forward.1} parent=1 // pred_region
      %s218 = ssub.s32 512, 512
      %219 = vsyncadd [#allocation21], %s218
      %s220 = sshll.u32 [#allocation22], 4
      %s221 = int_to_ptr.vmem [resolvable:$true] %s220
      %226 = dma.hbm_to_vmem [thread:$0]  %s33, 512, %s221, [#allocation21], 128, 128, 8
    $region69: #{actor_forward.1} parent=1 // pred_fallthru
      _
    // Predicated region
    $region70: #{actor_forward.1} parent=1 // pred_check
      _
    $region71: #{actor_forward.1} parent=1 // pred_check_branch
      %228 = sbr.rel (0) target = $region73
    $region72: #{actor_forward.1} parent=1 // pred_region
      %s230 = ssub.s32 16, 16
      %231 = vsyncadd [#allocation24], %s230
      %s233 = sshll.u32 [#allocation23], 4
      %s234 = int_to_ptr.vmem [resolvable:$true] %s233
      %236 = dma.hbm_to_vmem [thread:$0]  %s35, 16, %s234, [#allocation24]
    $region73: #{actor_forward.1} parent=1 // pred_fallthru
      _
    // Predicated region
    $region74: #{actor_forward.1} parent=1 // pred_check
      _
    $region75: #{actor_forward.1} parent=1 // pred_check_branch
      %238 = sbr.rel (0) target = $region77
    $region76: #{actor_forward.1} parent=1 // pred_region
      _
    $region77: #{actor_forward.1} parent=1 // pred_fallthru
      _
    // Predicated region
    $region78: #{actor_forward.1} parent=1 // pred_check
      _
    $region79: #{actor_forward.1} parent=1 // pred_check_branch
      %240 = sbr.rel (0) target = $region81
    $region80: #{actor_forward.1} parent=1 // pred_region
      _
    $region81: #{actor_forward.1} parent=1 // pred_fallthru
      _
    // Predicated region
    $region82: #{actor_forward.1} parent=1 // pred_check
      _
    $region83: #{actor_forward.1} parent=1 // pred_check_branch
      %242 = sbr.rel (0) target = $region85
    $region84: #{actor_forward.1} parent=1 // pred_region
      _
    $region85: #{actor_forward.1} parent=1 // pred_fallthru
      _
    // Predicated region
    $region86: #{actor_forward.1} parent=1 // pred_check
      _
    $region87: #{actor_forward.1} parent=1 // pred_check_branch
      %244 = sbr.rel (0) target = $region89
    $region88: #{actor_forward.1} parent=1 // pred_region
      _
    $region89: #{actor_forward.1} parent=1 // pred_fallthru
      _
    // Predicated region
    $region90: #{actor_forward.1} parent=1 // pred_check
      _
    $region91: #{actor_forward.1} parent=1 // pred_check_branch
      %246 = sbr.rel (0) target = $region93
    $region92: #{actor_forward.1} parent=1 // pred_region
      _
    $region93: #{actor_forward.1} parent=1 // pred_fallthru
      _
    // Predicated region
    $region94: #{actor_forward.1} parent=1 // pred_check
      _
    $region95: #{actor_forward.1} parent=1 // pred_check_branch
      %248 = sbr.rel (0) target = $region97
    $region96: #{actor_forward.1} parent=1 // pred_region
      _
    $region97: #{actor_forward.1} parent=1 // pred_fallthru
      _
    // Predicated region
    $region98: #{actor_forward.1} parent=1 // pred_check
      _
    $region99: #{actor_forward.1} parent=1 // pred_check_branch
      %250 = sbr.rel (0) target = $region101
    $region100: #{actor_forward.1} parent=1 // pred_region
      _
    $region101: #{actor_forward.1} parent=1 // pred_fallthru
      _
    // Predicated region
    $region102: #{actor_forward.1} parent=1 // pred_check
      _
    $region103: #{actor_forward.1} parent=1 // pred_check_branch
      %252 = sbr.rel (0) target = $region105
    $region104: #{actor_forward.1} parent=1 // pred_region
      %s254 = ssub.s32 512, 512
      %255 = vsyncadd [#allocation24], %s254
      %s256 = sshll.u32 [#allocation25], 4
      %s257 = int_to_ptr.vmem [resolvable:$true] %s256
      %262 = dma.hbm_to_vmem [thread:$0]  %s51, 512, %s257, [#allocation24], 128, 128, 8
    $region105: #{actor_forward.1} parent=1 // pred_fallthru
      _
    // Predicated region
    $region106: #{actor_forward.1} parent=1 // pred_check
      _
    $region107: #{actor_forward.1} parent=1 // pred_check_branch
      %264 = sbr.rel (0) target = $region109
    $region108: #{actor_forward.1} parent=1 // pred_region
      _
    $region109: #{actor_forward.1} parent=1 // pred_fallthru
      _
    // Predicated region
    $region110: #{actor_forward.1} parent=1 // pred_check
      _
    $region111: #{actor_forward.1} parent=1 // pred_check_branch
      %266 = sbr.rel (0) target = $region113
    $region112: #{actor_forward.1} parent=1 // pred_region
      _
    $region113: #{actor_forward.1} parent=1 // pred_fallthru
      _
    // Predicated region
    $region114: #{actor_forward.1} parent=1 // pred_check
      _
    $region115: #{actor_forward.1} parent=1 // pred_check_branch
      %268 = sbr.rel (0) target = $region117
    $region116: #{actor_forward.1} parent=1 // pred_region
      _
    $region117: #{actor_forward.1} parent=1 // pred_fallthru
      _
    // Predicated region
    $region118: #{actor_forward.1} parent=1 // pred_check
      _
    $region119: #{actor_forward.1} parent=1 // pred_check_branch
      %270 = sbr.rel (0) target = $region121
    $region120: #{actor_forward.1} parent=1 // pred_region
      _
    $region121: #{actor_forward.1} parent=1 // pred_fallthru
      _
    // Predicated region
    $region122: #{actor_forward.1} parent=1 // pred_check
      _
    $region123: #{actor_forward.1} parent=1 // pred_check_branch
      %272 = sbr.rel (0) target = $region125
    $region124: #{actor_forward.1} parent=1 // pred_region
      _
    $region125: #{actor_forward.1} parent=1 // pred_fallthru
      _
    // Predicated region
    $region126: #{actor_forward.1} parent=1 // pred_check
      _
    $region127: #{actor_forward.1} parent=1 // pred_check_branch
      %274 = sbr.rel (0) target = $region129
    $region128: #{actor_forward.1} parent=1 // pred_region
      %275 = dma.done [#allocation3], 64
    $region129: #{actor_forward.1} parent=1 // pred_fallthru
      _
    // Predicated region
    $region130: #{actor_forward.1} parent=1 // pred_check
      _
    $region131: #{actor_forward.1} parent=1 // pred_check_branch
      %277 = sbr.rel (0) target = $region133
    $region132: #{actor_forward.1} parent=1 // pred_region
      %278 = dma.done [#allocation6], 64
    $region133: #{actor_forward.1} parent=1 // pred_fallthru
      _
    // Predicated region
    $region134: #{actor_forward.1} parent=1 // pred_check
      _
    $region135: #{actor_forward.1} parent=1 // pred_check_branch
      %280 = sbr.rel (0) target = $region137
    $region136: #{actor_forward.1} parent=1 // pred_region
      %281 = dma.done [#allocation6], 64
    $region137: #{actor_forward.1} parent=1 // pred_fallthru
      _
    // Predicated region
    $region138: #{actor_forward.1} parent=1 // pred_check
      _
    $region139: #{actor_forward.1} parent=1 // pred_check_branch
      %283 = sbr.rel (0) target = $region141
    $region140: #{actor_forward.1} parent=1 // pred_region
      %284 = dma.done [#allocation9], 512
    $region141: #{actor_forward.1} parent=1 // pred_fallthru
      _
    // Predicated region
    $region142: #{actor_forward.1} parent=1 // pred_check
      _
    $region143: #{actor_forward.1} parent=1 // pred_check_branch
      %286 = sbr.rel (0) target = $region145
    $region144: #{actor_forward.1} parent=1 // pred_region
      %287 = dma.done [#allocation9], 16
    $region145: #{actor_forward.1} parent=1 // pred_fallthru
      _
    // Predicated region
    $region146: #{actor_forward.1} parent=1 // pred_check
      _
    $region147: #{actor_forward.1} parent=1 // pred_check_branch
      %289 = sbr.rel (0) target = $region149
    $region148: #{actor_forward.1} parent=1 // pred_region
      %290 = dma.done [#allocation12], 16
    $region149: #{actor_forward.1} parent=1 // pred_fallthru
      _
    // Predicated region
    $region150: #{actor_forward.1} parent=1 // pred_check
      _
    $region151: #{actor_forward.1} parent=1 // pred_check_branch
      %292 = sbr.rel (0) target = $region153
    $region152: #{actor_forward.1} parent=1 // pred_region
      %293 = dma.done [#allocation12], 16
    $region153: #{actor_forward.1} parent=1 // pred_fallthru
      _
    // Predicated region
    $region154: #{actor_forward.1} parent=1 // pred_check
      _
    $region155: #{actor_forward.1} parent=1 // pred_check_branch
      %295 = sbr.rel (0) target = $region157
    $region156: #{actor_forward.1} parent=1 // pred_region
      %296 = dma.done [#allocation15], 16
    $region157: #{actor_forward.1} parent=1 // pred_fallthru
      _
    // Predicated region
    $region158: #{actor_forward.1} parent=1 // pred_check
      _
    $region159: #{actor_forward.1} parent=1 // pred_check_branch
      %298 = sbr.rel (0) target = $region161
    $region160: #{actor_forward.1} parent=1 // pred_region
      %299 = dma.done [#allocation15], 512
    $region161: #{actor_forward.1} parent=1 // pred_fallthru
      _
    // Predicated region
    $region162: #{actor_forward.1} parent=1 // pred_check
      _
    $region163: #{actor_forward.1} parent=1 // pred_check_branch
      %301 = sbr.rel (0) target = $region165
    $region164: #{actor_forward.1} parent=1 // pred_region
      %302 = dma.done [#allocation18], 512
    $region165: #{actor_forward.1} parent=1 // pred_fallthru
      _
    // Predicated region
    $region166: #{actor_forward.1} parent=1 // pred_check
      _
    $region167: #{actor_forward.1} parent=1 // pred_check_branch
      %304 = sbr.rel (0) target = $region169
    $region168: #{actor_forward.1} parent=1 // pred_region
      %305 = dma.done [#allocation18], 512
    $region169: #{actor_forward.1} parent=1 // pred_fallthru
      _
    // Predicated region
    $region170: #{actor_forward.1} parent=1 // pred_check
      _
    $region171: #{actor_forward.1} parent=1 // pred_check_branch
      %307 = sbr.rel (0) target = $region173
    $region172: #{actor_forward.1} parent=1 // pred_region
      %308 = dma.done [#allocation21], 512
    $region173: #{actor_forward.1} parent=1 // pred_fallthru
      _
    // Predicated region
    $region174: #{actor_forward.1} parent=1 // pred_check
      _
    $region175: #{actor_forward.1} parent=1 // pred_check_branch
      %310 = sbr.rel (0) target = $region177
    $region176: #{actor_forward.1} parent=1 // pred_region
      %311 = dma.done [#allocation21], 512
    $region177: #{actor_forward.1} parent=1 // pred_fallthru
      _
    // Predicated region
    $region178: #{actor_forward.1} parent=1 // pred_check
      _
    $region179: #{actor_forward.1} parent=1 // pred_check_branch
      %313 = sbr.rel (0) target = $region181
    $region180: #{actor_forward.1} parent=1 // pred_region
      %314 = dma.done [#allocation24], 16
    $region181: #{actor_forward.1} parent=1 // pred_fallthru
      _
    // Predicated region
    $region182: #{actor_forward.1} parent=1 // pred_check
      _
    $region183: #{actor_forward.1} parent=1 // pred_check_branch
      %316 = sbr.rel (0) target = $region185
    $region184: #{actor_forward.1} parent=1 // pred_region
      %317 = dma.done [#allocation24], 512
    $region185: #{actor_forward.1} parent=1 // pred_fallthru
      _
    %v318 = vld [vmem:[%s1] sm:$0xff]
    %v319 = vld [vmem:[%s1 + $0x8] sm:$0xff]
    %v320 = vld [vmem:[#allocation2] sm:$0xf]
    %v321 = vld [vmem:[#allocation10] sm:$0x1]
    %v323 = vlaneseq
    %v324 = vshrl.u32 %v323, 7
    %v325 = vsub.s32 0, %v324
    %v326 = vrot.slane %v321, %v325
    %vm328 = vcmask 31744
    %v330 = vsel %vm328, %v318, 0
    %v333 = vsel %vm328, %v319, 0
    %vm335 = vcmask 1043456
    %v337 = vsel %vm335, %v320, 0
    %339 = vmatprep.subr.mxu0 0.0
    %340 = vmatpush1.msra.mxu0 %v337
    %341 = vmatprep.subr.mxu0 0.0
    %342 = vmatpush1.msra.mxu0 0.0
    %343 = vmatprep.subr.mxu0 0.0
    %344 = vmatpush1.msra.mxu0 0.0
    %345 = vmatprep.subr.mxu0 0.0
    %346 = vmatpush1.msra.mxu0 0.0
    %347 = vmatprep.subr.mxu0 0.0
    %348 = vmatpush1.msra.mxu0 0.0
    %349 = vmatprep.subr.mxu0 0.0
    %350 = vmatpush1.msra.mxu0 0.0
    %351 = vmatprep.subr.mxu0 0.0
    %352 = vmatpush1.msra.mxu0 0.0
    %353 = vmatprep.subr.mxu0 0.0
    %354 = vmatpush1.msra.mxu0 0.0
    %355 = vmatprep.subr.mxu0 0.0
    %356 = vmatpush1.msra.mxu0 0.0
    %357 = vmatprep.subr.mxu0 0.0
    %358 = vmatpush1.msra.mxu0 0.0
    %359 = vmatprep.subr.mxu0 0.0
    %360 = vmatpush1.msra.mxu0 0.0
    %361 = vmatprep.subr.mxu0 0.0
    %362 = vmatpush1.msra.mxu0 0.0
    %363 = vmatprep.subr.mxu0 0.0
    %364 = vmatpush1.msra.mxu0 0.0
    %365 = vmatprep.subr.mxu0 0.0
    %366 = vmatpush1.msra.mxu0 0.0
    %367 = vmatprep.subr.mxu0 0.0
    %368 = vmatpush1.msra.mxu0 0.0
    %369 = vmatprep.subr.mxu0 0.0
    %370 = vmatpush1.msra.mxu0 0.0
    %371 = vmatprep.subr.mxu0 0.0
    %372 = vmatpush1.msra.mxu0 0.0
    %373 = vmatprep.subr.mxu0 0.0
    %374 = vmatpush1.msra.mxu0 0.0
    %375 = vmatprep.subr.mxu0 0.0
    %376 = vmatpush1.msra.mxu0 0.0
    %377 = vmatprep.subr.mxu0 0.0
    %378 = vmatpush1.msra.mxu0 0.0
    %379 = vmatprep.subr.mxu0 0.0
    %380 = vmatpush1.msra.mxu0 0.0
    %381 = vmatprep.subr.mxu0 0.0
    %382 = vmatpush1.msra.mxu0 0.0
    %383 = vmatprep.subr.mxu0 0.0
    %384 = vmatpush1.msra.mxu0 0.0
    %385 = vmatprep.subr.mxu0 0.0
    %386 = vmatpush1.msra.mxu0 0.0
    %387 = vmatprep.subr.mxu0 0.0
    %388 = vmatpush1.msra.mxu0 0.0
    %389 = vmatprep.subr.mxu0 0.0
    %390 = vmatpush1.msra.mxu0 0.0
    %391 = vmatprep.subr.mxu0 0.0
    %392 = vmatpush1.msra.mxu0 0.0
    %393 = vmatprep.subr.mxu0 0.0
    %394 = vmatpush1.msra.mxu0 0.0
    %395 = vmatprep.subr.mxu0 0.0
    %396 = vmatpush1.msra.mxu0 0.0
    %397 = vmatprep.subr.mxu0 0.0
    %398 = vmatpush1.msra.mxu0 0.0
    %399 = vmatprep.subr.mxu0 0.0
    %400 = vmatpush1.msra.mxu0 0.0
    %401 = vmatprep.subr.mxu0 0.0
    %402 = vmatpush1.msra.mxu0 0.0
    %403 = vmatprep.mubr.f32.mxu0 0.0
    %404 = vmatmul.mubr.f32.gmra.mrb[0].mxu0 %v330
    %v405 = vpop.f32.mrb[0].mxu0
    %v406 = vadd.f32 %v326, %v405
    %v407 = vpop.f32.mrb[0].mxu0
    %408 = vmatprep.mubr.f32.mxu0 0.0
    %409 = vmatmul.mubr.f32.gmra.mrb[0].mxu0 %v333
    %v410 = vpop.f32.mrb[0].mxu0
    %v411 = vadd.f32 %v326, %v410
    %v412 = vpop.f32.mrb[0].mxu0
    %413 = vdwg.mxu0
    %v414 = vld [vmem:[#allocation5] sm:$0xf]
    %v415 = vld [vmem:[#allocation11] sm:$0x1]
    %v417 = vlaneseq
    %v418 = vshrl.u32 %v417, 7
    %v419 = vsub.s32 0, %v418
    %v420 = vrot.slane %v415, %v419
    %v423 = vsel %vm335, %v414, 0
    %425 = vmatprep.subr.mxu0 0.0
    %426 = vmatpush1.msra.mxu0 %v423
    %427 = vmatprep.subr.mxu0 0.0
    %428 = vmatpush1.msra.mxu0 0.0
    %429 = vmatprep.subr.mxu0 0.0
    %430 = vmatpush1.msra.mxu0 0.0
    %431 = vmatprep.subr.mxu0 0.0
    %432 = vmatpush1.msra.mxu0 0.0
    %433 = vmatprep.subr.mxu0 0.0
    %434 = vmatpush1.msra.mxu0 0.0
    %435 = vmatprep.subr.mxu0 0.0
    %436 = vmatpush1.msra.mxu0 0.0
    %437 = vmatprep.subr.mxu0 0.0
    %438 = vmatpush1.msra.mxu0 0.0
    %439 = vmatprep.subr.mxu0 0.0
    %440 = vmatpush1.msra.mxu0 0.0
    %441 = vmatprep.subr.mxu0 0.0
    %442 = vmatpush1.msra.mxu0 0.0
    %443 = vmatprep.subr.mxu0 0.0
    %444 = vmatpush1.msra.mxu0 0.0
    %445 = vmatprep.subr.mxu0 0.0
    %446 = vmatpush1.msra.mxu0 0.0
    %447 = vmatprep.subr.mxu0 0.0
    %448 = vmatpush1.msra.mxu0 0.0
    %449 = vmatprep.subr.mxu0 0.0
    %450 = vmatpush1.msra.mxu0 0.0
    %451 = vmatprep.subr.mxu0 0.0
    %452 = vmatpush1.msra.mxu0 0.0
    %453 = vmatprep.subr.mxu0 0.0
    %454 = vmatpush1.msra.mxu0 0.0
    %455 = vmatprep.subr.mxu0 0.0
    %456 = vmatpush1.msra.mxu0 0.0
    %457 = vmatprep.subr.mxu0 0.0
    %458 = vmatpush1.msra.mxu0 0.0
    %459 = vmatprep.subr.mxu0 0.0
    %460 = vmatpush1.msra.mxu0 0.0
    %461 = vmatprep.subr.mxu0 0.0
    %462 = vmatpush1.msra.mxu0 0.0
    %463 = vmatprep.subr.mxu0 0.0
    %464 = vmatpush1.msra.mxu0 0.0
    %465 = vmatprep.subr.mxu0 0.0
    %466 = vmatpush1.msra.mxu0 0.0
    %467 = vmatprep.subr.mxu0 0.0
    %468 = vmatpush1.msra.mxu0 0.0
    %469 = vmatprep.subr.mxu0 0.0
    %470 = vmatpush1.msra.mxu0 0.0
    %471 = vmatprep.subr.mxu0 0.0
    %472 = vmatpush1.msra.mxu0 0.0
    %473 = vmatprep.subr.mxu0 0.0
    %474 = vmatpush1.msra.mxu0 0.0
    %475 = vmatprep.subr.mxu0 0.0
    %476 = vmatpush1.msra.mxu0 0.0
    %477 = vmatprep.subr.mxu0 0.0
    %478 = vmatpush1.msra.mxu0 0.0
    %479 = vmatprep.subr.mxu0 0.0
    %480 = vmatpush1.msra.mxu0 0.0
    %481 = vmatprep.subr.mxu0 0.0
    %482 = vmatpush1.msra.mxu0 0.0
    %483 = vmatprep.subr.mxu0 0.0
    %484 = vmatpush1.msra.mxu0 0.0
    %485 = vmatprep.subr.mxu0 0.0
    %486 = vmatpush1.msra.mxu0 0.0
    %487 = vmatprep.subr.mxu0 0.0
    %488 = vmatpush1.msra.mxu0 0.0
    %489 = vmatprep.mubr.f32.mxu0 0.0
    %490 = vmatmul.mubr.f32.gmra.mrb[0].mxu0 %v330
    %v491 = vpop.f32.mrb[0].mxu0
    %v492 = vadd.f32 %v420, %v491
    %v493 = vpop.f32.mrb[0].mxu0
    %494 = vmatprep.mubr.f32.mxu0 0.0
    %495 = vmatmul.mubr.f32.gmra.mrb[0].mxu0 %v333
    %v496 = vpop.f32.mrb[0].mxu0
    %v497 = vadd.f32 %v420, %v496
    %v498 = vpop.f32.mrb[0].mxu0
    %499 = vdwg.mxu0
    %v500 = vld [vmem:[#allocation7] sm:$0xf]
    %v501 = vld [vmem:[#allocation13] sm:$0x1]
    %v503 = vlaneseq
    %v504 = vshrl.u32 %v503, 7
    %v505 = vsub.s32 0, %v504
    %v506 = vrot.slane %v501, %v505
    %v509 = vsel %vm335, %v500, 0
    %511 = vmatprep.subr.mxu0 0.0
    %512 = vmatpush1.msra.mxu0 %v509
    %513 = vmatprep.subr.mxu0 0.0
    %514 = vmatpush1.msra.mxu0 0.0
    %515 = vmatprep.subr.mxu0 0.0
    %516 = vmatpush1.msra.mxu0 0.0
    %517 = vmatprep.subr.mxu0 0.0
    %518 = vmatpush1.msra.mxu0 0.0
    %519 = vmatprep.subr.mxu0 0.0
    %520 = vmatpush1.msra.mxu0 0.0
    %521 = vmatprep.subr.mxu0 0.0
    %522 = vmatpush1.msra.mxu0 0.0
    %523 = vmatprep.subr.mxu0 0.0
    %524 = vmatpush1.msra.mxu0 0.0
    %525 = vmatprep.subr.mxu0 0.0
    %526 = vmatpush1.msra.mxu0 0.0
    %527 = vmatprep.subr.mxu0 0.0
    %528 = vmatpush1.msra.mxu0 0.0
    %529 = vmatprep.subr.mxu0 0.0
    %530 = vmatpush1.msra.mxu0 0.0
    %531 = vmatprep.subr.mxu0 0.0
    %532 = vmatpush1.msra.mxu0 0.0
    %533 = vmatprep.subr.mxu0 0.0
    %534 = vmatpush1.msra.mxu0 0.0
    %535 = vmatprep.subr.mxu0 0.0
    %536 = vmatpush1.msra.mxu0 0.0
    %537 = vmatprep.subr.mxu0 0.0
    %538 = vmatpush1.msra.mxu0 0.0
    %539 = vmatprep.subr.mxu0 0.0
    %540 = vmatpush1.msra.mxu0 0.0
    %541 = vmatprep.subr.mxu0 0.0
    %542 = vmatpush1.msra.mxu0 0.0
    %543 = vmatprep.subr.mxu0 0.0
    %544 = vmatpush1.msra.mxu0 0.0
    %545 = vmatprep.subr.mxu0 0.0
    %546 = vmatpush1.msra.mxu0 0.0
    %547 = vmatprep.subr.mxu0 0.0
    %548 = vmatpush1.msra.mxu0 0.0
    %549 = vmatprep.subr.mxu0 0.0
    %550 = vmatpush1.msra.mxu0 0.0
    %551 = vmatprep.subr.mxu0 0.0
    %552 = vmatpush1.msra.mxu0 0.0
    %553 = vmatprep.subr.mxu0 0.0
    %554 = vmatpush1.msra.mxu0 0.0
    %555 = vmatprep.subr.mxu0 0.0
    %556 = vmatpush1.msra.mxu0 0.0
    %557 = vmatprep.subr.mxu0 0.0
    %558 = vmatpush1.msra.mxu0 0.0
    %559 = vmatprep.subr.mxu0 0.0
    %560 = vmatpush1.msra.mxu0 0.0
    %561 = vmatprep.subr.mxu0 0.0
    %562 = vmatpush1.msra.mxu0 0.0
    %563 = vmatprep.subr.mxu0 0.0
    %564 = vmatpush1.msra.mxu0 0.0
    %565 = vmatprep.subr.mxu0 0.0
    %566 = vmatpush1.msra.mxu0 0.0
    %567 = vmatprep.subr.mxu0 0.0
    %568 = vmatpush1.msra.mxu0 0.0
    %569 = vmatprep.subr.mxu0 0.0
    %570 = vmatpush1.msra.mxu0 0.0
    %571 = vmatprep.subr.mxu0 0.0
    %572 = vmatpush1.msra.mxu0 0.0
    %573 = vmatprep.subr.mxu0 0.0
    %574 = vmatpush1.msra.mxu0 0.0
    %575 = vmatprep.mubr.f32.mxu0 0.0
    %576 = vmatmul.mubr.f32.gmra.mrb[0].mxu0 %v330
    %v577 = vpop.f32.mrb[0].mxu0
    %v578 = vadd.f32 %v506, %v577
    %v579 = vpop.f32.mrb[0].mxu0
    %580 = vmatprep.mubr.f32.mxu0 0.0
    %581 = vmatmul.mubr.f32.gmra.mrb[0].mxu0 %v333
    %v582 = vpop.f32.mrb[0].mxu0
    %v583 = vadd.f32 %v506, %v582
    %v584 = vpop.f32.mrb[0].mxu0
    %585 = vdwg.mxu0
    %v586 = vld [vmem:[%s9] sm:$0xff]
    %v587 = vld [vmem:[%s9 + $0x8] sm:$0xff]
    %v588 = vld [vmem:[%s9 + $0x10] sm:$0xff]
    %v589 = vld [vmem:[%s9 + $0x18] sm:$0xff]
    %v590 = vld [vmem:[%s11] sm:$0xff]
    %v591 = vld [vmem:[%s11 + $0x8] sm:$0xff]
    %v592 = vld [vmem:[%s11 + $0x10] sm:$0xff]
    %v593 = vld [vmem:[%s11 + $0x18] sm:$0xff]
    %v594 = vld [vmem:[#allocation8] sm:$0xff]
    %v595 = vld [vmem:[#allocation8 + $0x8] sm:$0xff]
    %v596 = vld [vmem:[#allocation8 + $0x10] sm:$0xff]
    %v597 = vld [vmem:[#allocation8 + $0x18] sm:$0xff]
    %v598 = vld [vmem:[#allocation14] sm:$0x1]
    %vm599 = vcmask 261120
    %v601 = vsel %vm599, 0.0, 0
    %603 = vmatprep.subr.mxu0 0.0
    %604 = vmatpush1.msra.mxu0 %v586
    %605 = vmatprep.subr.mxu0 0.0
    %606 = vmatpush1.msra.mxu0 %v587
    %607 = vmatprep.subr.mxu0 0.0
    %608 = vmatpush1.msra.mxu0 %v588
    %609 = vmatprep.subr.mxu0 0.0
    %610 = vmatpush1.msra.mxu0 %v589
    %611 = vmatprep.subr.mxu0 0.0
    %612 = vmatpush1.msra.mxu0 0.0
    %613 = vmatprep.subr.mxu0 0.0
    %614 = vmatpush1.msra.mxu0 0.0
    %615 = vmatprep.subr.mxu0 0.0
    %616 = vmatpush1.msra.mxu0 0.0
    %617 = vmatprep.subr.mxu0 0.0
    %618 = vmatpush1.msra.mxu0 0.0
    %619 = vmatprep.subr.mxu0 0.0
    %620 = vmatpush1.msra.mxu0 0.0
    %621 = vmatprep.subr.mxu0 0.0
    %622 = vmatpush1.msra.mxu0 0.0
    %623 = vmatprep.subr.mxu0 0.0
    %624 = vmatpush1.msra.mxu0 0.0
    %625 = vmatprep.subr.mxu0 0.0
    %626 = vmatpush1.msra.mxu0 0.0
    %627 = vmatprep.subr.mxu0 0.0
    %628 = vmatpush1.msra.mxu0 0.0
    %629 = vmatprep.subr.mxu0 0.0
    %630 = vmatpush1.msra.mxu0 0.0
    %631 = vmatprep.subr.mxu0 0.0
    %632 = vmatpush1.msra.mxu0 0.0
    %633 = vmatprep.subr.mxu0 0.0
    %634 = vmatpush1.msra.mxu0 0.0
    %635 = vmatprep.subr.mxu0 0.0
    %636 = vmatpush1.msra.mxu0 0.0
    %637 = vmatprep.subr.mxu0 0.0
    %638 = vmatpush1.msra.mxu0 0.0
    %639 = vmatprep.subr.mxu0 0.0
    %640 = vmatpush1.msra.mxu0 0.0
    %641 = vmatprep.subr.mxu0 0.0
    %642 = vmatpush1.msra.mxu0 0.0
    %643 = vmatprep.subr.mxu0 0.0
    %644 = vmatpush1.msra.mxu0 0.0
    %645 = vmatprep.subr.mxu0 0.0
    %646 = vmatpush1.msra.mxu0 0.0
    %647 = vmatprep.subr.mxu0 0.0
    %648 = vmatpush1.msra.mxu0 0.0
    %649 = vmatprep.subr.mxu0 0.0
    %650 = vmatpush1.msra.mxu0 0.0
    %651 = vmatprep.subr.mxu0 0.0
    %652 = vmatpush1.msra.mxu0 0.0
    %653 = vmatprep.subr.mxu0 0.0
    %654 = vmatpush1.msra.mxu0 0.0
    %655 = vmatprep.subr.mxu0 0.0
    %656 = vmatpush1.msra.mxu0 0.0
    %657 = vmatprep.subr.mxu0 0.0
    %658 = vmatpush1.msra.mxu0 0.0
    %659 = vmatprep.subr.mxu0 0.0
    %660 = vmatpush1.msra.mxu0 0.0
    %661 = vmatprep.subr.mxu0 0.0
    %662 = vmatpush1.msra.mxu0 0.0
    %663 = vmatprep.subr.mxu0 0.0
    %664 = vmatpush1.msra.mxu0 0.0
    %665 = vmatprep.subr.mxu0 0.0
    %666 = vmatpush1.msra.mxu0 0.0
    %667 = vmatprep.mubr.f32.mxu0 0.0
    %668 = vmatmul.mubr.f32.gmra.mrb[0].mxu0 %v601
    %v669 = vpop.f32.mrb[0].mxu0
    %v670 = vadd.f32 0.0, %v669
    %v671 = vpop.f32.mrb[0].mxu0
    %672 = vdwg.mxu0
    %673 = vmatprep.subr.mxu0 0.0
    %674 = vmatpush1.msra.mxu0 %v590
    %675 = vmatprep.subr.mxu0 0.0
    %676 = vmatpush1.msra.mxu0 %v591
    %677 = vmatprep.subr.mxu0 0.0
    %678 = vmatpush1.msra.mxu0 %v592
    %679 = vmatprep.subr.mxu0 0.0
    %680 = vmatpush1.msra.mxu0 %v593
    %681 = vmatprep.subr.mxu0 0.0
    %682 = vmatpush1.msra.mxu0 0.0
    %683 = vmatprep.subr.mxu0 0.0
    %684 = vmatpush1.msra.mxu0 0.0
    %685 = vmatprep.subr.mxu0 0.0
    %686 = vmatpush1.msra.mxu0 0.0
    %687 = vmatprep.subr.mxu0 0.0
    %688 = vmatpush1.msra.mxu0 0.0
    %689 = vmatprep.subr.mxu0 0.0
    %690 = vmatpush1.msra.mxu0 0.0
    %691 = vmatprep.subr.mxu0 0.0
    %692 = vmatpush1.msra.mxu0 0.0
    %693 = vmatprep.subr.mxu0 0.0
    %694 = vmatpush1.msra.mxu0 0.0
    %695 = vmatprep.subr.mxu0 0.0
    %696 = vmatpush1.msra.mxu0 0.0
    %697 = vmatprep.subr.mxu0 0.0
    %698 = vmatpush1.msra.mxu0 0.0
    %699 = vmatprep.subr.mxu0 0.0
    %700 = vmatpush1.msra.mxu0 0.0
    %701 = vmatprep.subr.mxu0 0.0
    %702 = vmatpush1.msra.mxu0 0.0
    %703 = vmatprep.subr.mxu0 0.0
    %704 = vmatpush1.msra.mxu0 0.0
    %705 = vmatprep.subr.mxu0 0.0
    %706 = vmatpush1.msra.mxu0 0.0
    %707 = vmatprep.subr.mxu0 0.0
    %708 = vmatpush1.msra.mxu0 0.0
    %709 = vmatprep.subr.mxu0 0.0
    %710 = vmatpush1.msra.mxu0 0.0
    %711 = vmatprep.subr.mxu0 0.0
    %712 = vmatpush1.msra.mxu0 0.0
    %713 = vmatprep.subr.mxu0 0.0
    %714 = vmatpush1.msra.mxu0 0.0
    %715 = vmatprep.subr.mxu0 0.0
    %716 = vmatpush1.msra.mxu0 0.0
    %717 = vmatprep.subr.mxu0 0.0
    %718 = vmatpush1.msra.mxu0 0.0
    %719 = vmatprep.subr.mxu0 0.0
    %720 = vmatpush1.msra.mxu0 0.0
    %721 = vmatprep.subr.mxu0 0.0
    %722 = vmatpush1.msra.mxu0 0.0
    %723 = vmatprep.subr.mxu0 0.0
    %724 = vmatpush1.msra.mxu0 0.0
    %725 = vmatprep.subr.mxu0 0.0
    %726 = vmatpush1.msra.mxu0 0.0
    %727 = vmatprep.subr.mxu0 0.0
    %728 = vmatpush1.msra.mxu0 0.0
    %729 = vmatprep.subr.mxu0 0.0
    %730 = vmatpush1.msra.mxu0 0.0
    %731 = vmatprep.subr.mxu0 0.0
    %732 = vmatpush1.msra.mxu0 0.0
    %733 = vmatprep.subr.mxu0 0.0
    %734 = vmatpush1.msra.mxu0 0.0
    %735 = vmatprep.subr.mxu0 0.0
    %736 = vmatpush1.msra.mxu0 0.0
    %737 = vmatprep.mubr.f32.mxu0 0.0
    %738 = vmatmul.mubr.f32.gmra.mrb[0].mxu0 %v601
    %v739 = vpop.f32.mrb[0].mxu0
    %v740 = vadd.f32 0.0, %v739
    %v741 = vpop.f32.mrb[0].mxu0
    %742 = vdwg.mxu0
    %v743 = vadd.f32 %v406, %v670
    %v744 = vxor.u32 %v743, 2147483648
    %v745 = vmul.f32 %v744, 1.442695
    %v746 = vpow.pop %v745
    %v747 = vadd.f32 %v746, 1.0
    %v748 = vrcp.pop %v747
    %v749 = vmul.f32 1.0, %v748
    %v750 = vadd.f32 %v492, %v740
    %v751 = vxor.u32 %v750, 2147483648
    %v752 = vmul.f32 %v751, 1.442695
    %v753 = vpow.pop %v752
    %v754 = vadd.f32 %v753, 1.0
    %v755 = vrcp.pop %v754
    %v756 = vmul.f32 1.0, %v755
    %v758 = vlaneseq
    %v759 = vshrl.u32 %v758, 7
    %v760 = vsub.s32 0, %v759
    %v761 = vrot.slane %v598, %v760
    %763 = vmatprep.subr.mxu0 0.0
    %764 = vmatpush1.msra.mxu0 %v594
    %765 = vmatprep.subr.mxu0 0.0
    %766 = vmatpush1.msra.mxu0 %v595
    %767 = vmatprep.subr.mxu0 0.0
    %768 = vmatpush1.msra.mxu0 %v596
    %769 = vmatprep.subr.mxu0 0.0
    %770 = vmatpush1.msra.mxu0 %v597
    %771 = vmatprep.subr.mxu0 0.0
    %772 = vmatpush1.msra.mxu0 0.0
    %773 = vmatprep.subr.mxu0 0.0
    %774 = vmatpush1.msra.mxu0 0.0
    %775 = vmatprep.subr.mxu0 0.0
    %776 = vmatpush1.msra.mxu0 0.0
    %777 = vmatprep.subr.mxu0 0.0
    %778 = vmatpush1.msra.mxu0 0.0
    %779 = vmatprep.subr.mxu0 0.0
    %780 = vmatpush1.msra.mxu0 0.0
    %781 = vmatprep.subr.mxu0 0.0
    %782 = vmatpush1.msra.mxu0 0.0
    %783 = vmatprep.subr.mxu0 0.0
    %784 = vmatpush1.msra.mxu0 0.0
    %785 = vmatprep.subr.mxu0 0.0
    %786 = vmatpush1.msra.mxu0 0.0
    %787 = vmatprep.subr.mxu0 0.0
    %788 = vmatpush1.msra.mxu0 0.0
    %789 = vmatprep.subr.mxu0 0.0
    %790 = vmatpush1.msra.mxu0 0.0
    %791 = vmatprep.subr.mxu0 0.0
    %792 = vmatpush1.msra.mxu0 0.0
    %793 = vmatprep.subr.mxu0 0.0
    %794 = vmatpush1.msra.mxu0 0.0
    %795 = vmatprep.subr.mxu0 0.0
    %796 = vmatpush1.msra.mxu0 0.0
    %797 = vmatprep.subr.mxu0 0.0
    %798 = vmatpush1.msra.mxu0 0.0
    %799 = vmatprep.subr.mxu0 0.0
    %800 = vmatpush1.msra.mxu0 0.0
    %801 = vmatprep.subr.mxu0 0.0
    %802 = vmatpush1.msra.mxu0 0.0
    %803 = vmatprep.subr.mxu0 0.0
    %804 = vmatpush1.msra.mxu0 0.0
    %805 = vmatprep.subr.mxu0 0.0
    %806 = vmatpush1.msra.mxu0 0.0
    %807 = vmatprep.subr.mxu0 0.0
    %808 = vmatpush1.msra.mxu0 0.0
    %809 = vmatprep.subr.mxu0 0.0
    %810 = vmatpush1.msra.mxu0 0.0
    %811 = vmatprep.subr.mxu0 0.0
    %812 = vmatpush1.msra.mxu0 0.0
    %813 = vmatprep.subr.mxu0 0.0
    %814 = vmatpush1.msra.mxu0 0.0
    %815 = vmatprep.subr.mxu0 0.0
    %816 = vmatpush1.msra.mxu0 0.0
    %817 = vmatprep.subr.mxu0 0.0
    %818 = vmatpush1.msra.mxu0 0.0
    %819 = vmatprep.subr.mxu0 0.0
    %820 = vmatpush1.msra.mxu0 0.0
    %821 = vmatprep.subr.mxu0 0.0
    %822 = vmatpush1.msra.mxu0 0.0
    %823 = vmatprep.subr.mxu0 0.0
    %824 = vmatpush1.msra.mxu0 0.0
    %825 = vmatprep.subr.mxu0 0.0
    %826 = vmatpush1.msra.mxu0 0.0
    %827 = vmatprep.mubr.f32.mxu0 0.0
    %828 = vmatmul.mubr.f32.gmra.mrb[0].mxu0 %v601
    %v829 = vpop.f32.mrb[0].mxu0
    %v830 = vadd.f32 %v761, %v829
    %v831 = vpop.f32.mrb[0].mxu0
    %832 = vdwg.mxu0
    %v833 = vmul.f32 %v749, %v830
    %v834 = vadd.f32 %v578, %v833
    %v835 = vtanh.pop %v834
    %v836 = vsub.f32 1.0, %v756
    %v837 = vmul.f32 %v836, %v835
    %v838 = vmul.f32 %v756, 0.0
    %v839 = vadd.f32 %v837, %v838
    %v841 = vsel %vm599, %v839, 0
    %843 = vmatprep.subr.mxu0 0.0
    %844 = vmatpush1.msra.mxu0 %v586
    %845 = vmatprep.subr.mxu0 0.0
    %846 = vmatpush1.msra.mxu0 %v587
    %847 = vmatprep.subr.mxu0 0.0
    %848 = vmatpush1.msra.mxu0 %v588
    %849 = vmatprep.subr.mxu0 0.0
    %850 = vmatpush1.msra.mxu0 %v589
    %851 = vmatprep.subr.mxu0 0.0
    %852 = vmatpush1.msra.mxu0 0.0
    %853 = vmatprep.subr.mxu0 0.0
    %854 = vmatpush1.msra.mxu0 0.0
    %855 = vmatprep.subr.mxu0 0.0
    %856 = vmatpush1.msra.mxu0 0.0
    %857 = vmatprep.subr.mxu0 0.0
    %858 = vmatpush1.msra.mxu0 0.0
    %859 = vmatprep.subr.mxu0 0.0
    %860 = vmatpush1.msra.mxu0 0.0
    %861 = vmatprep.subr.mxu0 0.0
    %862 = vmatpush1.msra.mxu0 0.0
    %863 = vmatprep.subr.mxu0 0.0
    %864 = vmatpush1.msra.mxu0 0.0
    %865 = vmatprep.subr.mxu0 0.0
    %866 = vmatpush1.msra.mxu0 0.0
    %867 = vmatprep.subr.mxu0 0.0
    %868 = vmatpush1.msra.mxu0 0.0
    %869 = vmatprep.subr.mxu0 0.0
    %870 = vmatpush1.msra.mxu0 0.0
    %871 = vmatprep.subr.mxu0 0.0
    %872 = vmatpush1.msra.mxu0 0.0
    %873 = vmatprep.subr.mxu0 0.0
    %874 = vmatpush1.msra.mxu0 0.0
    %875 = vmatprep.subr.mxu0 0.0
    %876 = vmatpush1.msra.mxu0 0.0
    %877 = vmatprep.subr.mxu0 0.0
    %878 = vmatpush1.msra.mxu0 0.0
    %879 = vmatprep.subr.mxu0 0.0
    %880 = vmatpush1.msra.mxu0 0.0
    %881 = vmatprep.subr.mxu0 0.0
    %882 = vmatpush1.msra.mxu0 0.0
    %883 = vmatprep.subr.mxu0 0.0
    %884 = vmatpush1.msra.mxu0 0.0
    %885 = vmatprep.subr.mxu0 0.0
    %886 = vmatpush1.msra.mxu0 0.0
    %887 = vmatprep.subr.mxu0 0.0
    %888 = vmatpush1.msra.mxu0 0.0
    %889 = vmatprep.subr.mxu0 0.0
    %890 = vmatpush1.msra.mxu0 0.0
    %891 = vmatprep.subr.mxu0 0.0
    %892 = vmatpush1.msra.mxu0 0.0
    %893 = vmatprep.subr.mxu0 0.0
    %894 = vmatpush1.msra.mxu0 0.0
    %895 = vmatprep.subr.mxu0 0.0
    %896 = vmatpush1.msra.mxu0 0.0
    %897 = vmatprep.subr.mxu0 0.0
    %898 = vmatpush1.msra.mxu0 0.0
    %899 = vmatprep.subr.mxu0 0.0
    %900 = vmatpush1.msra.mxu0 0.0
    %901 = vmatprep.subr.mxu0 0.0
    %902 = vmatpush1.msra.mxu0 0.0
    %903 = vmatprep.subr.mxu0 0.0
    %904 = vmatpush1.msra.mxu0 0.0
    %905 = vmatprep.subr.mxu0 0.0
    %906 = vmatpush1.msra.mxu0 0.0
    %907 = vmatprep.mubr.f32.mxu0 0.0
    %908 = vmatmul.mubr.f32.gmra.mrb[0].mxu0 %v841
    %v909 = vpop.f32.mrb[0].mxu0
    %v910 = vadd.f32 0.0, %v909
    %v911 = vpop.f32.mrb[0].mxu0
    %912 = vdwg.mxu0
    %913 = vmatprep.subr.mxu0 0.0
    %914 = vmatpush1.msra.mxu0 %v590
    %915 = vmatprep.subr.mxu0 0.0
    %916 = vmatpush1.msra.mxu0 %v591
    %917 = vmatprep.subr.mxu0 0.0
    %918 = vmatpush1.msra.mxu0 %v592
    %919 = vmatprep.subr.mxu0 0.0
    %920 = vmatpush1.msra.mxu0 %v593
    %921 = vmatprep.subr.mxu0 0.0
    %922 = vmatpush1.msra.mxu0 0.0
    %923 = vmatprep.subr.mxu0 0.0
    %924 = vmatpush1.msra.mxu0 0.0
    %925 = vmatprep.subr.mxu0 0.0
    %926 = vmatpush1.msra.mxu0 0.0
    %927 = vmatprep.subr.mxu0 0.0
    %928 = vmatpush1.msra.mxu0 0.0
    %929 = vmatprep.subr.mxu0 0.0
    %930 = vmatpush1.msra.mxu0 0.0
    %931 = vmatprep.subr.mxu0 0.0
    %932 = vmatpush1.msra.mxu0 0.0
    %933 = vmatprep.subr.mxu0 0.0
    %934 = vmatpush1.msra.mxu0 0.0
    %935 = vmatprep.subr.mxu0 0.0
    %936 = vmatpush1.msra.mxu0 0.0
    %937 = vmatprep.subr.mxu0 0.0
    %938 = vmatpush1.msra.mxu0 0.0
    %939 = vmatprep.subr.mxu0 0.0
    %940 = vmatpush1.msra.mxu0 0.0
    %941 = vmatprep.subr.mxu0 0.0
    %942 = vmatpush1.msra.mxu0 0.0
    %943 = vmatprep.subr.mxu0 0.0
    %944 = vmatpush1.msra.mxu0 0.0
    %945 = vmatprep.subr.mxu0 0.0
    %946 = vmatpush1.msra.mxu0 0.0
    %947 = vmatprep.subr.mxu0 0.0
    %948 = vmatpush1.msra.mxu0 0.0
    %949 = vmatprep.subr.mxu0 0.0
    %950 = vmatpush1.msra.mxu0 0.0
    %951 = vmatprep.subr.mxu0 0.0
    %952 = vmatpush1.msra.mxu0 0.0
    %953 = vmatprep.subr.mxu0 0.0
    %954 = vmatpush1.msra.mxu0 0.0
    %955 = vmatprep.subr.mxu0 0.0
    %956 = vmatpush1.msra.mxu0 0.0
    %957 = vmatprep.subr.mxu0 0.0
    %958 = vmatpush1.msra.mxu0 0.0
    %959 = vmatprep.subr.mxu0 0.0
    %960 = vmatpush1.msra.mxu0 0.0
    %961 = vmatprep.subr.mxu0 0.0
    %962 = vmatpush1.msra.mxu0 0.0
    %963 = vmatprep.subr.mxu0 0.0
    %964 = vmatpush1.msra.mxu0 0.0
    %965 = vmatprep.subr.mxu0 0.0
    %966 = vmatpush1.msra.mxu0 0.0
    %967 = vmatprep.subr.mxu0 0.0
    %968 = vmatpush1.msra.mxu0 0.0
    %969 = vmatprep.subr.mxu0 0.0
    %970 = vmatpush1.msra.mxu0 0.0
    %971 = vmatprep.subr.mxu0 0.0
    %972 = vmatpush1.msra.mxu0 0.0
    %973 = vmatprep.subr.mxu0 0.0
    %974 = vmatpush1.msra.mxu0 0.0
    %975 = vmatprep.subr.mxu0 0.0
    %976 = vmatpush1.msra.mxu0 0.0
    %977 = vmatprep.mubr.f32.mxu0 0.0
    %978 = vmatmul.mubr.f32.gmra.mrb[0].mxu0 %v841
    %v979 = vpop.f32.mrb[0].mxu0
    %v980 = vadd.f32 0.0, %v979
    %v981 = vpop.f32.mrb[0].mxu0
    %982 = vdwg.mxu0
    %v984 = vrot.slane %v910, 6
    %v986 = vadd.f32 %v406, %v984
    %v987 = vxor.u32 %v986, 2147483648
    %v988 = vmul.f32 %v987, 1.442695
    %v989 = vpow.pop %v988
    %v990 = vadd.f32 %v989, 1.0
    %v991 = vrcp.pop %v990
    %v992 = vmul.f32 1.0, %v991
    %v994 = vrot.slane %v980, 6
    %v996 = vadd.f32 %v492, %v994
    %v997 = vxor.u32 %v996, 2147483648
    %v998 = vmul.f32 %v997, 1.442695
    %v999 = vpow.pop %v998
    %v1000 = vadd.f32 %v999, 1.0
    %v1001 = vrcp.pop %v1000
    %v1002 = vmul.f32 1.0, %v1001
    %1003 = vmatprep.subr.mxu0 0.0
    %1004 = vmatpush1.msra.mxu0 %v594
    %1005 = vmatprep.subr.mxu0 0.0
    %1006 = vmatpush1.msra.mxu0 %v595
    %1007 = vmatprep.subr.mxu0 0.0
    %1008 = vmatpush1.msra.mxu0 %v596
    %1009 = vmatprep.subr.mxu0 0.0
    %1010 = vmatpush1.msra.mxu0 %v597
    %1011 = vmatprep.subr.mxu0 0.0
    %1012 = vmatpush1.msra.mxu0 0.0
    %1013 = vmatprep.subr.mxu0 0.0
    %1014 = vmatpush1.msra.mxu0 0.0
    %1015 = vmatprep.subr.mxu0 0.0
    %1016 = vmatpush1.msra.mxu0 0.0
    %1017 = vmatprep.subr.mxu0 0.0
    %1018 = vmatpush1.msra.mxu0 0.0
    %1019 = vmatprep.subr.mxu0 0.0
    %1020 = vmatpush1.msra.mxu0 0.0
    %1021 = vmatprep.subr.mxu0 0.0
    %1022 = vmatpush1.msra.mxu0 0.0
    %1023 = vmatprep.subr.mxu0 0.0
    %1024 = vmatpush1.msra.mxu0 0.0
    %1025 = vmatprep.subr.mxu0 0.0
    %1026 = vmatpush1.msra.mxu0 0.0
    %1027 = vmatprep.subr.mxu0 0.0
    %1028 = vmatpush1.msra.mxu0 0.0
    %1029 = vmatprep.subr.mxu0 0.0
    %1030 = vmatpush1.msra.mxu0 0.0
    %1031 = vmatprep.subr.mxu0 0.0
    %1032 = vmatpush1.msra.mxu0 0.0
    %1033 = vmatprep.subr.mxu0 0.0
    %1034 = vmatpush1.msra.mxu0 0.0
    %1035 = vmatprep.subr.mxu0 0.0
    %1036 = vmatpush1.msra.mxu0 0.0
    %1037 = vmatprep.subr.mxu0 0.0
    %1038 = vmatpush1.msra.mxu0 0.0
    %1039 = vmatprep.subr.mxu0 0.0
    %1040 = vmatpush1.msra.mxu0 0.0
    %1041 = vmatprep.subr.mxu0 0.0
    %1042 = vmatpush1.msra.mxu0 0.0
    %1043 = vmatprep.subr.mxu0 0.0
    %1044 = vmatpush1.msra.mxu0 0.0
    %1045 = vmatprep.subr.mxu0 0.0
    %1046 = vmatpush1.msra.mxu0 0.0
    %1047 = vmatprep.subr.mxu0 0.0
    %1048 = vmatpush1.msra.mxu0 0.0
    %1049 = vmatprep.subr.mxu0 0.0
    %1050 = vmatpush1.msra.mxu0 0.0
    %1051 = vmatprep.subr.mxu0 0.0
    %1052 = vmatpush1.msra.mxu0 0.0
    %1053 = vmatprep.subr.mxu0 0.0
    %1054 = vmatpush1.msra.mxu0 0.0
    %1055 = vmatprep.subr.mxu0 0.0
    %1056 = vmatpush1.msra.mxu0 0.0
    %1057 = vmatprep.subr.mxu0 0.0
    %1058 = vmatpush1.msra.mxu0 0.0
    %1059 = vmatprep.subr.mxu0 0.0
    %1060 = vmatpush1.msra.mxu0 0.0
    %1061 = vmatprep.subr.mxu0 0.0
    %1062 = vmatpush1.msra.mxu0 0.0
    %1063 = vmatprep.subr.mxu0 0.0
    %1064 = vmatpush1.msra.mxu0 0.0
    %1065 = vmatprep.subr.mxu0 0.0
    %1066 = vmatpush1.msra.mxu0 0.0
    %1067 = vmatprep.mubr.f32.mxu0 0.0
    %1068 = vmatmul.mubr.f32.gmra.mrb[0].mxu0 %v841
    %v1069 = vpop.f32.mrb[0].mxu0
    %v1070 = vadd.f32 %v761, %v1069
    %v1071 = vpop.f32.mrb[0].mxu0
    %1072 = vdwg.mxu0
    %v1074 = vrot.slane %v1070, 6
    %v1076 = vmul.f32 %v992, %v1074
    %v1077 = vadd.f32 %v578, %v1076
    %v1078 = vtanh.pop %v1077
    %v1079 = vsub.f32 1.0, %v1002
    %v1080 = vmul.f32 %v1079, %v1078
    %v1081 = vrot.slane %v839, 6
    %v1083 = vmul.f32 %v1002, %v1081
    %v1084 = vadd.f32 %v1080, %v1083
    %v1086 = vrot.slane %v1084, 2
    %v1087 = vsel %vm599, %v1086, 0
    %1089 = vmatprep.subr.mxu0 0.0
    %1090 = vmatpush1.msra.mxu0 %v586
    %1091 = vmatprep.subr.mxu0 0.0
    %1092 = vmatpush1.msra.mxu0 %v587
    %1093 = vmatprep.subr.mxu0 0.0
    %1094 = vmatpush1.msra.mxu0 %v588
    %1095 = vmatprep.subr.mxu0 0.0
    %1096 = vmatpush1.msra.mxu0 %v589
    %1097 = vmatprep.subr.mxu0 0.0
    %1098 = vmatpush1.msra.mxu0 0.0
    %1099 = vmatprep.subr.mxu0 0.0
    %1100 = vmatpush1.msra.mxu0 0.0
    %1101 = vmatprep.subr.mxu0 0.0
    %1102 = vmatpush1.msra.mxu0 0.0
    %1103 = vmatprep.subr.mxu0 0.0
    %1104 = vmatpush1.msra.mxu0 0.0
    %1105 = vmatprep.subr.mxu0 0.0
    %1106 = vmatpush1.msra.mxu0 0.0
    %1107 = vmatprep.subr.mxu0 0.0
    %1108 = vmatpush1.msra.mxu0 0.0
    %1109 = vmatprep.subr.mxu0 0.0
    %1110 = vmatpush1.msra.mxu0 0.0
    %1111 = vmatprep.subr.mxu0 0.0
    %1112 = vmatpush1.msra.mxu0 0.0
    %1113 = vmatprep.subr.mxu0 0.0
    %1114 = vmatpush1.msra.mxu0 0.0
    %1115 = vmatprep.subr.mxu0 0.0
    %1116 = vmatpush1.msra.mxu0 0.0
    %1117 = vmatprep.subr.mxu0 0.0
    %1118 = vmatpush1.msra.mxu0 0.0
    %1119 = vmatprep.subr.mxu0 0.0
    %1120 = vmatpush1.msra.mxu0 0.0
    %1121 = vmatprep.subr.mxu0 0.0
    %1122 = vmatpush1.msra.mxu0 0.0
    %1123 = vmatprep.subr.mxu0 0.0
    %1124 = vmatpush1.msra.mxu0 0.0
    %1125 = vmatprep.subr.mxu0 0.0
    %1126 = vmatpush1.msra.mxu0 0.0
    %1127 = vmatprep.subr.mxu0 0.0
    %1128 = vmatpush1.msra.mxu0 0.0
    %1129 = vmatprep.subr.mxu0 0.0
    %1130 = vmatpush1.msra.mxu0 0.0
    %1131 = vmatprep.subr.mxu0 0.0
    %1132 = vmatpush1.msra.mxu0 0.0
    %1133 = vmatprep.subr.mxu0 0.0
    %1134 = vmatpush1.msra.mxu0 0.0
    %1135 = vmatprep.subr.mxu0 0.0
    %1136 = vmatpush1.msra.mxu0 0.0
    %1137 = vmatprep.subr.mxu0 0.0
    %1138 = vmatpush1.msra.mxu0 0.0
    %1139 = vmatprep.subr.mxu0 0.0
    %1140 = vmatpush1.msra.mxu0 0.0
    %1141 = vmatprep.subr.mxu0 0.0
    %1142 = vmatpush1.msra.mxu0 0.0
    %1143 = vmatprep.subr.mxu0 0.0
    %1144 = vmatpush1.msra.mxu0 0.0
    %1145 = vmatprep.subr.mxu0 0.0
    %1146 = vmatpush1.msra.mxu0 0.0
    %1147 = vmatprep.subr.mxu0 0.0
    %1148 = vmatpush1.msra.mxu0 0.0
    %1149 = vmatprep.subr.mxu0 0.0
    %1150 = vmatpush1.msra.mxu0 0.0
    %1151 = vmatprep.subr.mxu0 0.0
    %1152 = vmatpush1.msra.mxu0 0.0
    %1153 = vmatprep.mubr.f32.mxu0 0.0
    %1154 = vmatmul.mubr.f32.gmra.mrb[0].mxu0 %v1087
    %v1155 = vpop.f32.mrb[0].mxu0
    %v1156 = vadd.f32 0.0, %v1155
    %v1157 = vpop.f32.mrb[0].mxu0
    %1158 = vdwg.mxu0
    %1159 = vmatprep.subr.mxu0 0.0
    %1160 = vmatpush1.msra.mxu0 %v590
    %1161 = vmatprep.subr.mxu0 0.0
    %1162 = vmatpush1.msra.mxu0 %v591
    %1163 = vmatprep.subr.mxu0 0.0
    %1164 = vmatpush1.msra.mxu0 %v592
    %1165 = vmatprep.subr.mxu0 0.0
    %1166 = vmatpush1.msra.mxu0 %v593
    %1167 = vmatprep.subr.mxu0 0.0
    %1168 = vmatpush1.msra.mxu0 0.0
    %1169 = vmatprep.subr.mxu0 0.0
    %1170 = vmatpush1.msra.mxu0 0.0
    %1171 = vmatprep.subr.mxu0 0.0
    %1172 = vmatpush1.msra.mxu0 0.0
    %1173 = vmatprep.subr.mxu0 0.0
    %1174 = vmatpush1.msra.mxu0 0.0
    %1175 = vmatprep.subr.mxu0 0.0
    %1176 = vmatpush1.msra.mxu0 0.0
    %1177 = vmatprep.subr.mxu0 0.0
    %1178 = vmatpush1.msra.mxu0 0.0
    %1179 = vmatprep.subr.mxu0 0.0
    %1180 = vmatpush1.msra.mxu0 0.0
    %1181 = vmatprep.subr.mxu0 0.0
    %1182 = vmatpush1.msra.mxu0 0.0
    %1183 = vmatprep.subr.mxu0 0.0
    %1184 = vmatpush1.msra.mxu0 0.0
    %1185 = vmatprep.subr.mxu0 0.0
    %1186 = vmatpush1.msra.mxu0 0.0
    %1187 = vmatprep.subr.mxu0 0.0
    %1188 = vmatpush1.msra.mxu0 0.0
    %1189 = vmatprep.subr.mxu0 0.0
    %1190 = vmatpush1.msra.mxu0 0.0
    %1191 = vmatprep.subr.mxu0 0.0
    %1192 = vmatpush1.msra.mxu0 0.0
    %1193 = vmatprep.subr.mxu0 0.0
    %1194 = vmatpush1.msra.mxu0 0.0
    %1195 = vmatprep.subr.mxu0 0.0
    %1196 = vmatpush1.msra.mxu0 0.0
    %1197 = vmatprep.subr.mxu0 0.0
    %1198 = vmatpush1.msra.mxu0 0.0
    %1199 = vmatprep.subr.mxu0 0.0
    %1200 = vmatpush1.msra.mxu0 0.0
    %1201 = vmatprep.subr.mxu0 0.0
    %1202 = vmatpush1.msra.mxu0 0.0
    %1203 = vmatprep.subr.mxu0 0.0
    %1204 = vmatpush1.msra.mxu0 0.0
    %1205 = vmatprep.subr.mxu0 0.0
    %1206 = vmatpush1.msra.mxu0 0.0
    %1207 = vmatprep.subr.mxu0 0.0
    %1208 = vmatpush1.msra.mxu0 0.0
    %1209 = vmatprep.subr.mxu0 0.0
    %1210 = vmatpush1.msra.mxu0 0.0
    %1211 = vmatprep.subr.mxu0 0.0
    %1212 = vmatpush1.msra.mxu0 0.0
    %1213 = vmatprep.subr.mxu0 0.0
    %1214 = vmatpush1.msra.mxu0 0.0
    %1215 = vmatprep.subr.mxu0 0.0
    %1216 = vmatpush1.msra.mxu0 0.0
    %1217 = vmatprep.subr.mxu0 0.0
    %1218 = vmatpush1.msra.mxu0 0.0
    %1219 = vmatprep.subr.mxu0 0.0
    %1220 = vmatpush1.msra.mxu0 0.0
    %1221 = vmatprep.subr.mxu0 0.0
    %1222 = vmatpush1.msra.mxu0 0.0
    %1223 = vmatprep.mubr.f32.mxu0 0.0
    %1224 = vmatmul.mubr.f32.gmra.mrb[0].mxu0 %v1087
    %v1225 = vpop.f32.mrb[0].mxu0
    %v1226 = vadd.f32 0.0, %v1225
    %v1227 = vpop.f32.mrb[0].mxu0
    %1228 = vdwg.mxu0
    %v1230 = vrot.slane %v1156, 4
    %v1232 = vadd.f32 %v406, %v1230
    %v1233 = vxor.u32 %v1232, 2147483648
    %v1234 = vmul.f32 %v1233, 1.442695
    %v1235 = vpow.pop %v1234
    %v1236 = vadd.f32 %v1235, 1.0
    %v1237 = vrcp.pop %v1236
    %v1238 = vmul.f32 1.0, %v1237
    %v1240 = vrot.slane %v1226, 4
    %v1242 = vadd.f32 %v492, %v1240
    %v1243 = vxor.u32 %v1242, 2147483648
    %v1244 = vmul.f32 %v1243, 1.442695
    %v1245 = vpow.pop %v1244
    %v1246 = vadd.f32 %v1245, 1.0
    %v1247 = vrcp.pop %v1246
    %v1248 = vmul.f32 1.0, %v1247
    %1249 = vmatprep.subr.mxu0 0.0
    %1250 = vmatpush1.msra.mxu0 %v594
    %1251 = vmatprep.subr.mxu0 0.0
    %1252 = vmatpush1.msra.mxu0 %v595
    %1253 = vmatprep.subr.mxu0 0.0
    %1254 = vmatpush1.msra.mxu0 %v596
    %1255 = vmatprep.subr.mxu0 0.0
    %1256 = vmatpush1.msra.mxu0 %v597
    %1257 = vmatprep.subr.mxu0 0.0
    %1258 = vmatpush1.msra.mxu0 0.0
    %1259 = vmatprep.subr.mxu0 0.0
    %1260 = vmatpush1.msra.mxu0 0.0
    %1261 = vmatprep.subr.mxu0 0.0
    %1262 = vmatpush1.msra.mxu0 0.0
    %1263 = vmatprep.subr.mxu0 0.0
    %1264 = vmatpush1.msra.mxu0 0.0
    %1265 = vmatprep.subr.mxu0 0.0
    %1266 = vmatpush1.msra.mxu0 0.0
    %1267 = vmatprep.subr.mxu0 0.0
    %1268 = vmatpush1.msra.mxu0 0.0
    %1269 = vmatprep.subr.mxu0 0.0
    %1270 = vmatpush1.msra.mxu0 0.0
    %1271 = vmatprep.subr.mxu0 0.0
    %1272 = vmatpush1.msra.mxu0 0.0
    %1273 = vmatprep.subr.mxu0 0.0
    %1274 = vmatpush1.msra.mxu0 0.0
    %1275 = vmatprep.subr.mxu0 0.0
    %1276 = vmatpush1.msra.mxu0 0.0
    %1277 = vmatprep.subr.mxu0 0.0
    %1278 = vmatpush1.msra.mxu0 0.0
    %1279 = vmatprep.subr.mxu0 0.0
    %1280 = vmatpush1.msra.mxu0 0.0
    %1281 = vmatprep.subr.mxu0 0.0
    %1282 = vmatpush1.msra.mxu0 0.0
    %1283 = vmatprep.subr.mxu0 0.0
    %1284 = vmatpush1.msra.mxu0 0.0
    %1285 = vmatprep.subr.mxu0 0.0
    %1286 = vmatpush1.msra.mxu0 0.0
    %1287 = vmatprep.subr.mxu0 0.0
    %1288 = vmatpush1.msra.mxu0 0.0
    %1289 = vmatprep.subr.mxu0 0.0
    %1290 = vmatpush1.msra.mxu0 0.0
    %1291 = vmatprep.subr.mxu0 0.0
    %1292 = vmatpush1.msra.mxu0 0.0
    %1293 = vmatprep.subr.mxu0 0.0
    %1294 = vmatpush1.msra.mxu0 0.0
    %1295 = vmatprep.subr.mxu0 0.0
    %1296 = vmatpush1.msra.mxu0 0.0
    %1297 = vmatprep.subr.mxu0 0.0
    %1298 = vmatpush1.msra.mxu0 0.0
    %1299 = vmatprep.subr.mxu0 0.0
    %1300 = vmatpush1.msra.mxu0 0.0
    %1301 = vmatprep.subr.mxu0 0.0
    %1302 = vmatpush1.msra.mxu0 0.0
    %1303 = vmatprep.subr.mxu0 0.0
    %1304 = vmatpush1.msra.mxu0 0.0
    %1305 = vmatprep.subr.mxu0 0.0
    %1306 = vmatpush1.msra.mxu0 0.0
    %1307 = vmatprep.subr.mxu0 0.0
    %1308 = vmatpush1.msra.mxu0 0.0
    %1309 = vmatprep.subr.mxu0 0.0
    %1310 = vmatpush1.msra.mxu0 0.0
    %1311 = vmatprep.subr.mxu0 0.0
    %1312 = vmatpush1.msra.mxu0 0.0
    %1313 = vmatprep.mubr.f32.mxu0 0.0
    %1314 = vmatmul.mubr.f32.gmra.mrb[0].mxu0 %v1087
    %v1315 = vpop.f32.mrb[0].mxu0
    %v1316 = vadd.f32 %v761, %v1315
    %v1317 = vpop.f32.mrb[0].mxu0
    %1318 = vdwg.mxu0
    %v1320 = vrot.slane %v1316, 4
    %v1322 = vmul.f32 %v1238, %v1320
    %v1323 = vadd.f32 %v578, %v1322
    %v1324 = vtanh.pop %v1323
    %v1325 = vsub.f32 1.0, %v1248
    %v1326 = vmul.f32 %v1325, %v1324
    %v1327 = vrot.slane %v1084, 6
    %v1329 = vmul.f32 %v1248, %v1327
    %v1330 = vadd.f32 %v1326, %v1329
    %v1332 = vrot.slane %v1330, 4
    %v1333 = vsel %vm599, %v1332, 0
    %1335 = vmatprep.subr.mxu0 0.0
    %1336 = vmatpush1.msra.mxu0 %v586
    %1337 = vmatprep.subr.mxu0 0.0
    %1338 = vmatpush1.msra.mxu0 %v587
    %1339 = vmatprep.subr.mxu0 0.0
    %1340 = vmatpush1.msra.mxu0 %v588
    %1341 = vmatprep.subr.mxu0 0.0
    %1342 = vmatpush1.msra.mxu0 %v589
    %1343 = vmatprep.subr.mxu0 0.0
    %1344 = vmatpush1.msra.mxu0 0.0
    %1345 = vmatprep.subr.mxu0 0.0
    %1346 = vmatpush1.msra.mxu0 0.0
    %1347 = vmatprep.subr.mxu0 0.0
    %1348 = vmatpush1.msra.mxu0 0.0
    %1349 = vmatprep.subr.mxu0 0.0
    %1350 = vmatpush1.msra.mxu0 0.0
    %1351 = vmatprep.subr.mxu0 0.0
    %1352 = vmatpush1.msra.mxu0 0.0
    %1353 = vmatprep.subr.mxu0 0.0
    %1354 = vmatpush1.msra.mxu0 0.0
    %1355 = vmatprep.subr.mxu0 0.0
    %1356 = vmatpush1.msra.mxu0 0.0
    %1357 = vmatprep.subr.mxu0 0.0
    %1358 = vmatpush1.msra.mxu0 0.0
    %1359 = vmatprep.subr.mxu0 0.0
    %1360 = vmatpush1.msra.mxu0 0.0
    %1361 = vmatprep.subr.mxu0 0.0
    %1362 = vmatpush1.msra.mxu0 0.0
    %1363 = vmatprep.subr.mxu0 0.0
    %1364 = vmatpush1.msra.mxu0 0.0
    %1365 = vmatprep.subr.mxu0 0.0
    %1366 = vmatpush1.msra.mxu0 0.0
    %1367 = vmatprep.subr.mxu0 0.0
    %1368 = vmatpush1.msra.mxu0 0.0
    %1369 = vmatprep.subr.mxu0 0.0
    %1370 = vmatpush1.msra.mxu0 0.0
    %1371 = vmatprep.subr.mxu0 0.0
    %1372 = vmatpush1.msra.mxu0 0.0
    %1373 = vmatprep.subr.mxu0 0.0
    %1374 = vmatpush1.msra.mxu0 0.0
    %1375 = vmatprep.subr.mxu0 0.0
    %1376 = vmatpush1.msra.mxu0 0.0
    %1377 = vmatprep.subr.mxu0 0.0
    %1378 = vmatpush1.msra.mxu0 0.0
    %1379 = vmatprep.subr.mxu0 0.0
    %1380 = vmatpush1.msra.mxu0 0.0
    %1381 = vmatprep.subr.mxu0 0.0
    %1382 = vmatpush1.msra.mxu0 0.0
    %1383 = vmatprep.subr.mxu0 0.0
    %1384 = vmatpush1.msra.mxu0 0.0
    %1385 = vmatprep.subr.mxu0 0.0
    %1386 = vmatpush1.msra.mxu0 0.0
    %1387 = vmatprep.subr.mxu0 0.0
    %1388 = vmatpush1.msra.mxu0 0.0
    %1389 = vmatprep.subr.mxu0 0.0
    %1390 = vmatpush1.msra.mxu0 0.0
    %1391 = vmatprep.subr.mxu0 0.0
    %1392 = vmatpush1.msra.mxu0 0.0
    %1393 = vmatprep.subr.mxu0 0.0
    %1394 = vmatpush1.msra.mxu0 0.0
    %1395 = vmatprep.subr.mxu0 0.0
    %1396 = vmatpush1.msra.mxu0 0.0
    %1397 = vmatprep.subr.mxu0 0.0
    %1398 = vmatpush1.msra.mxu0 0.0
    %1399 = vmatprep.mubr.f32.mxu0 0.0
    %1400 = vmatmul.mubr.f32.gmra.mrb[0].mxu0 %v1333
    %v1401 = vpop.f32.mrb[0].mxu0
    %v1402 = vadd.f32 0.0, %v1401
    %v1403 = vpop.f32.mrb[0].mxu0
    %1404 = vdwg.mxu0
    %1405 = vmatprep.subr.mxu0 0.0
    %1406 = vmatpush1.msra.mxu0 %v590
    %1407 = vmatprep.subr.mxu0 0.0
    %1408 = vmatpush1.msra.mxu0 %v591
    %1409 = vmatprep.subr.mxu0 0.0
    %1410 = vmatpush1.msra.mxu0 %v592
    %1411 = vmatprep.subr.mxu0 0.0
    %1412 = vmatpush1.msra.mxu0 %v593
    %1413 = vmatprep.subr.mxu0 0.0
    %1414 = vmatpush1.msra.mxu0 0.0
    %1415 = vmatprep.subr.mxu0 0.0
    %1416 = vmatpush1.msra.mxu0 0.0
    %1417 = vmatprep.subr.mxu0 0.0
    %1418 = vmatpush1.msra.mxu0 0.0
    %1419 = vmatprep.subr.mxu0 0.0
    %1420 = vmatpush1.msra.mxu0 0.0
    %1421 = vmatprep.subr.mxu0 0.0
    %1422 = vmatpush1.msra.mxu0 0.0
    %1423 = vmatprep.subr.mxu0 0.0
    %1424 = vmatpush1.msra.mxu0 0.0
    %1425 = vmatprep.subr.mxu0 0.0
    %1426 = vmatpush1.msra.mxu0 0.0
    %1427 = vmatprep.subr.mxu0 0.0
    %1428 = vmatpush1.msra.mxu0 0.0
    %1429 = vmatprep.subr.mxu0 0.0
    %1430 = vmatpush1.msra.mxu0 0.0
    %1431 = vmatprep.subr.mxu0 0.0
    %1432 = vmatpush1.msra.mxu0 0.0
    %1433 = vmatprep.subr.mxu0 0.0
    %1434 = vmatpush1.msra.mxu0 0.0
    %1435 = vmatprep.subr.mxu0 0.0
    %1436 = vmatpush1.msra.mxu0 0.0
    %1437 = vmatprep.subr.mxu0 0.0
    %1438 = vmatpush1.msra.mxu0 0.0
    %1439 = vmatprep.subr.mxu0 0.0
    %1440 = vmatpush1.msra.mxu0 0.0
    %1441 = vmatprep.subr.mxu0 0.0
    %1442 = vmatpush1.msra.mxu0 0.0
    %1443 = vmatprep.subr.mxu0 0.0
    %1444 = vmatpush1.msra.mxu0 0.0
    %1445 = vmatprep.subr.mxu0 0.0
    %1446 = vmatpush1.msra.mxu0 0.0
    %1447 = vmatprep.subr.mxu0 0.0
    %1448 = vmatpush1.msra.mxu0 0.0
    %1449 = vmatprep.subr.mxu0 0.0
    %1450 = vmatpush1.msra.mxu0 0.0
    %1451 = vmatprep.subr.mxu0 0.0
    %1452 = vmatpush1.msra.mxu0 0.0
    %1453 = vmatprep.subr.mxu0 0.0
    %1454 = vmatpush1.msra.mxu0 0.0
    %1455 = vmatprep.subr.mxu0 0.0
    %1456 = vmatpush1.msra.mxu0 0.0
    %1457 = vmatprep.subr.mxu0 0.0
    %1458 = vmatpush1.msra.mxu0 0.0
    %1459 = vmatprep.subr.mxu0 0.0
    %1460 = vmatpush1.msra.mxu0 0.0
    %1461 = vmatprep.subr.mxu0 0.0
    %1462 = vmatpush1.msra.mxu0 0.0
    %1463 = vmatprep.subr.mxu0 0.0
    %1464 = vmatpush1.msra.mxu0 0.0
    %1465 = vmatprep.subr.mxu0 0.0
    %1466 = vmatpush1.msra.mxu0 0.0
    %1467 = vmatprep.subr.mxu0 0.0
    %1468 = vmatpush1.msra.mxu0 0.0
    %1469 = vmatprep.mubr.f32.mxu0 0.0
    %1470 = vmatmul.mubr.f32.gmra.mrb[0].mxu0 %v1333
    %v1471 = vpop.f32.mrb[0].mxu0
    %v1472 = vadd.f32 0.0, %v1471
    %v1473 = vpop.f32.mrb[0].mxu0
    %1474 = vdwg.mxu0
    %v1476 = vrot.slane %v1402, 2
    %v1478 = vadd.f32 %v406, %v1476
    %v1479 = vxor.u32 %v1478, 2147483648
    %v1480 = vmul.f32 %v1479, 1.442695
    %v1481 = vpow.pop %v1480
    %v1482 = vadd.f32 %v1481, 1.0
    %v1483 = vrcp.pop %v1482
    %v1484 = vmul.f32 1.0, %v1483
    %v1486 = vrot.slane %v1472, 2
    %v1488 = vadd.f32 %v492, %v1486
    %v1489 = vxor.u32 %v1488, 2147483648
    %v1490 = vmul.f32 %v1489, 1.442695
    %v1491 = vpow.pop %v1490
    %v1492 = vadd.f32 %v1491, 1.0
    %v1493 = vrcp.pop %v1492
    %v1494 = vmul.f32 1.0, %v1493
    %1495 = vmatprep.subr.mxu0 0.0
    %1496 = vmatpush1.msra.mxu0 %v594
    %1497 = vmatprep.subr.mxu0 0.0
    %1498 = vmatpush1.msra.mxu0 %v595
    %1499 = vmatprep.subr.mxu0 0.0
    %1500 = vmatpush1.msra.mxu0 %v596
    %1501 = vmatprep.subr.mxu0 0.0
    %1502 = vmatpush1.msra.mxu0 %v597
    %1503 = vmatprep.subr.mxu0 0.0
    %1504 = vmatpush1.msra.mxu0 0.0
    %1505 = vmatprep.subr.mxu0 0.0
    %1506 = vmatpush1.msra.mxu0 0.0
    %1507 = vmatprep.subr.mxu0 0.0
    %1508 = vmatpush1.msra.mxu0 0.0
    %1509 = vmatprep.subr.mxu0 0.0
    %1510 = vmatpush1.msra.mxu0 0.0
    %1511 = vmatprep.subr.mxu0 0.0
    %1512 = vmatpush1.msra.mxu0 0.0
    %1513 = vmatprep.subr.mxu0 0.0
    %1514 = vmatpush1.msra.mxu0 0.0
    %1515 = vmatprep.subr.mxu0 0.0
    %1516 = vmatpush1.msra.mxu0 0.0
    %1517 = vmatprep.subr.mxu0 0.0
    %1518 = vmatpush1.msra.mxu0 0.0
    %1519 = vmatprep.subr.mxu0 0.0
    %1520 = vmatpush1.msra.mxu0 0.0
    %1521 = vmatprep.subr.mxu0 0.0
    %1522 = vmatpush1.msra.mxu0 0.0
    %1523 = vmatprep.subr.mxu0 0.0
    %1524 = vmatpush1.msra.mxu0 0.0
    %1525 = vmatprep.subr.mxu0 0.0
    %1526 = vmatpush1.msra.mxu0 0.0
    %1527 = vmatprep.subr.mxu0 0.0
    %1528 = vmatpush1.msra.mxu0 0.0
    %1529 = vmatprep.subr.mxu0 0.0
    %1530 = vmatpush1.msra.mxu0 0.0
    %1531 = vmatprep.subr.mxu0 0.0
    %1532 = vmatpush1.msra.mxu0 0.0
    %1533 = vmatprep.subr.mxu0 0.0
    %1534 = vmatpush1.msra.mxu0 0.0
    %1535 = vmatprep.subr.mxu0 0.0
    %1536 = vmatpush1.msra.mxu0 0.0
    %1537 = vmatprep.subr.mxu0 0.0
    %1538 = vmatpush1.msra.mxu0 0.0
    %1539 = vmatprep.subr.mxu0 0.0
    %1540 = vmatpush1.msra.mxu0 0.0
    %1541 = vmatprep.subr.mxu0 0.0
    %1542 = vmatpush1.msra.mxu0 0.0
    %1543 = vmatprep.subr.mxu0 0.0
    %1544 = vmatpush1.msra.mxu0 0.0
    %1545 = vmatprep.subr.mxu0 0.0
    %1546 = vmatpush1.msra.mxu0 0.0
    %1547 = vmatprep.subr.mxu0 0.0
    %1548 = vmatpush1.msra.mxu0 0.0
    %1549 = vmatprep.subr.mxu0 0.0
    %1550 = vmatpush1.msra.mxu0 0.0
    %1551 = vmatprep.subr.mxu0 0.0
    %1552 = vmatpush1.msra.mxu0 0.0
    %1553 = vmatprep.subr.mxu0 0.0
    %1554 = vmatpush1.msra.mxu0 0.0
    %1555 = vmatprep.subr.mxu0 0.0
    %1556 = vmatpush1.msra.mxu0 0.0
    %1557 = vmatprep.subr.mxu0 0.0
    %1558 = vmatpush1.msra.mxu0 0.0
    %1559 = vmatprep.mubr.f32.mxu0 0.0
    %1560 = vmatmul.mubr.f32.gmra.mrb[0].mxu0 %v1333
    %v1561 = vpop.f32.mrb[0].mxu0
    %v1562 = vadd.f32 %v761, %v1561
    %v1563 = vpop.f32.mrb[0].mxu0
    %1564 = vdwg.mxu0
    %v1566 = vrot.slane %v1562, 2
    %v1568 = vmul.f32 %v1484, %v1566
    %v1569 = vadd.f32 %v578, %v1568
    %v1570 = vtanh.pop %v1569
    %v1571 = vsub.f32 1.0, %v1494
    %v1572 = vmul.f32 %v1571, %v1570
    %v1573 = vrot.slane %v1330, 6
    %v1575 = vmul.f32 %v1494, %v1573
    %v1576 = vadd.f32 %v1572, %v1575
    %v1578 = vrot.slane %v1576, 6
    %v1579 = vsel %vm599, %v1578, 0
    %1581 = vmatprep.subr.mxu0 0.0
    %1582 = vmatpush1.msra.mxu0 %v586
    %1583 = vmatprep.subr.mxu0 0.0
    %1584 = vmatpush1.msra.mxu0 %v587
    %1585 = vmatprep.subr.mxu0 0.0
    %1586 = vmatpush1.msra.mxu0 %v588
    %1587 = vmatprep.subr.mxu0 0.0
    %1588 = vmatpush1.msra.mxu0 %v589
    %1589 = vmatprep.subr.mxu0 0.0
    %1590 = vmatpush1.msra.mxu0 0.0
    %1591 = vmatprep.subr.mxu0 0.0
    %1592 = vmatpush1.msra.mxu0 0.0
    %1593 = vmatprep.subr.mxu0 0.0
    %1594 = vmatpush1.msra.mxu0 0.0
    %1595 = vmatprep.subr.mxu0 0.0
    %1596 = vmatpush1.msra.mxu0 0.0
    %1597 = vmatprep.subr.mxu0 0.0
    %1598 = vmatpush1.msra.mxu0 0.0
    %1599 = vmatprep.subr.mxu0 0.0
    %1600 = vmatpush1.msra.mxu0 0.0
    %1601 = vmatprep.subr.mxu0 0.0
    %1602 = vmatpush1.msra.mxu0 0.0
    %1603 = vmatprep.subr.mxu0 0.0
    %1604 = vmatpush1.msra.mxu0 0.0
    %1605 = vmatprep.subr.mxu0 0.0
    %1606 = vmatpush1.msra.mxu0 0.0
    %1607 = vmatprep.subr.mxu0 0.0
    %1608 = vmatpush1.msra.mxu0 0.0
    %1609 = vmatprep.subr.mxu0 0.0
    %1610 = vmatpush1.msra.mxu0 0.0
    %1611 = vmatprep.subr.mxu0 0.0
    %1612 = vmatpush1.msra.mxu0 0.0
    %1613 = vmatprep.subr.mxu0 0.0
    %1614 = vmatpush1.msra.mxu0 0.0
    %1615 = vmatprep.subr.mxu0 0.0
    %1616 = vmatpush1.msra.mxu0 0.0
    %1617 = vmatprep.subr.mxu0 0.0
    %1618 = vmatpush1.msra.mxu0 0.0
    %1619 = vmatprep.subr.mxu0 0.0
    %1620 = vmatpush1.msra.mxu0 0.0
    %1621 = vmatprep.subr.mxu0 0.0
    %1622 = vmatpush1.msra.mxu0 0.0
    %1623 = vmatprep.subr.mxu0 0.0
    %1624 = vmatpush1.msra.mxu0 0.0
    %1625 = vmatprep.subr.mxu0 0.0
    %1626 = vmatpush1.msra.mxu0 0.0
    %1627 = vmatprep.subr.mxu0 0.0
    %1628 = vmatpush1.msra.mxu0 0.0
    %1629 = vmatprep.subr.mxu0 0.0
    %1630 = vmatpush1.msra.mxu0 0.0
    %1631 = vmatprep.subr.mxu0 0.0
    %1632 = vmatpush1.msra.mxu0 0.0
    %1633 = vmatprep.subr.mxu0 0.0
    %1634 = vmatpush1.msra.mxu0 0.0
    %1635 = vmatprep.subr.mxu0 0.0
    %1636 = vmatpush1.msra.mxu0 0.0
    %1637 = vmatprep.subr.mxu0 0.0
    %1638 = vmatpush1.msra.mxu0 0.0
    %1639 = vmatprep.subr.mxu0 0.0
    %1640 = vmatpush1.msra.mxu0 0.0
    %1641 = vmatprep.subr.mxu0 0.0
    %1642 = vmatpush1.msra.mxu0 0.0
    %1643 = vmatprep.subr.mxu0 0.0
    %1644 = vmatpush1.msra.mxu0 0.0
    %1645 = vmatprep.mubr.f32.mxu0 0.0
    %1646 = vmatmul.mubr.f32.gmra.mrb[0].mxu0 %v1579
    %v1647 = vpop.f32.mrb[0].mxu0
    %v1648 = vadd.f32 0.0, %v1647
    %v1649 = vpop.f32.mrb[0].mxu0
    %1650 = vdwg.mxu0
    %1651 = vmatprep.subr.mxu0 0.0
    %1652 = vmatpush1.msra.mxu0 %v590
    %1653 = vmatprep.subr.mxu0 0.0
    %1654 = vmatpush1.msra.mxu0 %v591
    %1655 = vmatprep.subr.mxu0 0.0
    %1656 = vmatpush1.msra.mxu0 %v592
    %1657 = vmatprep.subr.mxu0 0.0
    %1658 = vmatpush1.msra.mxu0 %v593
    %1659 = vmatprep.subr.mxu0 0.0
    %1660 = vmatpush1.msra.mxu0 0.0
    %1661 = vmatprep.subr.mxu0 0.0
    %1662 = vmatpush1.msra.mxu0 0.0
    %1663 = vmatprep.subr.mxu0 0.0
    %1664 = vmatpush1.msra.mxu0 0.0
    %1665 = vmatprep.subr.mxu0 0.0
    %1666 = vmatpush1.msra.mxu0 0.0
    %1667 = vmatprep.subr.mxu0 0.0
    %1668 = vmatpush1.msra.mxu0 0.0
    %1669 = vmatprep.subr.mxu0 0.0
    %1670 = vmatpush1.msra.mxu0 0.0
    %1671 = vmatprep.subr.mxu0 0.0
    %1672 = vmatpush1.msra.mxu0 0.0
    %1673 = vmatprep.subr.mxu0 0.0
    %1674 = vmatpush1.msra.mxu0 0.0
    %1675 = vmatprep.subr.mxu0 0.0
    %1676 = vmatpush1.msra.mxu0 0.0
    %1677 = vmatprep.subr.mxu0 0.0
    %1678 = vmatpush1.msra.mxu0 0.0
    %1679 = vmatprep.subr.mxu0 0.0
    %1680 = vmatpush1.msra.mxu0 0.0
    %1681 = vmatprep.subr.mxu0 0.0
    %1682 = vmatpush1.msra.mxu0 0.0
    %1683 = vmatprep.subr.mxu0 0.0
    %1684 = vmatpush1.msra.mxu0 0.0
    %1685 = vmatprep.subr.mxu0 0.0
    %1686 = vmatpush1.msra.mxu0 0.0
    %1687 = vmatprep.subr.mxu0 0.0
    %1688 = vmatpush1.msra.mxu0 0.0
    %1689 = vmatprep.subr.mxu0 0.0
    %1690 = vmatpush1.msra.mxu0 0.0
    %1691 = vmatprep.subr.mxu0 0.0
    %1692 = vmatpush1.msra.mxu0 0.0
    %1693 = vmatprep.subr.mxu0 0.0
    %1694 = vmatpush1.msra.mxu0 0.0
    %1695 = vmatprep.subr.mxu0 0.0
    %1696 = vmatpush1.msra.mxu0 0.0
    %1697 = vmatprep.subr.mxu0 0.0
    %1698 = vmatpush1.msra.mxu0 0.0
    %1699 = vmatprep.subr.mxu0 0.0
    %1700 = vmatpush1.msra.mxu0 0.0
    %1701 = vmatprep.subr.mxu0 0.0
    %1702 = vmatpush1.msra.mxu0 0.0
    %1703 = vmatprep.subr.mxu0 0.0
    %1704 = vmatpush1.msra.mxu0 0.0
    %1705 = vmatprep.subr.mxu0 0.0
    %1706 = vmatpush1.msra.mxu0 0.0
    %1707 = vmatprep.subr.mxu0 0.0
    %1708 = vmatpush1.msra.mxu0 0.0
    %1709 = vmatprep.subr.mxu0 0.0
    %1710 = vmatpush1.msra.mxu0 0.0
    %1711 = vmatprep.subr.mxu0 0.0
    %1712 = vmatpush1.msra.mxu0 0.0
    %1713 = vmatprep.subr.mxu0 0.0
    %1714 = vmatpush1.msra.mxu0 0.0
    %1715 = vmatprep.mubr.f32.mxu0 0.0
    %1716 = vmatmul.mubr.f32.gmra.mrb[0].mxu0 %v1579
    %v1717 = vpop.f32.mrb[0].mxu0
    %v1718 = vadd.f32 0.0, %v1717
    %v1719 = vpop.f32.mrb[0].mxu0
    %1720 = vdwg.mxu0
    %v1721 = vadd.f32 %v411, %v1648
    %v1722 = vxor.u32 %v1721, 2147483648
    %v1723 = vmul.f32 %v1722, 1.442695
    %v1724 = vpow.pop %v1723
    %v1725 = vadd.f32 %v1724, 1.0
    %v1726 = vrcp.pop %v1725
    %v1727 = vmul.f32 1.0, %v1726
    %v1728 = vadd.f32 %v497, %v1718
    %v1729 = vxor.u32 %v1728, 2147483648
    %v1730 = vmul.f32 %v1729, 1.442695
    %v1731 = vpow.pop %v1730
    %v1732 = vadd.f32 %v1731, 1.0
    %v1733 = vrcp.pop %v1732
    %v1734 = vmul.f32 1.0, %v1733
    %1735 = vmatprep.subr.mxu0 0.0
    %1736 = vmatpush1.msra.mxu0 %v594
    %1737 = vmatprep.subr.mxu0 0.0
    %1738 = vmatpush1.msra.mxu0 %v595
    %1739 = vmatprep.subr.mxu0 0.0
    %1740 = vmatpush1.msra.mxu0 %v596
    %1741 = vmatprep.subr.mxu0 0.0
    %1742 = vmatpush1.msra.mxu0 %v597
    %1743 = vmatprep.subr.mxu0 0.0
    %1744 = vmatpush1.msra.mxu0 0.0
    %1745 = vmatprep.subr.mxu0 0.0
    %1746 = vmatpush1.msra.mxu0 0.0
    %1747 = vmatprep.subr.mxu0 0.0
    %1748 = vmatpush1.msra.mxu0 0.0
    %1749 = vmatprep.subr.mxu0 0.0
    %1750 = vmatpush1.msra.mxu0 0.0
    %1751 = vmatprep.subr.mxu0 0.0
    %1752 = vmatpush1.msra.mxu0 0.0
    %1753 = vmatprep.subr.mxu0 0.0
    %1754 = vmatpush1.msra.mxu0 0.0
    %1755 = vmatprep.subr.mxu0 0.0
    %1756 = vmatpush1.msra.mxu0 0.0
    %1757 = vmatprep.subr.mxu0 0.0
    %1758 = vmatpush1.msra.mxu0 0.0
    %1759 = vmatprep.subr.mxu0 0.0
    %1760 = vmatpush1.msra.mxu0 0.0
    %1761 = vmatprep.subr.mxu0 0.0
    %1762 = vmatpush1.msra.mxu0 0.0
    %1763 = vmatprep.subr.mxu0 0.0
    %1764 = vmatpush1.msra.mxu0 0.0
    %1765 = vmatprep.subr.mxu0 0.0
    %1766 = vmatpush1.msra.mxu0 0.0
    %1767 = vmatprep.subr.mxu0 0.0
    %1768 = vmatpush1.msra.mxu0 0.0
    %1769 = vmatprep.subr.mxu0 0.0
    %1770 = vmatpush1.msra.mxu0 0.0
    %1771 = vmatprep.subr.mxu0 0.0
    %1772 = vmatpush1.msra.mxu0 0.0
    %1773 = vmatprep.subr.mxu0 0.0
    %1774 = vmatpush1.msra.mxu0 0.0
    %1775 = vmatprep.subr.mxu0 0.0
    %1776 = vmatpush1.msra.mxu0 0.0
    %1777 = vmatprep.subr.mxu0 0.0
    %1778 = vmatpush1.msra.mxu0 0.0
    %1779 = vmatprep.subr.mxu0 0.0
    %1780 = vmatpush1.msra.mxu0 0.0
    %1781 = vmatprep.subr.mxu0 0.0
    %1782 = vmatpush1.msra.mxu0 0.0
    %1783 = vmatprep.subr.mxu0 0.0
    %1784 = vmatpush1.msra.mxu0 0.0
    %1785 = vmatprep.subr.mxu0 0.0
    %1786 = vmatpush1.msra.mxu0 0.0
    %1787 = vmatprep.subr.mxu0 0.0
    %1788 = vmatpush1.msra.mxu0 0.0
    %1789 = vmatprep.subr.mxu0 0.0
    %1790 = vmatpush1.msra.mxu0 0.0
    %1791 = vmatprep.subr.mxu0 0.0
    %1792 = vmatpush1.msra.mxu0 0.0
    %1793 = vmatprep.subr.mxu0 0.0
    %1794 = vmatpush1.msra.mxu0 0.0
    %1795 = vmatprep.subr.mxu0 0.0
    %1796 = vmatpush1.msra.mxu0 0.0
    %1797 = vmatprep.subr.mxu0 0.0
    %1798 = vmatpush1.msra.mxu0 0.0
    %1799 = vmatprep.mubr.f32.mxu0 0.0
    %1800 = vmatmul.mubr.f32.gmra.mrb[0].mxu0 %v1579
    %v1801 = vpop.f32.mrb[0].mxu0
    %v1802 = vadd.f32 %v761, %v1801
    %v1803 = vpop.f32.mrb[0].mxu0
    %1804 = vdwg.mxu0
    %v1805 = vmul.f32 %v1727, %v1802
    %v1806 = vadd.f32 %v583, %v1805
    %v1807 = vtanh.pop %v1806
    %v1808 = vsub.f32 1.0, %v1734
    %v1809 = vmul.f32 %v1808, %v1807
    %v1811 = vmul.f32 %v1734, %v1578
    %v1812 = vadd.f32 %v1809, %v1811
    %v1814 = vsel %vm599, %v1812, 0
    %1816 = vmatprep.subr.mxu0 0.0
    %1817 = vmatpush1.msra.mxu0 %v586
    %1818 = vmatprep.subr.mxu0 0.0
    %1819 = vmatpush1.msra.mxu0 %v587
    %1820 = vmatprep.subr.mxu0 0.0
    %1821 = vmatpush1.msra.mxu0 %v588
    %1822 = vmatprep.subr.mxu0 0.0
    %1823 = vmatpush1.msra.mxu0 %v589
    %1824 = vmatprep.subr.mxu0 0.0
    %1825 = vmatpush1.msra.mxu0 0.0
    %1826 = vmatprep.subr.mxu0 0.0
    %1827 = vmatpush1.msra.mxu0 0.0
    %1828 = vmatprep.subr.mxu0 0.0
    %1829 = vmatpush1.msra.mxu0 0.0
    %1830 = vmatprep.subr.mxu0 0.0
    %1831 = vmatpush1.msra.mxu0 0.0
    %1832 = vmatprep.subr.mxu0 0.0
    %1833 = vmatpush1.msra.mxu0 0.0
    %1834 = vmatprep.subr.mxu0 0.0
    %1835 = vmatpush1.msra.mxu0 0.0
    %1836 = vmatprep.subr.mxu0 0.0
    %1837 = vmatpush1.msra.mxu0 0.0
    %1838 = vmatprep.subr.mxu0 0.0
    %1839 = vmatpush1.msra.mxu0 0.0
    %1840 = vmatprep.subr.mxu0 0.0
    %1841 = vmatpush1.msra.mxu0 0.0
    %1842 = vmatprep.subr.mxu0 0.0
    %1843 = vmatpush1.msra.mxu0 0.0
    %1844 = vmatprep.subr.mxu0 0.0
    %1845 = vmatpush1.msra.mxu0 0.0
    %1846 = vmatprep.subr.mxu0 0.0
    %1847 = vmatpush1.msra.mxu0 0.0
    %1848 = vmatprep.subr.mxu0 0.0
    %1849 = vmatpush1.msra.mxu0 0.0
    %1850 = vmatprep.subr.mxu0 0.0
    %1851 = vmatpush1.msra.mxu0 0.0
    %1852 = vmatprep.subr.mxu0 0.0
    %1853 = vmatpush1.msra.mxu0 0.0
    %1854 = vmatprep.subr.mxu0 0.0
    %1855 = vmatpush1.msra.mxu0 0.0
    %1856 = vmatprep.subr.mxu0 0.0
    %1857 = vmatpush1.msra.mxu0 0.0
    %1858 = vmatprep.subr.mxu0 0.0
    %1859 = vmatpush1.msra.mxu0 0.0
    %1860 = vmatprep.subr.mxu0 0.0
    %1861 = vmatpush1.msra.mxu0 0.0
    %1862 = vmatprep.subr.mxu0 0.0
    %1863 = vmatpush1.msra.mxu0 0.0
    %1864 = vmatprep.subr.mxu0 0.0
    %1865 = vmatpush1.msra.mxu0 0.0
    %1866 = vmatprep.subr.mxu0 0.0
    %1867 = vmatpush1.msra.mxu0 0.0
    %1868 = vmatprep.subr.mxu0 0.0
    %1869 = vmatpush1.msra.mxu0 0.0
    %1870 = vmatprep.subr.mxu0 0.0
    %1871 = vmatpush1.msra.mxu0 0.0
    %1872 = vmatprep.subr.mxu0 0.0
    %1873 = vmatpush1.msra.mxu0 0.0
    %1874 = vmatprep.subr.mxu0 0.0
    %1875 = vmatpush1.msra.mxu0 0.0
    %1876 = vmatprep.subr.mxu0 0.0
    %1877 = vmatpush1.msra.mxu0 0.0
    %1878 = vmatprep.subr.mxu0 0.0
    %1879 = vmatpush1.msra.mxu0 0.0
    %1880 = vmatprep.mubr.f32.mxu0 0.0
    %1881 = vmatmul.mubr.f32.gmra.mrb[0].mxu0 %v1814
    %v1882 = vpop.f32.mrb[0].mxu0
    %v1883 = vadd.f32 0.0, %v1882
    %v1884 = vpop.f32.mrb[0].mxu0
    %1885 = vdwg.mxu0
    %1886 = vmatprep.subr.mxu0 0.0
    %1887 = vmatpush1.msra.mxu0 %v590
    %1888 = vmatprep.subr.mxu0 0.0
    %1889 = vmatpush1.msra.mxu0 %v591
    %1890 = vmatprep.subr.mxu0 0.0
    %1891 = vmatpush1.msra.mxu0 %v592
    %1892 = vmatprep.subr.mxu0 0.0
    %1893 = vmatpush1.msra.mxu0 %v593
    %1894 = vmatprep.subr.mxu0 0.0
    %1895 = vmatpush1.msra.mxu0 0.0
    %1896 = vmatprep.subr.mxu0 0.0
    %1897 = vmatpush1.msra.mxu0 0.0
    %1898 = vmatprep.subr.mxu0 0.0
    %1899 = vmatpush1.msra.mxu0 0.0
    %1900 = vmatprep.subr.mxu0 0.0
    %1901 = vmatpush1.msra.mxu0 0.0
    %1902 = vmatprep.subr.mxu0 0.0
    %1903 = vmatpush1.msra.mxu0 0.0
    %1904 = vmatprep.subr.mxu0 0.0
    %1905 = vmatpush1.msra.mxu0 0.0
    %1906 = vmatprep.subr.mxu0 0.0
    %1907 = vmatpush1.msra.mxu0 0.0
    %1908 = vmatprep.subr.mxu0 0.0
    %1909 = vmatpush1.msra.mxu0 0.0
    %1910 = vmatprep.subr.mxu0 0.0
    %1911 = vmatpush1.msra.mxu0 0.0
    %1912 = vmatprep.subr.mxu0 0.0
    %1913 = vmatpush1.msra.mxu0 0.0
    %1914 = vmatprep.subr.mxu0 0.0
    %1915 = vmatpush1.msra.mxu0 0.0
    %1916 = vmatprep.subr.mxu0 0.0
    %1917 = vmatpush1.msra.mxu0 0.0
    %1918 = vmatprep.subr.mxu0 0.0
    %1919 = vmatpush1.msra.mxu0 0.0
    %1920 = vmatprep.subr.mxu0 0.0
    %1921 = vmatpush1.msra.mxu0 0.0
    %1922 = vmatprep.subr.mxu0 0.0
    %1923 = vmatpush1.msra.mxu0 0.0
    %1924 = vmatprep.subr.mxu0 0.0
    %1925 = vmatpush1.msra.mxu0 0.0
    %1926 = vmatprep.subr.mxu0 0.0
    %1927 = vmatpush1.msra.mxu0 0.0
    %1928 = vmatprep.subr.mxu0 0.0
    %1929 = vmatpush1.msra.mxu0 0.0
    %1930 = vmatprep.subr.mxu0 0.0
    %1931 = vmatpush1.msra.mxu0 0.0
    %1932 = vmatprep.subr.mxu0 0.0
    %1933 = vmatpush1.msra.mxu0 0.0
    %1934 = vmatprep.subr.mxu0 0.0
    %1935 = vmatpush1.msra.mxu0 0.0
    %1936 = vmatprep.subr.mxu0 0.0
    %1937 = vmatpush1.msra.mxu0 0.0
    %1938 = vmatprep.subr.mxu0 0.0
    %1939 = vmatpush1.msra.mxu0 0.0
    %1940 = vmatprep.subr.mxu0 0.0
    %1941 = vmatpush1.msra.mxu0 0.0
    %1942 = vmatprep.subr.mxu0 0.0
    %1943 = vmatpush1.msra.mxu0 0.0
    %1944 = vmatprep.subr.mxu0 0.0
    %1945 = vmatpush1.msra.mxu0 0.0
    %1946 = vmatprep.subr.mxu0 0.0
    %1947 = vmatpush1.msra.mxu0 0.0
    %1948 = vmatprep.subr.mxu0 0.0
    %1949 = vmatpush1.msra.mxu0 0.0
    %1950 = vmatprep.mubr.f32.mxu0 0.0
    %1951 = vmatmul.mubr.f32.gmra.mrb[0].mxu0 %v1814
    %v1952 = vpop.f32.mrb[0].mxu0
    %v1953 = vadd.f32 0.0, %v1952
    %v1954 = vpop.f32.mrb[0].mxu0
    %1955 = vdwg.mxu0
    %v1957 = vrot.slane %v1883, 6
    %v1959 = vadd.f32 %v411, %v1957
    %v1960 = vxor.u32 %v1959, 2147483648
    %v1961 = vmul.f32 %v1960, 1.442695
    %v1962 = vpow.pop %v1961
    %v1963 = vadd.f32 %v1962, 1.0
    %v1964 = vrcp.pop %v1963
    %v1965 = vmul.f32 1.0, %v1964
    %v1967 = vrot.slane %v1953, 6
    %v1969 = vadd.f32 %v497, %v1967
    %v1970 = vxor.u32 %v1969, 2147483648
    %v1971 = vmul.f32 %v1970, 1.442695
    %v1972 = vpow.pop %v1971
    %v1973 = vadd.f32 %v1972, 1.0
    %v1974 = vrcp.pop %v1973
    %v1975 = vmul.f32 1.0, %v1974
    %1976 = vmatprep.subr.mxu0 0.0
    %1977 = vmatpush1.msra.mxu0 %v594
    %1978 = vmatprep.subr.mxu0 0.0
    %1979 = vmatpush1.msra.mxu0 %v595
    %1980 = vmatprep.subr.mxu0 0.0
    %1981 = vmatpush1.msra.mxu0 %v596
    %1982 = vmatprep.subr.mxu0 0.0
    %1983 = vmatpush1.msra.mxu0 %v597
    %1984 = vmatprep.subr.mxu0 0.0
    %1985 = vmatpush1.msra.mxu0 0.0
    %1986 = vmatprep.subr.mxu0 0.0
    %1987 = vmatpush1.msra.mxu0 0.0
    %1988 = vmatprep.subr.mxu0 0.0
    %1989 = vmatpush1.msra.mxu0 0.0
    %1990 = vmatprep.subr.mxu0 0.0
    %1991 = vmatpush1.msra.mxu0 0.0
    %1992 = vmatprep.subr.mxu0 0.0
    %1993 = vmatpush1.msra.mxu0 0.0
    %1994 = vmatprep.subr.mxu0 0.0
    %1995 = vmatpush1.msra.mxu0 0.0
    %1996 = vmatprep.subr.mxu0 0.0
    %1997 = vmatpush1.msra.mxu0 0.0
    %1998 = vmatprep.subr.mxu0 0.0
    %1999 = vmatpush1.msra.mxu0 0.0
    %2000 = vmatprep.subr.mxu0 0.0
    %2001 = vmatpush1.msra.mxu0 0.0
    %2002 = vmatprep.subr.mxu0 0.0
    %2003 = vmatpush1.msra.mxu0 0.0
    %2004 = vmatprep.subr.mxu0 0.0
    %2005 = vmatpush1.msra.mxu0 0.0
    %2006 = vmatprep.subr.mxu0 0.0
    %2007 = vmatpush1.msra.mxu0 0.0
    %2008 = vmatprep.subr.mxu0 0.0
    %2009 = vmatpush1.msra.mxu0 0.0
    %2010 = vmatprep.subr.mxu0 0.0
    %2011 = vmatpush1.msra.mxu0 0.0
    %2012 = vmatprep.subr.mxu0 0.0
    %2013 = vmatpush1.msra.mxu0 0.0
    %2014 = vmatprep.subr.mxu0 0.0
    %2015 = vmatpush1.msra.mxu0 0.0
    %2016 = vmatprep.subr.mxu0 0.0
    %2017 = vmatpush1.msra.mxu0 0.0
    %2018 = vmatprep.subr.mxu0 0.0
    %2019 = vmatpush1.msra.mxu0 0.0
    %2020 = vmatprep.subr.mxu0 0.0
    %2021 = vmatpush1.msra.mxu0 0.0
    %2022 = vmatprep.subr.mxu0 0.0
    %2023 = vmatpush1.msra.mxu0 0.0
    %2024 = vmatprep.subr.mxu0 0.0
    %2025 = vmatpush1.msra.mxu0 0.0
    %2026 = vmatprep.subr.mxu0 0.0
    %2027 = vmatpush1.msra.mxu0 0.0
    %2028 = vmatprep.subr.mxu0 0.0
    %2029 = vmatpush1.msra.mxu0 0.0
    %2030 = vmatprep.subr.mxu0 0.0
    %2031 = vmatpush1.msra.mxu0 0.0
    %2032 = vmatprep.subr.mxu0 0.0
    %2033 = vmatpush1.msra.mxu0 0.0
    %2034 = vmatprep.subr.mxu0 0.0
    %2035 = vmatpush1.msra.mxu0 0.0
    %2036 = vmatprep.subr.mxu0 0.0
    %2037 = vmatpush1.msra.mxu0 0.0
    %2038 = vmatprep.subr.mxu0 0.0
    %2039 = vmatpush1.msra.mxu0 0.0
    %2040 = vmatprep.mubr.f32.mxu0 0.0
    %2041 = vmatmul.mubr.f32.gmra.mrb[0].mxu0 %v1814
    %v2042 = vpop.f32.mrb[0].mxu0
    %v2043 = vadd.f32 %v761, %v2042
    %v2044 = vpop.f32.mrb[0].mxu0
    %2045 = vdwg.mxu0
    %v2047 = vrot.slane %v2043, 6
    %v2049 = vmul.f32 %v1965, %v2047
    %v2050 = vadd.f32 %v583, %v2049
    %v2051 = vtanh.pop %v2050
    %v2052 = vsub.f32 1.0, %v1975
    %v2053 = vmul.f32 %v2052, %v2051
    %v2054 = vrot.slane %v1812, 6
    %v2056 = vmul.f32 %v1975, %v2054
    %v2057 = vadd.f32 %v2053, %v2056
    %v2059 = vrot.slane %v2057, 2
    %v2060 = vsel %vm599, %v2059, 0
    %2062 = vmatprep.subr.mxu0 0.0
    %2063 = vmatpush1.msra.mxu0 %v586
    %2064 = vmatprep.subr.mxu0 0.0
    %2065 = vmatpush1.msra.mxu0 %v587
    %2066 = vmatprep.subr.mxu0 0.0
    %2067 = vmatpush1.msra.mxu0 %v588
    %2068 = vmatprep.subr.mxu0 0.0
    %2069 = vmatpush1.msra.mxu0 %v589
    %2070 = vmatprep.subr.mxu0 0.0
    %2071 = vmatpush1.msra.mxu0 0.0
    %2072 = vmatprep.subr.mxu0 0.0
    %2073 = vmatpush1.msra.mxu0 0.0
    %2074 = vmatprep.subr.mxu0 0.0
    %2075 = vmatpush1.msra.mxu0 0.0
    %2076 = vmatprep.subr.mxu0 0.0
    %2077 = vmatpush1.msra.mxu0 0.0
    %2078 = vmatprep.subr.mxu0 0.0
    %2079 = vmatpush1.msra.mxu0 0.0
    %2080 = vmatprep.subr.mxu0 0.0
    %2081 = vmatpush1.msra.mxu0 0.0
    %2082 = vmatprep.subr.mxu0 0.0
    %2083 = vmatpush1.msra.mxu0 0.0
    %2084 = vmatprep.subr.mxu0 0.0
    %2085 = vmatpush1.msra.mxu0 0.0
    %2086 = vmatprep.subr.mxu0 0.0
    %2087 = vmatpush1.msra.mxu0 0.0
    %2088 = vmatprep.subr.mxu0 0.0
    %2089 = vmatpush1.msra.mxu0 0.0
    %2090 = vmatprep.subr.mxu0 0.0
    %2091 = vmatpush1.msra.mxu0 0.0
    %2092 = vmatprep.subr.mxu0 0.0
    %2093 = vmatpush1.msra.mxu0 0.0
    %2094 = vmatprep.subr.mxu0 0.0
    %2095 = vmatpush1.msra.mxu0 0.0
    %2096 = vmatprep.subr.mxu0 0.0
    %2097 = vmatpush1.msra.mxu0 0.0
    %2098 = vmatprep.subr.mxu0 0.0
    %2099 = vmatpush1.msra.mxu0 0.0
    %2100 = vmatprep.subr.mxu0 0.0
    %2101 = vmatpush1.msra.mxu0 0.0
    %2102 = vmatprep.subr.mxu0 0.0
    %2103 = vmatpush1.msra.mxu0 0.0
    %2104 = vmatprep.subr.mxu0 0.0
    %2105 = vmatpush1.msra.mxu0 0.0
    %2106 = vmatprep.subr.mxu0 0.0
    %2107 = vmatpush1.msra.mxu0 0.0
    %2108 = vmatprep.subr.mxu0 0.0
    %2109 = vmatpush1.msra.mxu0 0.0
    %2110 = vmatprep.subr.mxu0 0.0
    %2111 = vmatpush1.msra.mxu0 0.0
    %2112 = vmatprep.subr.mxu0 0.0
    %2113 = vmatpush1.msra.mxu0 0.0
    %2114 = vmatprep.subr.mxu0 0.0
    %2115 = vmatpush1.msra.mxu0 0.0
    %2116 = vmatprep.subr.mxu0 0.0
    %2117 = vmatpush1.msra.mxu0 0.0
    %2118 = vmatprep.subr.mxu0 0.0
    %2119 = vmatpush1.msra.mxu0 0.0
    %2120 = vmatprep.subr.mxu0 0.0
    %2121 = vmatpush1.msra.mxu0 0.0
    %2122 = vmatprep.subr.mxu0 0.0
    %2123 = vmatpush1.msra.mxu0 0.0
    %2124 = vmatprep.subr.mxu0 0.0
    %2125 = vmatpush1.msra.mxu0 0.0
    %2126 = vmatprep.mubr.f32.mxu0 0.0
    %2127 = vmatmul.mubr.f32.gmra.mrb[0].mxu0 %v2060
    %v2128 = vpop.f32.mrb[0].mxu0
    %v2129 = vadd.f32 0.0, %v2128
    %v2130 = vpop.f32.mrb[0].mxu0
    %2131 = vdwg.mxu0
    %2132 = vmatprep.subr.mxu0 0.0
    %2133 = vmatpush1.msra.mxu0 %v590
    %2134 = vmatprep.subr.mxu0 0.0
    %2135 = vmatpush1.msra.mxu0 %v591
    %2136 = vmatprep.subr.mxu0 0.0
    %2137 = vmatpush1.msra.mxu0 %v592
    %2138 = vmatprep.subr.mxu0 0.0
    %2139 = vmatpush1.msra.mxu0 %v593
    %2140 = vmatprep.subr.mxu0 0.0
    %2141 = vmatpush1.msra.mxu0 0.0
    %2142 = vmatprep.subr.mxu0 0.0
    %2143 = vmatpush1.msra.mxu0 0.0
    %2144 = vmatprep.subr.mxu0 0.0
    %2145 = vmatpush1.msra.mxu0 0.0
    %2146 = vmatprep.subr.mxu0 0.0
    %2147 = vmatpush1.msra.mxu0 0.0
    %2148 = vmatprep.subr.mxu0 0.0
    %2149 = vmatpush1.msra.mxu0 0.0
    %2150 = vmatprep.subr.mxu0 0.0
    %2151 = vmatpush1.msra.mxu0 0.0
    %2152 = vmatprep.subr.mxu0 0.0
    %2153 = vmatpush1.msra.mxu0 0.0
    %2154 = vmatprep.subr.mxu0 0.0
    %2155 = vmatpush1.msra.mxu0 0.0
    %2156 = vmatprep.subr.mxu0 0.0
    %2157 = vmatpush1.msra.mxu0 0.0
    %2158 = vmatprep.subr.mxu0 0.0
    %2159 = vmatpush1.msra.mxu0 0.0
    %2160 = vmatprep.subr.mxu0 0.0
    %2161 = vmatpush1.msra.mxu0 0.0
    %2162 = vmatprep.subr.mxu0 0.0
    %2163 = vmatpush1.msra.mxu0 0.0
    %2164 = vmatprep.subr.mxu0 0.0
    %2165 = vmatpush1.msra.mxu0 0.0
    %2166 = vmatprep.subr.mxu0 0.0
    %2167 = vmatpush1.msra.mxu0 0.0
    %2168 = vmatprep.subr.mxu0 0.0
    %2169 = vmatpush1.msra.mxu0 0.0
    %2170 = vmatprep.subr.mxu0 0.0
    %2171 = vmatpush1.msra.mxu0 0.0
    %2172 = vmatprep.subr.mxu0 0.0
    %2173 = vmatpush1.msra.mxu0 0.0
    %2174 = vmatprep.subr.mxu0 0.0
    %2175 = vmatpush1.msra.mxu0 0.0
    %2176 = vmatprep.subr.mxu0 0.0
    %2177 = vmatpush1.msra.mxu0 0.0
    %2178 = vmatprep.subr.mxu0 0.0
    %2179 = vmatpush1.msra.mxu0 0.0
    %2180 = vmatprep.subr.mxu0 0.0
    %2181 = vmatpush1.msra.mxu0 0.0
    %2182 = vmatprep.subr.mxu0 0.0
    %2183 = vmatpush1.msra.mxu0 0.0
    %2184 = vmatprep.subr.mxu0 0.0
    %2185 = vmatpush1.msra.mxu0 0.0
    %2186 = vmatprep.subr.mxu0 0.0
    %2187 = vmatpush1.msra.mxu0 0.0
    %2188 = vmatprep.subr.mxu0 0.0
    %2189 = vmatpush1.msra.mxu0 0.0
    %2190 = vmatprep.subr.mxu0 0.0
    %2191 = vmatpush1.msra.mxu0 0.0
    %2192 = vmatprep.subr.mxu0 0.0
    %2193 = vmatpush1.msra.mxu0 0.0
    %2194 = vmatprep.subr.mxu0 0.0
    %2195 = vmatpush1.msra.mxu0 0.0
    %2196 = vmatprep.mubr.f32.mxu0 0.0
    %2197 = vmatmul.mubr.f32.gmra.mrb[0].mxu0 %v2060
    %v2198 = vpop.f32.mrb[0].mxu0
    %v2199 = vadd.f32 0.0, %v2198
    %v2200 = vpop.f32.mrb[0].mxu0
    %2201 = vdwg.mxu0
    %v2203 = vrot.slane %v2129, 4
    %v2205 = vadd.f32 %v411, %v2203
    %v2206 = vxor.u32 %v2205, 2147483648
    %v2207 = vmul.f32 %v2206, 1.442695
    %v2208 = vpow.pop %v2207
    %v2209 = vadd.f32 %v2208, 1.0
    %v2210 = vrcp.pop %v2209
    %v2211 = vmul.f32 1.0, %v2210
    %v2213 = vrot.slane %v2199, 4
    %v2215 = vadd.f32 %v497, %v2213
    %v2216 = vxor.u32 %v2215, 2147483648
    %v2217 = vmul.f32 %v2216, 1.442695
    %v2218 = vpow.pop %v2217
    %v2219 = vadd.f32 %v2218, 1.0
    %v2220 = vrcp.pop %v2219
    %v2221 = vmul.f32 1.0, %v2220
    %2222 = vmatprep.subr.mxu0 0.0
    %2223 = vmatpush1.msra.mxu0 %v594
    %2224 = vmatprep.subr.mxu0 0.0
    %2225 = vmatpush1.msra.mxu0 %v595
    %2226 = vmatprep.subr.mxu0 0.0
    %2227 = vmatpush1.msra.mxu0 %v596
    %2228 = vmatprep.subr.mxu0 0.0
    %2229 = vmatpush1.msra.mxu0 %v597
    %2230 = vmatprep.subr.mxu0 0.0
    %2231 = vmatpush1.msra.mxu0 0.0
    %2232 = vmatprep.subr.mxu0 0.0
    %2233 = vmatpush1.msra.mxu0 0.0
    %2234 = vmatprep.subr.mxu0 0.0
    %2235 = vmatpush1.msra.mxu0 0.0
    %2236 = vmatprep.subr.mxu0 0.0
    %2237 = vmatpush1.msra.mxu0 0.0
    %2238 = vmatprep.subr.mxu0 0.0
    %2239 = vmatpush1.msra.mxu0 0.0
    %2240 = vmatprep.subr.mxu0 0.0
    %2241 = vmatpush1.msra.mxu0 0.0
    %2242 = vmatprep.subr.mxu0 0.0
    %2243 = vmatpush1.msra.mxu0 0.0
    %2244 = vmatprep.subr.mxu0 0.0
    %2245 = vmatpush1.msra.mxu0 0.0
    %2246 = vmatprep.subr.mxu0 0.0
    %2247 = vmatpush1.msra.mxu0 0.0
    %2248 = vmatprep.subr.mxu0 0.0
    %2249 = vmatpush1.msra.mxu0 0.0
    %2250 = vmatprep.subr.mxu0 0.0
    %2251 = vmatpush1.msra.mxu0 0.0
    %2252 = vmatprep.subr.mxu0 0.0
    %2253 = vmatpush1.msra.mxu0 0.0
    %2254 = vmatprep.subr.mxu0 0.0
    %2255 = vmatpush1.msra.mxu0 0.0
    %2256 = vmatprep.subr.mxu0 0.0
    %2257 = vmatpush1.msra.mxu0 0.0
    %2258 = vmatprep.subr.mxu0 0.0
    %2259 = vmatpush1.msra.mxu0 0.0
    %2260 = vmatprep.subr.mxu0 0.0
    %2261 = vmatpush1.msra.mxu0 0.0
    %2262 = vmatprep.subr.mxu0 0.0
    %2263 = vmatpush1.msra.mxu0 0.0
    %2264 = vmatprep.subr.mxu0 0.0
    %2265 = vmatpush1.msra.mxu0 0.0
    %2266 = vmatprep.subr.mxu0 0.0
    %2267 = vmatpush1.msra.mxu0 0.0
    %2268 = vmatprep.subr.mxu0 0.0
    %2269 = vmatpush1.msra.mxu0 0.0
    %2270 = vmatprep.subr.mxu0 0.0
    %2271 = vmatpush1.msra.mxu0 0.0
    %2272 = vmatprep.subr.mxu0 0.0
    %2273 = vmatpush1.msra.mxu0 0.0
    %2274 = vmatprep.subr.mxu0 0.0
    %2275 = vmatpush1.msra.mxu0 0.0
    %2276 = vmatprep.subr.mxu0 0.0
    %2277 = vmatpush1.msra.mxu0 0.0
    %2278 = vmatprep.subr.mxu0 0.0
    %2279 = vmatpush1.msra.mxu0 0.0
    %2280 = vmatprep.subr.mxu0 0.0
    %2281 = vmatpush1.msra.mxu0 0.0
    %2282 = vmatprep.subr.mxu0 0.0
    %2283 = vmatpush1.msra.mxu0 0.0
    %2284 = vmatprep.subr.mxu0 0.0
    %2285 = vmatpush1.msra.mxu0 0.0
    %2286 = vmatprep.mubr.f32.mxu0 0.0
    %2287 = vmatmul.mubr.f32.gmra.mrb[0].mxu0 %v2060
    %v2288 = vpop.f32.mrb[0].mxu0
    %v2289 = vadd.f32 %v761, %v2288
    %v2290 = vpop.f32.mrb[0].mxu0
    %2291 = vdwg.mxu0
    %v2293 = vrot.slane %v2289, 4
    %v2295 = vmul.f32 %v2211, %v2293
    %v2296 = vadd.f32 %v583, %v2295
    %v2297 = vtanh.pop %v2296
    %v2298 = vsub.f32 1.0, %v2221
    %v2299 = vmul.f32 %v2298, %v2297
    %v2300 = vrot.slane %v2057, 6
    %v2302 = vmul.f32 %v2221, %v2300
    %v2303 = vadd.f32 %v2299, %v2302
    %v2305 = vrot.slane %v2303, 4
    %v2306 = vsel %vm599, %v2305, 0
    %2308 = vmatprep.subr.mxu0 0.0
    %2309 = vmatpush1.msra.mxu0 %v586
    %2310 = vmatprep.subr.mxu0 0.0
    %2311 = vmatpush1.msra.mxu0 %v587
    %2312 = vmatprep.subr.mxu0 0.0
    %2313 = vmatpush1.msra.mxu0 %v588
    %2314 = vmatprep.subr.mxu0 0.0
    %2315 = vmatpush1.msra.mxu0 %v589
    %2316 = vmatprep.subr.mxu0 0.0
    %2317 = vmatpush1.msra.mxu0 0.0
    %2318 = vmatprep.subr.mxu0 0.0
    %2319 = vmatpush1.msra.mxu0 0.0
    %2320 = vmatprep.subr.mxu0 0.0
    %2321 = vmatpush1.msra.mxu0 0.0
    %2322 = vmatprep.subr.mxu0 0.0
    %2323 = vmatpush1.msra.mxu0 0.0
    %2324 = vmatprep.subr.mxu0 0.0
    %2325 = vmatpush1.msra.mxu0 0.0
    %2326 = vmatprep.subr.mxu0 0.0
    %2327 = vmatpush1.msra.mxu0 0.0
    %2328 = vmatprep.subr.mxu0 0.0
    %2329 = vmatpush1.msra.mxu0 0.0
    %2330 = vmatprep.subr.mxu0 0.0
    %2331 = vmatpush1.msra.mxu0 0.0
    %2332 = vmatprep.subr.mxu0 0.0
    %2333 = vmatpush1.msra.mxu0 0.0
    %2334 = vmatprep.subr.mxu0 0.0
    %2335 = vmatpush1.msra.mxu0 0.0
    %2336 = vmatprep.subr.mxu0 0.0
    %2337 = vmatpush1.msra.mxu0 0.0
    %2338 = vmatprep.subr.mxu0 0.0
    %2339 = vmatpush1.msra.mxu0 0.0
    %2340 = vmatprep.subr.mxu0 0.0
    %2341 = vmatpush1.msra.mxu0 0.0
    %2342 = vmatprep.subr.mxu0 0.0
    %2343 = vmatpush1.msra.mxu0 0.0
    %2344 = vmatprep.subr.mxu0 0.0
    %2345 = vmatpush1.msra.mxu0 0.0
    %2346 = vmatprep.subr.mxu0 0.0
    %2347 = vmatpush1.msra.mxu0 0.0
    %2348 = vmatprep.subr.mxu0 0.0
    %2349 = vmatpush1.msra.mxu0 0.0
    %2350 = vmatprep.subr.mxu0 0.0
    %2351 = vmatpush1.msra.mxu0 0.0
    %2352 = vmatprep.subr.mxu0 0.0
    %2353 = vmatpush1.msra.mxu0 0.0
    %2354 = vmatprep.subr.mxu0 0.0
    %2355 = vmatpush1.msra.mxu0 0.0
    %2356 = vmatprep.subr.mxu0 0.0
    %2357 = vmatpush1.msra.mxu0 0.0
    %2358 = vmatprep.subr.mxu0 0.0
    %2359 = vmatpush1.msra.mxu0 0.0
    %2360 = vmatprep.subr.mxu0 0.0
    %2361 = vmatpush1.msra.mxu0 0.0
    %2362 = vmatprep.subr.mxu0 0.0
    %2363 = vmatpush1.msra.mxu0 0.0
    %2364 = vmatprep.subr.mxu0 0.0
    %2365 = vmatpush1.msra.mxu0 0.0
    %2366 = vmatprep.subr.mxu0 0.0
    %2367 = vmatpush1.msra.mxu0 0.0
    %2368 = vmatprep.subr.mxu0 0.0
    %2369 = vmatpush1.msra.mxu0 0.0
    %2370 = vmatprep.subr.mxu0 0.0
    %2371 = vmatpush1.msra.mxu0 0.0
    %2372 = vmatprep.mubr.f32.mxu0 0.0
    %2373 = vmatmul.mubr.f32.gmra.mrb[0].mxu0 %v2306
    %v2374 = vpop.f32.mrb[0].mxu0
    %v2375 = vadd.f32 0.0, %v2374
    %v2376 = vpop.f32.mrb[0].mxu0
    %2377 = vdwg.mxu0
    %2378 = vmatprep.subr.mxu0 0.0
    %2379 = vmatpush1.msra.mxu0 %v590
    %2380 = vmatprep.subr.mxu0 0.0
    %2381 = vmatpush1.msra.mxu0 %v591
    %2382 = vmatprep.subr.mxu0 0.0
    %2383 = vmatpush1.msra.mxu0 %v592
    %2384 = vmatprep.subr.mxu0 0.0
    %2385 = vmatpush1.msra.mxu0 %v593
    %2386 = vmatprep.subr.mxu0 0.0
    %2387 = vmatpush1.msra.mxu0 0.0
    %2388 = vmatprep.subr.mxu0 0.0
    %2389 = vmatpush1.msra.mxu0 0.0
    %2390 = vmatprep.subr.mxu0 0.0
    %2391 = vmatpush1.msra.mxu0 0.0
    %2392 = vmatprep.subr.mxu0 0.0
    %2393 = vmatpush1.msra.mxu0 0.0
    %2394 = vmatprep.subr.mxu0 0.0
    %2395 = vmatpush1.msra.mxu0 0.0
    %2396 = vmatprep.subr.mxu0 0.0
    %2397 = vmatpush1.msra.mxu0 0.0
    %2398 = vmatprep.subr.mxu0 0.0
    %2399 = vmatpush1.msra.mxu0 0.0
    %2400 = vmatprep.subr.mxu0 0.0
    %2401 = vmatpush1.msra.mxu0 0.0
    %2402 = vmatprep.subr.mxu0 0.0
    %2403 = vmatpush1.msra.mxu0 0.0
    %2404 = vmatprep.subr.mxu0 0.0
    %2405 = vmatpush1.msra.mxu0 0.0
    %2406 = vmatprep.subr.mxu0 0.0
    %2407 = vmatpush1.msra.mxu0 0.0
    %2408 = vmatprep.subr.mxu0 0.0
    %2409 = vmatpush1.msra.mxu0 0.0
    %2410 = vmatprep.subr.mxu0 0.0
    %2411 = vmatpush1.msra.mxu0 0.0
    %2412 = vmatprep.subr.mxu0 0.0
    %2413 = vmatpush1.msra.mxu0 0.0
    %2414 = vmatprep.subr.mxu0 0.0
    %2415 = vmatpush1.msra.mxu0 0.0
    %2416 = vmatprep.subr.mxu0 0.0
    %2417 = vmatpush1.msra.mxu0 0.0
    %2418 = vmatprep.subr.mxu0 0.0
    %2419 = vmatpush1.msra.mxu0 0.0
    %2420 = vmatprep.subr.mxu0 0.0
    %2421 = vmatpush1.msra.mxu0 0.0
    %2422 = vmatprep.subr.mxu0 0.0
    %2423 = vmatpush1.msra.mxu0 0.0
    %2424 = vmatprep.subr.mxu0 0.0
    %2425 = vmatpush1.msra.mxu0 0.0
    %2426 = vmatprep.subr.mxu0 0.0
    %2427 = vmatpush1.msra.mxu0 0.0
    %2428 = vmatprep.subr.mxu0 0.0
    %2429 = vmatpush1.msra.mxu0 0.0
    %2430 = vmatprep.subr.mxu0 0.0
    %2431 = vmatpush1.msra.mxu0 0.0
    %2432 = vmatprep.subr.mxu0 0.0
    %2433 = vmatpush1.msra.mxu0 0.0
    %2434 = vmatprep.subr.mxu0 0.0
    %2435 = vmatpush1.msra.mxu0 0.0
    %2436 = vmatprep.subr.mxu0 0.0
    %2437 = vmatpush1.msra.mxu0 0.0
    %2438 = vmatprep.subr.mxu0 0.0
    %2439 = vmatpush1.msra.mxu0 0.0
    %2440 = vmatprep.subr.mxu0 0.0
    %2441 = vmatpush1.msra.mxu0 0.0
    %2442 = vmatprep.mubr.f32.mxu0 0.0
    %2443 = vmatmul.mubr.f32.gmra.mrb[0].mxu0 %v2306
    %v2444 = vpop.f32.mrb[0].mxu0
    %v2445 = vadd.f32 0.0, %v2444
    %v2446 = vpop.f32.mrb[0].mxu0
    %2447 = vdwg.mxu0
    %v2449 = vrot.slane %v2375, 2
    %v2451 = vadd.f32 %v411, %v2449
    %v2452 = vxor.u32 %v2451, 2147483648
    %v2453 = vmul.f32 %v2452, 1.442695
    %v2454 = vpow.pop %v2453
    %v2455 = vadd.f32 %v2454, 1.0
    %v2456 = vrcp.pop %v2455
    %v2457 = vmul.f32 1.0, %v2456
    %v2459 = vrot.slane %v2445, 2
    %v2461 = vadd.f32 %v497, %v2459
    %v2462 = vxor.u32 %v2461, 2147483648
    %v2463 = vmul.f32 %v2462, 1.442695
    %v2464 = vpow.pop %v2463
    %v2465 = vadd.f32 %v2464, 1.0
    %v2466 = vrcp.pop %v2465
    %v2467 = vmul.f32 1.0, %v2466
    %2468 = vmatprep.subr.mxu0 0.0
    %2469 = vmatpush1.msra.mxu0 %v594
    %2470 = vmatprep.subr.mxu0 0.0
    %2471 = vmatpush1.msra.mxu0 %v595
    %2472 = vmatprep.subr.mxu0 0.0
    %2473 = vmatpush1.msra.mxu0 %v596
    %2474 = vmatprep.subr.mxu0 0.0
    %2475 = vmatpush1.msra.mxu0 %v597
    %2476 = vmatprep.subr.mxu0 0.0
    %2477 = vmatpush1.msra.mxu0 0.0
    %2478 = vmatprep.subr.mxu0 0.0
    %2479 = vmatpush1.msra.mxu0 0.0
    %2480 = vmatprep.subr.mxu0 0.0
    %2481 = vmatpush1.msra.mxu0 0.0
    %2482 = vmatprep.subr.mxu0 0.0
    %2483 = vmatpush1.msra.mxu0 0.0
    %2484 = vmatprep.subr.mxu0 0.0
    %2485 = vmatpush1.msra.mxu0 0.0
    %2486 = vmatprep.subr.mxu0 0.0
    %2487 = vmatpush1.msra.mxu0 0.0
    %2488 = vmatprep.subr.mxu0 0.0
    %2489 = vmatpush1.msra.mxu0 0.0
    %2490 = vmatprep.subr.mxu0 0.0
    %2491 = vmatpush1.msra.mxu0 0.0
    %2492 = vmatprep.subr.mxu0 0.0
    %2493 = vmatpush1.msra.mxu0 0.0
    %2494 = vmatprep.subr.mxu0 0.0
    %2495 = vmatpush1.msra.mxu0 0.0
    %2496 = vmatprep.subr.mxu0 0.0
    %2497 = vmatpush1.msra.mxu0 0.0
    %2498 = vmatprep.subr.mxu0 0.0
    %2499 = vmatpush1.msra.mxu0 0.0
    %2500 = vmatprep.subr.mxu0 0.0
    %2501 = vmatpush1.msra.mxu0 0.0
    %2502 = vmatprep.subr.mxu0 0.0
    %2503 = vmatpush1.msra.mxu0 0.0
    %2504 = vmatprep.subr.mxu0 0.0
    %2505 = vmatpush1.msra.mxu0 0.0
    %2506 = vmatprep.subr.mxu0 0.0
    %2507 = vmatpush1.msra.mxu0 0.0
    %2508 = vmatprep.subr.mxu0 0.0
    %2509 = vmatpush1.msra.mxu0 0.0
    %2510 = vmatprep.subr.mxu0 0.0
    %2511 = vmatpush1.msra.mxu0 0.0
    %2512 = vmatprep.subr.mxu0 0.0
    %2513 = vmatpush1.msra.mxu0 0.0
    %2514 = vmatprep.subr.mxu0 0.0
    %2515 = vmatpush1.msra.mxu0 0.0
    %2516 = vmatprep.subr.mxu0 0.0
    %2517 = vmatpush1.msra.mxu0 0.0
    %2518 = vmatprep.subr.mxu0 0.0
    %2519 = vmatpush1.msra.mxu0 0.0
    %2520 = vmatprep.subr.mxu0 0.0
    %2521 = vmatpush1.msra.mxu0 0.0
    %2522 = vmatprep.subr.mxu0 0.0
    %2523 = vmatpush1.msra.mxu0 0.0
    %2524 = vmatprep.subr.mxu0 0.0
    %2525 = vmatpush1.msra.mxu0 0.0
    %2526 = vmatprep.subr.mxu0 0.0
    %2527 = vmatpush1.msra.mxu0 0.0
    %2528 = vmatprep.subr.mxu0 0.0
    %2529 = vmatpush1.msra.mxu0 0.0
    %2530 = vmatprep.subr.mxu0 0.0
    %2531 = vmatpush1.msra.mxu0 0.0
    %2532 = vmatprep.mubr.f32.mxu0 0.0
    %2533 = vmatmul.mubr.f32.gmra.mrb[0].mxu0 %v2306
    %v2534 = vpop.f32.mrb[0].mxu0
    %v2535 = vadd.f32 %v761, %v2534
    %v2536 = vpop.f32.mrb[0].mxu0
    %2537 = vdwg.mxu0
    %v2539 = vrot.slane %v2535, 2
    %v2541 = vmul.f32 %v2457, %v2539
    %v2542 = vadd.f32 %v583, %v2541
    %v2543 = vtanh.pop %v2542
    %v2544 = vsub.f32 1.0, %v2467
    %v2545 = vmul.f32 %v2544, %v2543
    %v2546 = vrot.slane %v2303, 6
    %v2548 = vmul.f32 %v2467, %v2546
    %v2549 = vadd.f32 %v2545, %v2548
    %v2550 = vld [vmem:[%s23] sm:$0xff]
    %v2551 = vld [vmem:[%s23 + $0x8] sm:$0xff]
    %v2552 = vld [vmem:[%s23 + $0x10] sm:$0xff]
    %v2553 = vld [vmem:[%s23 + $0x18] sm:$0xff]
    %v2554 = vld [vmem:[#allocation16] sm:$0xff]
    %v2555 = vld [vmem:[#allocation16 + $0x8] sm:$0xff]
    %v2556 = vld [vmem:[#allocation16 + $0x10] sm:$0xff]
    %v2557 = vld [vmem:[#allocation16 + $0x18] sm:$0xff]
    %v2558 = vld [vmem:[#allocation17] sm:$0xff]
    %v2559 = vld [vmem:[#allocation17 + $0x8] sm:$0xff]
    %v2560 = vld [vmem:[#allocation17 + $0x10] sm:$0xff]
    %v2561 = vld [vmem:[#allocation17 + $0x18] sm:$0xff]
    %v2562 = vld [vmem:[#allocation19] sm:$0xff]
    %v2563 = vld [vmem:[#allocation19 + $0x8] sm:$0xff]
    %v2564 = vld [vmem:[#allocation19 + $0x10] sm:$0xff]
    %v2565 = vld [vmem:[#allocation19 + $0x18] sm:$0xff]
    %v2566 = vld [vmem:[#allocation20] sm:$0xff]
    %v2567 = vld [vmem:[#allocation20 + $0x8] sm:$0xff]
    %v2568 = vld [vmem:[#allocation20 + $0x10] sm:$0xff]
    %v2569 = vld [vmem:[#allocation20 + $0x18] sm:$0xff]
    %v2570 = vld [vmem:[#allocation22] sm:$0xff]
    %v2571 = vld [vmem:[#allocation22 + $0x8] sm:$0xff]
    %v2572 = vld [vmem:[#allocation22 + $0x10] sm:$0xff]
    %v2573 = vld [vmem:[#allocation22 + $0x18] sm:$0xff]
    %v2574 = vld [vmem:[#allocation23] sm:$0x1]
    %v2575 = vld [vmem:[%s37] sm:$0x1]
    %v2576 = vld [vmem:[%s39] sm:$0x1]
    %v2577 = vld [vmem:[%s41] sm:$0x1]
    %v2579 = vlaneseq
    %v2580 = vshrl.u32 %v2579, 7
    %v2581 = vsub.s32 0, %v2580
    %v2582 = vrot.slane %v2574, %v2581
    %2584 = vmatprep.subr.mxu0 0.0
    %2585 = vmatpush1.msra.mxu0 %v2550
    %2586 = vmatprep.subr.mxu0 0.0
    %2587 = vmatpush1.msra.mxu0 %v2551
    %2588 = vmatprep.subr.mxu0 0.0
    %2589 = vmatpush1.msra.mxu0 %v2552
    %2590 = vmatprep.subr.mxu0 0.0
    %2591 = vmatpush1.msra.mxu0 %v2553
    %2592 = vmatprep.subr.mxu0 0.0
    %2593 = vmatpush1.msra.mxu0 0.0
    %2594 = vmatprep.subr.mxu0 0.0
    %2595 = vmatpush1.msra.mxu0 0.0
    %2596 = vmatprep.subr.mxu0 0.0
    %2597 = vmatpush1.msra.mxu0 0.0
    %2598 = vmatprep.subr.mxu0 0.0
    %2599 = vmatpush1.msra.mxu0 0.0
    %2600 = vmatprep.subr.mxu0 0.0
    %2601 = vmatpush1.msra.mxu0 0.0
    %2602 = vmatprep.subr.mxu0 0.0
    %2603 = vmatpush1.msra.mxu0 0.0
    %2604 = vmatprep.subr.mxu0 0.0
    %2605 = vmatpush1.msra.mxu0 0.0
    %2606 = vmatprep.subr.mxu0 0.0
    %2607 = vmatpush1.msra.mxu0 0.0
    %2608 = vmatprep.subr.mxu0 0.0
    %2609 = vmatpush1.msra.mxu0 0.0
    %2610 = vmatprep.subr.mxu0 0.0
    %2611 = vmatpush1.msra.mxu0 0.0
    %2612 = vmatprep.subr.mxu0 0.0
    %2613 = vmatpush1.msra.mxu0 0.0
    %2614 = vmatprep.subr.mxu0 0.0
    %2615 = vmatpush1.msra.mxu0 0.0
    %2616 = vmatprep.subr.mxu0 0.0
    %2617 = vmatpush1.msra.mxu0 0.0
    %2618 = vmatprep.subr.mxu0 0.0
    %2619 = vmatpush1.msra.mxu0 0.0
    %2620 = vmatprep.subr.mxu0 0.0
    %2621 = vmatpush1.msra.mxu0 0.0
    %2622 = vmatprep.subr.mxu0 0.0
    %2623 = vmatpush1.msra.mxu0 0.0
    %2624 = vmatprep.subr.mxu0 0.0
    %2625 = vmatpush1.msra.mxu0 0.0
    %2626 = vmatprep.subr.mxu0 0.0
    %2627 = vmatpush1.msra.mxu0 0.0
    %2628 = vmatprep.subr.mxu0 0.0
    %2629 = vmatpush1.msra.mxu0 0.0
    %2630 = vmatprep.subr.mxu0 0.0
    %2631 = vmatpush1.msra.mxu0 0.0
    %2632 = vmatprep.subr.mxu0 0.0
    %2633 = vmatpush1.msra.mxu0 0.0
    %2634 = vmatprep.subr.mxu0 0.0
    %2635 = vmatpush1.msra.mxu0 0.0
    %2636 = vmatprep.subr.mxu0 0.0
    %2637 = vmatpush1.msra.mxu0 0.0
    %2638 = vmatprep.subr.mxu0 0.0
    %2639 = vmatpush1.msra.mxu0 0.0
    %2640 = vmatprep.subr.mxu0 0.0
    %2641 = vmatpush1.msra.mxu0 0.0
    %2642 = vmatprep.subr.mxu0 0.0
    %2643 = vmatpush1.msra.mxu0 0.0
    %2644 = vmatprep.subr.mxu0 0.0
    %2645 = vmatpush1.msra.mxu0 0.0
    %2646 = vmatprep.subr.mxu0 0.0
    %2647 = vmatpush1.msra.mxu0 0.0
    %2648 = vmatprep.mubr.f32.mxu0 0.0
    %2649 = vmatmul.mubr.f32.gmra.mrb[0].mxu0 %v841
    %v2650 = vpop.f32.mrb[0].mxu0
    %v2651 = vadd.f32 %v2582, %v2650
    %v2652 = vpop.f32.mrb[0].mxu0
    %2653 = vdwg.mxu0
    %v2655 = vlaneseq
    %v2656 = vshrl.u32 %v2655, 7
    %v2657 = vsub.s32 0, %v2656
    %v2658 = vrot.slane %v2575, %v2657
    %2660 = vmatprep.subr.mxu0 0.0
    %2661 = vmatpush1.msra.mxu0 %v2554
    %2662 = vmatprep.subr.mxu0 0.0
    %2663 = vmatpush1.msra.mxu0 %v2555
    %2664 = vmatprep.subr.mxu0 0.0
    %2665 = vmatpush1.msra.mxu0 %v2556
    %2666 = vmatprep.subr.mxu0 0.0
    %2667 = vmatpush1.msra.mxu0 %v2557
    %2668 = vmatprep.subr.mxu0 0.0
    %2669 = vmatpush1.msra.mxu0 0.0
    %2670 = vmatprep.subr.mxu0 0.0
    %2671 = vmatpush1.msra.mxu0 0.0
    %2672 = vmatprep.subr.mxu0 0.0
    %2673 = vmatpush1.msra.mxu0 0.0
    %2674 = vmatprep.subr.mxu0 0.0
    %2675 = vmatpush1.msra.mxu0 0.0
    %2676 = vmatprep.subr.mxu0 0.0
    %2677 = vmatpush1.msra.mxu0 0.0
    %2678 = vmatprep.subr.mxu0 0.0
    %2679 = vmatpush1.msra.mxu0 0.0
    %2680 = vmatprep.subr.mxu0 0.0
    %2681 = vmatpush1.msra.mxu0 0.0
    %2682 = vmatprep.subr.mxu0 0.0
    %2683 = vmatpush1.msra.mxu0 0.0
    %2684 = vmatprep.subr.mxu0 0.0
    %2685 = vmatpush1.msra.mxu0 0.0
    %2686 = vmatprep.subr.mxu0 0.0
    %2687 = vmatpush1.msra.mxu0 0.0
    %2688 = vmatprep.subr.mxu0 0.0
    %2689 = vmatpush1.msra.mxu0 0.0
    %2690 = vmatprep.subr.mxu0 0.0
    %2691 = vmatpush1.msra.mxu0 0.0
    %2692 = vmatprep.subr.mxu0 0.0
    %2693 = vmatpush1.msra.mxu0 0.0
    %2694 = vmatprep.subr.mxu0 0.0
    %2695 = vmatpush1.msra.mxu0 0.0
    %2696 = vmatprep.subr.mxu0 0.0
    %2697 = vmatpush1.msra.mxu0 0.0
    %2698 = vmatprep.subr.mxu0 0.0
    %2699 = vmatpush1.msra.mxu0 0.0
    %2700 = vmatprep.subr.mxu0 0.0
    %2701 = vmatpush1.msra.mxu0 0.0
    %2702 = vmatprep.subr.mxu0 0.0
    %2703 = vmatpush1.msra.mxu0 0.0
    %2704 = vmatprep.subr.mxu0 0.0
    %2705 = vmatpush1.msra.mxu0 0.0
    %2706 = vmatprep.subr.mxu0 0.0
    %2707 = vmatpush1.msra.mxu0 0.0
    %2708 = vmatprep.subr.mxu0 0.0
    %2709 = vmatpush1.msra.mxu0 0.0
    %2710 = vmatprep.subr.mxu0 0.0
    %2711 = vmatpush1.msra.mxu0 0.0
    %2712 = vmatprep.subr.mxu0 0.0
    %2713 = vmatpush1.msra.mxu0 0.0
    %2714 = vmatprep.subr.mxu0 0.0
    %2715 = vmatpush1.msra.mxu0 0.0
    %2716 = vmatprep.subr.mxu0 0.0
    %2717 = vmatpush1.msra.mxu0 0.0
    %2718 = vmatprep.subr.mxu0 0.0
    %2719 = vmatpush1.msra.mxu0 0.0
    %2720 = vmatprep.subr.mxu0 0.0
    %2721 = vmatpush1.msra.mxu0 0.0
    %2722 = vmatprep.subr.mxu0 0.0
    %2723 = vmatpush1.msra.mxu0 0.0
    %2724 = vmatprep.mubr.f32.mxu0 0.0
    %2725 = vmatmul.mubr.f32.gmra.mrb[0].mxu0 %v841
    %v2726 = vpop.f32.mrb[0].mxu0
    %v2727 = vadd.f32 %v2658, %v2726
    %v2728 = vpop.f32.mrb[0].mxu0
    %2729 = vdwg.mxu0
    %v2731 = vlaneseq
    %v2732 = vshrl.u32 %v2731, 7
    %v2733 = vsub.s32 0, %v2732
    %v2734 = vrot.slane %v2576, %v2733
    %2736 = vmatprep.subr.mxu0 0.0
    %2737 = vmatpush1.msra.mxu0 %v2558
    %2738 = vmatprep.subr.mxu0 0.0
    %2739 = vmatpush1.msra.mxu0 %v2559
    %2740 = vmatprep.subr.mxu0 0.0
    %2741 = vmatpush1.msra.mxu0 %v2560
    %2742 = vmatprep.subr.mxu0 0.0
    %2743 = vmatpush1.msra.mxu0 %v2561
    %2744 = vmatprep.subr.mxu0 0.0
    %2745 = vmatpush1.msra.mxu0 0.0
    %2746 = vmatprep.subr.mxu0 0.0
    %2747 = vmatpush1.msra.mxu0 0.0
    %2748 = vmatprep.subr.mxu0 0.0
    %2749 = vmatpush1.msra.mxu0 0.0
    %2750 = vmatprep.subr.mxu0 0.0
    %2751 = vmatpush1.msra.mxu0 0.0
    %2752 = vmatprep.subr.mxu0 0.0
    %2753 = vmatpush1.msra.mxu0 0.0
    %2754 = vmatprep.subr.mxu0 0.0
    %2755 = vmatpush1.msra.mxu0 0.0
    %2756 = vmatprep.subr.mxu0 0.0
    %2757 = vmatpush1.msra.mxu0 0.0
    %2758 = vmatprep.subr.mxu0 0.0
    %2759 = vmatpush1.msra.mxu0 0.0
    %2760 = vmatprep.subr.mxu0 0.0
    %2761 = vmatpush1.msra.mxu0 0.0
    %2762 = vmatprep.subr.mxu0 0.0
    %2763 = vmatpush1.msra.mxu0 0.0
    %2764 = vmatprep.subr.mxu0 0.0
    %2765 = vmatpush1.msra.mxu0 0.0
    %2766 = vmatprep.subr.mxu0 0.0
    %2767 = vmatpush1.msra.mxu0 0.0
    %2768 = vmatprep.subr.mxu0 0.0
    %2769 = vmatpush1.msra.mxu0 0.0
    %2770 = vmatprep.subr.mxu0 0.0
    %2771 = vmatpush1.msra.mxu0 0.0
    %2772 = vmatprep.subr.mxu0 0.0
    %2773 = vmatpush1.msra.mxu0 0.0
    %2774 = vmatprep.subr.mxu0 0.0
    %2775 = vmatpush1.msra.mxu0 0.0
    %2776 = vmatprep.subr.mxu0 0.0
    %2777 = vmatpush1.msra.mxu0 0.0
    %2778 = vmatprep.subr.mxu0 0.0
    %2779 = vmatpush1.msra.mxu0 0.0
    %2780 = vmatprep.subr.mxu0 0.0
    %2781 = vmatpush1.msra.mxu0 0.0
    %2782 = vmatprep.subr.mxu0 0.0
    %2783 = vmatpush1.msra.mxu0 0.0
    %2784 = vmatprep.subr.mxu0 0.0
    %2785 = vmatpush1.msra.mxu0 0.0
    %2786 = vmatprep.subr.mxu0 0.0
    %2787 = vmatpush1.msra.mxu0 0.0
    %2788 = vmatprep.subr.mxu0 0.0
    %2789 = vmatpush1.msra.mxu0 0.0
    %2790 = vmatprep.subr.mxu0 0.0
    %2791 = vmatpush1.msra.mxu0 0.0
    %2792 = vmatprep.subr.mxu0 0.0
    %2793 = vmatpush1.msra.mxu0 0.0
    %2794 = vmatprep.subr.mxu0 0.0
    %2795 = vmatpush1.msra.mxu0 0.0
    %2796 = vmatprep.subr.mxu0 0.0
    %2797 = vmatpush1.msra.mxu0 0.0
    %2798 = vmatprep.subr.mxu0 0.0
    %2799 = vmatpush1.msra.mxu0 0.0
    %2800 = vmatprep.mubr.f32.mxu0 0.0
    %2801 = vmatmul.mubr.f32.gmra.mrb[0].mxu0 %v841
    %v2802 = vpop.f32.mrb[0].mxu0
    %v2803 = vadd.f32 %v2734, %v2802
    %v2804 = vpop.f32.mrb[0].mxu0
    %2805 = vdwg.mxu0
    %2806 = vmatprep.subr.mxu0 0.0
    %2807 = vmatpush1.msra.mxu0 %v2562
    %2808 = vmatprep.subr.mxu0 0.0
    %2809 = vmatpush1.msra.mxu0 %v2563
    %2810 = vmatprep.subr.mxu0 0.0
    %2811 = vmatpush1.msra.mxu0 %v2564
    %2812 = vmatprep.subr.mxu0 0.0
    %2813 = vmatpush1.msra.mxu0 %v2565
    %2814 = vmatprep.subr.mxu0 0.0
    %2815 = vmatpush1.msra.mxu0 0.0
    %2816 = vmatprep.subr.mxu0 0.0
    %2817 = vmatpush1.msra.mxu0 0.0
    %2818 = vmatprep.subr.mxu0 0.0
    %2819 = vmatpush1.msra.mxu0 0.0
    %2820 = vmatprep.subr.mxu0 0.0
    %2821 = vmatpush1.msra.mxu0 0.0
    %2822 = vmatprep.subr.mxu0 0.0
    %2823 = vmatpush1.msra.mxu0 0.0
    %2824 = vmatprep.subr.mxu0 0.0
    %2825 = vmatpush1.msra.mxu0 0.0
    %2826 = vmatprep.subr.mxu0 0.0
    %2827 = vmatpush1.msra.mxu0 0.0
    %2828 = vmatprep.subr.mxu0 0.0
    %2829 = vmatpush1.msra.mxu0 0.0
    %2830 = vmatprep.subr.mxu0 0.0
    %2831 = vmatpush1.msra.mxu0 0.0
    %2832 = vmatprep.subr.mxu0 0.0
    %2833 = vmatpush1.msra.mxu0 0.0
    %2834 = vmatprep.subr.mxu0 0.0
    %2835 = vmatpush1.msra.mxu0 0.0
    %2836 = vmatprep.subr.mxu0 0.0
    %2837 = vmatpush1.msra.mxu0 0.0
    %2838 = vmatprep.subr.mxu0 0.0
    %2839 = vmatpush1.msra.mxu0 0.0
    %2840 = vmatprep.subr.mxu0 0.0
    %2841 = vmatpush1.msra.mxu0 0.0
    %2842 = vmatprep.subr.mxu0 0.0
    %2843 = vmatpush1.msra.mxu0 0.0
    %2844 = vmatprep.subr.mxu0 0.0
    %2845 = vmatpush1.msra.mxu0 0.0
    %2846 = vmatprep.subr.mxu0 0.0
    %2847 = vmatpush1.msra.mxu0 0.0
    %2848 = vmatprep.subr.mxu0 0.0
    %2849 = vmatpush1.msra.mxu0 0.0
    %2850 = vmatprep.subr.mxu0 0.0
    %2851 = vmatpush1.msra.mxu0 0.0
    %2852 = vmatprep.subr.mxu0 0.0
    %2853 = vmatpush1.msra.mxu0 0.0
    %2854 = vmatprep.subr.mxu0 0.0
    %2855 = vmatpush1.msra.mxu0 0.0
    %2856 = vmatprep.subr.mxu0 0.0
    %2857 = vmatpush1.msra.mxu0 0.0
    %2858 = vmatprep.subr.mxu0 0.0
    %2859 = vmatpush1.msra.mxu0 0.0
    %2860 = vmatprep.subr.mxu0 0.0
    %2861 = vmatpush1.msra.mxu0 0.0
    %2862 = vmatprep.subr.mxu0 0.0
    %2863 = vmatpush1.msra.mxu0 0.0
    %2864 = vmatprep.subr.mxu0 0.0
    %2865 = vmatpush1.msra.mxu0 0.0
    %2866 = vmatprep.subr.mxu0 0.0
    %2867 = vmatpush1.msra.mxu0 0.0
    %2868 = vmatprep.subr.mxu0 0.0
    %2869 = vmatpush1.msra.mxu0 0.0
    %2870 = vmatprep.mubr.f32.mxu0 0.0
    %2871 = vmatmul.mubr.f32.gmra.mrb[0].mxu0 %v601
    %v2872 = vpop.f32.mrb[0].mxu0
    %v2873 = vadd.f32 0.0, %v2872
    %v2874 = vpop.f32.mrb[0].mxu0
    %2875 = vdwg.mxu0
    %2876 = vmatprep.subr.mxu0 0.0
    %2877 = vmatpush1.msra.mxu0 %v2566
    %2878 = vmatprep.subr.mxu0 0.0
    %2879 = vmatpush1.msra.mxu0 %v2567
    %2880 = vmatprep.subr.mxu0 0.0
    %2881 = vmatpush1.msra.mxu0 %v2568
    %2882 = vmatprep.subr.mxu0 0.0
    %2883 = vmatpush1.msra.mxu0 %v2569
    %2884 = vmatprep.subr.mxu0 0.0
    %2885 = vmatpush1.msra.mxu0 0.0
    %2886 = vmatprep.subr.mxu0 0.0
    %2887 = vmatpush1.msra.mxu0 0.0
    %2888 = vmatprep.subr.mxu0 0.0
    %2889 = vmatpush1.msra.mxu0 0.0
    %2890 = vmatprep.subr.mxu0 0.0
    %2891 = vmatpush1.msra.mxu0 0.0
    %2892 = vmatprep.subr.mxu0 0.0
    %2893 = vmatpush1.msra.mxu0 0.0
    %2894 = vmatprep.subr.mxu0 0.0
    %2895 = vmatpush1.msra.mxu0 0.0
    %2896 = vmatprep.subr.mxu0 0.0
    %2897 = vmatpush1.msra.mxu0 0.0
    %2898 = vmatprep.subr.mxu0 0.0
    %2899 = vmatpush1.msra.mxu0 0.0
    %2900 = vmatprep.subr.mxu0 0.0
    %2901 = vmatpush1.msra.mxu0 0.0
    %2902 = vmatprep.subr.mxu0 0.0
    %2903 = vmatpush1.msra.mxu0 0.0
    %2904 = vmatprep.subr.mxu0 0.0
    %2905 = vmatpush1.msra.mxu0 0.0
    %2906 = vmatprep.subr.mxu0 0.0
    %2907 = vmatpush1.msra.mxu0 0.0
    %2908 = vmatprep.subr.mxu0 0.0
    %2909 = vmatpush1.msra.mxu0 0.0
    %2910 = vmatprep.subr.mxu0 0.0
    %2911 = vmatpush1.msra.mxu0 0.0
    %2912 = vmatprep.subr.mxu0 0.0
    %2913 = vmatpush1.msra.mxu0 0.0
    %2914 = vmatprep.subr.mxu0 0.0
    %2915 = vmatpush1.msra.mxu0 0.0
    %2916 = vmatprep.subr.mxu0 0.0
    %2917 = vmatpush1.msra.mxu0 0.0
    %2918 = vmatprep.subr.mxu0 0.0
    %2919 = vmatpush1.msra.mxu0 0.0
    %2920 = vmatprep.subr.mxu0 0.0
    %2921 = vmatpush1.msra.mxu0 0.0
    %2922 = vmatprep.subr.mxu0 0.0
    %2923 = vmatpush1.msra.mxu0 0.0
    %2924 = vmatprep.subr.mxu0 0.0
    %2925 = vmatpush1.msra.mxu0 0.0
    %2926 = vmatprep.subr.mxu0 0.0
    %2927 = vmatpush1.msra.mxu0 0.0
    %2928 = vmatprep.subr.mxu0 0.0
    %2929 = vmatpush1.msra.mxu0 0.0
    %2930 = vmatprep.subr.mxu0 0.0
    %2931 = vmatpush1.msra.mxu0 0.0
    %2932 = vmatprep.subr.mxu0 0.0
    %2933 = vmatpush1.msra.mxu0 0.0
    %2934 = vmatprep.subr.mxu0 0.0
    %2935 = vmatpush1.msra.mxu0 0.0
    %2936 = vmatprep.subr.mxu0 0.0
    %2937 = vmatpush1.msra.mxu0 0.0
    %2938 = vmatprep.subr.mxu0 0.0
    %2939 = vmatpush1.msra.mxu0 0.0
    %2940 = vmatprep.mubr.f32.mxu0 0.0
    %2941 = vmatmul.mubr.f32.gmra.mrb[0].mxu0 %v601
    %v2942 = vpop.f32.mrb[0].mxu0
    %v2943 = vadd.f32 0.0, %v2942
    %v2944 = vpop.f32.mrb[0].mxu0
    %2945 = vdwg.mxu0
    %v2946 = vadd.f32 %v2651, %v2873
    %v2947 = vxor.u32 %v2946, 2147483648
    %v2948 = vmul.f32 %v2947, 1.442695
    %v2949 = vpow.pop %v2948
    %v2950 = vadd.f32 %v2949, 1.0
    %v2951 = vrcp.pop %v2950
    %v2952 = vmul.f32 1.0, %v2951
    %v2953 = vadd.f32 %v2727, %v2943
    %v2954 = vxor.u32 %v2953, 2147483648
    %v2955 = vmul.f32 %v2954, 1.442695
    %v2956 = vpow.pop %v2955
    %v2957 = vadd.f32 %v2956, 1.0
    %v2958 = vrcp.pop %v2957
    %v2959 = vmul.f32 1.0, %v2958
    %v2961 = vlaneseq
    %v2962 = vshrl.u32 %v2961, 7
    %v2963 = vsub.s32 0, %v2962
    %v2964 = vrot.slane %v2577, %v2963
    %2966 = vmatprep.subr.mxu0 0.0
    %2967 = vmatpush1.msra.mxu0 %v2570
    %2968 = vmatprep.subr.mxu0 0.0
    %2969 = vmatpush1.msra.mxu0 %v2571
    %2970 = vmatprep.subr.mxu0 0.0
    %2971 = vmatpush1.msra.mxu0 %v2572
    %2972 = vmatprep.subr.mxu0 0.0
    %2973 = vmatpush1.msra.mxu0 %v2573
    %2974 = vmatprep.subr.mxu0 0.0
    %2975 = vmatpush1.msra.mxu0 0.0
    %2976 = vmatprep.subr.mxu0 0.0
    %2977 = vmatpush1.msra.mxu0 0.0
    %2978 = vmatprep.subr.mxu0 0.0
    %2979 = vmatpush1.msra.mxu0 0.0
    %2980 = vmatprep.subr.mxu0 0.0
    %2981 = vmatpush1.msra.mxu0 0.0
    %2982 = vmatprep.subr.mxu0 0.0
    %2983 = vmatpush1.msra.mxu0 0.0
    %2984 = vmatprep.subr.mxu0 0.0
    %2985 = vmatpush1.msra.mxu0 0.0
    %2986 = vmatprep.subr.mxu0 0.0
    %2987 = vmatpush1.msra.mxu0 0.0
    %2988 = vmatprep.subr.mxu0 0.0
    %2989 = vmatpush1.msra.mxu0 0.0
    %2990 = vmatprep.subr.mxu0 0.0
    %2991 = vmatpush1.msra.mxu0 0.0
    %2992 = vmatprep.subr.mxu0 0.0
    %2993 = vmatpush1.msra.mxu0 0.0
    %2994 = vmatprep.subr.mxu0 0.0
    %2995 = vmatpush1.msra.mxu0 0.0
    %2996 = vmatprep.subr.mxu0 0.0
    %2997 = vmatpush1.msra.mxu0 0.0
    %2998 = vmatprep.subr.mxu0 0.0
    %2999 = vmatpush1.msra.mxu0 0.0
    %3000 = vmatprep.subr.mxu0 0.0
    %3001 = vmatpush1.msra.mxu0 0.0
    %3002 = vmatprep.subr.mxu0 0.0
    %3003 = vmatpush1.msra.mxu0 0.0
    %3004 = vmatprep.subr.mxu0 0.0
    %3005 = vmatpush1.msra.mxu0 0.0
    %3006 = vmatprep.subr.mxu0 0.0
    %3007 = vmatpush1.msra.mxu0 0.0
    %3008 = vmatprep.subr.mxu0 0.0
    %3009 = vmatpush1.msra.mxu0 0.0
    %3010 = vmatprep.subr.mxu0 0.0
    %3011 = vmatpush1.msra.mxu0 0.0
    %3012 = vmatprep.subr.mxu0 0.0
    %3013 = vmatpush1.msra.mxu0 0.0
    %3014 = vmatprep.subr.mxu0 0.0
    %3015 = vmatpush1.msra.mxu0 0.0
    %3016 = vmatprep.subr.mxu0 0.0
    %3017 = vmatpush1.msra.mxu0 0.0
    %3018 = vmatprep.subr.mxu0 0.0
    %3019 = vmatpush1.msra.mxu0 0.0
    %3020 = vmatprep.subr.mxu0 0.0
    %3021 = vmatpush1.msra.mxu0 0.0
    %3022 = vmatprep.subr.mxu0 0.0
    %3023 = vmatpush1.msra.mxu0 0.0
    %3024 = vmatprep.subr.mxu0 0.0
    %3025 = vmatpush1.msra.mxu0 0.0
    %3026 = vmatprep.subr.mxu0 0.0
    %3027 = vmatpush1.msra.mxu0 0.0
    %3028 = vmatprep.subr.mxu0 0.0
    %3029 = vmatpush1.msra.mxu0 0.0
    %3030 = vmatprep.mubr.f32.mxu0 0.0
    %3031 = vmatmul.mubr.f32.gmra.mrb[0].mxu0 %v601
    %v3032 = vpop.f32.mrb[0].mxu0
    %v3033 = vadd.f32 %v2964, %v3032
    %v3034 = vpop.f32.mrb[0].mxu0
    %3035 = vdwg.mxu0
    %v3036 = vmul.f32 %v2952, %v3033
    %v3037 = vadd.f32 %v2803, %v3036
    %v3038 = vtanh.pop %v3037
    %v3039 = vsub.f32 1.0, %v2959
    %v3040 = vmul.f32 %v3039, %v3038
    %v3041 = vmul.f32 %v2959, 0.0
    %v3042 = vadd.f32 %v3040, %v3041
    %3043 = vmatprep.subr.mxu0 0.0
    %3044 = vmatpush1.msra.mxu0 %v2550
    %3045 = vmatprep.subr.mxu0 0.0
    %3046 = vmatpush1.msra.mxu0 %v2551
    %3047 = vmatprep.subr.mxu0 0.0
    %3048 = vmatpush1.msra.mxu0 %v2552
    %3049 = vmatprep.subr.mxu0 0.0
    %3050 = vmatpush1.msra.mxu0 %v2553
    %3051 = vmatprep.subr.mxu0 0.0
    %3052 = vmatpush1.msra.mxu0 0.0
    %3053 = vmatprep.subr.mxu0 0.0
    %3054 = vmatpush1.msra.mxu0 0.0
    %3055 = vmatprep.subr.mxu0 0.0
    %3056 = vmatpush1.msra.mxu0 0.0
    %3057 = vmatprep.subr.mxu0 0.0
    %3058 = vmatpush1.msra.mxu0 0.0
    %3059 = vmatprep.subr.mxu0 0.0
    %3060 = vmatpush1.msra.mxu0 0.0
    %3061 = vmatprep.subr.mxu0 0.0
    %3062 = vmatpush1.msra.mxu0 0.0
    %3063 = vmatprep.subr.mxu0 0.0
    %3064 = vmatpush1.msra.mxu0 0.0
    %3065 = vmatprep.subr.mxu0 0.0
    %3066 = vmatpush1.msra.mxu0 0.0
    %3067 = vmatprep.subr.mxu0 0.0
    %3068 = vmatpush1.msra.mxu0 0.0
    %3069 = vmatprep.subr.mxu0 0.0
    %3070 = vmatpush1.msra.mxu0 0.0
    %3071 = vmatprep.subr.mxu0 0.0
    %3072 = vmatpush1.msra.mxu0 0.0
    %3073 = vmatprep.subr.mxu0 0.0
    %3074 = vmatpush1.msra.mxu0 0.0
    %3075 = vmatprep.subr.mxu0 0.0
    %3076 = vmatpush1.msra.mxu0 0.0
    %3077 = vmatprep.subr.mxu0 0.0
    %3078 = vmatpush1.msra.mxu0 0.0
    %3079 = vmatprep.subr.mxu0 0.0
    %3080 = vmatpush1.msra.mxu0 0.0
    %3081 = vmatprep.subr.mxu0 0.0
    %3082 = vmatpush1.msra.mxu0 0.0
    %3083 = vmatprep.subr.mxu0 0.0
    %3084 = vmatpush1.msra.mxu0 0.0
    %3085 = vmatprep.subr.mxu0 0.0
    %3086 = vmatpush1.msra.mxu0 0.0
    %3087 = vmatprep.subr.mxu0 0.0
    %3088 = vmatpush1.msra.mxu0 0.0
    %3089 = vmatprep.subr.mxu0 0.0
    %3090 = vmatpush1.msra.mxu0 0.0
    %3091 = vmatprep.subr.mxu0 0.0
    %3092 = vmatpush1.msra.mxu0 0.0
    %3093 = vmatprep.subr.mxu0 0.0
    %3094 = vmatpush1.msra.mxu0 0.0
    %3095 = vmatprep.subr.mxu0 0.0
    %3096 = vmatpush1.msra.mxu0 0.0
    %3097 = vmatprep.subr.mxu0 0.0
    %3098 = vmatpush1.msra.mxu0 0.0
    %3099 = vmatprep.subr.mxu0 0.0
    %3100 = vmatpush1.msra.mxu0 0.0
    %3101 = vmatprep.subr.mxu0 0.0
    %3102 = vmatpush1.msra.mxu0 0.0
    %3103 = vmatprep.subr.mxu0 0.0
    %3104 = vmatpush1.msra.mxu0 0.0
    %3105 = vmatprep.subr.mxu0 0.0
    %3106 = vmatpush1.msra.mxu0 0.0
    %3107 = vmatprep.mubr.f32.mxu0 0.0
    %3108 = vmatmul.mubr.f32.gmra.mrb[0].mxu0 %v1087
    %v3109 = vpop.f32.mrb[0].mxu0
    %v3110 = vadd.f32 %v2582, %v3109
    %v3111 = vpop.f32.mrb[0].mxu0
    %3112 = vdwg.mxu0
    %3113 = vmatprep.subr.mxu0 0.0
    %3114 = vmatpush1.msra.mxu0 %v2554
    %3115 = vmatprep.subr.mxu0 0.0
    %3116 = vmatpush1.msra.mxu0 %v2555
    %3117 = vmatprep.subr.mxu0 0.0
    %3118 = vmatpush1.msra.mxu0 %v2556
    %3119 = vmatprep.subr.mxu0 0.0
    %3120 = vmatpush1.msra.mxu0 %v2557
    %3121 = vmatprep.subr.mxu0 0.0
    %3122 = vmatpush1.msra.mxu0 0.0
    %3123 = vmatprep.subr.mxu0 0.0
    %3124 = vmatpush1.msra.mxu0 0.0
    %3125 = vmatprep.subr.mxu0 0.0
    %3126 = vmatpush1.msra.mxu0 0.0
    %3127 = vmatprep.subr.mxu0 0.0
    %3128 = vmatpush1.msra.mxu0 0.0
    %3129 = vmatprep.subr.mxu0 0.0
    %3130 = vmatpush1.msra.mxu0 0.0
    %3131 = vmatprep.subr.mxu0 0.0
    %3132 = vmatpush1.msra.mxu0 0.0
    %3133 = vmatprep.subr.mxu0 0.0
    %3134 = vmatpush1.msra.mxu0 0.0
    %3135 = vmatprep.subr.mxu0 0.0
    %3136 = vmatpush1.msra.mxu0 0.0
    %3137 = vmatprep.subr.mxu0 0.0
    %3138 = vmatpush1.msra.mxu0 0.0
    %3139 = vmatprep.subr.mxu0 0.0
    %3140 = vmatpush1.msra.mxu0 0.0
    %3141 = vmatprep.subr.mxu0 0.0
    %3142 = vmatpush1.msra.mxu0 0.0
    %3143 = vmatprep.subr.mxu0 0.0
    %3144 = vmatpush1.msra.mxu0 0.0
    %3145 = vmatprep.subr.mxu0 0.0
    %3146 = vmatpush1.msra.mxu0 0.0
    %3147 = vmatprep.subr.mxu0 0.0
    %3148 = vmatpush1.msra.mxu0 0.0
    %3149 = vmatprep.subr.mxu0 0.0
    %3150 = vmatpush1.msra.mxu0 0.0
    %3151 = vmatprep.subr.mxu0 0.0
    %3152 = vmatpush1.msra.mxu0 0.0
    %3153 = vmatprep.subr.mxu0 0.0
    %3154 = vmatpush1.msra.mxu0 0.0
    %3155 = vmatprep.subr.mxu0 0.0
    %3156 = vmatpush1.msra.mxu0 0.0
    %3157 = vmatprep.subr.mxu0 0.0
    %3158 = vmatpush1.msra.mxu0 0.0
    %3159 = vmatprep.subr.mxu0 0.0
    %3160 = vmatpush1.msra.mxu0 0.0
    %3161 = vmatprep.subr.mxu0 0.0
    %3162 = vmatpush1.msra.mxu0 0.0
    %3163 = vmatprep.subr.mxu0 0.0
    %3164 = vmatpush1.msra.mxu0 0.0
    %3165 = vmatprep.subr.mxu0 0.0
    %3166 = vmatpush1.msra.mxu0 0.0
    %3167 = vmatprep.subr.mxu0 0.0
    %3168 = vmatpush1.msra.mxu0 0.0
    %3169 = vmatprep.subr.mxu0 0.0
    %3170 = vmatpush1.msra.mxu0 0.0
    %3171 = vmatprep.subr.mxu0 0.0
    %3172 = vmatpush1.msra.mxu0 0.0
    %3173 = vmatprep.subr.mxu0 0.0
    %3174 = vmatpush1.msra.mxu0 0.0
    %3175 = vmatprep.subr.mxu0 0.0
    %3176 = vmatpush1.msra.mxu0 0.0
    %3177 = vmatprep.mubr.f32.mxu0 0.0
    %3178 = vmatmul.mubr.f32.gmra.mrb[0].mxu0 %v1087
    %v3179 = vpop.f32.mrb[0].mxu0
    %v3180 = vadd.f32 %v2658, %v3179
    %v3181 = vpop.f32.mrb[0].mxu0
    %3182 = vdwg.mxu0
    %3183 = vmatprep.subr.mxu0 0.0
    %3184 = vmatpush1.msra.mxu0 %v2558
    %3185 = vmatprep.subr.mxu0 0.0
    %3186 = vmatpush1.msra.mxu0 %v2559
    %3187 = vmatprep.subr.mxu0 0.0
    %3188 = vmatpush1.msra.mxu0 %v2560
    %3189 = vmatprep.subr.mxu0 0.0
    %3190 = vmatpush1.msra.mxu0 %v2561
    %3191 = vmatprep.subr.mxu0 0.0
    %3192 = vmatpush1.msra.mxu0 0.0
    %3193 = vmatprep.subr.mxu0 0.0
    %3194 = vmatpush1.msra.mxu0 0.0
    %3195 = vmatprep.subr.mxu0 0.0
    %3196 = vmatpush1.msra.mxu0 0.0
    %3197 = vmatprep.subr.mxu0 0.0
    %3198 = vmatpush1.msra.mxu0 0.0
    %3199 = vmatprep.subr.mxu0 0.0
    %3200 = vmatpush1.msra.mxu0 0.0
    %3201 = vmatprep.subr.mxu0 0.0
    %3202 = vmatpush1.msra.mxu0 0.0
    %3203 = vmatprep.subr.mxu0 0.0
    %3204 = vmatpush1.msra.mxu0 0.0
    %3205 = vmatprep.subr.mxu0 0.0
    %3206 = vmatpush1.msra.mxu0 0.0
    %3207 = vmatprep.subr.mxu0 0.0
    %3208 = vmatpush1.msra.mxu0 0.0
    %3209 = vmatprep.subr.mxu0 0.0
    %3210 = vmatpush1.msra.mxu0 0.0
    %3211 = vmatprep.subr.mxu0 0.0
    %3212 = vmatpush1.msra.mxu0 0.0
    %3213 = vmatprep.subr.mxu0 0.0
    %3214 = vmatpush1.msra.mxu0 0.0
    %3215 = vmatprep.subr.mxu0 0.0
    %3216 = vmatpush1.msra.mxu0 0.0
    %3217 = vmatprep.subr.mxu0 0.0
    %3218 = vmatpush1.msra.mxu0 0.0
    %3219 = vmatprep.subr.mxu0 0.0
    %3220 = vmatpush1.msra.mxu0 0.0
    %3221 = vmatprep.subr.mxu0 0.0
    %3222 = vmatpush1.msra.mxu0 0.0
    %3223 = vmatprep.subr.mxu0 0.0
    %3224 = vmatpush1.msra.mxu0 0.0
    %3225 = vmatprep.subr.mxu0 0.0
    %3226 = vmatpush1.msra.mxu0 0.0
    %3227 = vmatprep.subr.mxu0 0.0
    %3228 = vmatpush1.msra.mxu0 0.0
    %3229 = vmatprep.subr.mxu0 0.0
    %3230 = vmatpush1.msra.mxu0 0.0
    %3231 = vmatprep.subr.mxu0 0.0
    %3232 = vmatpush1.msra.mxu0 0.0
    %3233 = vmatprep.subr.mxu0 0.0
    %3234 = vmatpush1.msra.mxu0 0.0
    %3235 = vmatprep.subr.mxu0 0.0
    %3236 = vmatpush1.msra.mxu0 0.0
    %3237 = vmatprep.subr.mxu0 0.0
    %3238 = vmatpush1.msra.mxu0 0.0
    %3239 = vmatprep.subr.mxu0 0.0
    %3240 = vmatpush1.msra.mxu0 0.0
    %3241 = vmatprep.subr.mxu0 0.0
    %3242 = vmatpush1.msra.mxu0 0.0
    %3243 = vmatprep.subr.mxu0 0.0
    %3244 = vmatpush1.msra.mxu0 0.0
    %3245 = vmatprep.subr.mxu0 0.0
    %3246 = vmatpush1.msra.mxu0 0.0
    %3247 = vmatprep.mubr.f32.mxu0 0.0
    %3248 = vmatmul.mubr.f32.gmra.mrb[0].mxu0 %v1087
    %v3249 = vpop.f32.mrb[0].mxu0
    %v3250 = vadd.f32 %v2734, %v3249
    %v3251 = vpop.f32.mrb[0].mxu0
    %3252 = vdwg.mxu0
    %v3254 = vsel %vm599, %v3042, 0
    %3256 = vmatprep.subr.mxu0 0.0
    %3257 = vmatpush1.msra.mxu0 %v2562
    %3258 = vmatprep.subr.mxu0 0.0
    %3259 = vmatpush1.msra.mxu0 %v2563
    %3260 = vmatprep.subr.mxu0 0.0
    %3261 = vmatpush1.msra.mxu0 %v2564
    %3262 = vmatprep.subr.mxu0 0.0
    %3263 = vmatpush1.msra.mxu0 %v2565
    %3264 = vmatprep.subr.mxu0 0.0
    %3265 = vmatpush1.msra.mxu0 0.0
    %3266 = vmatprep.subr.mxu0 0.0
    %3267 = vmatpush1.msra.mxu0 0.0
    %3268 = vmatprep.subr.mxu0 0.0
    %3269 = vmatpush1.msra.mxu0 0.0
    %3270 = vmatprep.subr.mxu0 0.0
    %3271 = vmatpush1.msra.mxu0 0.0
    %3272 = vmatprep.subr.mxu0 0.0
    %3273 = vmatpush1.msra.mxu0 0.0
    %3274 = vmatprep.subr.mxu0 0.0
    %3275 = vmatpush1.msra.mxu0 0.0
    %3276 = vmatprep.subr.mxu0 0.0
    %3277 = vmatpush1.msra.mxu0 0.0
    %3278 = vmatprep.subr.mxu0 0.0
    %3279 = vmatpush1.msra.mxu0 0.0
    %3280 = vmatprep.subr.mxu0 0.0
    %3281 = vmatpush1.msra.mxu0 0.0
    %3282 = vmatprep.subr.mxu0 0.0
    %3283 = vmatpush1.msra.mxu0 0.0
    %3284 = vmatprep.subr.mxu0 0.0
    %3285 = vmatpush1.msra.mxu0 0.0
    %3286 = vmatprep.subr.mxu0 0.0
    %3287 = vmatpush1.msra.mxu0 0.0
    %3288 = vmatprep.subr.mxu0 0.0
    %3289 = vmatpush1.msra.mxu0 0.0
    %3290 = vmatprep.subr.mxu0 0.0
    %3291 = vmatpush1.msra.mxu0 0.0
    %3292 = vmatprep.subr.mxu0 0.0
    %3293 = vmatpush1.msra.mxu0 0.0
    %3294 = vmatprep.subr.mxu0 0.0
    %3295 = vmatpush1.msra.mxu0 0.0
    %3296 = vmatprep.subr.mxu0 0.0
    %3297 = vmatpush1.msra.mxu0 0.0
    %3298 = vmatprep.subr.mxu0 0.0
    %3299 = vmatpush1.msra.mxu0 0.0
    %3300 = vmatprep.subr.mxu0 0.0
    %3301 = vmatpush1.msra.mxu0 0.0
    %3302 = vmatprep.subr.mxu0 0.0
    %3303 = vmatpush1.msra.mxu0 0.0
    %3304 = vmatprep.subr.mxu0 0.0
    %3305 = vmatpush1.msra.mxu0 0.0
    %3306 = vmatprep.subr.mxu0 0.0
    %3307 = vmatpush1.msra.mxu0 0.0
    %3308 = vmatprep.subr.mxu0 0.0
    %3309 = vmatpush1.msra.mxu0 0.0
    %3310 = vmatprep.subr.mxu0 0.0
    %3311 = vmatpush1.msra.mxu0 0.0
    %3312 = vmatprep.subr.mxu0 0.0
    %3313 = vmatpush1.msra.mxu0 0.0
    %3314 = vmatprep.subr.mxu0 0.0
    %3315 = vmatpush1.msra.mxu0 0.0
    %3316 = vmatprep.subr.mxu0 0.0
    %3317 = vmatpush1.msra.mxu0 0.0
    %3318 = vmatprep.subr.mxu0 0.0
    %3319 = vmatpush1.msra.mxu0 0.0
    %3320 = vmatprep.mubr.f32.mxu0 0.0
    %3321 = vmatmul.mubr.f32.gmra.mrb[0].mxu0 %v3254
    %v3322 = vpop.f32.mrb[0].mxu0
    %v3323 = vadd.f32 0.0, %v3322
    %v3324 = vpop.f32.mrb[0].mxu0
    %3325 = vdwg.mxu0
    %3326 = vmatprep.subr.mxu0 0.0
    %3327 = vmatpush1.msra.mxu0 %v2566
    %3328 = vmatprep.subr.mxu0 0.0
    %3329 = vmatpush1.msra.mxu0 %v2567
    %3330 = vmatprep.subr.mxu0 0.0
    %3331 = vmatpush1.msra.mxu0 %v2568
    %3332 = vmatprep.subr.mxu0 0.0
    %3333 = vmatpush1.msra.mxu0 %v2569
    %3334 = vmatprep.subr.mxu0 0.0
    %3335 = vmatpush1.msra.mxu0 0.0
    %3336 = vmatprep.subr.mxu0 0.0
    %3337 = vmatpush1.msra.mxu0 0.0
    %3338 = vmatprep.subr.mxu0 0.0
    %3339 = vmatpush1.msra.mxu0 0.0
    %3340 = vmatprep.subr.mxu0 0.0
    %3341 = vmatpush1.msra.mxu0 0.0
    %3342 = vmatprep.subr.mxu0 0.0
    %3343 = vmatpush1.msra.mxu0 0.0
    %3344 = vmatprep.subr.mxu0 0.0
    %3345 = vmatpush1.msra.mxu0 0.0
    %3346 = vmatprep.subr.mxu0 0.0
    %3347 = vmatpush1.msra.mxu0 0.0
    %3348 = vmatprep.subr.mxu0 0.0
    %3349 = vmatpush1.msra.mxu0 0.0
    %3350 = vmatprep.subr.mxu0 0.0
    %3351 = vmatpush1.msra.mxu0 0.0
    %3352 = vmatprep.subr.mxu0 0.0
    %3353 = vmatpush1.msra.mxu0 0.0
    %3354 = vmatprep.subr.mxu0 0.0
    %3355 = vmatpush1.msra.mxu0 0.0
    %3356 = vmatprep.subr.mxu0 0.0
    %3357 = vmatpush1.msra.mxu0 0.0
    %3358 = vmatprep.subr.mxu0 0.0
    %3359 = vmatpush1.msra.mxu0 0.0
    %3360 = vmatprep.subr.mxu0 0.0
    %3361 = vmatpush1.msra.mxu0 0.0
    %3362 = vmatprep.subr.mxu0 0.0
    %3363 = vmatpush1.msra.mxu0 0.0
    %3364 = vmatprep.subr.mxu0 0.0
    %3365 = vmatpush1.msra.mxu0 0.0
    %3366 = vmatprep.subr.mxu0 0.0
    %3367 = vmatpush1.msra.mxu0 0.0
    %3368 = vmatprep.subr.mxu0 0.0
    %3369 = vmatpush1.msra.mxu0 0.0
    %3370 = vmatprep.subr.mxu0 0.0
    %3371 = vmatpush1.msra.mxu0 0.0
    %3372 = vmatprep.subr.mxu0 0.0
    %3373 = vmatpush1.msra.mxu0 0.0
    %3374 = vmatprep.subr.mxu0 0.0
    %3375 = vmatpush1.msra.mxu0 0.0
    %3376 = vmatprep.subr.mxu0 0.0
    %3377 = vmatpush1.msra.mxu0 0.0
    %3378 = vmatprep.subr.mxu0 0.0
    %3379 = vmatpush1.msra.mxu0 0.0
    %3380 = vmatprep.subr.mxu0 0.0
    %3381 = vmatpush1.msra.mxu0 0.0
    %3382 = vmatprep.subr.mxu0 0.0
    %3383 = vmatpush1.msra.mxu0 0.0
    %3384 = vmatprep.subr.mxu0 0.0
    %3385 = vmatpush1.msra.mxu0 0.0
    %3386 = vmatprep.subr.mxu0 0.0
    %3387 = vmatpush1.msra.mxu0 0.0
    %3388 = vmatprep.subr.mxu0 0.0
    %3389 = vmatpush1.msra.mxu0 0.0
    %3390 = vmatprep.mubr.f32.mxu0 0.0
    %3391 = vmatmul.mubr.f32.gmra.mrb[0].mxu0 %v3254
    %v3392 = vpop.f32.mrb[0].mxu0
    %v3393 = vadd.f32 0.0, %v3392
    %v3394 = vpop.f32.mrb[0].mxu0
    %3395 = vdwg.mxu0
    %v3396 = vadd.f32 %v3110, %v3323
    %v3397 = vxor.u32 %v3396, 2147483648
    %v3398 = vmul.f32 %v3397, 1.442695
    %v3399 = vpow.pop %v3398
    %v3400 = vadd.f32 %v3399, 1.0
    %v3401 = vrcp.pop %v3400
    %v3402 = vmul.f32 1.0, %v3401
    %v3403 = vadd.f32 %v3180, %v3393
    %v3404 = vxor.u32 %v3403, 2147483648
    %v3405 = vmul.f32 %v3404, 1.442695
    %v3406 = vpow.pop %v3405
    %v3407 = vadd.f32 %v3406, 1.0
    %v3408 = vrcp.pop %v3407
    %v3409 = vmul.f32 1.0, %v3408
    %3410 = vmatprep.subr.mxu0 0.0
    %3411 = vmatpush1.msra.mxu0 %v2570
    %3412 = vmatprep.subr.mxu0 0.0
    %3413 = vmatpush1.msra.mxu0 %v2571
    %3414 = vmatprep.subr.mxu0 0.0
    %3415 = vmatpush1.msra.mxu0 %v2572
    %3416 = vmatprep.subr.mxu0 0.0
    %3417 = vmatpush1.msra.mxu0 %v2573
    %3418 = vmatprep.subr.mxu0 0.0
    %3419 = vmatpush1.msra.mxu0 0.0
    %3420 = vmatprep.subr.mxu0 0.0
    %3421 = vmatpush1.msra.mxu0 0.0
    %3422 = vmatprep.subr.mxu0 0.0
    %3423 = vmatpush1.msra.mxu0 0.0
    %3424 = vmatprep.subr.mxu0 0.0
    %3425 = vmatpush1.msra.mxu0 0.0
    %3426 = vmatprep.subr.mxu0 0.0
    %3427 = vmatpush1.msra.mxu0 0.0
    %3428 = vmatprep.subr.mxu0 0.0
    %3429 = vmatpush1.msra.mxu0 0.0
    %3430 = vmatprep.subr.mxu0 0.0
    %3431 = vmatpush1.msra.mxu0 0.0
    %3432 = vmatprep.subr.mxu0 0.0
    %3433 = vmatpush1.msra.mxu0 0.0
    %3434 = vmatprep.subr.mxu0 0.0
    %3435 = vmatpush1.msra.mxu0 0.0
    %3436 = vmatprep.subr.mxu0 0.0
    %3437 = vmatpush1.msra.mxu0 0.0
    %3438 = vmatprep.subr.mxu0 0.0
    %3439 = vmatpush1.msra.mxu0 0.0
    %3440 = vmatprep.subr.mxu0 0.0
    %3441 = vmatpush1.msra.mxu0 0.0
    %3442 = vmatprep.subr.mxu0 0.0
    %3443 = vmatpush1.msra.mxu0 0.0
    %3444 = vmatprep.subr.mxu0 0.0
    %3445 = vmatpush1.msra.mxu0 0.0
    %3446 = vmatprep.subr.mxu0 0.0
    %3447 = vmatpush1.msra.mxu0 0.0
    %3448 = vmatprep.subr.mxu0 0.0
    %3449 = vmatpush1.msra.mxu0 0.0
    %3450 = vmatprep.subr.mxu0 0.0
    %3451 = vmatpush1.msra.mxu0 0.0
    %3452 = vmatprep.subr.mxu0 0.0
    %3453 = vmatpush1.msra.mxu0 0.0
    %3454 = vmatprep.subr.mxu0 0.0
    %3455 = vmatpush1.msra.mxu0 0.0
    %3456 = vmatprep.subr.mxu0 0.0
    %3457 = vmatpush1.msra.mxu0 0.0
    %3458 = vmatprep.subr.mxu0 0.0
    %3459 = vmatpush1.msra.mxu0 0.0
    %3460 = vmatprep.subr.mxu0 0.0
    %3461 = vmatpush1.msra.mxu0 0.0
    %3462 = vmatprep.subr.mxu0 0.0
    %3463 = vmatpush1.msra.mxu0 0.0
    %3464 = vmatprep.subr.mxu0 0.0
    %3465 = vmatpush1.msra.mxu0 0.0
    %3466 = vmatprep.subr.mxu0 0.0
    %3467 = vmatpush1.msra.mxu0 0.0
    %3468 = vmatprep.subr.mxu0 0.0
    %3469 = vmatpush1.msra.mxu0 0.0
    %3470 = vmatprep.subr.mxu0 0.0
    %3471 = vmatpush1.msra.mxu0 0.0
    %3472 = vmatprep.subr.mxu0 0.0
    %3473 = vmatpush1.msra.mxu0 0.0
    %3474 = vmatprep.mubr.f32.mxu0 0.0
    %3475 = vmatmul.mubr.f32.gmra.mrb[0].mxu0 %v3254
    %v3476 = vpop.f32.mrb[0].mxu0
    %v3477 = vadd.f32 %v2964, %v3476
    %v3478 = vpop.f32.mrb[0].mxu0
    %3479 = vdwg.mxu0
    %v3480 = vmul.f32 %v3402, %v3477
    %v3481 = vadd.f32 %v3250, %v3480
    %v3482 = vtanh.pop %v3481
    %v3483 = vsub.f32 1.0, %v3409
    %v3484 = vmul.f32 %v3483, %v3482
    %v3485 = vmul.f32 %v3409, %v3042
    %v3486 = vadd.f32 %v3484, %v3485
    %3487 = vmatprep.subr.mxu0 0.0
    %3488 = vmatpush1.msra.mxu0 %v2550
    %3489 = vmatprep.subr.mxu0 0.0
    %3490 = vmatpush1.msra.mxu0 %v2551
    %3491 = vmatprep.subr.mxu0 0.0
    %3492 = vmatpush1.msra.mxu0 %v2552
    %3493 = vmatprep.subr.mxu0 0.0
    %3494 = vmatpush1.msra.mxu0 %v2553
    %3495 = vmatprep.subr.mxu0 0.0
    %3496 = vmatpush1.msra.mxu0 0.0
    %3497 = vmatprep.subr.mxu0 0.0
    %3498 = vmatpush1.msra.mxu0 0.0
    %3499 = vmatprep.subr.mxu0 0.0
    %3500 = vmatpush1.msra.mxu0 0.0
    %3501 = vmatprep.subr.mxu0 0.0
    %3502 = vmatpush1.msra.mxu0 0.0
    %3503 = vmatprep.subr.mxu0 0.0
    %3504 = vmatpush1.msra.mxu0 0.0
    %3505 = vmatprep.subr.mxu0 0.0
    %3506 = vmatpush1.msra.mxu0 0.0
    %3507 = vmatprep.subr.mxu0 0.0
    %3508 = vmatpush1.msra.mxu0 0.0
    %3509 = vmatprep.subr.mxu0 0.0
    %3510 = vmatpush1.msra.mxu0 0.0
    %3511 = vmatprep.subr.mxu0 0.0
    %3512 = vmatpush1.msra.mxu0 0.0
    %3513 = vmatprep.subr.mxu0 0.0
    %3514 = vmatpush1.msra.mxu0 0.0
    %3515 = vmatprep.subr.mxu0 0.0
    %3516 = vmatpush1.msra.mxu0 0.0
    %3517 = vmatprep.subr.mxu0 0.0
    %3518 = vmatpush1.msra.mxu0 0.0
    %3519 = vmatprep.subr.mxu0 0.0
    %3520 = vmatpush1.msra.mxu0 0.0
    %3521 = vmatprep.subr.mxu0 0.0
    %3522 = vmatpush1.msra.mxu0 0.0
    %3523 = vmatprep.subr.mxu0 0.0
    %3524 = vmatpush1.msra.mxu0 0.0
    %3525 = vmatprep.subr.mxu0 0.0
    %3526 = vmatpush1.msra.mxu0 0.0
    %3527 = vmatprep.subr.mxu0 0.0
    %3528 = vmatpush1.msra.mxu0 0.0
    %3529 = vmatprep.subr.mxu0 0.0
    %3530 = vmatpush1.msra.mxu0 0.0
    %3531 = vmatprep.subr.mxu0 0.0
    %3532 = vmatpush1.msra.mxu0 0.0
    %3533 = vmatprep.subr.mxu0 0.0
    %3534 = vmatpush1.msra.mxu0 0.0
    %3535 = vmatprep.subr.mxu0 0.0
    %3536 = vmatpush1.msra.mxu0 0.0
    %3537 = vmatprep.subr.mxu0 0.0
    %3538 = vmatpush1.msra.mxu0 0.0
    %3539 = vmatprep.subr.mxu0 0.0
    %3540 = vmatpush1.msra.mxu0 0.0
    %3541 = vmatprep.subr.mxu0 0.0
    %3542 = vmatpush1.msra.mxu0 0.0
    %3543 = vmatprep.subr.mxu0 0.0
    %3544 = vmatpush1.msra.mxu0 0.0
    %3545 = vmatprep.subr.mxu0 0.0
    %3546 = vmatpush1.msra.mxu0 0.0
    %3547 = vmatprep.subr.mxu0 0.0
    %3548 = vmatpush1.msra.mxu0 0.0
    %3549 = vmatprep.subr.mxu0 0.0
    %3550 = vmatpush1.msra.mxu0 0.0
    %3551 = vmatprep.mubr.f32.mxu0 0.0
    %3552 = vmatmul.mubr.f32.gmra.mrb[0].mxu0 %v1333
    %v3553 = vpop.f32.mrb[0].mxu0
    %v3554 = vadd.f32 %v2582, %v3553
    %v3555 = vpop.f32.mrb[0].mxu0
    %3556 = vdwg.mxu0
    %3557 = vmatprep.subr.mxu0 0.0
    %3558 = vmatpush1.msra.mxu0 %v2554
    %3559 = vmatprep.subr.mxu0 0.0
    %3560 = vmatpush1.msra.mxu0 %v2555
    %3561 = vmatprep.subr.mxu0 0.0
    %3562 = vmatpush1.msra.mxu0 %v2556
    %3563 = vmatprep.subr.mxu0 0.0
    %3564 = vmatpush1.msra.mxu0 %v2557
    %3565 = vmatprep.subr.mxu0 0.0
    %3566 = vmatpush1.msra.mxu0 0.0
    %3567 = vmatprep.subr.mxu0 0.0
    %3568 = vmatpush1.msra.mxu0 0.0
    %3569 = vmatprep.subr.mxu0 0.0
    %3570 = vmatpush1.msra.mxu0 0.0
    %3571 = vmatprep.subr.mxu0 0.0
    %3572 = vmatpush1.msra.mxu0 0.0
    %3573 = vmatprep.subr.mxu0 0.0
    %3574 = vmatpush1.msra.mxu0 0.0
    %3575 = vmatprep.subr.mxu0 0.0
    %3576 = vmatpush1.msra.mxu0 0.0
    %3577 = vmatprep.subr.mxu0 0.0
    %3578 = vmatpush1.msra.mxu0 0.0
    %3579 = vmatprep.subr.mxu0 0.0
    %3580 = vmatpush1.msra.mxu0 0.0
    %3581 = vmatprep.subr.mxu0 0.0
    %3582 = vmatpush1.msra.mxu0 0.0
    %3583 = vmatprep.subr.mxu0 0.0
    %3584 = vmatpush1.msra.mxu0 0.0
    %3585 = vmatprep.subr.mxu0 0.0
    %3586 = vmatpush1.msra.mxu0 0.0
    %3587 = vmatprep.subr.mxu0 0.0
    %3588 = vmatpush1.msra.mxu0 0.0
    %3589 = vmatprep.subr.mxu0 0.0
    %3590 = vmatpush1.msra.mxu0 0.0
    %3591 = vmatprep.subr.mxu0 0.0
    %3592 = vmatpush1.msra.mxu0 0.0
    %3593 = vmatprep.subr.mxu0 0.0
    %3594 = vmatpush1.msra.mxu0 0.0
    %3595 = vmatprep.subr.mxu0 0.0
    %3596 = vmatpush1.msra.mxu0 0.0
    %3597 = vmatprep.subr.mxu0 0.0
    %3598 = vmatpush1.msra.mxu0 0.0
    %3599 = vmatprep.subr.mxu0 0.0
    %3600 = vmatpush1.msra.mxu0 0.0
    %3601 = vmatprep.subr.mxu0 0.0
    %3602 = vmatpush1.msra.mxu0 0.0
    %3603 = vmatprep.subr.mxu0 0.0
    %3604 = vmatpush1.msra.mxu0 0.0
    %3605 = vmatprep.subr.mxu0 0.0
    %3606 = vmatpush1.msra.mxu0 0.0
    %3607 = vmatprep.subr.mxu0 0.0
    %3608 = vmatpush1.msra.mxu0 0.0
    %3609 = vmatprep.subr.mxu0 0.0
    %3610 = vmatpush1.msra.mxu0 0.0
    %3611 = vmatprep.subr.mxu0 0.0
    %3612 = vmatpush1.msra.mxu0 0.0
    %3613 = vmatprep.subr.mxu0 0.0
    %3614 = vmatpush1.msra.mxu0 0.0
    %3615 = vmatprep.subr.mxu0 0.0
    %3616 = vmatpush1.msra.mxu0 0.0
    %3617 = vmatprep.subr.mxu0 0.0
    %3618 = vmatpush1.msra.mxu0 0.0
    %3619 = vmatprep.subr.mxu0 0.0
    %3620 = vmatpush1.msra.mxu0 0.0
    %3621 = vmatprep.mubr.f32.mxu0 0.0
    %3622 = vmatmul.mubr.f32.gmra.mrb[0].mxu0 %v1333
    %v3623 = vpop.f32.mrb[0].mxu0
    %v3624 = vadd.f32 %v2658, %v3623
    %v3625 = vpop.f32.mrb[0].mxu0
    %3626 = vdwg.mxu0
    %3627 = vmatprep.subr.mxu0 0.0
    %3628 = vmatpush1.msra.mxu0 %v2558
    %3629 = vmatprep.subr.mxu0 0.0
    %3630 = vmatpush1.msra.mxu0 %v2559
    %3631 = vmatprep.subr.mxu0 0.0
    %3632 = vmatpush1.msra.mxu0 %v2560
    %3633 = vmatprep.subr.mxu0 0.0
    %3634 = vmatpush1.msra.mxu0 %v2561
    %3635 = vmatprep.subr.mxu0 0.0
    %3636 = vmatpush1.msra.mxu0 0.0
    %3637 = vmatprep.subr.mxu0 0.0
    %3638 = vmatpush1.msra.mxu0 0.0
    %3639 = vmatprep.subr.mxu0 0.0
    %3640 = vmatpush1.msra.mxu0 0.0
    %3641 = vmatprep.subr.mxu0 0.0
    %3642 = vmatpush1.msra.mxu0 0.0
    %3643 = vmatprep.subr.mxu0 0.0
    %3644 = vmatpush1.msra.mxu0 0.0
    %3645 = vmatprep.subr.mxu0 0.0
    %3646 = vmatpush1.msra.mxu0 0.0
    %3647 = vmatprep.subr.mxu0 0.0
    %3648 = vmatpush1.msra.mxu0 0.0
    %3649 = vmatprep.subr.mxu0 0.0
    %3650 = vmatpush1.msra.mxu0 0.0
    %3651 = vmatprep.subr.mxu0 0.0
    %3652 = vmatpush1.msra.mxu0 0.0
    %3653 = vmatprep.subr.mxu0 0.0
    %3654 = vmatpush1.msra.mxu0 0.0
    %3655 = vmatprep.subr.mxu0 0.0
    %3656 = vmatpush1.msra.mxu0 0.0
    %3657 = vmatprep.subr.mxu0 0.0
    %3658 = vmatpush1.msra.mxu0 0.0
    %3659 = vmatprep.subr.mxu0 0.0
    %3660 = vmatpush1.msra.mxu0 0.0
    %3661 = vmatprep.subr.mxu0 0.0
    %3662 = vmatpush1.msra.mxu0 0.0
    %3663 = vmatprep.subr.mxu0 0.0
    %3664 = vmatpush1.msra.mxu0 0.0
    %3665 = vmatprep.subr.mxu0 0.0
    %3666 = vmatpush1.msra.mxu0 0.0
    %3667 = vmatprep.subr.mxu0 0.0
    %3668 = vmatpush1.msra.mxu0 0.0
    %3669 = vmatprep.subr.mxu0 0.0
    %3670 = vmatpush1.msra.mxu0 0.0
    %3671 = vmatprep.subr.mxu0 0.0
    %3672 = vmatpush1.msra.mxu0 0.0
    %3673 = vmatprep.subr.mxu0 0.0
    %3674 = vmatpush1.msra.mxu0 0.0
    %3675 = vmatprep.subr.mxu0 0.0
    %3676 = vmatpush1.msra.mxu0 0.0
    %3677 = vmatprep.subr.mxu0 0.0
    %3678 = vmatpush1.msra.mxu0 0.0
    %3679 = vmatprep.subr.mxu0 0.0
    %3680 = vmatpush1.msra.mxu0 0.0
    %3681 = vmatprep.subr.mxu0 0.0
    %3682 = vmatpush1.msra.mxu0 0.0
    %3683 = vmatprep.subr.mxu0 0.0
    %3684 = vmatpush1.msra.mxu0 0.0
    %3685 = vmatprep.subr.mxu0 0.0
    %3686 = vmatpush1.msra.mxu0 0.0
    %3687 = vmatprep.subr.mxu0 0.0
    %3688 = vmatpush1.msra.mxu0 0.0
    %3689 = vmatprep.subr.mxu0 0.0
    %3690 = vmatpush1.msra.mxu0 0.0
    %3691 = vmatprep.mubr.f32.mxu0 0.0
    %3692 = vmatmul.mubr.f32.gmra.mrb[0].mxu0 %v1333
    %v3693 = vpop.f32.mrb[0].mxu0
    %v3694 = vadd.f32 %v2734, %v3693
    %v3695 = vpop.f32.mrb[0].mxu0
    %3696 = vdwg.mxu0
    %v3698 = vsel %vm599, %v3486, 0
    %3700 = vmatprep.subr.mxu0 0.0
    %3701 = vmatpush1.msra.mxu0 %v2562
    %3702 = vmatprep.subr.mxu0 0.0
    %3703 = vmatpush1.msra.mxu0 %v2563
    %3704 = vmatprep.subr.mxu0 0.0
    %3705 = vmatpush1.msra.mxu0 %v2564
    %3706 = vmatprep.subr.mxu0 0.0
    %3707 = vmatpush1.msra.mxu0 %v2565
    %3708 = vmatprep.subr.mxu0 0.0
    %3709 = vmatpush1.msra.mxu0 0.0
    %3710 = vmatprep.subr.mxu0 0.0
    %3711 = vmatpush1.msra.mxu0 0.0
    %3712 = vmatprep.subr.mxu0 0.0
    %3713 = vmatpush1.msra.mxu0 0.0
    %3714 = vmatprep.subr.mxu0 0.0
    %3715 = vmatpush1.msra.mxu0 0.0
    %3716 = vmatprep.subr.mxu0 0.0
    %3717 = vmatpush1.msra.mxu0 0.0
    %3718 = vmatprep.subr.mxu0 0.0
    %3719 = vmatpush1.msra.mxu0 0.0
    %3720 = vmatprep.subr.mxu0 0.0
    %3721 = vmatpush1.msra.mxu0 0.0
    %3722 = vmatprep.subr.mxu0 0.0
    %3723 = vmatpush1.msra.mxu0 0.0
    %3724 = vmatprep.subr.mxu0 0.0
    %3725 = vmatpush1.msra.mxu0 0.0
    %3726 = vmatprep.subr.mxu0 0.0
    %3727 = vmatpush1.msra.mxu0 0.0
    %3728 = vmatprep.subr.mxu0 0.0
    %3729 = vmatpush1.msra.mxu0 0.0
    %3730 = vmatprep.subr.mxu0 0.0
    %3731 = vmatpush1.msra.mxu0 0.0
    %3732 = vmatprep.subr.mxu0 0.0
    %3733 = vmatpush1.msra.mxu0 0.0
    %3734 = vmatprep.subr.mxu0 0.0
    %3735 = vmatpush1.msra.mxu0 0.0
    %3736 = vmatprep.subr.mxu0 0.0
    %3737 = vmatpush1.msra.mxu0 0.0
    %3738 = vmatprep.subr.mxu0 0.0
    %3739 = vmatpush1.msra.mxu0 0.0
    %3740 = vmatprep.subr.mxu0 0.0
    %3741 = vmatpush1.msra.mxu0 0.0
    %3742 = vmatprep.subr.mxu0 0.0
    %3743 = vmatpush1.msra.mxu0 0.0
    %3744 = vmatprep.subr.mxu0 0.0
    %3745 = vmatpush1.msra.mxu0 0.0
    %3746 = vmatprep.subr.mxu0 0.0
    %3747 = vmatpush1.msra.mxu0 0.0
    %3748 = vmatprep.subr.mxu0 0.0
    %3749 = vmatpush1.msra.mxu0 0.0
    %3750 = vmatprep.subr.mxu0 0.0
    %3751 = vmatpush1.msra.mxu0 0.0
    %3752 = vmatprep.subr.mxu0 0.0
    %3753 = vmatpush1.msra.mxu0 0.0
    %3754 = vmatprep.subr.mxu0 0.0
    %3755 = vmatpush1.msra.mxu0 0.0
    %3756 = vmatprep.subr.mxu0 0.0
    %3757 = vmatpush1.msra.mxu0 0.0
    %3758 = vmatprep.subr.mxu0 0.0
    %3759 = vmatpush1.msra.mxu0 0.0
    %3760 = vmatprep.subr.mxu0 0.0
    %3761 = vmatpush1.msra.mxu0 0.0
    %3762 = vmatprep.subr.mxu0 0.0
    %3763 = vmatpush1.msra.mxu0 0.0
    %3764 = vmatprep.mubr.f32.mxu0 0.0
    %3765 = vmatmul.mubr.f32.gmra.mrb[0].mxu0 %v3698
    %v3766 = vpop.f32.mrb[0].mxu0
    %v3767 = vadd.f32 0.0, %v3766
    %v3768 = vpop.f32.mrb[0].mxu0
    %3769 = vdwg.mxu0
    %3770 = vmatprep.subr.mxu0 0.0
    %3771 = vmatpush1.msra.mxu0 %v2566
    %3772 = vmatprep.subr.mxu0 0.0
    %3773 = vmatpush1.msra.mxu0 %v2567
    %3774 = vmatprep.subr.mxu0 0.0
    %3775 = vmatpush1.msra.mxu0 %v2568
    %3776 = vmatprep.subr.mxu0 0.0
    %3777 = vmatpush1.msra.mxu0 %v2569
    %3778 = vmatprep.subr.mxu0 0.0
    %3779 = vmatpush1.msra.mxu0 0.0
    %3780 = vmatprep.subr.mxu0 0.0
    %3781 = vmatpush1.msra.mxu0 0.0
    %3782 = vmatprep.subr.mxu0 0.0
    %3783 = vmatpush1.msra.mxu0 0.0
    %3784 = vmatprep.subr.mxu0 0.0
    %3785 = vmatpush1.msra.mxu0 0.0
    %3786 = vmatprep.subr.mxu0 0.0
    %3787 = vmatpush1.msra.mxu0 0.0
    %3788 = vmatprep.subr.mxu0 0.0
    %3789 = vmatpush1.msra.mxu0 0.0
    %3790 = vmatprep.subr.mxu0 0.0
    %3791 = vmatpush1.msra.mxu0 0.0
    %3792 = vmatprep.subr.mxu0 0.0
    %3793 = vmatpush1.msra.mxu0 0.0
    %3794 = vmatprep.subr.mxu0 0.0
    %3795 = vmatpush1.msra.mxu0 0.0
    %3796 = vmatprep.subr.mxu0 0.0
    %3797 = vmatpush1.msra.mxu0 0.0
    %3798 = vmatprep.subr.mxu0 0.0
    %3799 = vmatpush1.msra.mxu0 0.0
    %3800 = vmatprep.subr.mxu0 0.0
    %3801 = vmatpush1.msra.mxu0 0.0
    %3802 = vmatprep.subr.mxu0 0.0
    %3803 = vmatpush1.msra.mxu0 0.0
    %3804 = vmatprep.subr.mxu0 0.0
    %3805 = vmatpush1.msra.mxu0 0.0
    %3806 = vmatprep.subr.mxu0 0.0
    %3807 = vmatpush1.msra.mxu0 0.0
    %3808 = vmatprep.subr.mxu0 0.0
    %3809 = vmatpush1.msra.mxu0 0.0
    %3810 = vmatprep.subr.mxu0 0.0
    %3811 = vmatpush1.msra.mxu0 0.0
    %3812 = vmatprep.subr.mxu0 0.0
    %3813 = vmatpush1.msra.mxu0 0.0
    %3814 = vmatprep.subr.mxu0 0.0
    %3815 = vmatpush1.msra.mxu0 0.0
    %3816 = vmatprep.subr.mxu0 0.0
    %3817 = vmatpush1.msra.mxu0 0.0
    %3818 = vmatprep.subr.mxu0 0.0
    %3819 = vmatpush1.msra.mxu0 0.0
    %3820 = vmatprep.subr.mxu0 0.0
    %3821 = vmatpush1.msra.mxu0 0.0
    %3822 = vmatprep.subr.mxu0 0.0
    %3823 = vmatpush1.msra.mxu0 0.0
    %3824 = vmatprep.subr.mxu0 0.0
    %3825 = vmatpush1.msra.mxu0 0.0
    %3826 = vmatprep.subr.mxu0 0.0
    %3827 = vmatpush1.msra.mxu0 0.0
    %3828 = vmatprep.subr.mxu0 0.0
    %3829 = vmatpush1.msra.mxu0 0.0
    %3830 = vmatprep.subr.mxu0 0.0
    %3831 = vmatpush1.msra.mxu0 0.0
    %3832 = vmatprep.subr.mxu0 0.0
    %3833 = vmatpush1.msra.mxu0 0.0
    %3834 = vmatprep.mubr.f32.mxu0 0.0
    %3835 = vmatmul.mubr.f32.gmra.mrb[0].mxu0 %v3698
    %v3836 = vpop.f32.mrb[0].mxu0
    %v3837 = vadd.f32 0.0, %v3836
    %v3838 = vpop.f32.mrb[0].mxu0
    %3839 = vdwg.mxu0
    %v3840 = vadd.f32 %v3554, %v3767
    %v3841 = vxor.u32 %v3840, 2147483648
    %v3842 = vmul.f32 %v3841, 1.442695
    %v3843 = vpow.pop %v3842
    %v3844 = vadd.f32 %v3843, 1.0
    %v3845 = vrcp.pop %v3844
    %v3846 = vmul.f32 1.0, %v3845
    %v3847 = vadd.f32 %v3624, %v3837
    %v3848 = vxor.u32 %v3847, 2147483648
    %v3849 = vmul.f32 %v3848, 1.442695
    %v3850 = vpow.pop %v3849
    %v3851 = vadd.f32 %v3850, 1.0
    %v3852 = vrcp.pop %v3851
    %v3853 = vmul.f32 1.0, %v3852
    %3854 = vmatprep.subr.mxu0 0.0
    %3855 = vmatpush1.msra.mxu0 %v2570
    %3856 = vmatprep.subr.mxu0 0.0
    %3857 = vmatpush1.msra.mxu0 %v2571
    %3858 = vmatprep.subr.mxu0 0.0
    %3859 = vmatpush1.msra.mxu0 %v2572
    %3860 = vmatprep.subr.mxu0 0.0
    %3861 = vmatpush1.msra.mxu0 %v2573
    %3862 = vmatprep.subr.mxu0 0.0
    %3863 = vmatpush1.msra.mxu0 0.0
    %3864 = vmatprep.subr.mxu0 0.0
    %3865 = vmatpush1.msra.mxu0 0.0
    %3866 = vmatprep.subr.mxu0 0.0
    %3867 = vmatpush1.msra.mxu0 0.0
    %3868 = vmatprep.subr.mxu0 0.0
    %3869 = vmatpush1.msra.mxu0 0.0
    %3870 = vmatprep.subr.mxu0 0.0
    %3871 = vmatpush1.msra.mxu0 0.0
    %3872 = vmatprep.subr.mxu0 0.0
    %3873 = vmatpush1.msra.mxu0 0.0
    %3874 = vmatprep.subr.mxu0 0.0
    %3875 = vmatpush1.msra.mxu0 0.0
    %3876 = vmatprep.subr.mxu0 0.0
    %3877 = vmatpush1.msra.mxu0 0.0
    %3878 = vmatprep.subr.mxu0 0.0
    %3879 = vmatpush1.msra.mxu0 0.0
    %3880 = vmatprep.subr.mxu0 0.0
    %3881 = vmatpush1.msra.mxu0 0.0
    %3882 = vmatprep.subr.mxu0 0.0
    %3883 = vmatpush1.msra.mxu0 0.0
    %3884 = vmatprep.subr.mxu0 0.0
    %3885 = vmatpush1.msra.mxu0 0.0
    %3886 = vmatprep.subr.mxu0 0.0
    %3887 = vmatpush1.msra.mxu0 0.0
    %3888 = vmatprep.subr.mxu0 0.0
    %3889 = vmatpush1.msra.mxu0 0.0
    %3890 = vmatprep.subr.mxu0 0.0
    %3891 = vmatpush1.msra.mxu0 0.0
    %3892 = vmatprep.subr.mxu0 0.0
    %3893 = vmatpush1.msra.mxu0 0.0
    %3894 = vmatprep.subr.mxu0 0.0
    %3895 = vmatpush1.msra.mxu0 0.0
    %3896 = vmatprep.subr.mxu0 0.0
    %3897 = vmatpush1.msra.mxu0 0.0
    %3898 = vmatprep.subr.mxu0 0.0
    %3899 = vmatpush1.msra.mxu0 0.0
    %3900 = vmatprep.subr.mxu0 0.0
    %3901 = vmatpush1.msra.mxu0 0.0
    %3902 = vmatprep.subr.mxu0 0.0
    %3903 = vmatpush1.msra.mxu0 0.0
    %3904 = vmatprep.subr.mxu0 0.0
    %3905 = vmatpush1.msra.mxu0 0.0
    %3906 = vmatprep.subr.mxu0 0.0
    %3907 = vmatpush1.msra.mxu0 0.0
    %3908 = vmatprep.subr.mxu0 0.0
    %3909 = vmatpush1.msra.mxu0 0.0
    %3910 = vmatprep.subr.mxu0 0.0
    %3911 = vmatpush1.msra.mxu0 0.0
    %3912 = vmatprep.subr.mxu0 0.0
    %3913 = vmatpush1.msra.mxu0 0.0
    %3914 = vmatprep.subr.mxu0 0.0
    %3915 = vmatpush1.msra.mxu0 0.0
    %3916 = vmatprep.subr.mxu0 0.0
    %3917 = vmatpush1.msra.mxu0 0.0
    %3918 = vmatprep.mubr.f32.mxu0 0.0
    %3919 = vmatmul.mubr.f32.gmra.mrb[0].mxu0 %v3698
    %v3920 = vpop.f32.mrb[0].mxu0
    %v3921 = vadd.f32 %v2964, %v3920
    %v3922 = vpop.f32.mrb[0].mxu0
    %3923 = vdwg.mxu0
    %v3924 = vmul.f32 %v3846, %v3921
    %v3925 = vadd.f32 %v3694, %v3924
    %v3926 = vtanh.pop %v3925
    %v3927 = vsub.f32 1.0, %v3853
    %v3928 = vmul.f32 %v3927, %v3926
    %v3929 = vmul.f32 %v3853, %v3486
    %v3930 = vadd.f32 %v3928, %v3929
    %3931 = vmatprep.subr.mxu0 0.0
    %3932 = vmatpush1.msra.mxu0 %v2550
    %3933 = vmatprep.subr.mxu0 0.0
    %3934 = vmatpush1.msra.mxu0 %v2551
    %3935 = vmatprep.subr.mxu0 0.0
    %3936 = vmatpush1.msra.mxu0 %v2552
    %3937 = vmatprep.subr.mxu0 0.0
    %3938 = vmatpush1.msra.mxu0 %v2553
    %3939 = vmatprep.subr.mxu0 0.0
    %3940 = vmatpush1.msra.mxu0 0.0
    %3941 = vmatprep.subr.mxu0 0.0
    %3942 = vmatpush1.msra.mxu0 0.0
    %3943 = vmatprep.subr.mxu0 0.0
    %3944 = vmatpush1.msra.mxu0 0.0
    %3945 = vmatprep.subr.mxu0 0.0
    %3946 = vmatpush1.msra.mxu0 0.0
    %3947 = vmatprep.subr.mxu0 0.0
    %3948 = vmatpush1.msra.mxu0 0.0
    %3949 = vmatprep.subr.mxu0 0.0
    %3950 = vmatpush1.msra.mxu0 0.0
    %3951 = vmatprep.subr.mxu0 0.0
    %3952 = vmatpush1.msra.mxu0 0.0
    %3953 = vmatprep.subr.mxu0 0.0
    %3954 = vmatpush1.msra.mxu0 0.0
    %3955 = vmatprep.subr.mxu0 0.0
    %3956 = vmatpush1.msra.mxu0 0.0
    %3957 = vmatprep.subr.mxu0 0.0
    %3958 = vmatpush1.msra.mxu0 0.0
    %3959 = vmatprep.subr.mxu0 0.0
    %3960 = vmatpush1.msra.mxu0 0.0
    %3961 = vmatprep.subr.mxu0 0.0
    %3962 = vmatpush1.msra.mxu0 0.0
    %3963 = vmatprep.subr.mxu0 0.0
    %3964 = vmatpush1.msra.mxu0 0.0
    %3965 = vmatprep.subr.mxu0 0.0
    %3966 = vmatpush1.msra.mxu0 0.0
    %3967 = vmatprep.subr.mxu0 0.0
    %3968 = vmatpush1.msra.mxu0 0.0
    %3969 = vmatprep.subr.mxu0 0.0
    %3970 = vmatpush1.msra.mxu0 0.0
    %3971 = vmatprep.subr.mxu0 0.0
    %3972 = vmatpush1.msra.mxu0 0.0
    %3973 = vmatprep.subr.mxu0 0.0
    %3974 = vmatpush1.msra.mxu0 0.0
    %3975 = vmatprep.subr.mxu0 0.0
    %3976 = vmatpush1.msra.mxu0 0.0
    %3977 = vmatprep.subr.mxu0 0.0
    %3978 = vmatpush1.msra.mxu0 0.0
    %3979 = vmatprep.subr.mxu0 0.0
    %3980 = vmatpush1.msra.mxu0 0.0
    %3981 = vmatprep.subr.mxu0 0.0
    %3982 = vmatpush1.msra.mxu0 0.0
    %3983 = vmatprep.subr.mxu0 0.0
    %3984 = vmatpush1.msra.mxu0 0.0
    %3985 = vmatprep.subr.mxu0 0.0
    %3986 = vmatpush1.msra.mxu0 0.0
    %3987 = vmatprep.subr.mxu0 0.0
    %3988 = vmatpush1.msra.mxu0 0.0
    %3989 = vmatprep.subr.mxu0 0.0
    %3990 = vmatpush1.msra.mxu0 0.0
    %3991 = vmatprep.subr.mxu0 0.0
    %3992 = vmatpush1.msra.mxu0 0.0
    %3993 = vmatprep.subr.mxu0 0.0
    %3994 = vmatpush1.msra.mxu0 0.0
    %3995 = vmatprep.mubr.f32.mxu0 0.0
    %3996 = vmatmul.mubr.f32.gmra.mrb[0].mxu0 %v1579
    %v3997 = vpop.f32.mrb[0].mxu0
    %v3998 = vadd.f32 %v2582, %v3997
    %v3999 = vpop.f32.mrb[0].mxu0
    %4000 = vdwg.mxu0
    %4001 = vmatprep.subr.mxu0 0.0
    %4002 = vmatpush1.msra.mxu0 %v2554
    %4003 = vmatprep.subr.mxu0 0.0
    %4004 = vmatpush1.msra.mxu0 %v2555
    %4005 = vmatprep.subr.mxu0 0.0
    %4006 = vmatpush1.msra.mxu0 %v2556
    %4007 = vmatprep.subr.mxu0 0.0
    %4008 = vmatpush1.msra.mxu0 %v2557
    %4009 = vmatprep.subr.mxu0 0.0
    %4010 = vmatpush1.msra.mxu0 0.0
    %4011 = vmatprep.subr.mxu0 0.0
    %4012 = vmatpush1.msra.mxu0 0.0
    %4013 = vmatprep.subr.mxu0 0.0
    %4014 = vmatpush1.msra.mxu0 0.0
    %4015 = vmatprep.subr.mxu0 0.0
    %4016 = vmatpush1.msra.mxu0 0.0
    %4017 = vmatprep.subr.mxu0 0.0
    %4018 = vmatpush1.msra.mxu0 0.0
    %4019 = vmatprep.subr.mxu0 0.0
    %4020 = vmatpush1.msra.mxu0 0.0
    %4021 = vmatprep.subr.mxu0 0.0
    %4022 = vmatpush1.msra.mxu0 0.0
    %4023 = vmatprep.subr.mxu0 0.0
    %4024 = vmatpush1.msra.mxu0 0.0
    %4025 = vmatprep.subr.mxu0 0.0
    %4026 = vmatpush1.msra.mxu0 0.0
    %4027 = vmatprep.subr.mxu0 0.0
    %4028 = vmatpush1.msra.mxu0 0.0
    %4029 = vmatprep.subr.mxu0 0.0
    %4030 = vmatpush1.msra.mxu0 0.0
    %4031 = vmatprep.subr.mxu0 0.0
    %4032 = vmatpush1.msra.mxu0 0.0
    %4033 = vmatprep.subr.mxu0 0.0
    %4034 = vmatpush1.msra.mxu0 0.0
    %4035 = vmatprep.subr.mxu0 0.0
    %4036 = vmatpush1.msra.mxu0 0.0
    %4037 = vmatprep.subr.mxu0 0.0
    %4038 = vmatpush1.msra.mxu0 0.0
    %4039 = vmatprep.subr.mxu0 0.0
    %4040 = vmatpush1.msra.mxu0 0.0
    %4041 = vmatprep.subr.mxu0 0.0
    %4042 = vmatpush1.msra.mxu0 0.0
    %4043 = vmatprep.subr.mxu0 0.0
    %4044 = vmatpush1.msra.mxu0 0.0
    %4045 = vmatprep.subr.mxu0 0.0
    %4046 = vmatpush1.msra.mxu0 0.0
    %4047 = vmatprep.subr.mxu0 0.0
    %4048 = vmatpush1.msra.mxu0 0.0
    %4049 = vmatprep.subr.mxu0 0.0
    %4050 = vmatpush1.msra.mxu0 0.0
    %4051 = vmatprep.subr.mxu0 0.0
    %4052 = vmatpush1.msra.mxu0 0.0
    %4053 = vmatprep.subr.mxu0 0.0
    %4054 = vmatpush1.msra.mxu0 0.0
    %4055 = vmatprep.subr.mxu0 0.0
    %4056 = vmatpush1.msra.mxu0 0.0
    %4057 = vmatprep.subr.mxu0 0.0
    %4058 = vmatpush1.msra.mxu0 0.0
    %4059 = vmatprep.subr.mxu0 0.0
    %4060 = vmatpush1.msra.mxu0 0.0
    %4061 = vmatprep.subr.mxu0 0.0
    %4062 = vmatpush1.msra.mxu0 0.0
    %4063 = vmatprep.subr.mxu0 0.0
    %4064 = vmatpush1.msra.mxu0 0.0
    %4065 = vmatprep.mubr.f32.mxu0 0.0
    %4066 = vmatmul.mubr.f32.gmra.mrb[0].mxu0 %v1579
    %v4067 = vpop.f32.mrb[0].mxu0
    %v4068 = vadd.f32 %v2658, %v4067
    %v4069 = vpop.f32.mrb[0].mxu0
    %4070 = vdwg.mxu0
    %4071 = vmatprep.subr.mxu0 0.0
    %4072 = vmatpush1.msra.mxu0 %v2558
    %4073 = vmatprep.subr.mxu0 0.0
    %4074 = vmatpush1.msra.mxu0 %v2559
    %4075 = vmatprep.subr.mxu0 0.0
    %4076 = vmatpush1.msra.mxu0 %v2560
    %4077 = vmatprep.subr.mxu0 0.0
    %4078 = vmatpush1.msra.mxu0 %v2561
    %4079 = vmatprep.subr.mxu0 0.0
    %4080 = vmatpush1.msra.mxu0 0.0
    %4081 = vmatprep.subr.mxu0 0.0
    %4082 = vmatpush1.msra.mxu0 0.0
    %4083 = vmatprep.subr.mxu0 0.0
    %4084 = vmatpush1.msra.mxu0 0.0
    %4085 = vmatprep.subr.mxu0 0.0
    %4086 = vmatpush1.msra.mxu0 0.0
    %4087 = vmatprep.subr.mxu0 0.0
    %4088 = vmatpush1.msra.mxu0 0.0
    %4089 = vmatprep.subr.mxu0 0.0
    %4090 = vmatpush1.msra.mxu0 0.0
    %4091 = vmatprep.subr.mxu0 0.0
    %4092 = vmatpush1.msra.mxu0 0.0
    %4093 = vmatprep.subr.mxu0 0.0
    %4094 = vmatpush1.msra.mxu0 0.0
    %4095 = vmatprep.subr.mxu0 0.0
    %4096 = vmatpush1.msra.mxu0 0.0
    %4097 = vmatprep.subr.mxu0 0.0
    %4098 = vmatpush1.msra.mxu0 0.0
    %4099 = vmatprep.subr.mxu0 0.0
    %4100 = vmatpush1.msra.mxu0 0.0
    %4101 = vmatprep.subr.mxu0 0.0
    %4102 = vmatpush1.msra.mxu0 0.0
    %4103 = vmatprep.subr.mxu0 0.0
    %4104 = vmatpush1.msra.mxu0 0.0
    %4105 = vmatprep.subr.mxu0 0.0
    %4106 = vmatpush1.msra.mxu0 0.0
    %4107 = vmatprep.subr.mxu0 0.0
    %4108 = vmatpush1.msra.mxu0 0.0
    %4109 = vmatprep.subr.mxu0 0.0
    %4110 = vmatpush1.msra.mxu0 0.0
    %4111 = vmatprep.subr.mxu0 0.0
    %4112 = vmatpush1.msra.mxu0 0.0
    %4113 = vmatprep.subr.mxu0 0.0
    %4114 = vmatpush1.msra.mxu0 0.0
    %4115 = vmatprep.subr.mxu0 0.0
    %4116 = vmatpush1.msra.mxu0 0.0
    %4117 = vmatprep.subr.mxu0 0.0
    %4118 = vmatpush1.msra.mxu0 0.0
    %4119 = vmatprep.subr.mxu0 0.0
    %4120 = vmatpush1.msra.mxu0 0.0
    %4121 = vmatprep.subr.mxu0 0.0
    %4122 = vmatpush1.msra.mxu0 0.0
    %4123 = vmatprep.subr.mxu0 0.0
    %4124 = vmatpush1.msra.mxu0 0.0
    %4125 = vmatprep.subr.mxu0 0.0
    %4126 = vmatpush1.msra.mxu0 0.0
    %4127 = vmatprep.subr.mxu0 0.0
    %4128 = vmatpush1.msra.mxu0 0.0
    %4129 = vmatprep.subr.mxu0 0.0
    %4130 = vmatpush1.msra.mxu0 0.0
    %4131 = vmatprep.subr.mxu0 0.0
    %4132 = vmatpush1.msra.mxu0 0.0
    %4133 = vmatprep.subr.mxu0 0.0
    %4134 = vmatpush1.msra.mxu0 0.0
    %4135 = vmatprep.mubr.f32.mxu0 0.0
    %4136 = vmatmul.mubr.f32.gmra.mrb[0].mxu0 %v1579
    %v4137 = vpop.f32.mrb[0].mxu0
    %v4138 = vadd.f32 %v2734, %v4137
    %v4139 = vpop.f32.mrb[0].mxu0
    %4140 = vdwg.mxu0
    %v4142 = vsel %vm599, %v3930, 0
    %4144 = vmatprep.subr.mxu0 0.0
    %4145 = vmatpush1.msra.mxu0 %v2562
    %4146 = vmatprep.subr.mxu0 0.0
    %4147 = vmatpush1.msra.mxu0 %v2563
    %4148 = vmatprep.subr.mxu0 0.0
    %4149 = vmatpush1.msra.mxu0 %v2564
    %4150 = vmatprep.subr.mxu0 0.0
    %4151 = vmatpush1.msra.mxu0 %v2565
    %4152 = vmatprep.subr.mxu0 0.0
    %4153 = vmatpush1.msra.mxu0 0.0
    %4154 = vmatprep.subr.mxu0 0.0
    %4155 = vmatpush1.msra.mxu0 0.0
    %4156 = vmatprep.subr.mxu0 0.0
    %4157 = vmatpush1.msra.mxu0 0.0
    %4158 = vmatprep.subr.mxu0 0.0
    %4159 = vmatpush1.msra.mxu0 0.0
    %4160 = vmatprep.subr.mxu0 0.0
    %4161 = vmatpush1.msra.mxu0 0.0
    %4162 = vmatprep.subr.mxu0 0.0
    %4163 = vmatpush1.msra.mxu0 0.0
    %4164 = vmatprep.subr.mxu0 0.0
    %4165 = vmatpush1.msra.mxu0 0.0
    %4166 = vmatprep.subr.mxu0 0.0
    %4167 = vmatpush1.msra.mxu0 0.0
    %4168 = vmatprep.subr.mxu0 0.0
    %4169 = vmatpush1.msra.mxu0 0.0
    %4170 = vmatprep.subr.mxu0 0.0
    %4171 = vmatpush1.msra.mxu0 0.0
    %4172 = vmatprep.subr.mxu0 0.0
    %4173 = vmatpush1.msra.mxu0 0.0
    %4174 = vmatprep.subr.mxu0 0.0
    %4175 = vmatpush1.msra.mxu0 0.0
    %4176 = vmatprep.subr.mxu0 0.0
    %4177 = vmatpush1.msra.mxu0 0.0
    %4178 = vmatprep.subr.mxu0 0.0
    %4179 = vmatpush1.msra.mxu0 0.0
    %4180 = vmatprep.subr.mxu0 0.0
    %4181 = vmatpush1.msra.mxu0 0.0
    %4182 = vmatprep.subr.mxu0 0.0
    %4183 = vmatpush1.msra.mxu0 0.0
    %4184 = vmatprep.subr.mxu0 0.0
    %4185 = vmatpush1.msra.mxu0 0.0
    %4186 = vmatprep.subr.mxu0 0.0
    %4187 = vmatpush1.msra.mxu0 0.0
    %4188 = vmatprep.subr.mxu0 0.0
    %4189 = vmatpush1.msra.mxu0 0.0
    %4190 = vmatprep.subr.mxu0 0.0
    %4191 = vmatpush1.msra.mxu0 0.0
    %4192 = vmatprep.subr.mxu0 0.0
    %4193 = vmatpush1.msra.mxu0 0.0
    %4194 = vmatprep.subr.mxu0 0.0
    %4195 = vmatpush1.msra.mxu0 0.0
    %4196 = vmatprep.subr.mxu0 0.0
    %4197 = vmatpush1.msra.mxu0 0.0
    %4198 = vmatprep.subr.mxu0 0.0
    %4199 = vmatpush1.msra.mxu0 0.0
    %4200 = vmatprep.subr.mxu0 0.0
    %4201 = vmatpush1.msra.mxu0 0.0
    %4202 = vmatprep.subr.mxu0 0.0
    %4203 = vmatpush1.msra.mxu0 0.0
    %4204 = vmatprep.subr.mxu0 0.0
    %4205 = vmatpush1.msra.mxu0 0.0
    %4206 = vmatprep.subr.mxu0 0.0
    %4207 = vmatpush1.msra.mxu0 0.0
    %4208 = vmatprep.mubr.f32.mxu0 0.0
    %4209 = vmatmul.mubr.f32.gmra.mrb[0].mxu0 %v4142
    %v4210 = vpop.f32.mrb[0].mxu0
    %v4211 = vadd.f32 0.0, %v4210
    %v4212 = vpop.f32.mrb[0].mxu0
    %4213 = vdwg.mxu0
    %4214 = vmatprep.subr.mxu0 0.0
    %4215 = vmatpush1.msra.mxu0 %v2566
    %4216 = vmatprep.subr.mxu0 0.0
    %4217 = vmatpush1.msra.mxu0 %v2567
    %4218 = vmatprep.subr.mxu0 0.0
    %4219 = vmatpush1.msra.mxu0 %v2568
    %4220 = vmatprep.subr.mxu0 0.0
    %4221 = vmatpush1.msra.mxu0 %v2569
    %4222 = vmatprep.subr.mxu0 0.0
    %4223 = vmatpush1.msra.mxu0 0.0
    %4224 = vmatprep.subr.mxu0 0.0
    %4225 = vmatpush1.msra.mxu0 0.0
    %4226 = vmatprep.subr.mxu0 0.0
    %4227 = vmatpush1.msra.mxu0 0.0
    %4228 = vmatprep.subr.mxu0 0.0
    %4229 = vmatpush1.msra.mxu0 0.0
    %4230 = vmatprep.subr.mxu0 0.0
    %4231 = vmatpush1.msra.mxu0 0.0
    %4232 = vmatprep.subr.mxu0 0.0
    %4233 = vmatpush1.msra.mxu0 0.0
    %4234 = vmatprep.subr.mxu0 0.0
    %4235 = vmatpush1.msra.mxu0 0.0
    %4236 = vmatprep.subr.mxu0 0.0
    %4237 = vmatpush1.msra.mxu0 0.0
    %4238 = vmatprep.subr.mxu0 0.0
    %4239 = vmatpush1.msra.mxu0 0.0
    %4240 = vmatprep.subr.mxu0 0.0
    %4241 = vmatpush1.msra.mxu0 0.0
    %4242 = vmatprep.subr.mxu0 0.0
    %4243 = vmatpush1.msra.mxu0 0.0
    %4244 = vmatprep.subr.mxu0 0.0
    %4245 = vmatpush1.msra.mxu0 0.0
    %4246 = vmatprep.subr.mxu0 0.0
    %4247 = vmatpush1.msra.mxu0 0.0
    %4248 = vmatprep.subr.mxu0 0.0
    %4249 = vmatpush1.msra.mxu0 0.0
    %4250 = vmatprep.subr.mxu0 0.0
    %4251 = vmatpush1.msra.mxu0 0.0
    %4252 = vmatprep.subr.mxu0 0.0
    %4253 = vmatpush1.msra.mxu0 0.0
    %4254 = vmatprep.subr.mxu0 0.0
    %4255 = vmatpush1.msra.mxu0 0.0
    %4256 = vmatprep.subr.mxu0 0.0
    %4257 = vmatpush1.msra.mxu0 0.0
    %4258 = vmatprep.subr.mxu0 0.0
    %4259 = vmatpush1.msra.mxu0 0.0
    %4260 = vmatprep.subr.mxu0 0.0
    %4261 = vmatpush1.msra.mxu0 0.0
    %4262 = vmatprep.subr.mxu0 0.0
    %4263 = vmatpush1.msra.mxu0 0.0
    %4264 = vmatprep.subr.mxu0 0.0
    %4265 = vmatpush1.msra.mxu0 0.0
    %4266 = vmatprep.subr.mxu0 0.0
    %4267 = vmatpush1.msra.mxu0 0.0
    %4268 = vmatprep.subr.mxu0 0.0
    %4269 = vmatpush1.msra.mxu0 0.0
    %4270 = vmatprep.subr.mxu0 0.0
    %4271 = vmatpush1.msra.mxu0 0.0
    %4272 = vmatprep.subr.mxu0 0.0
    %4273 = vmatpush1.msra.mxu0 0.0
    %4274 = vmatprep.subr.mxu0 0.0
    %4275 = vmatpush1.msra.mxu0 0.0
    %4276 = vmatprep.subr.mxu0 0.0
    %4277 = vmatpush1.msra.mxu0 0.0
    %4278 = vmatprep.mubr.f32.mxu0 0.0
    %4279 = vmatmul.mubr.f32.gmra.mrb[0].mxu0 %v4142
    %v4280 = vpop.f32.mrb[0].mxu0
    %v4281 = vadd.f32 0.0, %v4280
    %v4282 = vpop.f32.mrb[0].mxu0
    %4283 = vdwg.mxu0
    %v4284 = vadd.f32 %v3998, %v4211
    %v4285 = vxor.u32 %v4284, 2147483648
    %v4286 = vmul.f32 %v4285, 1.442695
    %v4287 = vpow.pop %v4286
    %v4288 = vadd.f32 %v4287, 1.0
    %v4289 = vrcp.pop %v4288
    %v4290 = vmul.f32 1.0, %v4289
    %v4291 = vadd.f32 %v4068, %v4281
    %v4292 = vxor.u32 %v4291, 2147483648
    %v4293 = vmul.f32 %v4292, 1.442695
    %v4294 = vpow.pop %v4293
    %v4295 = vadd.f32 %v4294, 1.0
    %v4296 = vrcp.pop %v4295
    %v4297 = vmul.f32 1.0, %v4296
    %4298 = vmatprep.subr.mxu0 0.0
    %4299 = vmatpush1.msra.mxu0 %v2570
    %4300 = vmatprep.subr.mxu0 0.0
    %4301 = vmatpush1.msra.mxu0 %v2571
    %4302 = vmatprep.subr.mxu0 0.0
    %4303 = vmatpush1.msra.mxu0 %v2572
    %4304 = vmatprep.subr.mxu0 0.0
    %4305 = vmatpush1.msra.mxu0 %v2573
    %4306 = vmatprep.subr.mxu0 0.0
    %4307 = vmatpush1.msra.mxu0 0.0
    %4308 = vmatprep.subr.mxu0 0.0
    %4309 = vmatpush1.msra.mxu0 0.0
    %4310 = vmatprep.subr.mxu0 0.0
    %4311 = vmatpush1.msra.mxu0 0.0
    %4312 = vmatprep.subr.mxu0 0.0
    %4313 = vmatpush1.msra.mxu0 0.0
    %4314 = vmatprep.subr.mxu0 0.0
    %4315 = vmatpush1.msra.mxu0 0.0
    %4316 = vmatprep.subr.mxu0 0.0
    %4317 = vmatpush1.msra.mxu0 0.0
    %4318 = vmatprep.subr.mxu0 0.0
    %4319 = vmatpush1.msra.mxu0 0.0
    %4320 = vmatprep.subr.mxu0 0.0
    %4321 = vmatpush1.msra.mxu0 0.0
    %4322 = vmatprep.subr.mxu0 0.0
    %4323 = vmatpush1.msra.mxu0 0.0
    %4324 = vmatprep.subr.mxu0 0.0
    %4325 = vmatpush1.msra.mxu0 0.0
    %4326 = vmatprep.subr.mxu0 0.0
    %4327 = vmatpush1.msra.mxu0 0.0
    %4328 = vmatprep.subr.mxu0 0.0
    %4329 = vmatpush1.msra.mxu0 0.0
    %4330 = vmatprep.subr.mxu0 0.0
    %4331 = vmatpush1.msra.mxu0 0.0
    %4332 = vmatprep.subr.mxu0 0.0
    %4333 = vmatpush1.msra.mxu0 0.0
    %4334 = vmatprep.subr.mxu0 0.0
    %4335 = vmatpush1.msra.mxu0 0.0
    %4336 = vmatprep.subr.mxu0 0.0
    %4337 = vmatpush1.msra.mxu0 0.0
    %4338 = vmatprep.subr.mxu0 0.0
    %4339 = vmatpush1.msra.mxu0 0.0
    %4340 = vmatprep.subr.mxu0 0.0
    %4341 = vmatpush1.msra.mxu0 0.0
    %4342 = vmatprep.subr.mxu0 0.0
    %4343 = vmatpush1.msra.mxu0 0.0
    %4344 = vmatprep.subr.mxu0 0.0
    %4345 = vmatpush1.msra.mxu0 0.0
    %4346 = vmatprep.subr.mxu0 0.0
    %4347 = vmatpush1.msra.mxu0 0.0
    %4348 = vmatprep.subr.mxu0 0.0
    %4349 = vmatpush1.msra.mxu0 0.0
    %4350 = vmatprep.subr.mxu0 0.0
    %4351 = vmatpush1.msra.mxu0 0.0
    %4352 = vmatprep.subr.mxu0 0.0
    %4353 = vmatpush1.msra.mxu0 0.0
    %4354 = vmatprep.subr.mxu0 0.0
    %4355 = vmatpush1.msra.mxu0 0.0
    %4356 = vmatprep.subr.mxu0 0.0
    %4357 = vmatpush1.msra.mxu0 0.0
    %4358 = vmatprep.subr.mxu0 0.0
    %4359 = vmatpush1.msra.mxu0 0.0
    %4360 = vmatprep.subr.mxu0 0.0
    %4361 = vmatpush1.msra.mxu0 0.0
    %4362 = vmatprep.mubr.f32.mxu0 0.0
    %4363 = vmatmul.mubr.f32.gmra.mrb[0].mxu0 %v4142
    %v4364 = vpop.f32.mrb[0].mxu0
    %v4365 = vadd.f32 %v2964, %v4364
    %v4366 = vpop.f32.mrb[0].mxu0
    %4367 = vdwg.mxu0
    %v4368 = vmul.f32 %v4290, %v4365
    %v4369 = vadd.f32 %v4138, %v4368
    %v4370 = vtanh.pop %v4369
    %v4371 = vsub.f32 1.0, %v4297
    %v4372 = vmul.f32 %v4371, %v4370
    %v4373 = vmul.f32 %v4297, %v3930
    %v4374 = vadd.f32 %v4372, %v4373
    %4375 = vmatprep.subr.mxu0 0.0
    %4376 = vmatpush1.msra.mxu0 %v2550
    %4377 = vmatprep.subr.mxu0 0.0
    %4378 = vmatpush1.msra.mxu0 %v2551
    %4379 = vmatprep.subr.mxu0 0.0
    %4380 = vmatpush1.msra.mxu0 %v2552
    %4381 = vmatprep.subr.mxu0 0.0
    %4382 = vmatpush1.msra.mxu0 %v2553
    %4383 = vmatprep.subr.mxu0 0.0
    %4384 = vmatpush1.msra.mxu0 0.0
    %4385 = vmatprep.subr.mxu0 0.0
    %4386 = vmatpush1.msra.mxu0 0.0
    %4387 = vmatprep.subr.mxu0 0.0
    %4388 = vmatpush1.msra.mxu0 0.0
    %4389 = vmatprep.subr.mxu0 0.0
    %4390 = vmatpush1.msra.mxu0 0.0
    %4391 = vmatprep.subr.mxu0 0.0
    %4392 = vmatpush1.msra.mxu0 0.0
    %4393 = vmatprep.subr.mxu0 0.0
    %4394 = vmatpush1.msra.mxu0 0.0
    %4395 = vmatprep.subr.mxu0 0.0
    %4396 = vmatpush1.msra.mxu0 0.0
    %4397 = vmatprep.subr.mxu0 0.0
    %4398 = vmatpush1.msra.mxu0 0.0
    %4399 = vmatprep.subr.mxu0 0.0
    %4400 = vmatpush1.msra.mxu0 0.0
    %4401 = vmatprep.subr.mxu0 0.0
    %4402 = vmatpush1.msra.mxu0 0.0
    %4403 = vmatprep.subr.mxu0 0.0
    %4404 = vmatpush1.msra.mxu0 0.0
    %4405 = vmatprep.subr.mxu0 0.0
    %4406 = vmatpush1.msra.mxu0 0.0
    %4407 = vmatprep.subr.mxu0 0.0
    %4408 = vmatpush1.msra.mxu0 0.0
    %4409 = vmatprep.subr.mxu0 0.0
    %4410 = vmatpush1.msra.mxu0 0.0
    %4411 = vmatprep.subr.mxu0 0.0
    %4412 = vmatpush1.msra.mxu0 0.0
    %4413 = vmatprep.subr.mxu0 0.0
    %4414 = vmatpush1.msra.mxu0 0.0
    %4415 = vmatprep.subr.mxu0 0.0
    %4416 = vmatpush1.msra.mxu0 0.0
    %4417 = vmatprep.subr.mxu0 0.0
    %4418 = vmatpush1.msra.mxu0 0.0
    %4419 = vmatprep.subr.mxu0 0.0
    %4420 = vmatpush1.msra.mxu0 0.0
    %4421 = vmatprep.subr.mxu0 0.0
    %4422 = vmatpush1.msra.mxu0 0.0
    %4423 = vmatprep.subr.mxu0 0.0
    %4424 = vmatpush1.msra.mxu0 0.0
    %4425 = vmatprep.subr.mxu0 0.0
    %4426 = vmatpush1.msra.mxu0 0.0
    %4427 = vmatprep.subr.mxu0 0.0
    %4428 = vmatpush1.msra.mxu0 0.0
    %4429 = vmatprep.subr.mxu0 0.0
    %4430 = vmatpush1.msra.mxu0 0.0
    %4431 = vmatprep.subr.mxu0 0.0
    %4432 = vmatpush1.msra.mxu0 0.0
    %4433 = vmatprep.subr.mxu0 0.0
    %4434 = vmatpush1.msra.mxu0 0.0
    %4435 = vmatprep.subr.mxu0 0.0
    %4436 = vmatpush1.msra.mxu0 0.0
    %4437 = vmatprep.subr.mxu0 0.0
    %4438 = vmatpush1.msra.mxu0 0.0
    %4439 = vmatprep.mubr.f32.mxu0 0.0
    %4440 = vmatmul.mubr.f32.gmra.mrb[0].mxu0 %v1814
    %v4441 = vpop.f32.mrb[0].mxu0
    %v4442 = vadd.f32 %v2582, %v4441
    %v4443 = vpop.f32.mrb[0].mxu0
    %4444 = vdwg.mxu0
    %4445 = vmatprep.subr.mxu0 0.0
    %4446 = vmatpush1.msra.mxu0 %v2554
    %4447 = vmatprep.subr.mxu0 0.0
    %4448 = vmatpush1.msra.mxu0 %v2555
    %4449 = vmatprep.subr.mxu0 0.0
    %4450 = vmatpush1.msra.mxu0 %v2556
    %4451 = vmatprep.subr.mxu0 0.0
    %4452 = vmatpush1.msra.mxu0 %v2557
    %4453 = vmatprep.subr.mxu0 0.0
    %4454 = vmatpush1.msra.mxu0 0.0
    %4455 = vmatprep.subr.mxu0 0.0
    %4456 = vmatpush1.msra.mxu0 0.0
    %4457 = vmatprep.subr.mxu0 0.0
    %4458 = vmatpush1.msra.mxu0 0.0
    %4459 = vmatprep.subr.mxu0 0.0
    %4460 = vmatpush1.msra.mxu0 0.0
    %4461 = vmatprep.subr.mxu0 0.0
    %4462 = vmatpush1.msra.mxu0 0.0
    %4463 = vmatprep.subr.mxu0 0.0
    %4464 = vmatpush1.msra.mxu0 0.0
    %4465 = vmatprep.subr.mxu0 0.0
    %4466 = vmatpush1.msra.mxu0 0.0
    %4467 = vmatprep.subr.mxu0 0.0
    %4468 = vmatpush1.msra.mxu0 0.0
    %4469 = vmatprep.subr.mxu0 0.0
    %4470 = vmatpush1.msra.mxu0 0.0
    %4471 = vmatprep.subr.mxu0 0.0
    %4472 = vmatpush1.msra.mxu0 0.0
    %4473 = vmatprep.subr.mxu0 0.0
    %4474 = vmatpush1.msra.mxu0 0.0
    %4475 = vmatprep.subr.mxu0 0.0
    %4476 = vmatpush1.msra.mxu0 0.0
    %4477 = vmatprep.subr.mxu0 0.0
    %4478 = vmatpush1.msra.mxu0 0.0
    %4479 = vmatprep.subr.mxu0 0.0
    %4480 = vmatpush1.msra.mxu0 0.0
    %4481 = vmatprep.subr.mxu0 0.0
    %4482 = vmatpush1.msra.mxu0 0.0
    %4483 = vmatprep.subr.mxu0 0.0
    %4484 = vmatpush1.msra.mxu0 0.0
    %4485 = vmatprep.subr.mxu0 0.0
    %4486 = vmatpush1.msra.mxu0 0.0
    %4487 = vmatprep.subr.mxu0 0.0
    %4488 = vmatpush1.msra.mxu0 0.0
    %4489 = vmatprep.subr.mxu0 0.0
    %4490 = vmatpush1.msra.mxu0 0.0
    %4491 = vmatprep.subr.mxu0 0.0
    %4492 = vmatpush1.msra.mxu0 0.0
    %4493 = vmatprep.subr.mxu0 0.0
    %4494 = vmatpush1.msra.mxu0 0.0
    %4495 = vmatprep.subr.mxu0 0.0
    %4496 = vmatpush1.msra.mxu0 0.0
    %4497 = vmatprep.subr.mxu0 0.0
    %4498 = vmatpush1.msra.mxu0 0.0
    %4499 = vmatprep.subr.mxu0 0.0
    %4500 = vmatpush1.msra.mxu0 0.0
    %4501 = vmatprep.subr.mxu0 0.0
    %4502 = vmatpush1.msra.mxu0 0.0
    %4503 = vmatprep.subr.mxu0 0.0
    %4504 = vmatpush1.msra.mxu0 0.0
    %4505 = vmatprep.subr.mxu0 0.0
    %4506 = vmatpush1.msra.mxu0 0.0
    %4507 = vmatprep.subr.mxu0 0.0
    %4508 = vmatpush1.msra.mxu0 0.0
    %4509 = vmatprep.mubr.f32.mxu0 0.0
    %4510 = vmatmul.mubr.f32.gmra.mrb[0].mxu0 %v1814
    %v4511 = vpop.f32.mrb[0].mxu0
    %v4512 = vadd.f32 %v2658, %v4511
    %v4513 = vpop.f32.mrb[0].mxu0
    %4514 = vdwg.mxu0
    %4515 = vmatprep.subr.mxu0 0.0
    %4516 = vmatpush1.msra.mxu0 %v2558
    %4517 = vmatprep.subr.mxu0 0.0
    %4518 = vmatpush1.msra.mxu0 %v2559
    %4519 = vmatprep.subr.mxu0 0.0
    %4520 = vmatpush1.msra.mxu0 %v2560
    %4521 = vmatprep.subr.mxu0 0.0
    %4522 = vmatpush1.msra.mxu0 %v2561
    %4523 = vmatprep.subr.mxu0 0.0
    %4524 = vmatpush1.msra.mxu0 0.0
    %4525 = vmatprep.subr.mxu0 0.0
    %4526 = vmatpush1.msra.mxu0 0.0
    %4527 = vmatprep.subr.mxu0 0.0
    %4528 = vmatpush1.msra.mxu0 0.0
    %4529 = vmatprep.subr.mxu0 0.0
    %4530 = vmatpush1.msra.mxu0 0.0
    %4531 = vmatprep.subr.mxu0 0.0
    %4532 = vmatpush1.msra.mxu0 0.0
    %4533 = vmatprep.subr.mxu0 0.0
    %4534 = vmatpush1.msra.mxu0 0.0
    %4535 = vmatprep.subr.mxu0 0.0
    %4536 = vmatpush1.msra.mxu0 0.0
    %4537 = vmatprep.subr.mxu0 0.0
    %4538 = vmatpush1.msra.mxu0 0.0
    %4539 = vmatprep.subr.mxu0 0.0
    %4540 = vmatpush1.msra.mxu0 0.0
    %4541 = vmatprep.subr.mxu0 0.0
    %4542 = vmatpush1.msra.mxu0 0.0
    %4543 = vmatprep.subr.mxu0 0.0
    %4544 = vmatpush1.msra.mxu0 0.0
    %4545 = vmatprep.subr.mxu0 0.0
    %4546 = vmatpush1.msra.mxu0 0.0
    %4547 = vmatprep.subr.mxu0 0.0
    %4548 = vmatpush1.msra.mxu0 0.0
    %4549 = vmatprep.subr.mxu0 0.0
    %4550 = vmatpush1.msra.mxu0 0.0
    %4551 = vmatprep.subr.mxu0 0.0
    %4552 = vmatpush1.msra.mxu0 0.0
    %4553 = vmatprep.subr.mxu0 0.0
    %4554 = vmatpush1.msra.mxu0 0.0
    %4555 = vmatprep.subr.mxu0 0.0
    %4556 = vmatpush1.msra.mxu0 0.0
    %4557 = vmatprep.subr.mxu0 0.0
    %4558 = vmatpush1.msra.mxu0 0.0
    %4559 = vmatprep.subr.mxu0 0.0
    %4560 = vmatpush1.msra.mxu0 0.0
    %4561 = vmatprep.subr.mxu0 0.0
    %4562 = vmatpush1.msra.mxu0 0.0
    %4563 = vmatprep.subr.mxu0 0.0
    %4564 = vmatpush1.msra.mxu0 0.0
    %4565 = vmatprep.subr.mxu0 0.0
    %4566 = vmatpush1.msra.mxu0 0.0
    %4567 = vmatprep.subr.mxu0 0.0
    %4568 = vmatpush1.msra.mxu0 0.0
    %4569 = vmatprep.subr.mxu0 0.0
    %4570 = vmatpush1.msra.mxu0 0.0
    %4571 = vmatprep.subr.mxu0 0.0
    %4572 = vmatpush1.msra.mxu0 0.0
    %4573 = vmatprep.subr.mxu0 0.0
    %4574 = vmatpush1.msra.mxu0 0.0
    %4575 = vmatprep.subr.mxu0 0.0
    %4576 = vmatpush1.msra.mxu0 0.0
    %4577 = vmatprep.subr.mxu0 0.0
    %4578 = vmatpush1.msra.mxu0 0.0
    %4579 = vmatprep.mubr.f32.mxu0 0.0
    %4580 = vmatmul.mubr.f32.gmra.mrb[0].mxu0 %v1814
    %v4581 = vpop.f32.mrb[0].mxu0
    %v4582 = vadd.f32 %v2734, %v4581
    %v4583 = vpop.f32.mrb[0].mxu0
    %4584 = vdwg.mxu0
    %v4586 = vsel %vm599, %v4374, 0
    %4588 = vmatprep.subr.mxu0 0.0
    %4589 = vmatpush1.msra.mxu0 %v2562
    %4590 = vmatprep.subr.mxu0 0.0
    %4591 = vmatpush1.msra.mxu0 %v2563
    %4592 = vmatprep.subr.mxu0 0.0
    %4593 = vmatpush1.msra.mxu0 %v2564
    %4594 = vmatprep.subr.mxu0 0.0
    %4595 = vmatpush1.msra.mxu0 %v2565
    %4596 = vmatprep.subr.mxu0 0.0
    %4597 = vmatpush1.msra.mxu0 0.0
    %4598 = vmatprep.subr.mxu0 0.0
    %4599 = vmatpush1.msra.mxu0 0.0
    %4600 = vmatprep.subr.mxu0 0.0
    %4601 = vmatpush1.msra.mxu0 0.0
    %4602 = vmatprep.subr.mxu0 0.0
    %4603 = vmatpush1.msra.mxu0 0.0
    %4604 = vmatprep.subr.mxu0 0.0
    %4605 = vmatpush1.msra.mxu0 0.0
    %4606 = vmatprep.subr.mxu0 0.0
    %4607 = vmatpush1.msra.mxu0 0.0
    %4608 = vmatprep.subr.mxu0 0.0
    %4609 = vmatpush1.msra.mxu0 0.0
    %4610 = vmatprep.subr.mxu0 0.0
    %4611 = vmatpush1.msra.mxu0 0.0
    %4612 = vmatprep.subr.mxu0 0.0
    %4613 = vmatpush1.msra.mxu0 0.0
    %4614 = vmatprep.subr.mxu0 0.0
    %4615 = vmatpush1.msra.mxu0 0.0
    %4616 = vmatprep.subr.mxu0 0.0
    %4617 = vmatpush1.msra.mxu0 0.0
    %4618 = vmatprep.subr.mxu0 0.0
    %4619 = vmatpush1.msra.mxu0 0.0
    %4620 = vmatprep.subr.mxu0 0.0
    %4621 = vmatpush1.msra.mxu0 0.0
    %4622 = vmatprep.subr.mxu0 0.0
    %4623 = vmatpush1.msra.mxu0 0.0
    %4624 = vmatprep.subr.mxu0 0.0
    %4625 = vmatpush1.msra.mxu0 0.0
    %4626 = vmatprep.subr.mxu0 0.0
    %4627 = vmatpush1.msra.mxu0 0.0
    %4628 = vmatprep.subr.mxu0 0.0
    %4629 = vmatpush1.msra.mxu0 0.0
    %4630 = vmatprep.subr.mxu0 0.0
    %4631 = vmatpush1.msra.mxu0 0.0
    %4632 = vmatprep.subr.mxu0 0.0
    %4633 = vmatpush1.msra.mxu0 0.0
    %4634 = vmatprep.subr.mxu0 0.0
    %4635 = vmatpush1.msra.mxu0 0.0
    %4636 = vmatprep.subr.mxu0 0.0
    %4637 = vmatpush1.msra.mxu0 0.0
    %4638 = vmatprep.subr.mxu0 0.0
    %4639 = vmatpush1.msra.mxu0 0.0
    %4640 = vmatprep.subr.mxu0 0.0
    %4641 = vmatpush1.msra.mxu0 0.0
    %4642 = vmatprep.subr.mxu0 0.0
    %4643 = vmatpush1.msra.mxu0 0.0
    %4644 = vmatprep.subr.mxu0 0.0
    %4645 = vmatpush1.msra.mxu0 0.0
    %4646 = vmatprep.subr.mxu0 0.0
    %4647 = vmatpush1.msra.mxu0 0.0
    %4648 = vmatprep.subr.mxu0 0.0
    %4649 = vmatpush1.msra.mxu0 0.0
    %4650 = vmatprep.subr.mxu0 0.0
    %4651 = vmatpush1.msra.mxu0 0.0
    %4652 = vmatprep.mubr.f32.mxu0 0.0
    %4653 = vmatmul.mubr.f32.gmra.mrb[0].mxu0 %v4586
    %v4654 = vpop.f32.mrb[0].mxu0
    %v4655 = vadd.f32 0.0, %v4654
    %v4656 = vpop.f32.mrb[0].mxu0
    %4657 = vdwg.mxu0
    %4658 = vmatprep.subr.mxu0 0.0
    %4659 = vmatpush1.msra.mxu0 %v2566
    %4660 = vmatprep.subr.mxu0 0.0
    %4661 = vmatpush1.msra.mxu0 %v2567
    %4662 = vmatprep.subr.mxu0 0.0
    %4663 = vmatpush1.msra.mxu0 %v2568
    %4664 = vmatprep.subr.mxu0 0.0
    %4665 = vmatpush1.msra.mxu0 %v2569
    %4666 = vmatprep.subr.mxu0 0.0
    %4667 = vmatpush1.msra.mxu0 0.0
    %4668 = vmatprep.subr.mxu0 0.0
    %4669 = vmatpush1.msra.mxu0 0.0
    %4670 = vmatprep.subr.mxu0 0.0
    %4671 = vmatpush1.msra.mxu0 0.0
    %4672 = vmatprep.subr.mxu0 0.0
    %4673 = vmatpush1.msra.mxu0 0.0
    %4674 = vmatprep.subr.mxu0 0.0
    %4675 = vmatpush1.msra.mxu0 0.0
    %4676 = vmatprep.subr.mxu0 0.0
    %4677 = vmatpush1.msra.mxu0 0.0
    %4678 = vmatprep.subr.mxu0 0.0
    %4679 = vmatpush1.msra.mxu0 0.0
    %4680 = vmatprep.subr.mxu0 0.0
    %4681 = vmatpush1.msra.mxu0 0.0
    %4682 = vmatprep.subr.mxu0 0.0
    %4683 = vmatpush1.msra.mxu0 0.0
    %4684 = vmatprep.subr.mxu0 0.0
    %4685 = vmatpush1.msra.mxu0 0.0
    %4686 = vmatprep.subr.mxu0 0.0
    %4687 = vmatpush1.msra.mxu0 0.0
    %4688 = vmatprep.subr.mxu0 0.0
    %4689 = vmatpush1.msra.mxu0 0.0
    %4690 = vmatprep.subr.mxu0 0.0
    %4691 = vmatpush1.msra.mxu0 0.0
    %4692 = vmatprep.subr.mxu0 0.0
    %4693 = vmatpush1.msra.mxu0 0.0
    %4694 = vmatprep.subr.mxu0 0.0
    %4695 = vmatpush1.msra.mxu0 0.0
    %4696 = vmatprep.subr.mxu0 0.0
    %4697 = vmatpush1.msra.mxu0 0.0
    %4698 = vmatprep.subr.mxu0 0.0
    %4699 = vmatpush1.msra.mxu0 0.0
    %4700 = vmatprep.subr.mxu0 0.0
    %4701 = vmatpush1.msra.mxu0 0.0
    %4702 = vmatprep.subr.mxu0 0.0
    %4703 = vmatpush1.msra.mxu0 0.0
    %4704 = vmatprep.subr.mxu0 0.0
    %4705 = vmatpush1.msra.mxu0 0.0
    %4706 = vmatprep.subr.mxu0 0.0
    %4707 = vmatpush1.msra.mxu0 0.0
    %4708 = vmatprep.subr.mxu0 0.0
    %4709 = vmatpush1.msra.mxu0 0.0
    %4710 = vmatprep.subr.mxu0 0.0
    %4711 = vmatpush1.msra.mxu0 0.0
    %4712 = vmatprep.subr.mxu0 0.0
    %4713 = vmatpush1.msra.mxu0 0.0
    %4714 = vmatprep.subr.mxu0 0.0
    %4715 = vmatpush1.msra.mxu0 0.0
    %4716 = vmatprep.subr.mxu0 0.0
    %4717 = vmatpush1.msra.mxu0 0.0
    %4718 = vmatprep.subr.mxu0 0.0
    %4719 = vmatpush1.msra.mxu0 0.0
    %4720 = vmatprep.subr.mxu0 0.0
    %4721 = vmatpush1.msra.mxu0 0.0
    %4722 = vmatprep.mubr.f32.mxu0 0.0
    %4723 = vmatmul.mubr.f32.gmra.mrb[0].mxu0 %v4586
    %v4724 = vpop.f32.mrb[0].mxu0
    %v4725 = vadd.f32 0.0, %v4724
    %v4726 = vpop.f32.mrb[0].mxu0
    %4727 = vdwg.mxu0
    %v4728 = vadd.f32 %v4442, %v4655
    %v4729 = vxor.u32 %v4728, 2147483648
    %v4730 = vmul.f32 %v4729, 1.442695
    %v4731 = vpow.pop %v4730
    %v4732 = vadd.f32 %v4731, 1.0
    %v4733 = vrcp.pop %v4732
    %v4734 = vmul.f32 1.0, %v4733
    %v4735 = vadd.f32 %v4512, %v4725
    %v4736 = vxor.u32 %v4735, 2147483648
    %v4737 = vmul.f32 %v4736, 1.442695
    %v4738 = vpow.pop %v4737
    %v4739 = vadd.f32 %v4738, 1.0
    %v4740 = vrcp.pop %v4739
    %v4741 = vmul.f32 1.0, %v4740
    %4742 = vmatprep.subr.mxu0 0.0
    %4743 = vmatpush1.msra.mxu0 %v2570
    %4744 = vmatprep.subr.mxu0 0.0
    %4745 = vmatpush1.msra.mxu0 %v2571
    %4746 = vmatprep.subr.mxu0 0.0
    %4747 = vmatpush1.msra.mxu0 %v2572
    %4748 = vmatprep.subr.mxu0 0.0
    %4749 = vmatpush1.msra.mxu0 %v2573
    %4750 = vmatprep.subr.mxu0 0.0
    %4751 = vmatpush1.msra.mxu0 0.0
    %4752 = vmatprep.subr.mxu0 0.0
    %4753 = vmatpush1.msra.mxu0 0.0
    %4754 = vmatprep.subr.mxu0 0.0
    %4755 = vmatpush1.msra.mxu0 0.0
    %4756 = vmatprep.subr.mxu0 0.0
    %4757 = vmatpush1.msra.mxu0 0.0
    %4758 = vmatprep.subr.mxu0 0.0
    %4759 = vmatpush1.msra.mxu0 0.0
    %4760 = vmatprep.subr.mxu0 0.0
    %4761 = vmatpush1.msra.mxu0 0.0
    %4762 = vmatprep.subr.mxu0 0.0
    %4763 = vmatpush1.msra.mxu0 0.0
    %4764 = vmatprep.subr.mxu0 0.0
    %4765 = vmatpush1.msra.mxu0 0.0
    %4766 = vmatprep.subr.mxu0 0.0
    %4767 = vmatpush1.msra.mxu0 0.0
    %4768 = vmatprep.subr.mxu0 0.0
    %4769 = vmatpush1.msra.mxu0 0.0
    %4770 = vmatprep.subr.mxu0 0.0
    %4771 = vmatpush1.msra.mxu0 0.0
    %4772 = vmatprep.subr.mxu0 0.0
    %4773 = vmatpush1.msra.mxu0 0.0
    %4774 = vmatprep.subr.mxu0 0.0
    %4775 = vmatpush1.msra.mxu0 0.0
    %4776 = vmatprep.subr.mxu0 0.0
    %4777 = vmatpush1.msra.mxu0 0.0
    %4778 = vmatprep.subr.mxu0 0.0
    %4779 = vmatpush1.msra.mxu0 0.0
    %4780 = vmatprep.subr.mxu0 0.0
    %4781 = vmatpush1.msra.mxu0 0.0
    %4782 = vmatprep.subr.mxu0 0.0
    %4783 = vmatpush1.msra.mxu0 0.0
    %4784 = vmatprep.subr.mxu0 0.0
    %4785 = vmatpush1.msra.mxu0 0.0
    %4786 = vmatprep.subr.mxu0 0.0
    %4787 = vmatpush1.msra.mxu0 0.0
    %4788 = vmatprep.subr.mxu0 0.0
    %4789 = vmatpush1.msra.mxu0 0.0
    %4790 = vmatprep.subr.mxu0 0.0
    %4791 = vmatpush1.msra.mxu0 0.0
    %4792 = vmatprep.subr.mxu0 0.0
    %4793 = vmatpush1.msra.mxu0 0.0
    %4794 = vmatprep.subr.mxu0 0.0
    %4795 = vmatpush1.msra.mxu0 0.0
    %4796 = vmatprep.subr.mxu0 0.0
    %4797 = vmatpush1.msra.mxu0 0.0
    %4798 = vmatprep.subr.mxu0 0.0
    %4799 = vmatpush1.msra.mxu0 0.0
    %4800 = vmatprep.subr.mxu0 0.0
    %4801 = vmatpush1.msra.mxu0 0.0
    %4802 = vmatprep.subr.mxu0 0.0
    %4803 = vmatpush1.msra.mxu0 0.0
    %4804 = vmatprep.subr.mxu0 0.0
    %4805 = vmatpush1.msra.mxu0 0.0
    %4806 = vmatprep.mubr.f32.mxu0 0.0
    %4807 = vmatmul.mubr.f32.gmra.mrb[0].mxu0 %v4586
    %v4808 = vpop.f32.mrb[0].mxu0
    %v4809 = vadd.f32 %v2964, %v4808
    %v4810 = vpop.f32.mrb[0].mxu0
    %4811 = vdwg.mxu0
    %v4812 = vmul.f32 %v4734, %v4809
    %v4813 = vadd.f32 %v4582, %v4812
    %v4814 = vtanh.pop %v4813
    %v4815 = vsub.f32 1.0, %v4741
    %v4816 = vmul.f32 %v4815, %v4814
    %v4817 = vmul.f32 %v4741, %v4374
    %v4818 = vadd.f32 %v4816, %v4817
    %4819 = vmatprep.subr.mxu0 0.0
    %4820 = vmatpush1.msra.mxu0 %v2550
    %4821 = vmatprep.subr.mxu0 0.0
    %4822 = vmatpush1.msra.mxu0 %v2551
    %4823 = vmatprep.subr.mxu0 0.0
    %4824 = vmatpush1.msra.mxu0 %v2552
    %4825 = vmatprep.subr.mxu0 0.0
    %4826 = vmatpush1.msra.mxu0 %v2553
    %4827 = vmatprep.subr.mxu0 0.0
    %4828 = vmatpush1.msra.mxu0 0.0
    %4829 = vmatprep.subr.mxu0 0.0
    %4830 = vmatpush1.msra.mxu0 0.0
    %4831 = vmatprep.subr.mxu0 0.0
    %4832 = vmatpush1.msra.mxu0 0.0
    %4833 = vmatprep.subr.mxu0 0.0
    %4834 = vmatpush1.msra.mxu0 0.0
    %4835 = vmatprep.subr.mxu0 0.0
    %4836 = vmatpush1.msra.mxu0 0.0
    %4837 = vmatprep.subr.mxu0 0.0
    %4838 = vmatpush1.msra.mxu0 0.0
    %4839 = vmatprep.subr.mxu0 0.0
    %4840 = vmatpush1.msra.mxu0 0.0
    %4841 = vmatprep.subr.mxu0 0.0
    %4842 = vmatpush1.msra.mxu0 0.0
    %4843 = vmatprep.subr.mxu0 0.0
    %4844 = vmatpush1.msra.mxu0 0.0
    %4845 = vmatprep.subr.mxu0 0.0
    %4846 = vmatpush1.msra.mxu0 0.0
    %4847 = vmatprep.subr.mxu0 0.0
    %4848 = vmatpush1.msra.mxu0 0.0
    %4849 = vmatprep.subr.mxu0 0.0
    %4850 = vmatpush1.msra.mxu0 0.0
    %4851 = vmatprep.subr.mxu0 0.0
    %4852 = vmatpush1.msra.mxu0 0.0
    %4853 = vmatprep.subr.mxu0 0.0
    %4854 = vmatpush1.msra.mxu0 0.0
    %4855 = vmatprep.subr.mxu0 0.0
    %4856 = vmatpush1.msra.mxu0 0.0
    %4857 = vmatprep.subr.mxu0 0.0
    %4858 = vmatpush1.msra.mxu0 0.0
    %4859 = vmatprep.subr.mxu0 0.0
    %4860 = vmatpush1.msra.mxu0 0.0
    %4861 = vmatprep.subr.mxu0 0.0
    %4862 = vmatpush1.msra.mxu0 0.0
    %4863 = vmatprep.subr.mxu0 0.0
    %4864 = vmatpush1.msra.mxu0 0.0
    %4865 = vmatprep.subr.mxu0 0.0
    %4866 = vmatpush1.msra.mxu0 0.0
    %4867 = vmatprep.subr.mxu0 0.0
    %4868 = vmatpush1.msra.mxu0 0.0
    %4869 = vmatprep.subr.mxu0 0.0
    %4870 = vmatpush1.msra.mxu0 0.0
    %4871 = vmatprep.subr.mxu0 0.0
    %4872 = vmatpush1.msra.mxu0 0.0
    %4873 = vmatprep.subr.mxu0 0.0
    %4874 = vmatpush1.msra.mxu0 0.0
    %4875 = vmatprep.subr.mxu0 0.0
    %4876 = vmatpush1.msra.mxu0 0.0
    %4877 = vmatprep.subr.mxu0 0.0
    %4878 = vmatpush1.msra.mxu0 0.0
    %4879 = vmatprep.subr.mxu0 0.0
    %4880 = vmatpush1.msra.mxu0 0.0
    %4881 = vmatprep.subr.mxu0 0.0
    %4882 = vmatpush1.msra.mxu0 0.0
    %4883 = vmatprep.mubr.f32.mxu0 0.0
    %4884 = vmatmul.mubr.f32.gmra.mrb[0].mxu0 %v2060
    %v4885 = vpop.f32.mrb[0].mxu0
    %v4886 = vadd.f32 %v2582, %v4885
    %v4887 = vpop.f32.mrb[0].mxu0
    %4888 = vdwg.mxu0
    %4889 = vmatprep.subr.mxu0 0.0
    %4890 = vmatpush1.msra.mxu0 %v2554
    %4891 = vmatprep.subr.mxu0 0.0
    %4892 = vmatpush1.msra.mxu0 %v2555
    %4893 = vmatprep.subr.mxu0 0.0
    %4894 = vmatpush1.msra.mxu0 %v2556
    %4895 = vmatprep.subr.mxu0 0.0
    %4896 = vmatpush1.msra.mxu0 %v2557
    %4897 = vmatprep.subr.mxu0 0.0
    %4898 = vmatpush1.msra.mxu0 0.0
    %4899 = vmatprep.subr.mxu0 0.0
    %4900 = vmatpush1.msra.mxu0 0.0
    %4901 = vmatprep.subr.mxu0 0.0
    %4902 = vmatpush1.msra.mxu0 0.0
    %4903 = vmatprep.subr.mxu0 0.0
    %4904 = vmatpush1.msra.mxu0 0.0
    %4905 = vmatprep.subr.mxu0 0.0
    %4906 = vmatpush1.msra.mxu0 0.0
    %4907 = vmatprep.subr.mxu0 0.0
    %4908 = vmatpush1.msra.mxu0 0.0
    %4909 = vmatprep.subr.mxu0 0.0
    %4910 = vmatpush1.msra.mxu0 0.0
    %4911 = vmatprep.subr.mxu0 0.0
    %4912 = vmatpush1.msra.mxu0 0.0
    %4913 = vmatprep.subr.mxu0 0.0
    %4914 = vmatpush1.msra.mxu0 0.0
    %4915 = vmatprep.subr.mxu0 0.0
    %4916 = vmatpush1.msra.mxu0 0.0
    %4917 = vmatprep.subr.mxu0 0.0
    %4918 = vmatpush1.msra.mxu0 0.0
    %4919 = vmatprep.subr.mxu0 0.0
    %4920 = vmatpush1.msra.mxu0 0.0
    %4921 = vmatprep.subr.mxu0 0.0
    %4922 = vmatpush1.msra.mxu0 0.0
    %4923 = vmatprep.subr.mxu0 0.0
    %4924 = vmatpush1.msra.mxu0 0.0
    %4925 = vmatprep.subr.mxu0 0.0
    %4926 = vmatpush1.msra.mxu0 0.0
    %4927 = vmatprep.subr.mxu0 0.0
    %4928 = vmatpush1.msra.mxu0 0.0
    %4929 = vmatprep.subr.mxu0 0.0
    %4930 = vmatpush1.msra.mxu0 0.0
    %4931 = vmatprep.subr.mxu0 0.0
    %4932 = vmatpush1.msra.mxu0 0.0
    %4933 = vmatprep.subr.mxu0 0.0
    %4934 = vmatpush1.msra.mxu0 0.0
    %4935 = vmatprep.subr.mxu0 0.0
    %4936 = vmatpush1.msra.mxu0 0.0
    %4937 = vmatprep.subr.mxu0 0.0
    %4938 = vmatpush1.msra.mxu0 0.0
    %4939 = vmatprep.subr.mxu0 0.0
    %4940 = vmatpush1.msra.mxu0 0.0
    %4941 = vmatprep.subr.mxu0 0.0
    %4942 = vmatpush1.msra.mxu0 0.0
    %4943 = vmatprep.subr.mxu0 0.0
    %4944 = vmatpush1.msra.mxu0 0.0
    %4945 = vmatprep.subr.mxu0 0.0
    %4946 = vmatpush1.msra.mxu0 0.0
    %4947 = vmatprep.subr.mxu0 0.0
    %4948 = vmatpush1.msra.mxu0 0.0
    %4949 = vmatprep.subr.mxu0 0.0
    %4950 = vmatpush1.msra.mxu0 0.0
    %4951 = vmatprep.subr.mxu0 0.0
    %4952 = vmatpush1.msra.mxu0 0.0
    %4953 = vmatprep.mubr.f32.mxu0 0.0
    %4954 = vmatmul.mubr.f32.gmra.mrb[0].mxu0 %v2060
    %v4955 = vpop.f32.mrb[0].mxu0
    %v4956 = vadd.f32 %v2658, %v4955
    %v4957 = vpop.f32.mrb[0].mxu0
    %4958 = vdwg.mxu0
    %4959 = vmatprep.subr.mxu0 0.0
    %4960 = vmatpush1.msra.mxu0 %v2558
    %4961 = vmatprep.subr.mxu0 0.0
    %4962 = vmatpush1.msra.mxu0 %v2559
    %4963 = vmatprep.subr.mxu0 0.0
    %4964 = vmatpush1.msra.mxu0 %v2560
    %4965 = vmatprep.subr.mxu0 0.0
    %4966 = vmatpush1.msra.mxu0 %v2561
    %4967 = vmatprep.subr.mxu0 0.0
    %4968 = vmatpush1.msra.mxu0 0.0
    %4969 = vmatprep.subr.mxu0 0.0
    %4970 = vmatpush1.msra.mxu0 0.0
    %4971 = vmatprep.subr.mxu0 0.0
    %4972 = vmatpush1.msra.mxu0 0.0
    %4973 = vmatprep.subr.mxu0 0.0
    %4974 = vmatpush1.msra.mxu0 0.0
    %4975 = vmatprep.subr.mxu0 0.0
    %4976 = vmatpush1.msra.mxu0 0.0
    %4977 = vmatprep.subr.mxu0 0.0
    %4978 = vmatpush1.msra.mxu0 0.0
    %4979 = vmatprep.subr.mxu0 0.0
    %4980 = vmatpush1.msra.mxu0 0.0
    %4981 = vmatprep.subr.mxu0 0.0
    %4982 = vmatpush1.msra.mxu0 0.0
    %4983 = vmatprep.subr.mxu0 0.0
    %4984 = vmatpush1.msra.mxu0 0.0
    %4985 = vmatprep.subr.mxu0 0.0
    %4986 = vmatpush1.msra.mxu0 0.0
    %4987 = vmatprep.subr.mxu0 0.0
    %4988 = vmatpush1.msra.mxu0 0.0
    %4989 = vmatprep.subr.mxu0 0.0
    %4990 = vmatpush1.msra.mxu0 0.0
    %4991 = vmatprep.subr.mxu0 0.0
    %4992 = vmatpush1.msra.mxu0 0.0
    %4993 = vmatprep.subr.mxu0 0.0
    %4994 = vmatpush1.msra.mxu0 0.0
    %4995 = vmatprep.subr.mxu0 0.0
    %4996 = vmatpush1.msra.mxu0 0.0
    %4997 = vmatprep.subr.mxu0 0.0
    %4998 = vmatpush1.msra.mxu0 0.0
    %4999 = vmatprep.subr.mxu0 0.0
    %5000 = vmatpush1.msra.mxu0 0.0
    %5001 = vmatprep.subr.mxu0 0.0
    %5002 = vmatpush1.msra.mxu0 0.0
    %5003 = vmatprep.subr.mxu0 0.0
    %5004 = vmatpush1.msra.mxu0 0.0
    %5005 = vmatprep.subr.mxu0 0.0
    %5006 = vmatpush1.msra.mxu0 0.0
    %5007 = vmatprep.subr.mxu0 0.0
    %5008 = vmatpush1.msra.mxu0 0.0
    %5009 = vmatprep.subr.mxu0 0.0
    %5010 = vmatpush1.msra.mxu0 0.0
    %5011 = vmatprep.subr.mxu0 0.0
    %5012 = vmatpush1.msra.mxu0 0.0
    %5013 = vmatprep.subr.mxu0 0.0
    %5014 = vmatpush1.msra.mxu0 0.0
    %5015 = vmatprep.subr.mxu0 0.0
    %5016 = vmatpush1.msra.mxu0 0.0
    %5017 = vmatprep.subr.mxu0 0.0
    %5018 = vmatpush1.msra.mxu0 0.0
    %5019 = vmatprep.subr.mxu0 0.0
    %5020 = vmatpush1.msra.mxu0 0.0
    %5021 = vmatprep.subr.mxu0 0.0
    %5022 = vmatpush1.msra.mxu0 0.0
    %5023 = vmatprep.mubr.f32.mxu0 0.0
    %5024 = vmatmul.mubr.f32.gmra.mrb[0].mxu0 %v2060
    %v5025 = vpop.f32.mrb[0].mxu0
    %v5026 = vadd.f32 %v2734, %v5025
    %v5027 = vpop.f32.mrb[0].mxu0
    %5028 = vdwg.mxu0
    %v5030 = vsel %vm599, %v4818, 0
    %5032 = vmatprep.subr.mxu0 0.0
    %5033 = vmatpush1.msra.mxu0 %v2562
    %5034 = vmatprep.subr.mxu0 0.0
    %5035 = vmatpush1.msra.mxu0 %v2563
    %5036 = vmatprep.subr.mxu0 0.0
    %5037 = vmatpush1.msra.mxu0 %v2564
    %5038 = vmatprep.subr.mxu0 0.0
    %5039 = vmatpush1.msra.mxu0 %v2565
    %5040 = vmatprep.subr.mxu0 0.0
    %5041 = vmatpush1.msra.mxu0 0.0
    %5042 = vmatprep.subr.mxu0 0.0
    %5043 = vmatpush1.msra.mxu0 0.0
    %5044 = vmatprep.subr.mxu0 0.0
    %5045 = vmatpush1.msra.mxu0 0.0
    %5046 = vmatprep.subr.mxu0 0.0
    %5047 = vmatpush1.msra.mxu0 0.0
    %5048 = vmatprep.subr.mxu0 0.0
    %5049 = vmatpush1.msra.mxu0 0.0
    %5050 = vmatprep.subr.mxu0 0.0
    %5051 = vmatpush1.msra.mxu0 0.0
    %5052 = vmatprep.subr.mxu0 0.0
    %5053 = vmatpush1.msra.mxu0 0.0
    %5054 = vmatprep.subr.mxu0 0.0
    %5055 = vmatpush1.msra.mxu0 0.0
    %5056 = vmatprep.subr.mxu0 0.0
    %5057 = vmatpush1.msra.mxu0 0.0
    %5058 = vmatprep.subr.mxu0 0.0
    %5059 = vmatpush1.msra.mxu0 0.0
    %5060 = vmatprep.subr.mxu0 0.0
    %5061 = vmatpush1.msra.mxu0 0.0
    %5062 = vmatprep.subr.mxu0 0.0
    %5063 = vmatpush1.msra.mxu0 0.0
    %5064 = vmatprep.subr.mxu0 0.0
    %5065 = vmatpush1.msra.mxu0 0.0
    %5066 = vmatprep.subr.mxu0 0.0
    %5067 = vmatpush1.msra.mxu0 0.0
    %5068 = vmatprep.subr.mxu0 0.0
    %5069 = vmatpush1.msra.mxu0 0.0
    %5070 = vmatprep.subr.mxu0 0.0
    %5071 = vmatpush1.msra.mxu0 0.0
    %5072 = vmatprep.subr.mxu0 0.0
    %5073 = vmatpush1.msra.mxu0 0.0
    %5074 = vmatprep.subr.mxu0 0.0
    %5075 = vmatpush1.msra.mxu0 0.0
    %5076 = vmatprep.subr.mxu0 0.0
    %5077 = vmatpush1.msra.mxu0 0.0
    %5078 = vmatprep.subr.mxu0 0.0
    %5079 = vmatpush1.msra.mxu0 0.0
    %5080 = vmatprep.subr.mxu0 0.0
    %5081 = vmatpush1.msra.mxu0 0.0
    %5082 = vmatprep.subr.mxu0 0.0
    %5083 = vmatpush1.msra.mxu0 0.0
    %5084 = vmatprep.subr.mxu0 0.0
    %5085 = vmatpush1.msra.mxu0 0.0
    %5086 = vmatprep.subr.mxu0 0.0
    %5087 = vmatpush1.msra.mxu0 0.0
    %5088 = vmatprep.subr.mxu0 0.0
    %5089 = vmatpush1.msra.mxu0 0.0
    %5090 = vmatprep.subr.mxu0 0.0
    %5091 = vmatpush1.msra.mxu0 0.0
    %5092 = vmatprep.subr.mxu0 0.0
    %5093 = vmatpush1.msra.mxu0 0.0
    %5094 = vmatprep.subr.mxu0 0.0
    %5095 = vmatpush1.msra.mxu0 0.0
    %5096 = vmatprep.mubr.f32.mxu0 0.0
    %5097 = vmatmul.mubr.f32.gmra.mrb[0].mxu0 %v5030
    %v5098 = vpop.f32.mrb[0].mxu0
    %v5099 = vadd.f32 0.0, %v5098
    %v5100 = vpop.f32.mrb[0].mxu0
    %5101 = vdwg.mxu0
    %5102 = vmatprep.subr.mxu0 0.0
    %5103 = vmatpush1.msra.mxu0 %v2566
    %5104 = vmatprep.subr.mxu0 0.0
    %5105 = vmatpush1.msra.mxu0 %v2567
    %5106 = vmatprep.subr.mxu0 0.0
    %5107 = vmatpush1.msra.mxu0 %v2568
    %5108 = vmatprep.subr.mxu0 0.0
    %5109 = vmatpush1.msra.mxu0 %v2569
    %5110 = vmatprep.subr.mxu0 0.0
    %5111 = vmatpush1.msra.mxu0 0.0
    %5112 = vmatprep.subr.mxu0 0.0
    %5113 = vmatpush1.msra.mxu0 0.0
    %5114 = vmatprep.subr.mxu0 0.0
    %5115 = vmatpush1.msra.mxu0 0.0
    %5116 = vmatprep.subr.mxu0 0.0
    %5117 = vmatpush1.msra.mxu0 0.0
    %5118 = vmatprep.subr.mxu0 0.0
    %5119 = vmatpush1.msra.mxu0 0.0
    %5120 = vmatprep.subr.mxu0 0.0
    %5121 = vmatpush1.msra.mxu0 0.0
    %5122 = vmatprep.subr.mxu0 0.0
    %5123 = vmatpush1.msra.mxu0 0.0
    %5124 = vmatprep.subr.mxu0 0.0
    %5125 = vmatpush1.msra.mxu0 0.0
    %5126 = vmatprep.subr.mxu0 0.0
    %5127 = vmatpush1.msra.mxu0 0.0
    %5128 = vmatprep.subr.mxu0 0.0
    %5129 = vmatpush1.msra.mxu0 0.0
    %5130 = vmatprep.subr.mxu0 0.0
    %5131 = vmatpush1.msra.mxu0 0.0
    %5132 = vmatprep.subr.mxu0 0.0
    %5133 = vmatpush1.msra.mxu0 0.0
    %5134 = vmatprep.subr.mxu0 0.0
    %5135 = vmatpush1.msra.mxu0 0.0
    %5136 = vmatprep.subr.mxu0 0.0
    %5137 = vmatpush1.msra.mxu0 0.0
    %5138 = vmatprep.subr.mxu0 0.0
    %5139 = vmatpush1.msra.mxu0 0.0
    %5140 = vmatprep.subr.mxu0 0.0
    %5141 = vmatpush1.msra.mxu0 0.0
    %5142 = vmatprep.subr.mxu0 0.0
    %5143 = vmatpush1.msra.mxu0 0.0
    %5144 = vmatprep.subr.mxu0 0.0
    %5145 = vmatpush1.msra.mxu0 0.0
    %5146 = vmatprep.subr.mxu0 0.0
    %5147 = vmatpush1.msra.mxu0 0.0
    %5148 = vmatprep.subr.mxu0 0.0
    %5149 = vmatpush1.msra.mxu0 0.0
    %5150 = vmatprep.subr.mxu0 0.0
    %5151 = vmatpush1.msra.mxu0 0.0
    %5152 = vmatprep.subr.mxu0 0.0
    %5153 = vmatpush1.msra.mxu0 0.0
    %5154 = vmatprep.subr.mxu0 0.0
    %5155 = vmatpush1.msra.mxu0 0.0
    %5156 = vmatprep.subr.mxu0 0.0
    %5157 = vmatpush1.msra.mxu0 0.0
    %5158 = vmatprep.subr.mxu0 0.0
    %5159 = vmatpush1.msra.mxu0 0.0
    %5160 = vmatprep.subr.mxu0 0.0
    %5161 = vmatpush1.msra.mxu0 0.0
    %5162 = vmatprep.subr.mxu0 0.0
    %5163 = vmatpush1.msra.mxu0 0.0
    %5164 = vmatprep.subr.mxu0 0.0
    %5165 = vmatpush1.msra.mxu0 0.0
    %5166 = vmatprep.mubr.f32.mxu0 0.0
    %5167 = vmatmul.mubr.f32.gmra.mrb[0].mxu0 %v5030
    %v5168 = vpop.f32.mrb[0].mxu0
    %v5169 = vadd.f32 0.0, %v5168
    %v5170 = vpop.f32.mrb[0].mxu0
    %5171 = vdwg.mxu0
    %v5172 = vadd.f32 %v4886, %v5099
    %v5173 = vxor.u32 %v5172, 2147483648
    %v5174 = vmul.f32 %v5173, 1.442695
    %v5175 = vpow.pop %v5174
    %v5176 = vadd.f32 %v5175, 1.0
    %v5177 = vrcp.pop %v5176
    %v5178 = vmul.f32 1.0, %v5177
    %v5179 = vadd.f32 %v4956, %v5169
    %v5180 = vxor.u32 %v5179, 2147483648
    %v5181 = vmul.f32 %v5180, 1.442695
    %v5182 = vpow.pop %v5181
    %v5183 = vadd.f32 %v5182, 1.0
    %v5184 = vrcp.pop %v5183
    %v5185 = vmul.f32 1.0, %v5184
    %5186 = vmatprep.subr.mxu0 0.0
    %5187 = vmatpush1.msra.mxu0 %v2570
    %5188 = vmatprep.subr.mxu0 0.0
    %5189 = vmatpush1.msra.mxu0 %v2571
    %5190 = vmatprep.subr.mxu0 0.0
    %5191 = vmatpush1.msra.mxu0 %v2572
    %5192 = vmatprep.subr.mxu0 0.0
    %5193 = vmatpush1.msra.mxu0 %v2573
    %5194 = vmatprep.subr.mxu0 0.0
    %5195 = vmatpush1.msra.mxu0 0.0
    %5196 = vmatprep.subr.mxu0 0.0
    %5197 = vmatpush1.msra.mxu0 0.0
    %5198 = vmatprep.subr.mxu0 0.0
    %5199 = vmatpush1.msra.mxu0 0.0
    %5200 = vmatprep.subr.mxu0 0.0
    %5201 = vmatpush1.msra.mxu0 0.0
    %5202 = vmatprep.subr.mxu0 0.0
    %5203 = vmatpush1.msra.mxu0 0.0
    %5204 = vmatprep.subr.mxu0 0.0
    %5205 = vmatpush1.msra.mxu0 0.0
    %5206 = vmatprep.subr.mxu0 0.0
    %5207 = vmatpush1.msra.mxu0 0.0
    %5208 = vmatprep.subr.mxu0 0.0
    %5209 = vmatpush1.msra.mxu0 0.0
    %5210 = vmatprep.subr.mxu0 0.0
    %5211 = vmatpush1.msra.mxu0 0.0
    %5212 = vmatprep.subr.mxu0 0.0
    %5213 = vmatpush1.msra.mxu0 0.0
    %5214 = vmatprep.subr.mxu0 0.0
    %5215 = vmatpush1.msra.mxu0 0.0
    %5216 = vmatprep.subr.mxu0 0.0
    %5217 = vmatpush1.msra.mxu0 0.0
    %5218 = vmatprep.subr.mxu0 0.0
    %5219 = vmatpush1.msra.mxu0 0.0
    %5220 = vmatprep.subr.mxu0 0.0
    %5221 = vmatpush1.msra.mxu0 0.0
    %5222 = vmatprep.subr.mxu0 0.0
    %5223 = vmatpush1.msra.mxu0 0.0
    %5224 = vmatprep.subr.mxu0 0.0
    %5225 = vmatpush1.msra.mxu0 0.0
    %5226 = vmatprep.subr.mxu0 0.0
    %5227 = vmatpush1.msra.mxu0 0.0
    %5228 = vmatprep.subr.mxu0 0.0
    %5229 = vmatpush1.msra.mxu0 0.0
    %5230 = vmatprep.subr.mxu0 0.0
    %5231 = vmatpush1.msra.mxu0 0.0
    %5232 = vmatprep.subr.mxu0 0.0
    %5233 = vmatpush1.msra.mxu0 0.0
    %5234 = vmatprep.subr.mxu0 0.0
    %5235 = vmatpush1.msra.mxu0 0.0
    %5236 = vmatprep.subr.mxu0 0.0
    %5237 = vmatpush1.msra.mxu0 0.0
    %5238 = vmatprep.subr.mxu0 0.0
    %5239 = vmatpush1.msra.mxu0 0.0
    %5240 = vmatprep.subr.mxu0 0.0
    %5241 = vmatpush1.msra.mxu0 0.0
    %5242 = vmatprep.subr.mxu0 0.0
    %5243 = vmatpush1.msra.mxu0 0.0
    %5244 = vmatprep.subr.mxu0 0.0
    %5245 = vmatpush1.msra.mxu0 0.0
    %5246 = vmatprep.subr.mxu0 0.0
    %5247 = vmatpush1.msra.mxu0 0.0
    %5248 = vmatprep.subr.mxu0 0.0
    %5249 = vmatpush1.msra.mxu0 0.0
    %5250 = vmatprep.mubr.f32.mxu0 0.0
    %5251 = vmatmul.mubr.f32.gmra.mrb[0].mxu0 %v5030
    %v5252 = vpop.f32.mrb[0].mxu0
    %v5253 = vadd.f32 %v2964, %v5252
    %v5254 = vpop.f32.mrb[0].mxu0
    %5255 = vdwg.mxu0
    %v5256 = vmul.f32 %v5178, %v5253
    %v5257 = vadd.f32 %v5026, %v5256
    %v5258 = vtanh.pop %v5257
    %v5259 = vsub.f32 1.0, %v5185
    %v5260 = vmul.f32 %v5259, %v5258
    %v5261 = vmul.f32 %v5185, %v4818
    %v5262 = vadd.f32 %v5260, %v5261
    %5263 = vmatprep.subr.mxu0 0.0
    %5264 = vmatpush1.msra.mxu0 %v2550
    %5265 = vmatprep.subr.mxu0 0.0
    %5266 = vmatpush1.msra.mxu0 %v2551
    %5267 = vmatprep.subr.mxu0 0.0
    %5268 = vmatpush1.msra.mxu0 %v2552
    %5269 = vmatprep.subr.mxu0 0.0
    %5270 = vmatpush1.msra.mxu0 %v2553
    %5271 = vmatprep.subr.mxu0 0.0
    %5272 = vmatpush1.msra.mxu0 0.0
    %5273 = vmatprep.subr.mxu0 0.0
    %5274 = vmatpush1.msra.mxu0 0.0
    %5275 = vmatprep.subr.mxu0 0.0
    %5276 = vmatpush1.msra.mxu0 0.0
    %5277 = vmatprep.subr.mxu0 0.0
    %5278 = vmatpush1.msra.mxu0 0.0
    %5279 = vmatprep.subr.mxu0 0.0
    %5280 = vmatpush1.msra.mxu0 0.0
    %5281 = vmatprep.subr.mxu0 0.0
    %5282 = vmatpush1.msra.mxu0 0.0
    %5283 = vmatprep.subr.mxu0 0.0
    %5284 = vmatpush1.msra.mxu0 0.0
    %5285 = vmatprep.subr.mxu0 0.0
    %5286 = vmatpush1.msra.mxu0 0.0
    %5287 = vmatprep.subr.mxu0 0.0
    %5288 = vmatpush1.msra.mxu0 0.0
    %5289 = vmatprep.subr.mxu0 0.0
    %5290 = vmatpush1.msra.mxu0 0.0
    %5291 = vmatprep.subr.mxu0 0.0
    %5292 = vmatpush1.msra.mxu0 0.0
    %5293 = vmatprep.subr.mxu0 0.0
    %5294 = vmatpush1.msra.mxu0 0.0
    %5295 = vmatprep.subr.mxu0 0.0
    %5296 = vmatpush1.msra.mxu0 0.0
    %5297 = vmatprep.subr.mxu0 0.0
    %5298 = vmatpush1.msra.mxu0 0.0
    %5299 = vmatprep.subr.mxu0 0.0
    %5300 = vmatpush1.msra.mxu0 0.0
    %5301 = vmatprep.subr.mxu0 0.0
    %5302 = vmatpush1.msra.mxu0 0.0
    %5303 = vmatprep.subr.mxu0 0.0
    %5304 = vmatpush1.msra.mxu0 0.0
    %5305 = vmatprep.subr.mxu0 0.0
    %5306 = vmatpush1.msra.mxu0 0.0
    %5307 = vmatprep.subr.mxu0 0.0
    %5308 = vmatpush1.msra.mxu0 0.0
    %5309 = vmatprep.subr.mxu0 0.0
    %5310 = vmatpush1.msra.mxu0 0.0
    %5311 = vmatprep.subr.mxu0 0.0
    %5312 = vmatpush1.msra.mxu0 0.0
    %5313 = vmatprep.subr.mxu0 0.0
    %5314 = vmatpush1.msra.mxu0 0.0
    %5315 = vmatprep.subr.mxu0 0.0
    %5316 = vmatpush1.msra.mxu0 0.0
    %5317 = vmatprep.subr.mxu0 0.0
    %5318 = vmatpush1.msra.mxu0 0.0
    %5319 = vmatprep.subr.mxu0 0.0
    %5320 = vmatpush1.msra.mxu0 0.0
    %5321 = vmatprep.subr.mxu0 0.0
    %5322 = vmatpush1.msra.mxu0 0.0
    %5323 = vmatprep.subr.mxu0 0.0
    %5324 = vmatpush1.msra.mxu0 0.0
    %5325 = vmatprep.subr.mxu0 0.0
    %5326 = vmatpush1.msra.mxu0 0.0
    %5327 = vmatprep.mubr.f32.mxu0 0.0
    %5328 = vmatmul.mubr.f32.gmra.mrb[0].mxu0 %v2306
    %v5329 = vpop.f32.mrb[0].mxu0
    %v5330 = vadd.f32 %v2582, %v5329
    %v5331 = vpop.f32.mrb[0].mxu0
    %5332 = vdwg.mxu0
    %5333 = vmatprep.subr.mxu0 0.0
    %5334 = vmatpush1.msra.mxu0 %v2554
    %5335 = vmatprep.subr.mxu0 0.0
    %5336 = vmatpush1.msra.mxu0 %v2555
    %5337 = vmatprep.subr.mxu0 0.0
    %5338 = vmatpush1.msra.mxu0 %v2556
    %5339 = vmatprep.subr.mxu0 0.0
    %5340 = vmatpush1.msra.mxu0 %v2557
    %5341 = vmatprep.subr.mxu0 0.0
    %5342 = vmatpush1.msra.mxu0 0.0
    %5343 = vmatprep.subr.mxu0 0.0
    %5344 = vmatpush1.msra.mxu0 0.0
    %5345 = vmatprep.subr.mxu0 0.0
    %5346 = vmatpush1.msra.mxu0 0.0
    %5347 = vmatprep.subr.mxu0 0.0
    %5348 = vmatpush1.msra.mxu0 0.0
    %5349 = vmatprep.subr.mxu0 0.0
    %5350 = vmatpush1.msra.mxu0 0.0
    %5351 = vmatprep.subr.mxu0 0.0
    %5352 = vmatpush1.msra.mxu0 0.0
    %5353 = vmatprep.subr.mxu0 0.0
    %5354 = vmatpush1.msra.mxu0 0.0
    %5355 = vmatprep.subr.mxu0 0.0
    %5356 = vmatpush1.msra.mxu0 0.0
    %5357 = vmatprep.subr.mxu0 0.0
    %5358 = vmatpush1.msra.mxu0 0.0
    %5359 = vmatprep.subr.mxu0 0.0
    %5360 = vmatpush1.msra.mxu0 0.0
    %5361 = vmatprep.subr.mxu0 0.0
    %5362 = vmatpush1.msra.mxu0 0.0
    %5363 = vmatprep.subr.mxu0 0.0
    %5364 = vmatpush1.msra.mxu0 0.0
    %5365 = vmatprep.subr.mxu0 0.0
    %5366 = vmatpush1.msra.mxu0 0.0
    %5367 = vmatprep.subr.mxu0 0.0
    %5368 = vmatpush1.msra.mxu0 0.0
    %5369 = vmatprep.subr.mxu0 0.0
    %5370 = vmatpush1.msra.mxu0 0.0
    %5371 = vmatprep.subr.mxu0 0.0
    %5372 = vmatpush1.msra.mxu0 0.0
    %5373 = vmatprep.subr.mxu0 0.0
    %5374 = vmatpush1.msra.mxu0 0.0
    %5375 = vmatprep.subr.mxu0 0.0
    %5376 = vmatpush1.msra.mxu0 0.0
    %5377 = vmatprep.subr.mxu0 0.0
    %5378 = vmatpush1.msra.mxu0 0.0
    %5379 = vmatprep.subr.mxu0 0.0
    %5380 = vmatpush1.msra.mxu0 0.0
    %5381 = vmatprep.subr.mxu0 0.0
    %5382 = vmatpush1.msra.mxu0 0.0
    %5383 = vmatprep.subr.mxu0 0.0
    %5384 = vmatpush1.msra.mxu0 0.0
    %5385 = vmatprep.subr.mxu0 0.0
    %5386 = vmatpush1.msra.mxu0 0.0
    %5387 = vmatprep.subr.mxu0 0.0
    %5388 = vmatpush1.msra.mxu0 0.0
    %5389 = vmatprep.subr.mxu0 0.0
    %5390 = vmatpush1.msra.mxu0 0.0
    %5391 = vmatprep.subr.mxu0 0.0
    %5392 = vmatpush1.msra.mxu0 0.0
    %5393 = vmatprep.subr.mxu0 0.0
    %5394 = vmatpush1.msra.mxu0 0.0
    %5395 = vmatprep.subr.mxu0 0.0
    %5396 = vmatpush1.msra.mxu0 0.0
    %5397 = vmatprep.mubr.f32.mxu0 0.0
    %5398 = vmatmul.mubr.f32.gmra.mrb[0].mxu0 %v2306
    %v5399 = vpop.f32.mrb[0].mxu0
    %v5400 = vadd.f32 %v2658, %v5399
    %v5401 = vpop.f32.mrb[0].mxu0
    %5402 = vdwg.mxu0
    %5403 = vmatprep.subr.mxu0 0.0
    %5404 = vmatpush1.msra.mxu0 %v2558
    %5405 = vmatprep.subr.mxu0 0.0
    %5406 = vmatpush1.msra.mxu0 %v2559
    %5407 = vmatprep.subr.mxu0 0.0
    %5408 = vmatpush1.msra.mxu0 %v2560
    %5409 = vmatprep.subr.mxu0 0.0
    %5410 = vmatpush1.msra.mxu0 %v2561
    %5411 = vmatprep.subr.mxu0 0.0
    %5412 = vmatpush1.msra.mxu0 0.0
    %5413 = vmatprep.subr.mxu0 0.0
    %5414 = vmatpush1.msra.mxu0 0.0
    %5415 = vmatprep.subr.mxu0 0.0
    %5416 = vmatpush1.msra.mxu0 0.0
    %5417 = vmatprep.subr.mxu0 0.0
    %5418 = vmatpush1.msra.mxu0 0.0
    %5419 = vmatprep.subr.mxu0 0.0
    %5420 = vmatpush1.msra.mxu0 0.0
    %5421 = vmatprep.subr.mxu0 0.0
    %5422 = vmatpush1.msra.mxu0 0.0
    %5423 = vmatprep.subr.mxu0 0.0
    %5424 = vmatpush1.msra.mxu0 0.0
    %5425 = vmatprep.subr.mxu0 0.0
    %5426 = vmatpush1.msra.mxu0 0.0
    %5427 = vmatprep.subr.mxu0 0.0
    %5428 = vmatpush1.msra.mxu0 0.0
    %5429 = vmatprep.subr.mxu0 0.0
    %5430 = vmatpush1.msra.mxu0 0.0
    %5431 = vmatprep.subr.mxu0 0.0
    %5432 = vmatpush1.msra.mxu0 0.0
    %5433 = vmatprep.subr.mxu0 0.0
    %5434 = vmatpush1.msra.mxu0 0.0
    %5435 = vmatprep.subr.mxu0 0.0
    %5436 = vmatpush1.msra.mxu0 0.0
    %5437 = vmatprep.subr.mxu0 0.0
    %5438 = vmatpush1.msra.mxu0 0.0
    %5439 = vmatprep.subr.mxu0 0.0
    %5440 = vmatpush1.msra.mxu0 0.0
    %5441 = vmatprep.subr.mxu0 0.0
    %5442 = vmatpush1.msra.mxu0 0.0
    %5443 = vmatprep.subr.mxu0 0.0
    %5444 = vmatpush1.msra.mxu0 0.0
    %5445 = vmatprep.subr.mxu0 0.0
    %5446 = vmatpush1.msra.mxu0 0.0
    %5447 = vmatprep.subr.mxu0 0.0
    %5448 = vmatpush1.msra.mxu0 0.0
    %5449 = vmatprep.subr.mxu0 0.0
    %5450 = vmatpush1.msra.mxu0 0.0
    %5451 = vmatprep.subr.mxu0 0.0
    %5452 = vmatpush1.msra.mxu0 0.0
    %5453 = vmatprep.subr.mxu0 0.0
    %5454 = vmatpush1.msra.mxu0 0.0
    %5455 = vmatprep.subr.mxu0 0.0
    %5456 = vmatpush1.msra.mxu0 0.0
    %5457 = vmatprep.subr.mxu0 0.0
    %5458 = vmatpush1.msra.mxu0 0.0
    %5459 = vmatprep.subr.mxu0 0.0
    %5460 = vmatpush1.msra.mxu0 0.0
    %5461 = vmatprep.subr.mxu0 0.0
    %5462 = vmatpush1.msra.mxu0 0.0
    %5463 = vmatprep.subr.mxu0 0.0
    %5464 = vmatpush1.msra.mxu0 0.0
    %5465 = vmatprep.subr.mxu0 0.0
    %5466 = vmatpush1.msra.mxu0 0.0
    %5467 = vmatprep.mubr.f32.mxu0 0.0
    %5468 = vmatmul.mubr.f32.gmra.mrb[0].mxu0 %v2306
    %v5469 = vpop.f32.mrb[0].mxu0
    %v5470 = vadd.f32 %v2734, %v5469
    %v5471 = vpop.f32.mrb[0].mxu0
    %5472 = vdwg.mxu0
    %v5474 = vsel %vm599, %v5262, 0
    %5476 = vmatprep.subr.mxu0 0.0
    %5477 = vmatpush1.msra.mxu0 %v2562
    %5478 = vmatprep.subr.mxu0 0.0
    %5479 = vmatpush1.msra.mxu0 %v2563
    %5480 = vmatprep.subr.mxu0 0.0
    %5481 = vmatpush1.msra.mxu0 %v2564
    %5482 = vmatprep.subr.mxu0 0.0
    %5483 = vmatpush1.msra.mxu0 %v2565
    %5484 = vmatprep.subr.mxu0 0.0
    %5485 = vmatpush1.msra.mxu0 0.0
    %5486 = vmatprep.subr.mxu0 0.0
    %5487 = vmatpush1.msra.mxu0 0.0
    %5488 = vmatprep.subr.mxu0 0.0
    %5489 = vmatpush1.msra.mxu0 0.0
    %5490 = vmatprep.subr.mxu0 0.0
    %5491 = vmatpush1.msra.mxu0 0.0
    %5492 = vmatprep.subr.mxu0 0.0
    %5493 = vmatpush1.msra.mxu0 0.0
    %5494 = vmatprep.subr.mxu0 0.0
    %5495 = vmatpush1.msra.mxu0 0.0
    %5496 = vmatprep.subr.mxu0 0.0
    %5497 = vmatpush1.msra.mxu0 0.0
    %5498 = vmatprep.subr.mxu0 0.0
    %5499 = vmatpush1.msra.mxu0 0.0
    %5500 = vmatprep.subr.mxu0 0.0
    %5501 = vmatpush1.msra.mxu0 0.0
    %5502 = vmatprep.subr.mxu0 0.0
    %5503 = vmatpush1.msra.mxu0 0.0
    %5504 = vmatprep.subr.mxu0 0.0
    %5505 = vmatpush1.msra.mxu0 0.0
    %5506 = vmatprep.subr.mxu0 0.0
    %5507 = vmatpush1.msra.mxu0 0.0
    %5508 = vmatprep.subr.mxu0 0.0
    %5509 = vmatpush1.msra.mxu0 0.0
    %5510 = vmatprep.subr.mxu0 0.0
    %5511 = vmatpush1.msra.mxu0 0.0
    %5512 = vmatprep.subr.mxu0 0.0
    %5513 = vmatpush1.msra.mxu0 0.0
    %5514 = vmatprep.subr.mxu0 0.0
    %5515 = vmatpush1.msra.mxu0 0.0
    %5516 = vmatprep.subr.mxu0 0.0
    %5517 = vmatpush1.msra.mxu0 0.0
    %5518 = vmatprep.subr.mxu0 0.0
    %5519 = vmatpush1.msra.mxu0 0.0
    %5520 = vmatprep.subr.mxu0 0.0
    %5521 = vmatpush1.msra.mxu0 0.0
    %5522 = vmatprep.subr.mxu0 0.0
    %5523 = vmatpush1.msra.mxu0 0.0
    %5524 = vmatprep.subr.mxu0 0.0
    %5525 = vmatpush1.msra.mxu0 0.0
    %5526 = vmatprep.subr.mxu0 0.0
    %5527 = vmatpush1.msra.mxu0 0.0
    %5528 = vmatprep.subr.mxu0 0.0
    %5529 = vmatpush1.msra.mxu0 0.0
    %5530 = vmatprep.subr.mxu0 0.0
    %5531 = vmatpush1.msra.mxu0 0.0
    %5532 = vmatprep.subr.mxu0 0.0
    %5533 = vmatpush1.msra.mxu0 0.0
    %5534 = vmatprep.subr.mxu0 0.0
    %5535 = vmatpush1.msra.mxu0 0.0
    %5536 = vmatprep.subr.mxu0 0.0
    %5537 = vmatpush1.msra.mxu0 0.0
    %5538 = vmatprep.subr.mxu0 0.0
    %5539 = vmatpush1.msra.mxu0 0.0
    %5540 = vmatprep.mubr.f32.mxu0 0.0
    %5541 = vmatmul.mubr.f32.gmra.mrb[0].mxu0 %v5474
    %v5542 = vpop.f32.mrb[0].mxu0
    %v5543 = vadd.f32 0.0, %v5542
    %v5544 = vpop.f32.mrb[0].mxu0
    %5545 = vdwg.mxu0
    %5546 = vmatprep.subr.mxu0 0.0
    %5547 = vmatpush1.msra.mxu0 %v2566
    %5548 = vmatprep.subr.mxu0 0.0
    %5549 = vmatpush1.msra.mxu0 %v2567
    %5550 = vmatprep.subr.mxu0 0.0
    %5551 = vmatpush1.msra.mxu0 %v2568
    %5552 = vmatprep.subr.mxu0 0.0
    %5553 = vmatpush1.msra.mxu0 %v2569
    %5554 = vmatprep.subr.mxu0 0.0
    %5555 = vmatpush1.msra.mxu0 0.0
    %5556 = vmatprep.subr.mxu0 0.0
    %5557 = vmatpush1.msra.mxu0 0.0
    %5558 = vmatprep.subr.mxu0 0.0
    %5559 = vmatpush1.msra.mxu0 0.0
    %5560 = vmatprep.subr.mxu0 0.0
    %5561 = vmatpush1.msra.mxu0 0.0
    %5562 = vmatprep.subr.mxu0 0.0
    %5563 = vmatpush1.msra.mxu0 0.0
    %5564 = vmatprep.subr.mxu0 0.0
    %5565 = vmatpush1.msra.mxu0 0.0
    %5566 = vmatprep.subr.mxu0 0.0
    %5567 = vmatpush1.msra.mxu0 0.0
    %5568 = vmatprep.subr.mxu0 0.0
    %5569 = vmatpush1.msra.mxu0 0.0
    %5570 = vmatprep.subr.mxu0 0.0
    %5571 = vmatpush1.msra.mxu0 0.0
    %5572 = vmatprep.subr.mxu0 0.0
    %5573 = vmatpush1.msra.mxu0 0.0
    %5574 = vmatprep.subr.mxu0 0.0
    %5575 = vmatpush1.msra.mxu0 0.0
    %5576 = vmatprep.subr.mxu0 0.0
    %5577 = vmatpush1.msra.mxu0 0.0
    %5578 = vmatprep.subr.mxu0 0.0
    %5579 = vmatpush1.msra.mxu0 0.0
    %5580 = vmatprep.subr.mxu0 0.0
    %5581 = vmatpush1.msra.mxu0 0.0
    %5582 = vmatprep.subr.mxu0 0.0
    %5583 = vmatpush1.msra.mxu0 0.0
    %5584 = vmatprep.subr.mxu0 0.0
    %5585 = vmatpush1.msra.mxu0 0.0
    %5586 = vmatprep.subr.mxu0 0.0
    %5587 = vmatpush1.msra.mxu0 0.0
    %5588 = vmatprep.subr.mxu0 0.0
    %5589 = vmatpush1.msra.mxu0 0.0
    %5590 = vmatprep.subr.mxu0 0.0
    %5591 = vmatpush1.msra.mxu0 0.0
    %5592 = vmatprep.subr.mxu0 0.0
    %5593 = vmatpush1.msra.mxu0 0.0
    %5594 = vmatprep.subr.mxu0 0.0
    %5595 = vmatpush1.msra.mxu0 0.0
    %5596 = vmatprep.subr.mxu0 0.0
    %5597 = vmatpush1.msra.mxu0 0.0
    %5598 = vmatprep.subr.mxu0 0.0
    %5599 = vmatpush1.msra.mxu0 0.0
    %5600 = vmatprep.subr.mxu0 0.0
    %5601 = vmatpush1.msra.mxu0 0.0
    %5602 = vmatprep.subr.mxu0 0.0
    %5603 = vmatpush1.msra.mxu0 0.0
    %5604 = vmatprep.subr.mxu0 0.0
    %5605 = vmatpush1.msra.mxu0 0.0
    %5606 = vmatprep.subr.mxu0 0.0
    %5607 = vmatpush1.msra.mxu0 0.0
    %5608 = vmatprep.subr.mxu0 0.0
    %5609 = vmatpush1.msra.mxu0 0.0
    %5610 = vmatprep.mubr.f32.mxu0 0.0
    %5611 = vmatmul.mubr.f32.gmra.mrb[0].mxu0 %v5474
    %v5612 = vpop.f32.mrb[0].mxu0
    %v5613 = vadd.f32 0.0, %v5612
    %v5614 = vpop.f32.mrb[0].mxu0
    %5615 = vdwg.mxu0
    %v5616 = vadd.f32 %v5330, %v5543
    %v5617 = vxor.u32 %v5616, 2147483648
    %v5618 = vmul.f32 %v5617, 1.442695
    %v5619 = vpow.pop %v5618
    %v5620 = vadd.f32 %v5619, 1.0
    %v5621 = vrcp.pop %v5620
    %v5622 = vmul.f32 1.0, %v5621
    %v5623 = vadd.f32 %v5400, %v5613
    %v5624 = vxor.u32 %v5623, 2147483648
    %v5625 = vmul.f32 %v5624, 1.442695
    %v5626 = vpow.pop %v5625
    %v5627 = vadd.f32 %v5626, 1.0
    %v5628 = vrcp.pop %v5627
    %v5629 = vmul.f32 1.0, %v5628
    %5630 = vmatprep.subr.mxu0 0.0
    %5631 = vmatpush1.msra.mxu0 %v2570
    %5632 = vmatprep.subr.mxu0 0.0
    %5633 = vmatpush1.msra.mxu0 %v2571
    %5634 = vmatprep.subr.mxu0 0.0
    %5635 = vmatpush1.msra.mxu0 %v2572
    %5636 = vmatprep.subr.mxu0 0.0
    %5637 = vmatpush1.msra.mxu0 %v2573
    %5638 = vmatprep.subr.mxu0 0.0
    %5639 = vmatpush1.msra.mxu0 0.0
    %5640 = vmatprep.subr.mxu0 0.0
    %5641 = vmatpush1.msra.mxu0 0.0
    %5642 = vmatprep.subr.mxu0 0.0
    %5643 = vmatpush1.msra.mxu0 0.0
    %5644 = vmatprep.subr.mxu0 0.0
    %5645 = vmatpush1.msra.mxu0 0.0
    %5646 = vmatprep.subr.mxu0 0.0
    %5647 = vmatpush1.msra.mxu0 0.0
    %5648 = vmatprep.subr.mxu0 0.0
    %5649 = vmatpush1.msra.mxu0 0.0
    %5650 = vmatprep.subr.mxu0 0.0
    %5651 = vmatpush1.msra.mxu0 0.0
    %5652 = vmatprep.subr.mxu0 0.0
    %5653 = vmatpush1.msra.mxu0 0.0
    %5654 = vmatprep.subr.mxu0 0.0
    %5655 = vmatpush1.msra.mxu0 0.0
    %5656 = vmatprep.subr.mxu0 0.0
    %5657 = vmatpush1.msra.mxu0 0.0
    %5658 = vmatprep.subr.mxu0 0.0
    %5659 = vmatpush1.msra.mxu0 0.0
    %5660 = vmatprep.subr.mxu0 0.0
    %5661 = vmatpush1.msra.mxu0 0.0
    %5662 = vmatprep.subr.mxu0 0.0
    %5663 = vmatpush1.msra.mxu0 0.0
    %5664 = vmatprep.subr.mxu0 0.0
    %5665 = vmatpush1.msra.mxu0 0.0
    %5666 = vmatprep.subr.mxu0 0.0
    %5667 = vmatpush1.msra.mxu0 0.0
    %5668 = vmatprep.subr.mxu0 0.0
    %5669 = vmatpush1.msra.mxu0 0.0
    %5670 = vmatprep.subr.mxu0 0.0
    %5671 = vmatpush1.msra.mxu0 0.0
    %5672 = vmatprep.subr.mxu0 0.0
    %5673 = vmatpush1.msra.mxu0 0.0
    %5674 = vmatprep.subr.mxu0 0.0
    %5675 = vmatpush1.msra.mxu0 0.0
    %5676 = vmatprep.subr.mxu0 0.0
    %5677 = vmatpush1.msra.mxu0 0.0
    %5678 = vmatprep.subr.mxu0 0.0
    %5679 = vmatpush1.msra.mxu0 0.0
    %5680 = vmatprep.subr.mxu0 0.0
    %5681 = vmatpush1.msra.mxu0 0.0
    %5682 = vmatprep.subr.mxu0 0.0
    %5683 = vmatpush1.msra.mxu0 0.0
    %5684 = vmatprep.subr.mxu0 0.0
    %5685 = vmatpush1.msra.mxu0 0.0
    %5686 = vmatprep.subr.mxu0 0.0
    %5687 = vmatpush1.msra.mxu0 0.0
    %5688 = vmatprep.subr.mxu0 0.0
    %5689 = vmatpush1.msra.mxu0 0.0
    %5690 = vmatprep.subr.mxu0 0.0
    %5691 = vmatpush1.msra.mxu0 0.0
    %5692 = vmatprep.subr.mxu0 0.0
    %5693 = vmatpush1.msra.mxu0 0.0
    %5694 = vmatprep.mubr.f32.mxu0 0.0
    %5695 = vmatmul.mubr.f32.gmra.mrb[0].mxu0 %v5474
    %v5696 = vpop.f32.mrb[0].mxu0
    %v5697 = vadd.f32 %v2964, %v5696
    %v5698 = vpop.f32.mrb[0].mxu0
    %5699 = vdwg.mxu0
    %v5700 = vmul.f32 %v5622, %v5697
    %v5701 = vadd.f32 %v5470, %v5700
    %v5702 = vtanh.pop %v5701
    %v5703 = vsub.f32 1.0, %v5629
    %v5704 = vmul.f32 %v5703, %v5702
    %v5705 = vmul.f32 %v5629, %v5262
    %v5706 = vadd.f32 %v5704, %v5705
    %v5708 = vrot.slane %v2549, 6
    %v5709 = vsel %vm599, %v5708, 0
    %5711 = vmatprep.subr.mxu0 0.0
    %5712 = vmatpush1.msra.mxu0 %v2550
    %5713 = vmatprep.subr.mxu0 0.0
    %5714 = vmatpush1.msra.mxu0 %v2551
    %5715 = vmatprep.subr.mxu0 0.0
    %5716 = vmatpush1.msra.mxu0 %v2552
    %5717 = vmatprep.subr.mxu0 0.0
    %5718 = vmatpush1.msra.mxu0 %v2553
    %5719 = vmatprep.subr.mxu0 0.0
    %5720 = vmatpush1.msra.mxu0 0.0
    %5721 = vmatprep.subr.mxu0 0.0
    %5722 = vmatpush1.msra.mxu0 0.0
    %5723 = vmatprep.subr.mxu0 0.0
    %5724 = vmatpush1.msra.mxu0 0.0
    %5725 = vmatprep.subr.mxu0 0.0
    %5726 = vmatpush1.msra.mxu0 0.0
    %5727 = vmatprep.subr.mxu0 0.0
    %5728 = vmatpush1.msra.mxu0 0.0
    %5729 = vmatprep.subr.mxu0 0.0
    %5730 = vmatpush1.msra.mxu0 0.0
    %5731 = vmatprep.subr.mxu0 0.0
    %5732 = vmatpush1.msra.mxu0 0.0
    %5733 = vmatprep.subr.mxu0 0.0
    %5734 = vmatpush1.msra.mxu0 0.0
    %5735 = vmatprep.subr.mxu0 0.0
    %5736 = vmatpush1.msra.mxu0 0.0
    %5737 = vmatprep.subr.mxu0 0.0
    %5738 = vmatpush1.msra.mxu0 0.0
    %5739 = vmatprep.subr.mxu0 0.0
    %5740 = vmatpush1.msra.mxu0 0.0
    %5741 = vmatprep.subr.mxu0 0.0
    %5742 = vmatpush1.msra.mxu0 0.0
    %5743 = vmatprep.subr.mxu0 0.0
    %5744 = vmatpush1.msra.mxu0 0.0
    %5745 = vmatprep.subr.mxu0 0.0
    %5746 = vmatpush1.msra.mxu0 0.0
    %5747 = vmatprep.subr.mxu0 0.0
    %5748 = vmatpush1.msra.mxu0 0.0
    %5749 = vmatprep.subr.mxu0 0.0
    %5750 = vmatpush1.msra.mxu0 0.0
    %5751 = vmatprep.subr.mxu0 0.0
    %5752 = vmatpush1.msra.mxu0 0.0
    %5753 = vmatprep.subr.mxu0 0.0
    %5754 = vmatpush1.msra.mxu0 0.0
    %5755 = vmatprep.subr.mxu0 0.0
    %5756 = vmatpush1.msra.mxu0 0.0
    %5757 = vmatprep.subr.mxu0 0.0
    %5758 = vmatpush1.msra.mxu0 0.0
    %5759 = vmatprep.subr.mxu0 0.0
    %5760 = vmatpush1.msra.mxu0 0.0
    %5761 = vmatprep.subr.mxu0 0.0
    %5762 = vmatpush1.msra.mxu0 0.0
    %5763 = vmatprep.subr.mxu0 0.0
    %5764 = vmatpush1.msra.mxu0 0.0
    %5765 = vmatprep.subr.mxu0 0.0
    %5766 = vmatpush1.msra.mxu0 0.0
    %5767 = vmatprep.subr.mxu0 0.0
    %5768 = vmatpush1.msra.mxu0 0.0
    %5769 = vmatprep.subr.mxu0 0.0
    %5770 = vmatpush1.msra.mxu0 0.0
    %5771 = vmatprep.subr.mxu0 0.0
    %5772 = vmatpush1.msra.mxu0 0.0
    %5773 = vmatprep.subr.mxu0 0.0
    %5774 = vmatpush1.msra.mxu0 0.0
    %5775 = vmatprep.mubr.f32.mxu0 0.0
    %5776 = vmatmul.mubr.f32.gmra.mrb[0].mxu0 %v5709
    %v5777 = vpop.f32.mrb[0].mxu0
    %v5778 = vadd.f32 %v2582, %v5777
    %v5779 = vpop.f32.mrb[0].mxu0
    %5780 = vdwg.mxu0
    %5781 = vmatprep.subr.mxu0 0.0
    %5782 = vmatpush1.msra.mxu0 %v2554
    %5783 = vmatprep.subr.mxu0 0.0
    %5784 = vmatpush1.msra.mxu0 %v2555
    %5785 = vmatprep.subr.mxu0 0.0
    %5786 = vmatpush1.msra.mxu0 %v2556
    %5787 = vmatprep.subr.mxu0 0.0
    %5788 = vmatpush1.msra.mxu0 %v2557
    %5789 = vmatprep.subr.mxu0 0.0
    %5790 = vmatpush1.msra.mxu0 0.0
    %5791 = vmatprep.subr.mxu0 0.0
    %5792 = vmatpush1.msra.mxu0 0.0
    %5793 = vmatprep.subr.mxu0 0.0
    %5794 = vmatpush1.msra.mxu0 0.0
    %5795 = vmatprep.subr.mxu0 0.0
    %5796 = vmatpush1.msra.mxu0 0.0
    %5797 = vmatprep.subr.mxu0 0.0
    %5798 = vmatpush1.msra.mxu0 0.0
    %5799 = vmatprep.subr.mxu0 0.0
    %5800 = vmatpush1.msra.mxu0 0.0
    %5801 = vmatprep.subr.mxu0 0.0
    %5802 = vmatpush1.msra.mxu0 0.0
    %5803 = vmatprep.subr.mxu0 0.0
    %5804 = vmatpush1.msra.mxu0 0.0
    %5805 = vmatprep.subr.mxu0 0.0
    %5806 = vmatpush1.msra.mxu0 0.0
    %5807 = vmatprep.subr.mxu0 0.0
    %5808 = vmatpush1.msra.mxu0 0.0
    %5809 = vmatprep.subr.mxu0 0.0
    %5810 = vmatpush1.msra.mxu0 0.0
    %5811 = vmatprep.subr.mxu0 0.0
    %5812 = vmatpush1.msra.mxu0 0.0
    %5813 = vmatprep.subr.mxu0 0.0
    %5814 = vmatpush1.msra.mxu0 0.0
    %5815 = vmatprep.subr.mxu0 0.0
    %5816 = vmatpush1.msra.mxu0 0.0
    %5817 = vmatprep.subr.mxu0 0.0
    %5818 = vmatpush1.msra.mxu0 0.0
    %5819 = vmatprep.subr.mxu0 0.0
    %5820 = vmatpush1.msra.mxu0 0.0
    %5821 = vmatprep.subr.mxu0 0.0
    %5822 = vmatpush1.msra.mxu0 0.0
    %5823 = vmatprep.subr.mxu0 0.0
    %5824 = vmatpush1.msra.mxu0 0.0
    %5825 = vmatprep.subr.mxu0 0.0
    %5826 = vmatpush1.msra.mxu0 0.0
    %5827 = vmatprep.subr.mxu0 0.0
    %5828 = vmatpush1.msra.mxu0 0.0
    %5829 = vmatprep.subr.mxu0 0.0
    %5830 = vmatpush1.msra.mxu0 0.0
    %5831 = vmatprep.subr.mxu0 0.0
    %5832 = vmatpush1.msra.mxu0 0.0
    %5833 = vmatprep.subr.mxu0 0.0
    %5834 = vmatpush1.msra.mxu0 0.0
    %5835 = vmatprep.subr.mxu0 0.0
    %5836 = vmatpush1.msra.mxu0 0.0
    %5837 = vmatprep.subr.mxu0 0.0
    %5838 = vmatpush1.msra.mxu0 0.0
    %5839 = vmatprep.subr.mxu0 0.0
    %5840 = vmatpush1.msra.mxu0 0.0
    %5841 = vmatprep.subr.mxu0 0.0
    %5842 = vmatpush1.msra.mxu0 0.0
    %5843 = vmatprep.subr.mxu0 0.0
    %5844 = vmatpush1.msra.mxu0 0.0
    %5845 = vmatprep.mubr.f32.mxu0 0.0
    %5846 = vmatmul.mubr.f32.gmra.mrb[0].mxu0 %v5709
    %v5847 = vpop.f32.mrb[0].mxu0
    %v5848 = vadd.f32 %v2658, %v5847
    %v5849 = vpop.f32.mrb[0].mxu0
    %5850 = vdwg.mxu0
    %5851 = vmatprep.subr.mxu0 0.0
    %5852 = vmatpush1.msra.mxu0 %v2558
    %5853 = vmatprep.subr.mxu0 0.0
    %5854 = vmatpush1.msra.mxu0 %v2559
    %5855 = vmatprep.subr.mxu0 0.0
    %5856 = vmatpush1.msra.mxu0 %v2560
    %5857 = vmatprep.subr.mxu0 0.0
    %5858 = vmatpush1.msra.mxu0 %v2561
    %5859 = vmatprep.subr.mxu0 0.0
    %5860 = vmatpush1.msra.mxu0 0.0
    %5861 = vmatprep.subr.mxu0 0.0
    %5862 = vmatpush1.msra.mxu0 0.0
    %5863 = vmatprep.subr.mxu0 0.0
    %5864 = vmatpush1.msra.mxu0 0.0
    %5865 = vmatprep.subr.mxu0 0.0
    %5866 = vmatpush1.msra.mxu0 0.0
    %5867 = vmatprep.subr.mxu0 0.0
    %5868 = vmatpush1.msra.mxu0 0.0
    %5869 = vmatprep.subr.mxu0 0.0
    %5870 = vmatpush1.msra.mxu0 0.0
    %5871 = vmatprep.subr.mxu0 0.0
    %5872 = vmatpush1.msra.mxu0 0.0
    %5873 = vmatprep.subr.mxu0 0.0
    %5874 = vmatpush1.msra.mxu0 0.0
    %5875 = vmatprep.subr.mxu0 0.0
    %5876 = vmatpush1.msra.mxu0 0.0
    %5877 = vmatprep.subr.mxu0 0.0
    %5878 = vmatpush1.msra.mxu0 0.0
    %5879 = vmatprep.subr.mxu0 0.0
    %5880 = vmatpush1.msra.mxu0 0.0
    %5881 = vmatprep.subr.mxu0 0.0
    %5882 = vmatpush1.msra.mxu0 0.0
    %5883 = vmatprep.subr.mxu0 0.0
    %5884 = vmatpush1.msra.mxu0 0.0
    %5885 = vmatprep.subr.mxu0 0.0
    %5886 = vmatpush1.msra.mxu0 0.0
    %5887 = vmatprep.subr.mxu0 0.0
    %5888 = vmatpush1.msra.mxu0 0.0
    %5889 = vmatprep.subr.mxu0 0.0
    %5890 = vmatpush1.msra.mxu0 0.0
    %5891 = vmatprep.subr.mxu0 0.0
    %5892 = vmatpush1.msra.mxu0 0.0
    %5893 = vmatprep.subr.mxu0 0.0
    %5894 = vmatpush1.msra.mxu0 0.0
    %5895 = vmatprep.subr.mxu0 0.0
    %5896 = vmatpush1.msra.mxu0 0.0
    %5897 = vmatprep.subr.mxu0 0.0
    %5898 = vmatpush1.msra.mxu0 0.0
    %5899 = vmatprep.subr.mxu0 0.0
    %5900 = vmatpush1.msra.mxu0 0.0
    %5901 = vmatprep.subr.mxu0 0.0
    %5902 = vmatpush1.msra.mxu0 0.0
    %5903 = vmatprep.subr.mxu0 0.0
    %5904 = vmatpush1.msra.mxu0 0.0
    %5905 = vmatprep.subr.mxu0 0.0
    %5906 = vmatpush1.msra.mxu0 0.0
    %5907 = vmatprep.subr.mxu0 0.0
    %5908 = vmatpush1.msra.mxu0 0.0
    %5909 = vmatprep.subr.mxu0 0.0
    %5910 = vmatpush1.msra.mxu0 0.0
    %5911 = vmatprep.subr.mxu0 0.0
    %5912 = vmatpush1.msra.mxu0 0.0
    %5913 = vmatprep.subr.mxu0 0.0
    %5914 = vmatpush1.msra.mxu0 0.0
    %5915 = vmatprep.mubr.f32.mxu0 0.0
    %5916 = vmatmul.mubr.f32.gmra.mrb[0].mxu0 %v5709
    %v5917 = vpop.f32.mrb[0].mxu0
    %v5918 = vadd.f32 %v2734, %v5917
    %v5919 = vpop.f32.mrb[0].mxu0
    %5920 = vdwg.mxu0
    %v5922 = vsel %vm599, %v5706, 0
    %5924 = vmatprep.subr.mxu0 0.0
    %5925 = vmatpush1.msra.mxu0 %v2562
    %5926 = vmatprep.subr.mxu0 0.0
    %5927 = vmatpush1.msra.mxu0 %v2563
    %5928 = vmatprep.subr.mxu0 0.0
    %5929 = vmatpush1.msra.mxu0 %v2564
    %5930 = vmatprep.subr.mxu0 0.0
    %5931 = vmatpush1.msra.mxu0 %v2565
    %5932 = vmatprep.subr.mxu0 0.0
    %5933 = vmatpush1.msra.mxu0 0.0
    %5934 = vmatprep.subr.mxu0 0.0
    %5935 = vmatpush1.msra.mxu0 0.0
    %5936 = vmatprep.subr.mxu0 0.0
    %5937 = vmatpush1.msra.mxu0 0.0
    %5938 = vmatprep.subr.mxu0 0.0
    %5939 = vmatpush1.msra.mxu0 0.0
    %5940 = vmatprep.subr.mxu0 0.0
    %5941 = vmatpush1.msra.mxu0 0.0
    %5942 = vmatprep.subr.mxu0 0.0
    %5943 = vmatpush1.msra.mxu0 0.0
    %5944 = vmatprep.subr.mxu0 0.0
    %5945 = vmatpush1.msra.mxu0 0.0
    %5946 = vmatprep.subr.mxu0 0.0
    %5947 = vmatpush1.msra.mxu0 0.0
    %5948 = vmatprep.subr.mxu0 0.0
    %5949 = vmatpush1.msra.mxu0 0.0
    %5950 = vmatprep.subr.mxu0 0.0
    %5951 = vmatpush1.msra.mxu0 0.0
    %5952 = vmatprep.subr.mxu0 0.0
    %5953 = vmatpush1.msra.mxu0 0.0
    %5954 = vmatprep.subr.mxu0 0.0
    %5955 = vmatpush1.msra.mxu0 0.0
    %5956 = vmatprep.subr.mxu0 0.0
    %5957 = vmatpush1.msra.mxu0 0.0
    %5958 = vmatprep.subr.mxu0 0.0
    %5959 = vmatpush1.msra.mxu0 0.0
    %5960 = vmatprep.subr.mxu0 0.0
    %5961 = vmatpush1.msra.mxu0 0.0
    %5962 = vmatprep.subr.mxu0 0.0
    %5963 = vmatpush1.msra.mxu0 0.0
    %5964 = vmatprep.subr.mxu0 0.0
    %5965 = vmatpush1.msra.mxu0 0.0
    %5966 = vmatprep.subr.mxu0 0.0
    %5967 = vmatpush1.msra.mxu0 0.0
    %5968 = vmatprep.subr.mxu0 0.0
    %5969 = vmatpush1.msra.mxu0 0.0
    %5970 = vmatprep.subr.mxu0 0.0
    %5971 = vmatpush1.msra.mxu0 0.0
    %5972 = vmatprep.subr.mxu0 0.0
    %5973 = vmatpush1.msra.mxu0 0.0
    %5974 = vmatprep.subr.mxu0 0.0
    %5975 = vmatpush1.msra.mxu0 0.0
    %5976 = vmatprep.subr.mxu0 0.0
    %5977 = vmatpush1.msra.mxu0 0.0
    %5978 = vmatprep.subr.mxu0 0.0
    %5979 = vmatpush1.msra.mxu0 0.0
    %5980 = vmatprep.subr.mxu0 0.0
    %5981 = vmatpush1.msra.mxu0 0.0
    %5982 = vmatprep.subr.mxu0 0.0
    %5983 = vmatpush1.msra.mxu0 0.0
    %5984 = vmatprep.subr.mxu0 0.0
    %5985 = vmatpush1.msra.mxu0 0.0
    %5986 = vmatprep.subr.mxu0 0.0
    %5987 = vmatpush1.msra.mxu0 0.0
    %5988 = vmatprep.mubr.f32.mxu0 0.0
    %5989 = vmatmul.mubr.f32.gmra.mrb[0].mxu0 %v5922
    %v5990 = vpop.f32.mrb[0].mxu0
    %v5991 = vadd.f32 0.0, %v5990
    %v5992 = vpop.f32.mrb[0].mxu0
    %5993 = vdwg.mxu0
    %5994 = vmatprep.subr.mxu0 0.0
    %5995 = vmatpush1.msra.mxu0 %v2566
    %5996 = vmatprep.subr.mxu0 0.0
    %5997 = vmatpush1.msra.mxu0 %v2567
    %5998 = vmatprep.subr.mxu0 0.0
    %5999 = vmatpush1.msra.mxu0 %v2568
    %6000 = vmatprep.subr.mxu0 0.0
    %6001 = vmatpush1.msra.mxu0 %v2569
    %6002 = vmatprep.subr.mxu0 0.0
    %6003 = vmatpush1.msra.mxu0 0.0
    %6004 = vmatprep.subr.mxu0 0.0
    %6005 = vmatpush1.msra.mxu0 0.0
    %6006 = vmatprep.subr.mxu0 0.0
    %6007 = vmatpush1.msra.mxu0 0.0
    %6008 = vmatprep.subr.mxu0 0.0
    %6009 = vmatpush1.msra.mxu0 0.0
    %6010 = vmatprep.subr.mxu0 0.0
    %6011 = vmatpush1.msra.mxu0 0.0
    %6012 = vmatprep.subr.mxu0 0.0
    %6013 = vmatpush1.msra.mxu0 0.0
    %6014 = vmatprep.subr.mxu0 0.0
    %6015 = vmatpush1.msra.mxu0 0.0
    %6016 = vmatprep.subr.mxu0 0.0
    %6017 = vmatpush1.msra.mxu0 0.0
    %6018 = vmatprep.subr.mxu0 0.0
    %6019 = vmatpush1.msra.mxu0 0.0
    %6020 = vmatprep.subr.mxu0 0.0
    %6021 = vmatpush1.msra.mxu0 0.0
    %6022 = vmatprep.subr.mxu0 0.0
    %6023 = vmatpush1.msra.mxu0 0.0
    %6024 = vmatprep.subr.mxu0 0.0
    %6025 = vmatpush1.msra.mxu0 0.0
    %6026 = vmatprep.subr.mxu0 0.0
    %6027 = vmatpush1.msra.mxu0 0.0
    %6028 = vmatprep.subr.mxu0 0.0
    %6029 = vmatpush1.msra.mxu0 0.0
    %6030 = vmatprep.subr.mxu0 0.0
    %6031 = vmatpush1.msra.mxu0 0.0
    %6032 = vmatprep.subr.mxu0 0.0
    %6033 = vmatpush1.msra.mxu0 0.0
    %6034 = vmatprep.subr.mxu0 0.0
    %6035 = vmatpush1.msra.mxu0 0.0
    %6036 = vmatprep.subr.mxu0 0.0
    %6037 = vmatpush1.msra.mxu0 0.0
    %6038 = vmatprep.subr.mxu0 0.0
    %6039 = vmatpush1.msra.mxu0 0.0
    %6040 = vmatprep.subr.mxu0 0.0
    %6041 = vmatpush1.msra.mxu0 0.0
    %6042 = vmatprep.subr.mxu0 0.0
    %6043 = vmatpush1.msra.mxu0 0.0
    %6044 = vmatprep.subr.mxu0 0.0
    %6045 = vmatpush1.msra.mxu0 0.0
    %6046 = vmatprep.subr.mxu0 0.0
    %6047 = vmatpush1.msra.mxu0 0.0
    %6048 = vmatprep.subr.mxu0 0.0
    %6049 = vmatpush1.msra.mxu0 0.0
    %6050 = vmatprep.subr.mxu0 0.0
    %6051 = vmatpush1.msra.mxu0 0.0
    %6052 = vmatprep.subr.mxu0 0.0
    %6053 = vmatpush1.msra.mxu0 0.0
    %6054 = vmatprep.subr.mxu0 0.0
    %6055 = vmatpush1.msra.mxu0 0.0
    %6056 = vmatprep.subr.mxu0 0.0
    %6057 = vmatpush1.msra.mxu0 0.0
    %6058 = vmatprep.mubr.f32.mxu0 0.0
    %6059 = vmatmul.mubr.f32.gmra.mrb[0].mxu0 %v5922
    %v6060 = vpop.f32.mrb[0].mxu0
    %v6061 = vadd.f32 0.0, %v6060
    %v6062 = vpop.f32.mrb[0].mxu0
    %6063 = vdwg.mxu0
    %v6064 = vadd.f32 %v5778, %v5991
    %v6065 = vxor.u32 %v6064, 2147483648
    %v6066 = vmul.f32 %v6065, 1.442695
    %v6067 = vpow.pop %v6066
    %v6068 = vadd.f32 %v6067, 1.0
    %v6069 = vrcp.pop %v6068
    %v6070 = vmul.f32 1.0, %v6069
    %v6071 = vadd.f32 %v5848, %v6061
    %v6072 = vxor.u32 %v6071, 2147483648
    %v6073 = vmul.f32 %v6072, 1.442695
    %v6074 = vpow.pop %v6073
    %v6075 = vadd.f32 %v6074, 1.0
    %v6076 = vrcp.pop %v6075
    %v6077 = vmul.f32 1.0, %v6076
    %6078 = vmatprep.subr.mxu0 0.0
    %6079 = vmatpush1.msra.mxu0 %v2570
    %6080 = vmatprep.subr.mxu0 0.0
    %6081 = vmatpush1.msra.mxu0 %v2571
    %6082 = vmatprep.subr.mxu0 0.0
    %6083 = vmatpush1.msra.mxu0 %v2572
    %6084 = vmatprep.subr.mxu0 0.0
    %6085 = vmatpush1.msra.mxu0 %v2573
    %6086 = vmatprep.subr.mxu0 0.0
    %6087 = vmatpush1.msra.mxu0 0.0
    %6088 = vmatprep.subr.mxu0 0.0
    %6089 = vmatpush1.msra.mxu0 0.0
    %6090 = vmatprep.subr.mxu0 0.0
    %6091 = vmatpush1.msra.mxu0 0.0
    %6092 = vmatprep.subr.mxu0 0.0
    %6093 = vmatpush1.msra.mxu0 0.0
    %6094 = vmatprep.subr.mxu0 0.0
    %6095 = vmatpush1.msra.mxu0 0.0
    %6096 = vmatprep.subr.mxu0 0.0
    %6097 = vmatpush1.msra.mxu0 0.0
    %6098 = vmatprep.subr.mxu0 0.0
    %6099 = vmatpush1.msra.mxu0 0.0
    %6100 = vmatprep.subr.mxu0 0.0
    %6101 = vmatpush1.msra.mxu0 0.0
    %6102 = vmatprep.subr.mxu0 0.0
    %6103 = vmatpush1.msra.mxu0 0.0
    %6104 = vmatprep.subr.mxu0 0.0
    %6105 = vmatpush1.msra.mxu0 0.0
    %6106 = vmatprep.subr.mxu0 0.0
    %6107 = vmatpush1.msra.mxu0 0.0
    %6108 = vmatprep.subr.mxu0 0.0
    %6109 = vmatpush1.msra.mxu0 0.0
    %6110 = vmatprep.subr.mxu0 0.0
    %6111 = vmatpush1.msra.mxu0 0.0
    %6112 = vmatprep.subr.mxu0 0.0
    %6113 = vmatpush1.msra.mxu0 0.0
    %6114 = vmatprep.subr.mxu0 0.0
    %6115 = vmatpush1.msra.mxu0 0.0
    %6116 = vmatprep.subr.mxu0 0.0
    %6117 = vmatpush1.msra.mxu0 0.0
    %6118 = vmatprep.subr.mxu0 0.0
    %6119 = vmatpush1.msra.mxu0 0.0
    %6120 = vmatprep.subr.mxu0 0.0
    %6121 = vmatpush1.msra.mxu0 0.0
    %6122 = vmatprep.subr.mxu0 0.0
    %6123 = vmatpush1.msra.mxu0 0.0
    %6124 = vmatprep.subr.mxu0 0.0
    %6125 = vmatpush1.msra.mxu0 0.0
    %6126 = vmatprep.subr.mxu0 0.0
    %6127 = vmatpush1.msra.mxu0 0.0
    %6128 = vmatprep.subr.mxu0 0.0
    %6129 = vmatpush1.msra.mxu0 0.0
    %6130 = vmatprep.subr.mxu0 0.0
    %6131 = vmatpush1.msra.mxu0 0.0
    %6132 = vmatprep.subr.mxu0 0.0
    %6133 = vmatpush1.msra.mxu0 0.0
    %6134 = vmatprep.subr.mxu0 0.0
    %6135 = vmatpush1.msra.mxu0 0.0
    %6136 = vmatprep.subr.mxu0 0.0
    %6137 = vmatpush1.msra.mxu0 0.0
    %6138 = vmatprep.subr.mxu0 0.0
    %6139 = vmatpush1.msra.mxu0 0.0
    %6140 = vmatprep.subr.mxu0 0.0
    %6141 = vmatpush1.msra.mxu0 0.0
    %6142 = vmatprep.mubr.f32.mxu0 0.0
    %6143 = vmatmul.mubr.f32.gmra.mrb[0].mxu0 %v5922
    %v6144 = vpop.f32.mrb[0].mxu0
    %v6145 = vadd.f32 %v2964, %v6144
    %v6146 = vpop.f32.mrb[0].mxu0
    %6147 = vdwg.mxu0
    %v6148 = vmul.f32 %v6070, %v6145
    %v6149 = vadd.f32 %v5918, %v6148
    %v6150 = vtanh.pop %v6149
    %v6151 = vsub.f32 1.0, %v6077
    %v6152 = vmul.f32 %v6151, %v6150
    %v6153 = vmul.f32 %v6077, %v5706
    %v6154 = vadd.f32 %v6152, %v6153
    %v6155 = vld [vmem:[%s43] sm:$0xff]
    %v6156 = vld [vmem:[%s43 + $0x8] sm:$0xff]
    %v6157 = vld [vmem:[%s43 + $0x10] sm:$0xff]
    %v6158 = vld [vmem:[%s43 + $0x18] sm:$0xff]
    %v6159 = vld [vmem:[%s45] sm:$0x1]
    %v6161 = vlaneseq
    %v6162 = vshrl.u32 %v6161, 7
    %v6163 = vsub.s32 0, %v6162
    %v6164 = vrot.slane %v6159, %v6163
    %v6167 = vsel %vm599, %v6154, 0
    %6169 = vmatprep.subr.mxu0 0.0
    %6170 = vmatpush1.msra.mxu0 %v6155
    %6171 = vmatprep.subr.mxu0 0.0
    %6172 = vmatpush1.msra.mxu0 %v6156
    %6173 = vmatprep.subr.mxu0 0.0
    %6174 = vmatpush1.msra.mxu0 %v6157
    %6175 = vmatprep.subr.mxu0 0.0
    %6176 = vmatpush1.msra.mxu0 %v6158
    %6177 = vmatprep.subr.mxu0 0.0
    %6178 = vmatpush1.msra.mxu0 0.0
    %6179 = vmatprep.subr.mxu0 0.0
    %6180 = vmatpush1.msra.mxu0 0.0
    %6181 = vmatprep.subr.mxu0 0.0
    %6182 = vmatpush1.msra.mxu0 0.0
    %6183 = vmatprep.subr.mxu0 0.0
    %6184 = vmatpush1.msra.mxu0 0.0
    %6185 = vmatprep.subr.mxu0 0.0
    %6186 = vmatpush1.msra.mxu0 0.0
    %6187 = vmatprep.subr.mxu0 0.0
    %6188 = vmatpush1.msra.mxu0 0.0
    %6189 = vmatprep.subr.mxu0 0.0
    %6190 = vmatpush1.msra.mxu0 0.0
    %6191 = vmatprep.subr.mxu0 0.0
    %6192 = vmatpush1.msra.mxu0 0.0
    %6193 = vmatprep.subr.mxu0 0.0
    %6194 = vmatpush1.msra.mxu0 0.0
    %6195 = vmatprep.subr.mxu0 0.0
    %6196 = vmatpush1.msra.mxu0 0.0
    %6197 = vmatprep.subr.mxu0 0.0
    %6198 = vmatpush1.msra.mxu0 0.0
    %6199 = vmatprep.subr.mxu0 0.0
    %6200 = vmatpush1.msra.mxu0 0.0
    %6201 = vmatprep.subr.mxu0 0.0
    %6202 = vmatpush1.msra.mxu0 0.0
    %6203 = vmatprep.subr.mxu0 0.0
    %6204 = vmatpush1.msra.mxu0 0.0
    %6205 = vmatprep.subr.mxu0 0.0
    %6206 = vmatpush1.msra.mxu0 0.0
    %6207 = vmatprep.subr.mxu0 0.0
    %6208 = vmatpush1.msra.mxu0 0.0
    %6209 = vmatprep.subr.mxu0 0.0
    %6210 = vmatpush1.msra.mxu0 0.0
    %6211 = vmatprep.subr.mxu0 0.0
    %6212 = vmatpush1.msra.mxu0 0.0
    %6213 = vmatprep.subr.mxu0 0.0
    %6214 = vmatpush1.msra.mxu0 0.0
    %6215 = vmatprep.subr.mxu0 0.0
    %6216 = vmatpush1.msra.mxu0 0.0
    %6217 = vmatprep.subr.mxu0 0.0
    %6218 = vmatpush1.msra.mxu0 0.0
    %6219 = vmatprep.subr.mxu0 0.0
    %6220 = vmatpush1.msra.mxu0 0.0
    %6221 = vmatprep.subr.mxu0 0.0
    %6222 = vmatpush1.msra.mxu0 0.0
    %6223 = vmatprep.subr.mxu0 0.0
    %6224 = vmatpush1.msra.mxu0 0.0
    %6225 = vmatprep.subr.mxu0 0.0
    %6226 = vmatpush1.msra.mxu0 0.0
    %6227 = vmatprep.subr.mxu0 0.0
    %6228 = vmatpush1.msra.mxu0 0.0
    %6229 = vmatprep.subr.mxu0 0.0
    %6230 = vmatpush1.msra.mxu0 0.0
    %6231 = vmatprep.subr.mxu0 0.0
    %6232 = vmatpush1.msra.mxu0 0.0
    %6233 = vmatprep.mubr.f32.mxu0 0.0
    %6234 = vmatmul.mubr.f32.gmra.mrb[0].mxu0 %v6167
    %v6235 = vpop.f32.mrb[0].mxu0
    %v6236 = vadd.f32 %v6164, %v6235
    %v6237 = vpop.f32.mrb[0].mxu0
    %6238 = vdwg.mxu0
    %vm6239 = vcmask 254976
    %v6240 = vsel %vm6239, %v6236, 0.0
    %6241 = vadd.xlane.f32.xlu0 %v6240
    %v6242 = vpop.xlane.xlu0 %6241
    %v6243 = vrcp.pop 32.0
    %v6244 = vmul.f32 %v6242, %v6243
    %v6245 = vsub.f32 %v6236, %v6244
    %v6246 = vmul.f32 %v6245, %v6245
    %v6247 = vsel %vm6239, %v6246, 0.0
    %6248 = vadd.xlane.f32.xlu0 %v6247
    %v6249 = vpop.xlane.xlu0 %6248
    %v6250 = vmul.f32 %v6249, %v6243
    %v6251 = vadd.f32 %v6250, 1e-05
    %v6252 = vrsqrt.pop %v6251
    %v6253 = vmul.f32 %v6245, %v6252
    %v6254 = vld [vmem:[%s47] sm:$0x1]
    %v6256 = vlaneseq
    %v6257 = vshrl.u32 %v6256, 7
    %v6258 = vsub.s32 0, %v6257
    %v6259 = vrot.slane %v6254, %v6258
    %v6261 = vmul.f32 %v6253, %v6259
    %v6262 = vld [vmem:[%s49] sm:$0x1]
    %v6264 = vlaneseq
    %v6265 = vshrl.u32 %v6264, 7
    %v6266 = vsub.s32 0, %v6265
    %v6267 = vrot.slane %v6262, %v6266
    %v6269 = vadd.f32 %v6261, %v6267
    %v6270 = vmax.f32 %v6269, 0.0
    %v6271 = vld [vmem:[#allocation25] sm:$0xff]
    %v6272 = vld [vmem:[#allocation25 + $0x8] sm:$0xff]
    %v6273 = vld [vmem:[#allocation25 + $0x10] sm:$0xff]
    %v6274 = vld [vmem:[#allocation25 + $0x18] sm:$0xff]
    %v6275 = vld [vmem:[%s53] sm:$0x1]
    %v6277 = vlaneseq
    %v6278 = vshrl.u32 %v6277, 7
    %v6279 = vsub.s32 0, %v6278
    %v6280 = vrot.slane %v6275, %v6279
    %v6283 = vsel %vm599, %v6270, 0
    %6285 = vmatprep.subr.mxu0 0.0
    %6286 = vmatpush1.msra.mxu0 %v6271
    %6287 = vmatprep.subr.mxu0 0.0
    %6288 = vmatpush1.msra.mxu0 %v6272
    %6289 = vmatprep.subr.mxu0 0.0
    %6290 = vmatpush1.msra.mxu0 %v6273
    %6291 = vmatprep.subr.mxu0 0.0
    %6292 = vmatpush1.msra.mxu0 %v6274
    %6293 = vmatprep.subr.mxu0 0.0
    %6294 = vmatpush1.msra.mxu0 0.0
    %6295 = vmatprep.subr.mxu0 0.0
    %6296 = vmatpush1.msra.mxu0 0.0
    %6297 = vmatprep.subr.mxu0 0.0
    %6298 = vmatpush1.msra.mxu0 0.0
    %6299 = vmatprep.subr.mxu0 0.0
    %6300 = vmatpush1.msra.mxu0 0.0
    %6301 = vmatprep.subr.mxu0 0.0
    %6302 = vmatpush1.msra.mxu0 0.0
    %6303 = vmatprep.subr.mxu0 0.0
    %6304 = vmatpush1.msra.mxu0 0.0
    %6305 = vmatprep.subr.mxu0 0.0
    %6306 = vmatpush1.msra.mxu0 0.0
    %6307 = vmatprep.subr.mxu0 0.0
    %6308 = vmatpush1.msra.mxu0 0.0
    %6309 = vmatprep.subr.mxu0 0.0
    %6310 = vmatpush1.msra.mxu0 0.0
    %6311 = vmatprep.subr.mxu0 0.0
    %6312 = vmatpush1.msra.mxu0 0.0
    %6313 = vmatprep.subr.mxu0 0.0
    %6314 = vmatpush1.msra.mxu0 0.0
    %6315 = vmatprep.subr.mxu0 0.0
    %6316 = vmatpush1.msra.mxu0 0.0
    %6317 = vmatprep.subr.mxu0 0.0
    %6318 = vmatpush1.msra.mxu0 0.0
    %6319 = vmatprep.subr.mxu0 0.0
    %6320 = vmatpush1.msra.mxu0 0.0
    %6321 = vmatprep.subr.mxu0 0.0
    %6322 = vmatpush1.msra.mxu0 0.0
    %6323 = vmatprep.subr.mxu0 0.0
    %6324 = vmatpush1.msra.mxu0 0.0
    %6325 = vmatprep.subr.mxu0 0.0
    %6326 = vmatpush1.msra.mxu0 0.0
    %6327 = vmatprep.subr.mxu0 0.0
    %6328 = vmatpush1.msra.mxu0 0.0
    %6329 = vmatprep.subr.mxu0 0.0
    %6330 = vmatpush1.msra.mxu0 0.0
    %6331 = vmatprep.subr.mxu0 0.0
    %6332 = vmatpush1.msra.mxu0 0.0
    %6333 = vmatprep.subr.mxu0 0.0
    %6334 = vmatpush1.msra.mxu0 0.0
    %6335 = vmatprep.subr.mxu0 0.0
    %6336 = vmatpush1.msra.mxu0 0.0
    %6337 = vmatprep.subr.mxu0 0.0
    %6338 = vmatpush1.msra.mxu0 0.0
    %6339 = vmatprep.subr.mxu0 0.0
    %6340 = vmatpush1.msra.mxu0 0.0
    %6341 = vmatprep.subr.mxu0 0.0
    %6342 = vmatpush1.msra.mxu0 0.0
    %6343 = vmatprep.subr.mxu0 0.0
    %6344 = vmatpush1.msra.mxu0 0.0
    %6345 = vmatprep.subr.mxu0 0.0
    %6346 = vmatpush1.msra.mxu0 0.0
    %6347 = vmatprep.subr.mxu0 0.0
    %6348 = vmatpush1.msra.mxu0 0.0
    %6349 = vmatprep.mubr.f32.mxu0 0.0
    %6350 = vmatmul.mubr.f32.gmra.mrb[0].mxu0 %v6283
    %v6351 = vpop.f32.mrb[0].mxu0
    %v6352 = vadd.f32 %v6280, %v6351
    %v6353 = vpop.f32.mrb[0].mxu0
    %6354 = vdwg.mxu0
    %v6355 = vsel %vm6239, %v6352, 0.0
    %6356 = vadd.xlane.f32.xlu0 %v6355
    %v6357 = vpop.xlane.xlu0 %6356
    %v6358 = vmul.f32 %v6357, %v6243
    %v6359 = vsub.f32 %v6352, %v6358
    %v6360 = vmul.f32 %v6359, %v6359
    %v6361 = vsel %vm6239, %v6360, 0.0
    %6362 = vadd.xlane.f32.xlu0 %v6361
    %v6363 = vpop.xlane.xlu0 %6362
    %v6364 = vmul.f32 %v6363, %v6243
    %v6365 = vadd.f32 %v6364, 1e-05
    %v6366 = vrsqrt.pop %v6365
    %v6367 = vmul.f32 %v6359, %v6366
    %v6368 = vld [vmem:[%s55] sm:$0x1]
    %v6370 = vlaneseq
    %v6371 = vshrl.u32 %v6370, 7
    %v6372 = vsub.s32 0, %v6371
    %v6373 = vrot.slane %v6368, %v6372
    %v6375 = vmul.f32 %v6367, %v6373
    %v6376 = vld [vmem:[%s57] sm:$0x1]
    %v6378 = vlaneseq
    %v6379 = vshrl.u32 %v6378, 7
    %v6380 = vsub.s32 0, %v6379
    %v6381 = vrot.slane %v6376, %v6380
    %v6383 = vadd.f32 %v6375, %v6381
    %v6384 = vmax.f32 %v6383, 0.0
    %v6385 = vld [vmem:[%s59] sm:$0xff]
    %v6386 = vld [vmem:[%s59 + $0x8] sm:$0xff]
    %v6387 = vld [vmem:[%s59 + $0x10] sm:$0xff]
    %v6388 = vld [vmem:[%s59 + $0x18] sm:$0xff]
    %v6389 = vld [vmem:[%s61] sm:$0x1]
    %v6391 = vlaneseq
    %v6392 = vshrl.u32 %v6391, 7
    %v6393 = vsub.s32 0, %v6392
    %v6394 = vrot.slane %v6389, %v6393
    %v6397 = vsel %vm599, %v6384, 0
    %6399 = vmatprep.subr.mxu0 0.0
    %6400 = vmatpush1.msra.mxu0 %v6385
    %6401 = vmatprep.subr.mxu0 0.0
    %6402 = vmatpush1.msra.mxu0 %v6386
    %6403 = vmatprep.subr.mxu0 0.0
    %6404 = vmatpush1.msra.mxu0 %v6387
    %6405 = vmatprep.subr.mxu0 0.0
    %6406 = vmatpush1.msra.mxu0 %v6388
    %6407 = vmatprep.subr.mxu0 0.0
    %6408 = vmatpush1.msra.mxu0 0.0
    %6409 = vmatprep.subr.mxu0 0.0
    %6410 = vmatpush1.msra.mxu0 0.0
    %6411 = vmatprep.subr.mxu0 0.0
    %6412 = vmatpush1.msra.mxu0 0.0
    %6413 = vmatprep.subr.mxu0 0.0
    %6414 = vmatpush1.msra.mxu0 0.0
    %6415 = vmatprep.subr.mxu0 0.0
    %6416 = vmatpush1.msra.mxu0 0.0
    %6417 = vmatprep.subr.mxu0 0.0
    %6418 = vmatpush1.msra.mxu0 0.0
    %6419 = vmatprep.subr.mxu0 0.0
    %6420 = vmatpush1.msra.mxu0 0.0
    %6421 = vmatprep.subr.mxu0 0.0
    %6422 = vmatpush1.msra.mxu0 0.0
    %6423 = vmatprep.subr.mxu0 0.0
    %6424 = vmatpush1.msra.mxu0 0.0
    %6425 = vmatprep.subr.mxu0 0.0
    %6426 = vmatpush1.msra.mxu0 0.0
    %6427 = vmatprep.subr.mxu0 0.0
    %6428 = vmatpush1.msra.mxu0 0.0
    %6429 = vmatprep.subr.mxu0 0.0
    %6430 = vmatpush1.msra.mxu0 0.0
    %6431 = vmatprep.subr.mxu0 0.0
    %6432 = vmatpush1.msra.mxu0 0.0
    %6433 = vmatprep.subr.mxu0 0.0
    %6434 = vmatpush1.msra.mxu0 0.0
    %6435 = vmatprep.subr.mxu0 0.0
    %6436 = vmatpush1.msra.mxu0 0.0
    %6437 = vmatprep.subr.mxu0 0.0
    %6438 = vmatpush1.msra.mxu0 0.0
    %6439 = vmatprep.subr.mxu0 0.0
    %6440 = vmatpush1.msra.mxu0 0.0
    %6441 = vmatprep.subr.mxu0 0.0
    %6442 = vmatpush1.msra.mxu0 0.0
    %6443 = vmatprep.subr.mxu0 0.0
    %6444 = vmatpush1.msra.mxu0 0.0
    %6445 = vmatprep.subr.mxu0 0.0
    %6446 = vmatpush1.msra.mxu0 0.0
    %6447 = vmatprep.subr.mxu0 0.0
    %6448 = vmatpush1.msra.mxu0 0.0
    %6449 = vmatprep.subr.mxu0 0.0
    %6450 = vmatpush1.msra.mxu0 0.0
    %6451 = vmatprep.subr.mxu0 0.0
    %6452 = vmatpush1.msra.mxu0 0.0
    %6453 = vmatprep.subr.mxu0 0.0
    %6454 = vmatpush1.msra.mxu0 0.0
    %6455 = vmatprep.subr.mxu0 0.0
    %6456 = vmatpush1.msra.mxu0 0.0
    %6457 = vmatprep.subr.mxu0 0.0
    %6458 = vmatpush1.msra.mxu0 0.0
    %6459 = vmatprep.subr.mxu0 0.0
    %6460 = vmatpush1.msra.mxu0 0.0
    %6461 = vmatprep.subr.mxu0 0.0
    %6462 = vmatpush1.msra.mxu0 0.0
    %6463 = vmatprep.mubr.f32.mxu0 0.0
    %6464 = vmatmul.mubr.f32.gmra.mrb[0].mxu0 %v6397
    %v6465 = vpop.f32.mrb[0].mxu0
    %v6466 = vadd.f32 %v6394, %v6465
    %v6467 = vpop.f32.mrb[0].mxu0
    %6468 = vdwg.mxu0
    %vm6469 = vcmask 25600
    %6470 = vst.msk [vmem:[#allocation26] sm:$0x3] %vm6469, %v6466
    // Predicated region
    $region186: #{actor_forward.1} parent=1 // pred_check
      _
    $region187: #{actor_forward.1} parent=1 // pred_check_branch
      %6472 = sbr.rel (0) target = $region189
    $region188: #{actor_forward.1} parent=1 // pred_region
      %s6474 = ssub.s32 32, 32
      %6475 = vsyncadd [#allocation4], %s6474
      %s6477 = sshll.u32 [#allocation26], 4
      %s6478 = int_to_ptr.vmem [resolvable:$true] %s6477
      %6480 = dma.vmem_to_hbm [thread:$0]  %s6478, 32, %s63, [#allocation4]
    $region189: #{actor_forward.1} parent=1 // pred_fallthru
      _
    // Predicated region
    $region190: #{actor_forward.1} parent=1 // pred_check
      _
    $region191: #{actor_forward.1} parent=1 // pred_check_branch
      %6482 = sbr.rel (0) target = $region193
    $region192: #{actor_forward.1} parent=1 // pred_region
      %6483 = dma.done [#allocation4], 32
    $region193: #{actor_forward.1} parent=1 // pred_fallthru
      _
    %6484 = vsyncpa [#allocation3], 1
    %6485 = vsyncpa [#allocation6], 1
    %6486 = vsyncpa [#allocation9], 1
    %6487 = vsyncpa [#allocation12], 1
    %6488 = vsyncpa [#allocation15], 1
    %6489 = vsyncpa [#allocation18], 1
    %6490 = vsyncpa [#allocation21], 1
    %6491 = vsyncpa [#allocation24], 1
    %6492 = vsyncpa [#allocation4], 1

</llo_original>
